<compile_context>
chip_gen: v6e
topology: v6e:2x2x1
jax: 0.10.0
libtpu: 0.0.40
codegen_flags: <defaults>
</compile_context>

<pallas_src>
import jax
import jax.numpy as jnp
import numpy as np
from jax import lax
from jax.experimental import pallas as pl
from jax.experimental.pallas import tpu as pltpu

N_EMBED = 384
N_HEAD = 8
HEAD_SIZE = N_EMBED // N_HEAD      # 48
BLOCK_SIZE = 8                     # sequence length T
LN_EPS = 1e-5                      # nn.LayerNorm default


def _layernorm(x, g, b):
    mean = jnp.mean(x, axis=-1, keepdims=True)
    var = jnp.mean((x - mean) ** 2, axis=-1, keepdims=True)
    return (x - mean) * lax.rsqrt(var + LN_EPS) * g + b


def block_kernel(x_ref,
                 ln1_g_ref, ln1_b_ref,
                 wqkv_ref,
                 wproj_ref, bproj_ref,
                 ln2_g_ref, ln2_b_ref,
                 w1_ref, b1_ref, w2_ref, b2_ref,
                 o_ref):
    bblk, T, C = x_ref.shape
    R = bblk * T
    x = x_ref[...].reshape(R, C)        # (R, C) f32, batch rows flattened

    # ---------------- x + sa(ln1(x)) ----------------
    xn = _layernorm(x, ln1_g_ref[...], ln1_b_ref[...])
    # single fused QKV matmul: bf16 x bf16 -> f32 accumulation
    qkv = jnp.dot(xn.astype(jnp.bfloat16), wqkv_ref[...],
                  preferred_element_type=jnp.float32)           # (R, 3C)
    q = qkv[:, :C]                       # slices at 128-aligned lane offsets
    k = qkv[:, C:2 * C]
    v = qkv[:, 2 * C:]

    # head-batched layout (N_HEAD*bblk, T, D): lane slices + leading-dim concat
    def to_heads(z):
        return jnp.concatenate(
            [z[:, h * HEAD_SIZE:(h + 1) * HEAD_SIZE].reshape(bblk, T, HEAD_SIZE)
             for h in range(N_HEAD)], axis=0)

    qh, kh, vh = to_heads(q), to_heads(k), to_heads(v)

    scale = float(N_EMBED) ** -0.5       # PyTorch uses C**-0.5 with C = n_embed
    wei = jnp.einsum('ntd,nsd->nts', qh, kh,
                     preferred_element_type=jnp.float32) * scale
    row = lax.broadcasted_iota(jnp.int32, (T, T), 0)
    col = lax.broadcasted_iota(jnp.int32, (T, T), 1)
    wei = jnp.where((row >= col)[None, :, :], wei, -1e30)
    wei = wei - jnp.max(wei, axis=-1, keepdims=True)
    p = jnp.exp(wei)
    wei = p / jnp.sum(p, axis=-1, keepdims=True)     # one softmax for all heads
    attn = jnp.einsum('nts,nsd->ntd', wei, vh,
                      preferred_element_type=jnp.float32)       # (H*bblk, T, D)

    # back to (R, C): cheap leading-dim slices, one lane concat
    sa = jnp.concatenate([attn[h * bblk:(h + 1) * bblk]
                          for h in range(N_HEAD)], axis=-1).reshape(R, C)
    sa = jnp.dot(sa.astype(jnp.bfloat16), wproj_ref[...],
                 preferred_element_type=jnp.float32) + bproj_ref[...]
    x1 = x + sa

    # ---------------- x + ffwd(ln2(x)) ----------------
    xn2 = _layernorm(x1, ln2_g_ref[...], ln2_b_ref[...])
    h1 = jnp.dot(xn2.astype(jnp.bfloat16), w1_ref[...],
                 preferred_element_type=jnp.float32) + b1_ref[...]
    h1 = jnp.maximum(h1, 0.0)
    ff = jnp.dot(h1.astype(jnp.bfloat16), w2_ref[...],
                 preferred_element_type=jnp.float32) + b2_ref[...]
    x2 = x1 + ff

    # TODO(synk): nn.Dropout is applied as identity (inference mode);
    # training-mode stochastic dropout is omitted.
    o_ref[...] = x2.reshape(bblk, T, C).astype(o_ref.dtype)


def _pick_bblk(B, T):
    # Enough rows per grid step to fill MXU rows (~128) when B allows it.
    bblk = max(1, min(B, max(1, 128 // T)))
    while B % bblk:
        bblk -= 1
    return bblk


def transformer_block(x, params):
    (ln1_g, ln1_b, wq, wk, wv, wproj, bproj,
     ln2_g, ln2_b, w1, b1, w2, b2) = params
    B, T, C = x.shape
    assert C == N_EMBED and T == BLOCK_SIZE
    bblk = _pick_bblk(B, T)

    # Pre-pack: fused bf16 QKV weight; bf16 for every large matmul weight.
    wqkv = jnp.concatenate([wq, wk, wv], axis=1).astype(jnp.bfloat16)  # (C, 3C)
    wproj_bf = wproj.astype(jnp.bfloat16)
    w1_bf = w1.astype(jnp.bfloat16)
    w2_bf = w2.astype(jnp.bfloat16)

    def full(shape):
        return pl.BlockSpec(shape, lambda b: (0,) * len(shape))

    in_specs = [
        pl.BlockSpec((bblk, T, C), lambda b: (b, 0, 0)),   # x
        full((1, C)), full((1, C)),                        # ln1 gamma, beta
        full((C, 3 * C)),                                  # fused Wqkv (bf16)
        full((C, C)), full((1, C)),                        # proj W (bf16), b
        full((1, C)), full((1, C)),                        # ln2 gamma, beta
        full((C, 4 * C)), full((1, 4 * C)),                # ffwd W1 (bf16), b1
        full((4 * C, C)), full((1, C)),                    # ffwd W2 (bf16), b2
    ]

    # Advisory cost estimate: weight-DMA dominated, tiny flops.
    flops = (2 * B * T * C * (3 * C + C + 4 * C + 4 * C)
             + 4 * B * N_HEAD * T * T * HEAD_SIZE)
    bytes_w = 2 * (3 * C * C + C * C + 4 * C * C + 4 * C * C)   # bf16 weights
    bytes_io = 4 * (2 * B * T * C) + 4 * (6 * C + 4 * C)        # f32 x/out + small params
    cost = pl.CostEstimate(flops=flops,
                           transcendentals=B * N_HEAD * T * T,
                           bytes_accessed=bytes_w + bytes_io)

    return pl.pallas_call(
        block_kernel,
        out_shape=jax.ShapeDtypeStruct((B, T, C), x.dtype),
        grid_spec=pltpu.PrefetchScalarGridSpec(
            num_scalar_prefetch=0,
            grid=(B // bblk,),
            in_specs=in_specs,
            out_specs=pl.BlockSpec((bblk, T, C), lambda b: (b, 0, 0)),
        ),
        compiler_params=pltpu.CompilerParams(
            dimension_semantics=("parallel",),
            vmem_limit_bytes=32 << 20,   # fits v7x's 64 MiB physical VMEM
        ),
        cost_estimate=cost,
    )(x, ln1_g, ln1_b, wqkv, wproj_bf, bproj, ln2_g, ln2_b,
      w1_bf, b1, w2_bf, b2)


def block_reference(x, params):
    """Pure-JAX f32 reference mirroring the PyTorch forward (eval mode)."""
    (ln1_g, ln1_b, wq, wk, wv, wproj, bproj,
     ln2_g, ln2_b, w1, b1, w2, b2) = params

    def ln(z, g, b):
        m = z.mean(-1, keepdims=True)
        v = ((z - m) ** 2).mean(-1, keepdims=True)
        return (z - m) / jnp.sqrt(v + LN_EPS) * g + b

    B, T, C = x.shape
    xn = ln(x, ln1_g, ln1_b)
    q = xn @ wq
    k = xn @ wk
    v = xn @ wv
    qh = q.reshape(B, T, N_HEAD, HEAD_SIZE).transpose(0, 2, 1, 3)
    kh = k.reshape(B, T, N_HEAD, HEAD_SIZE).transpose(0, 2, 1, 3)
    vh = v.reshape(B, T, N_HEAD, HEAD_SIZE).transpose(0, 2, 1, 3)
    wei = jnp.einsum('bhtd,bhsd->bhts', qh, kh) * (float(C) ** -0.5)
    mask = jnp.tril(jnp.ones((T, T), bool))
    wei = jnp.where(mask, wei, -jnp.inf)
    wei = jax.nn.softmax(wei, axis=-1)
    out = jnp.einsum('bhts,bhsd->bhtd', wei, vh)
    out = out.transpose(0, 2, 1, 3).reshape(B, T, C)
    x1 = x + (out @ wproj + bproj)
    xn2 = ln(x1, ln2_g, ln2_b)
    ff = jnp.maximum(xn2 @ w1 + b1, 0.0) @ w2 + b2
    return x1 + ff


def init_params(key):
    C = N_EMBED
    ks = jax.random.split(key, 13)
    nrm = lambda k, shape, s=0.02: s * jax.random.normal(k, shape, jnp.float32)
    return (
        jnp.ones((1, C), jnp.float32),             # ln1 gamma
        jnp.zeros((1, C), jnp.float32),            # ln1 beta
        nrm(ks[0], (C, C)),                        # Wq (all heads, pre-transposed)
        nrm(ks[1], (C, C)),                        # Wk
        nrm(ks[2], (C, C)),                        # Wv
        nrm(ks[3], (C, C)),                        # proj W
        nrm(ks[4], (1, C)),                        # proj b
        jnp.ones((1, C), jnp.float32),             # ln2 gamma
        jnp.zeros((1, C), jnp.float32),            # ln2 beta
        nrm(ks[5], (C, 4 * C)),                    # ffwd W1
        nrm(ks[6], (1, 4 * C)),                    # ffwd b1
        nrm(ks[7], (4 * C, C)),                    # ffwd W2
        nrm(ks[8], (1, C)),                        # ffwd b2
    )


if __name__ == "__main__":
    key = jax.random.PRNGKey(0)
    kx, kp = jax.random.split(key)
    B, T, C = 2, BLOCK_SIZE, N_EMBED
    x = jax.random.normal(kx, (B, T, C), jnp.float32)
    params = init_params(kp)

    out = transformer_block(x, params)
    out = jax.block_until_ready(out)

    ref = jax.block_until_ready(block_reference(x, params))
    # bf16 weights/activations in the kernel vs. f32 reference -> looser tol.
    np.testing.assert_allclose(np.asarray(out), np.asarray(ref),
                               rtol=2e-2, atol=2e-2)
    print("KERNEL_OK")
</pallas_src>

<mosaic_0001>
module attributes {stable_mosaic.version = 11 : i64} {
  func.func @block_kernel(%arg0: i32, %arg1: memref<2x8x384xf32, #tpu.memory_space<vmem>>, %arg2: memref<1x384xf32, #tpu.memory_space<vmem>>, %arg3: memref<1x384xf32, #tpu.memory_space<vmem>>, %arg4: memref<384x1152xbf16, #tpu.memory_space<vmem>>, %arg5: memref<384x384xbf16, #tpu.memory_space<vmem>>, %arg6: memref<1x384xf32, #tpu.memory_space<vmem>>, %arg7: memref<1x384xf32, #tpu.memory_space<vmem>>, %arg8: memref<1x384xf32, #tpu.memory_space<vmem>>, %arg9: memref<384x1536xbf16, #tpu.memory_space<vmem>>, %arg10: memref<1x1536xf32, #tpu.memory_space<vmem>>, %arg11: memref<1536x384xbf16, #tpu.memory_space<vmem>>, %arg12: memref<1x384xf32, #tpu.memory_space<vmem>>, %arg13: memref<2x8x384xf32, #tpu.memory_space<vmem>>) attributes {dimension_semantics = [#tpu.dimension_semantics<parallel>], iteration_bounds = array<i64: 1>, scalar_prefetch = 0 : i64, scratch_operands = 0 : i64, tpu.core_type = #tpu.core_type<tc>, window_params = [{transform_indices = @transform_0, window_bounds = array<i64: 2, 8, 384>}, {pipeline_mode = #tpu.pipeline_mode<synchronous>, transform_indices = @transform_1, window_bounds = array<i64: 1, 384>}, {pipeline_mode = #tpu.pipeline_mode<synchronous>, transform_indices = @transform_2, window_bounds = array<i64: 1, 384>}, {pipeline_mode = #tpu.pipeline_mode<synchronous>, transform_indices = @transform_3, window_bounds = array<i64: 384, 1152>}, {pipeline_mode = #tpu.pipeline_mode<synchronous>, transform_indices = @transform_4, window_bounds = array<i64: 384, 384>}, {pipeline_mode = #tpu.pipeline_mode<synchronous>, transform_indices = @transform_5, window_bounds = array<i64: 1, 384>}, {pipeline_mode = #tpu.pipeline_mode<synchronous>, transform_indices = @transform_6, window_bounds = array<i64: 1, 384>}, {pipeline_mode = #tpu.pipeline_mode<synchronous>, transform_indices = @transform_7, window_bounds = array<i64: 1, 384>}, {pipeline_mode = #tpu.pipeline_mode<synchronous>, transform_indices = @transform_8, window_bounds = array<i64: 384, 1536>}, {pipeline_mode = #tpu.pipeline_mode<synchronous>, transform_indices = @transform_9, window_bounds = array<i64: 1, 1536>}, {pipeline_mode = #tpu.pipeline_mode<synchronous>, transform_indices = @transform_10, window_bounds = array<i64: 1536, 384>}, {pipeline_mode = #tpu.pipeline_mode<synchronous>, transform_indices = @transform_11, window_bounds = array<i64: 1, 384>}, {transform_indices = @transform_12, window_bounds = array<i64: 2, 8, 384>}]} {
    %c0 = arith.constant 0 : index
    %c0_0 = arith.constant 0 : index
    %c0_1 = arith.constant 0 : index
    %0 = vector.load %arg1[%c0, %c0_0, %c0_1] : memref<2x8x384xf32, #tpu.memory_space<vmem>>, vector<2x8x384xf32>
    %1 = vector.shape_cast %0 : vector<2x8x384xf32> to vector<16x384xf32>
    %c0_2 = arith.constant 0 : index
    %c0_3 = arith.constant 0 : index
    %2 = vector.load %arg2[%c0_2, %c0_3] : memref<1x384xf32, #tpu.memory_space<vmem>>, vector<1x384xf32>
    %c0_4 = arith.constant 0 : index
    %c0_5 = arith.constant 0 : index
    %3 = vector.load %arg3[%c0_4, %c0_5] : memref<1x384xf32, #tpu.memory_space<vmem>>, vector<1x384xf32>
    %cst = arith.constant dense<0.000000e+00> : vector<16xf32>
    %4 = vector.multi_reduction <add>, %1, %cst [1] : vector<16x384xf32> to vector<16xf32>
    %5 = vector.shape_cast %4 : vector<16xf32> to vector<16x1xf32>
    %cst_6 = arith.constant 3.840000e+02 : f32
    %6 = vector.broadcast %cst_6 : f32 to vector<16x1xf32>
    %7 = arith.divf %5, %6 : vector<16x1xf32>
    %8 = vector.broadcast %7 : vector<16x1xf32> to vector<16x384xf32>
    %9 = arith.subf %1, %8 : vector<16x384xf32>
    %10 = arith.mulf %9, %9 : vector<16x384xf32>
    %cst_7 = arith.constant dense<0.000000e+00> : vector<16xf32>
    %11 = vector.multi_reduction <add>, %10, %cst_7 [1] : vector<16x384xf32> to vector<16xf32>
    %12 = vector.shape_cast %11 : vector<16xf32> to vector<16x1xf32>
    %cst_8 = arith.constant 3.840000e+02 : f32
    %13 = vector.broadcast %cst_8 : f32 to vector<16x1xf32>
    %14 = arith.divf %12, %13 : vector<16x1xf32>
    %15 = vector.broadcast %7 : vector<16x1xf32> to vector<16x384xf32>
    %16 = arith.subf %1, %15 : vector<16x384xf32>
    %cst_9 = arith.constant 9.99999974E-6 : f32
    %17 = vector.broadcast %cst_9 : f32 to vector<16x1xf32>
    %18 = arith.addf %14, %17 : vector<16x1xf32>
    %19 = math.rsqrt %18 : vector<16x1xf32>
    %20 = vector.broadcast %19 : vector<16x1xf32> to vector<16x384xf32>
    %21 = arith.mulf %16, %20 : vector<16x384xf32>
    %22 = vector.broadcast %2 : vector<1x384xf32> to vector<16x384xf32>
    %23 = arith.mulf %21, %22 : vector<16x384xf32>
    %24 = vector.broadcast %3 : vector<1x384xf32> to vector<16x384xf32>
    %25 = arith.addf %23, %24 : vector<16x384xf32>
    %26 = arith.truncf %25 : vector<16x384xf32> to vector<16x384xbf16>
    %c0_10 = arith.constant 0 : index
    %c0_11 = arith.constant 0 : index
    %27 = vector.load %arg4[%c0_10, %c0_11] : memref<384x1152xbf16, #tpu.memory_space<vmem>>, vector<384x1152xbf16>
    %cst_12 = arith.constant dense<0.000000e+00> : vector<16x1152xf32>
    %28 = tpu.matmul %26, %27, %cst_12 {dimension_numbers = #tpu.dot_dimension_numbers<[1], [0], [0], [1], [0, 0, 1, 1], [], []>} : vector<16x384xbf16>, vector<384x1152xbf16>, vector<16x1152xf32> -> vector<16x1152xf32>
    %29 = vector.extract_strided_slice %28 {offsets = [0, 0], sizes = [16, 384], strides = [1, 1]} : vector<16x1152xf32> to vector<16x384xf32>
    %30 = vector.extract_strided_slice %28 {offsets = [0, 384], sizes = [16, 384], strides = [1, 1]} : vector<16x1152xf32> to vector<16x384xf32>
    %31 = vector.extract_strided_slice %28 {offsets = [0, 768], sizes = [16, 384], strides = [1, 1]} : vector<16x1152xf32> to vector<16x384xf32>
    %32 = vector.extract_strided_slice %29 {offsets = [0, 0], sizes = [16, 48], strides = [1, 1]} : vector<16x384xf32> to vector<16x48xf32>
    %33 = vector.shape_cast %32 : vector<16x48xf32> to vector<2x8x48xf32>
    %34 = vector.extract_strided_slice %29 {offsets = [0, 48], sizes = [16, 48], strides = [1, 1]} : vector<16x384xf32> to vector<16x48xf32>
    %35 = vector.shape_cast %34 : vector<16x48xf32> to vector<2x8x48xf32>
    %36 = vector.extract_strided_slice %29 {offsets = [0, 96], sizes = [16, 48], strides = [1, 1]} : vector<16x384xf32> to vector<16x48xf32>
    %37 = vector.shape_cast %36 : vector<16x48xf32> to vector<2x8x48xf32>
    %38 = vector.extract_strided_slice %29 {offsets = [0, 144], sizes = [16, 48], strides = [1, 1]} : vector<16x384xf32> to vector<16x48xf32>
    %39 = vector.shape_cast %38 : vector<16x48xf32> to vector<2x8x48xf32>
    %40 = vector.extract_strided_slice %29 {offsets = [0, 192], sizes = [16, 48], strides = [1, 1]} : vector<16x384xf32> to vector<16x48xf32>
    %41 = vector.shape_cast %40 : vector<16x48xf32> to vector<2x8x48xf32>
    %42 = vector.extract_strided_slice %29 {offsets = [0, 240], sizes = [16, 48], strides = [1, 1]} : vector<16x384xf32> to vector<16x48xf32>
    %43 = vector.shape_cast %42 : vector<16x48xf32> to vector<2x8x48xf32>
    %44 = vector.extract_strided_slice %29 {offsets = [0, 288], sizes = [16, 48], strides = [1, 1]} : vector<16x384xf32> to vector<16x48xf32>
    %45 = vector.shape_cast %44 : vector<16x48xf32> to vector<2x8x48xf32>
    %46 = vector.extract_strided_slice %29 {offsets = [0, 336], sizes = [16, 48], strides = [1, 1]} : vector<16x384xf32> to vector<16x48xf32>
    %47 = vector.shape_cast %46 : vector<16x48xf32> to vector<2x8x48xf32>
    %48 = tpu.concatenate %33, %35, %37, %39, %41, %43, %45, %47 in 0 : vector<2x8x48xf32>, vector<2x8x48xf32>, vector<2x8x48xf32>, vector<2x8x48xf32>, vector<2x8x48xf32>, vector<2x8x48xf32>, vector<2x8x48xf32>, vector<2x8x48xf32> -> vector<16x8x48xf32>
    %49 = vector.extract_strided_slice %30 {offsets = [0, 0], sizes = [16, 48], strides = [1, 1]} : vector<16x384xf32> to vector<16x48xf32>
    %50 = vector.shape_cast %49 : vector<16x48xf32> to vector<2x8x48xf32>
    %51 = vector.extract_strided_slice %30 {offsets = [0, 48], sizes = [16, 48], strides = [1, 1]} : vector<16x384xf32> to vector<16x48xf32>
    %52 = vector.shape_cast %51 : vector<16x48xf32> to vector<2x8x48xf32>
    %53 = vector.extract_strided_slice %30 {offsets = [0, 96], sizes = [16, 48], strides = [1, 1]} : vector<16x384xf32> to vector<16x48xf32>
    %54 = vector.shape_cast %53 : vector<16x48xf32> to vector<2x8x48xf32>
    %55 = vector.extract_strided_slice %30 {offsets = [0, 144], sizes = [16, 48], strides = [1, 1]} : vector<16x384xf32> to vector<16x48xf32>
    %56 = vector.shape_cast %55 : vector<16x48xf32> to vector<2x8x48xf32>
    %57 = vector.extract_strided_slice %30 {offsets = [0, 192], sizes = [16, 48], strides = [1, 1]} : vector<16x384xf32> to vector<16x48xf32>
    %58 = vector.shape_cast %57 : vector<16x48xf32> to vector<2x8x48xf32>
    %59 = vector.extract_strided_slice %30 {offsets = [0, 240], sizes = [16, 48], strides = [1, 1]} : vector<16x384xf32> to vector<16x48xf32>
    %60 = vector.shape_cast %59 : vector<16x48xf32> to vector<2x8x48xf32>
    %61 = vector.extract_strided_slice %30 {offsets = [0, 288], sizes = [16, 48], strides = [1, 1]} : vector<16x384xf32> to vector<16x48xf32>
    %62 = vector.shape_cast %61 : vector<16x48xf32> to vector<2x8x48xf32>
    %63 = vector.extract_strided_slice %30 {offsets = [0, 336], sizes = [16, 48], strides = [1, 1]} : vector<16x384xf32> to vector<16x48xf32>
    %64 = vector.shape_cast %63 : vector<16x48xf32> to vector<2x8x48xf32>
    %65 = tpu.concatenate %50, %52, %54, %56, %58, %60, %62, %64 in 0 : vector<2x8x48xf32>, vector<2x8x48xf32>, vector<2x8x48xf32>, vector<2x8x48xf32>, vector<2x8x48xf32>, vector<2x8x48xf32>, vector<2x8x48xf32>, vector<2x8x48xf32> -> vector<16x8x48xf32>
    %66 = vector.extract_strided_slice %31 {offsets = [0, 0], sizes = [16, 48], strides = [1, 1]} : vector<16x384xf32> to vector<16x48xf32>
    %67 = vector.shape_cast %66 : vector<16x48xf32> to vector<2x8x48xf32>
    %68 = vector.extract_strided_slice %31 {offsets = [0, 48], sizes = [16, 48], strides = [1, 1]} : vector<16x384xf32> to vector<16x48xf32>
    %69 = vector.shape_cast %68 : vector<16x48xf32> to vector<2x8x48xf32>
    %70 = vector.extract_strided_slice %31 {offsets = [0, 96], sizes = [16, 48], strides = [1, 1]} : vector<16x384xf32> to vector<16x48xf32>
    %71 = vector.shape_cast %70 : vector<16x48xf32> to vector<2x8x48xf32>
    %72 = vector.extract_strided_slice %31 {offsets = [0, 144], sizes = [16, 48], strides = [1, 1]} : vector<16x384xf32> to vector<16x48xf32>
    %73 = vector.shape_cast %72 : vector<16x48xf32> to vector<2x8x48xf32>
    %74 = vector.extract_strided_slice %31 {offsets = [0, 192], sizes = [16, 48], strides = [1, 1]} : vector<16x384xf32> to vector<16x48xf32>
    %75 = vector.shape_cast %74 : vector<16x48xf32> to vector<2x8x48xf32>
    %76 = vector.extract_strided_slice %31 {offsets = [0, 240], sizes = [16, 48], strides = [1, 1]} : vector<16x384xf32> to vector<16x48xf32>
    %77 = vector.shape_cast %76 : vector<16x48xf32> to vector<2x8x48xf32>
    %78 = vector.extract_strided_slice %31 {offsets = [0, 288], sizes = [16, 48], strides = [1, 1]} : vector<16x384xf32> to vector<16x48xf32>
    %79 = vector.shape_cast %78 : vector<16x48xf32> to vector<2x8x48xf32>
    %80 = vector.extract_strided_slice %31 {offsets = [0, 336], sizes = [16, 48], strides = [1, 1]} : vector<16x384xf32> to vector<16x48xf32>
    %81 = vector.shape_cast %80 : vector<16x48xf32> to vector<2x8x48xf32>
    %82 = tpu.concatenate %67, %69, %71, %73, %75, %77, %79, %81 in 0 : vector<2x8x48xf32>, vector<2x8x48xf32>, vector<2x8x48xf32>, vector<2x8x48xf32>, vector<2x8x48xf32>, vector<2x8x48xf32>, vector<2x8x48xf32>, vector<2x8x48xf32> -> vector<16x8x48xf32>
    "tpu.trace_start"() <{level = 10 : i32, message = "ntd,nsd->nts"}> : () -> ()
    %cst_13 = arith.constant dense<0.000000e+00> : vector<16x8x8xf32>
    %83 = tpu.matmul %48, %65, %cst_13 {dimension_numbers = #tpu.dot_dimension_numbers<[2], [2], [1], [1], [0, 0, 0, 1, 1, 1], [0], [0]>} : vector<16x8x48xf32>, vector<16x8x48xf32>, vector<16x8x8xf32> -> vector<16x8x8xf32>
    "tpu.trace_stop"() : () -> ()
    %cst_14 = arith.constant 0.0510310382 : f32
    %84 = vector.broadcast %cst_14 : f32 to vector<16x8x8xf32>
    %85 = arith.mulf %83, %84 : vector<16x8x8xf32>
    %86 = tpu.iota {dimensions = array<i32: 0>} : vector<8x8xi32>
    %87 = tpu.iota {dimensions = array<i32: 1>} : vector<8x8xi32>
    %88 = arith.cmpi sge, %86, %87 : vector<8x8xi32>
    %89 = vector.shape_cast %88 : vector<8x8xi1> to vector<1x8x8xi1>
    %cst_15 = arith.constant -1.000000e+30 : f32
    %90 = vector.shape_cast %89 : vector<1x8x8xi1> to vector<1x8x8xi1>
    %91 = vector.broadcast %90 : vector<1x8x8xi1> to vector<16x8x8xi1>
    %92 = vector.broadcast %cst_15 : f32 to vector<16x8x8xf32>
    %93 = arith.select %91, %85, %92 : vector<16x8x8xi1>, vector<16x8x8xf32>
    %cst_16 = arith.constant dense<0xFF800000> : vector<16x8xf32>
    %94 = vector.multi_reduction <maximumf>, %93, %cst_16 [2] : vector<16x8x8xf32> to vector<16x8xf32>
    %95 = vector.shape_cast %94 : vector<16x8xf32> to vector<16x8x1xf32>
    %96 = vector.broadcast %95 : vector<16x8x1xf32> to vector<16x8x8xf32>
    %97 = arith.subf %93, %96 : vector<16x8x8xf32>
    %98 = math.exp %97 : vector<16x8x8xf32>
    %cst_17 = arith.constant dense<0.000000e+00> : vector<16x8xf32>
    %99 = vector.multi_reduction <add>, %98, %cst_17 [2] : vector<16x8x8xf32> to vector<16x8xf32>
    %100 = vector.shape_cast %99 : vector<16x8xf32> to vector<16x8x1xf32>
    %101 = vector.broadcast %100 : vector<16x8x1xf32> to vector<16x8x8xf32>
    %102 = arith.divf %98, %101 : vector<16x8x8xf32>
    "tpu.trace_start"() <{level = 10 : i32, message = "nts,nsd->ntd"}> : () -> ()
    %cst_18 = arith.constant dense<0.000000e+00> : vector<16x8x48xf32>
    %103 = tpu.matmul %102, %82, %cst_18 {dimension_numbers = #tpu.dot_dimension_numbers<[2], [1], [1], [2], [0, 0, 0, 1, 1, 2], [0], [0]>} : vector<16x8x8xf32>, vector<16x8x48xf32>, vector<16x8x48xf32> -> vector<16x8x48xf32>
    "tpu.trace_stop"() : () -> ()
    %104 = vector.extract_strided_slice %103 {offsets = [0, 0, 0], sizes = [2, 8, 48], strides = [1, 1, 1]} : vector<16x8x48xf32> to vector<2x8x48xf32>
    %105 = vector.extract_strided_slice %103 {offsets = [2, 0, 0], sizes = [2, 8, 48], strides = [1, 1, 1]} : vector<16x8x48xf32> to vector<2x8x48xf32>
    %106 = vector.extract_strided_slice %103 {offsets = [4, 0, 0], sizes = [2, 8, 48], strides = [1, 1, 1]} : vector<16x8x48xf32> to vector<2x8x48xf32>
    %107 = vector.extract_strided_slice %103 {offsets = [6, 0, 0], sizes = [2, 8, 48], strides = [1, 1, 1]} : vector<16x8x48xf32> to vector<2x8x48xf32>
    %108 = vector.extract_strided_slice %103 {offsets = [8, 0, 0], sizes = [2, 8, 48], strides = [1, 1, 1]} : vector<16x8x48xf32> to vector<2x8x48xf32>
    %109 = vector.extract_strided_slice %103 {offsets = [10, 0, 0], sizes = [2, 8, 48], strides = [1, 1, 1]} : vector<16x8x48xf32> to vector<2x8x48xf32>
    %110 = vector.extract_strided_slice %103 {offsets = [12, 0, 0], sizes = [2, 8, 48], strides = [1, 1, 1]} : vector<16x8x48xf32> to vector<2x8x48xf32>
    %111 = vector.extract_strided_slice %103 {offsets = [14, 0, 0], sizes = [2, 8, 48], strides = [1, 1, 1]} : vector<16x8x48xf32> to vector<2x8x48xf32>
    %112 = tpu.concatenate %104, %105, %106, %107, %108, %109, %110, %111 in 2 : vector<2x8x48xf32>, vector<2x8x48xf32>, vector<2x8x48xf32>, vector<2x8x48xf32>, vector<2x8x48xf32>, vector<2x8x48xf32>, vector<2x8x48xf32>, vector<2x8x48xf32> -> vector<2x8x384xf32>
    %113 = vector.shape_cast %112 : vector<2x8x384xf32> to vector<16x384xf32>
    %114 = arith.truncf %113 : vector<16x384xf32> to vector<16x384xbf16>
    %c0_19 = arith.constant 0 : index
    %c0_20 = arith.constant 0 : index
    %115 = vector.load %arg5[%c0_19, %c0_20] : memref<384x384xbf16, #tpu.memory_space<vmem>>, vector<384x384xbf16>
    %cst_21 = arith.constant dense<0.000000e+00> : vector<16x384xf32>
    %116 = tpu.matmul %114, %115, %cst_21 {dimension_numbers = #tpu.dot_dimension_numbers<[1], [0], [0], [1], [0, 0, 1, 1], [], []>} : vector<16x384xbf16>, vector<384x384xbf16>, vector<16x384xf32> -> vector<16x384xf32>
    %c0_22 = arith.constant 0 : index
    %c0_23 = arith.constant 0 : index
    %117 = vector.load %arg6[%c0_22, %c0_23] : memref<1x384xf32, #tpu.memory_space<vmem>>, vector<1x384xf32>
    %118 = vector.broadcast %117 : vector<1x384xf32> to vector<16x384xf32>
    %119 = arith.addf %116, %118 : vector<16x384xf32>
    %120 = arith.addf %1, %119 : vector<16x384xf32>
    %c0_24 = arith.constant 0 : index
    %c0_25 = arith.constant 0 : index
    %121 = vector.load %arg7[%c0_24, %c0_25] : memref<1x384xf32, #tpu.memory_space<vmem>>, vector<1x384xf32>
    %c0_26 = arith.constant 0 : index
    %c0_27 = arith.constant 0 : index
    %122 = vector.load %arg8[%c0_26, %c0_27] : memref<1x384xf32, #tpu.memory_space<vmem>>, vector<1x384xf32>
    %cst_28 = arith.constant dense<0.000000e+00> : vector<16xf32>
    %123 = vector.multi_reduction <add>, %120, %cst_28 [1] : vector<16x384xf32> to vector<16xf32>
    %124 = vector.shape_cast %123 : vector<16xf32> to vector<16x1xf32>
    %cst_29 = arith.constant 3.840000e+02 : f32
    %125 = vector.broadcast %cst_29 : f32 to vector<16x1xf32>
    %126 = arith.divf %124, %125 : vector<16x1xf32>
    %127 = vector.broadcast %126 : vector<16x1xf32> to vector<16x384xf32>
    %128 = arith.subf %120, %127 : vector<16x384xf32>
    %129 = arith.mulf %128, %128 : vector<16x384xf32>
    %cst_30 = arith.constant dense<0.000000e+00> : vector<16xf32>
    %130 = vector.multi_reduction <add>, %129, %cst_30 [1] : vector<16x384xf32> to vector<16xf32>
    %131 = vector.shape_cast %130 : vector<16xf32> to vector<16x1xf32>
    %cst_31 = arith.constant 3.840000e+02 : f32
    %132 = vector.broadcast %cst_31 : f32 to vector<16x1xf32>
    %133 = arith.divf %131, %132 : vector<16x1xf32>
    %134 = vector.broadcast %126 : vector<16x1xf32> to vector<16x384xf32>
    %135 = arith.subf %120, %134 : vector<16x384xf32>
    %cst_32 = arith.constant 9.99999974E-6 : f32
    %136 = vector.broadcast %cst_32 : f32 to vector<16x1xf32>
    %137 = arith.addf %133, %136 : vector<16x1xf32>
    %138 = math.rsqrt %137 : vector<16x1xf32>
    %139 = vector.broadcast %138 : vector<16x1xf32> to vector<16x384xf32>
    %140 = arith.mulf %135, %139 : vector<16x384xf32>
    %141 = vector.broadcast %121 : vector<1x384xf32> to vector<16x384xf32>
    %142 = arith.mulf %140, %141 : vector<16x384xf32>
    %143 = vector.broadcast %122 : vector<1x384xf32> to vector<16x384xf32>
    %144 = arith.addf %142, %143 : vector<16x384xf32>
    %145 = arith.truncf %144 : vector<16x384xf32> to vector<16x384xbf16>
    %c0_33 = arith.constant 0 : index
    %c0_34 = arith.constant 0 : index
    %146 = vector.load %arg9[%c0_33, %c0_34] : memref<384x1536xbf16, #tpu.memory_space<vmem>>, vector<384x1536xbf16>
    %cst_35 = arith.constant dense<0.000000e+00> : vector<16x1536xf32>
    %147 = tpu.matmul %145, %146, %cst_35 {dimension_numbers = #tpu.dot_dimension_numbers<[1], [0], [0], [1], [0, 0, 1, 1], [], []>} : vector<16x384xbf16>, vector<384x1536xbf16>, vector<16x1536xf32> -> vector<16x1536xf32>
    %c0_36 = arith.constant 0 : index
    %c0_37 = arith.constant 0 : index
    %148 = vector.load %arg10[%c0_36, %c0_37] : memref<1x1536xf32, #tpu.memory_space<vmem>>, vector<1x1536xf32>
    %149 = vector.broadcast %148 : vector<1x1536xf32> to vector<16x1536xf32>
    %150 = arith.addf %147, %149 : vector<16x1536xf32>
    %cst_38 = arith.constant 0.000000e+00 : f32
    %151 = vector.broadcast %cst_38 : f32 to vector<16x1536xf32>
    %152 = arith.maximumf %150, %151 : vector<16x1536xf32>
    %153 = arith.truncf %152 : vector<16x1536xf32> to vector<16x1536xbf16>
    %c0_39 = arith.constant 0 : index
    %c0_40 = arith.constant 0 : index
    %154 = vector.load %arg11[%c0_39, %c0_40] : memref<1536x384xbf16, #tpu.memory_space<vmem>>, vector<1536x384xbf16>
    %cst_41 = arith.constant dense<0.000000e+00> : vector<16x384xf32>
    %155 = tpu.matmul %153, %154, %cst_41 {dimension_numbers = #tpu.dot_dimension_numbers<[1], [0], [0], [1], [0, 0, 1, 1], [], []>} : vector<16x1536xbf16>, vector<1536x384xbf16>, vector<16x384xf32> -> vector<16x384xf32>
    %c0_42 = arith.constant 0 : index
    %c0_43 = arith.constant 0 : index
    %156 = vector.load %arg12[%c0_42, %c0_43] : memref<1x384xf32, #tpu.memory_space<vmem>>, vector<1x384xf32>
    %157 = vector.broadcast %156 : vector<1x384xf32> to vector<16x384xf32>
    %158 = arith.addf %155, %157 : vector<16x384xf32>
    %159 = arith.addf %120, %158 : vector<16x384xf32>
    %160 = vector.shape_cast %159 : vector<16x384xf32> to vector<2x8x384xf32>
    %c0_44 = arith.constant 0 : index
    %c0_45 = arith.constant 0 : index
    %c0_46 = arith.constant 0 : index
    %161 = vector.load %arg13[%c0_44, %c0_45, %c0_46] : memref<2x8x384xf32, #tpu.memory_space<vmem>>, vector<2x8x384xf32>
    tpu.vector_store %arg13[%c0_44, %c0_45, %c0_46], %160 {strides = array<i32>} : memref<2x8x384xf32, #tpu.memory_space<vmem>>, vector<2x8x384xf32>,
    return
  }
  func.func @transform_0(%arg0: i32) -> (i32, i32, i32) {
    %c0_i32 = arith.constant 0 : i32
    %c0_i32_0 = arith.constant 0 : i32
    %c0_i32_1 = arith.constant 0 : i32
    return %arg0, %c0_i32, %c0_i32_0 : i32, i32, i32
  }
  func.func @transform_1(%arg0: i32) -> (i32, i32) {
    %c0_i32 = arith.constant 0 : i32
    %c0_i32_0 = arith.constant 0 : i32
    %c0_i32_1 = arith.constant 0 : i32
    return %c0_i32, %c0_i32_0 : i32, i32
  }
  func.func @transform_2(%arg0: i32) -> (i32, i32) {
    %c0_i32 = arith.constant 0 : i32
    %c0_i32_0 = arith.constant 0 : i32
    %c0_i32_1 = arith.constant 0 : i32
    return %c0_i32, %c0_i32_0 : i32, i32
  }
  func.func @transform_3(%arg0: i32) -> (i32, i32) {
    %c0_i32 = arith.constant 0 : i32
    %c0_i32_0 = arith.constant 0 : i32
    %c0_i32_1 = arith.constant 0 : i32
    return %c0_i32, %c0_i32_0 : i32, i32
  }
  func.func @transform_4(%arg0: i32) -> (i32, i32) {
    %c0_i32 = arith.constant 0 : i32
    %c0_i32_0 = arith.constant 0 : i32
    %c0_i32_1 = arith.constant 0 : i32
    return %c0_i32, %c0_i32_0 : i32, i32
  }
  func.func @transform_5(%arg0: i32) -> (i32, i32) {
    %c0_i32 = arith.constant 0 : i32
    %c0_i32_0 = arith.constant 0 : i32
    %c0_i32_1 = arith.constant 0 : i32
    return %c0_i32, %c0_i32_0 : i32, i32
  }
  func.func @transform_6(%arg0: i32) -> (i32, i32) {
    %c0_i32 = arith.constant 0 : i32
    %c0_i32_0 = arith.constant 0 : i32
    %c0_i32_1 = arith.constant 0 : i32
    return %c0_i32, %c0_i32_0 : i32, i32
  }
  func.func @transform_7(%arg0: i32) -> (i32, i32) {
    %c0_i32 = arith.constant 0 : i32
    %c0_i32_0 = arith.constant 0 : i32
    %c0_i32_1 = arith.constant 0 : i32
    return %c0_i32, %c0_i32_0 : i32, i32
  }
  func.func @transform_8(%arg0: i32) -> (i32, i32) {
    %c0_i32 = arith.constant 0 : i32
    %c0_i32_0 = arith.constant 0 : i32
    %c0_i32_1 = arith.constant 0 : i32
    return %c0_i32, %c0_i32_0 : i32, i32
  }
  func.func @transform_9(%arg0: i32) -> (i32, i32) {
    %c0_i32 = arith.constant 0 : i32
    %c0_i32_0 = arith.constant 0 : i32
    %c0_i32_1 = arith.constant 0 : i32
    return %c0_i32, %c0_i32_0 : i32, i32
  }
  func.func @transform_10(%arg0: i32) -> (i32, i32) {
    %c0_i32 = arith.constant 0 : i32
    %c0_i32_0 = arith.constant 0 : i32
    %c0_i32_1 = arith.constant 0 : i32
    return %c0_i32, %c0_i32_0 : i32, i32
  }
  func.func @transform_11(%arg0: i32) -> (i32, i32) {
    %c0_i32 = arith.constant 0 : i32
    %c0_i32_0 = arith.constant 0 : i32
    %c0_i32_1 = arith.constant 0 : i32
    return %c0_i32, %c0_i32_0 : i32, i32
  }
  func.func @transform_12(%arg0: i32) -> (i32, i32, i32) {
    %c0_i32 = arith.constant 0 : i32
    %c0_i32_0 = arith.constant 0 : i32
    %c0_i32_1 = arith.constant 0 : i32
    return %arg0, %c0_i32, %c0_i32_0 : i32, i32, i32
  }
}

</mosaic_0001>

<llo_original>
// kernel: tpu_custom_call.1
$region0: #{tpu_custom_call.1}
  #allocation0 [shape = 'u32[]', space=smem, size = 0x4, offset = 0x4, fixed_abs, tag = 'smem constant byte address 0x4 - core index']
  #allocation1 [shape = 'u32[144,128]{1,0:T(1,128)}', space=vmem, size = 0x12000, scoped, tag = 'internal scratch']
  %s0 = inlined_call_operand.hbm [shape: f32[2,8,384], index: 0, kind: input, shape index: {}]
  %s1 = inlined_call_operand.hbm [shape: f32[1,384], index: 1, kind: input, shape index: {}]
  %s2 = inlined_call_operand.hbm [shape: f32[1,384], index: 2, kind: input, shape index: {}]
  %s3 = inlined_call_operand.hbm [shape: bf16[384,1152], index: 3, kind: input, shape index: {}]
  %s4 = inlined_call_operand.hbm [shape: bf16[384,384], index: 4, kind: input, shape index: {}]
  %s5 = inlined_call_operand.hbm [shape: f32[1,384], index: 5, kind: input, shape index: {}]
  %s6 = inlined_call_operand.hbm [shape: f32[1,384], index: 6, kind: input, shape index: {}]
  %s7 = inlined_call_operand.hbm [shape: f32[1,384], index: 7, kind: input, shape index: {}]
  %s8 = inlined_call_operand.hbm [shape: bf16[384,1536], index: 8, kind: input, shape index: {}]
  %s9 = inlined_call_operand.hbm [shape: f32[1,1536], index: 9, kind: input, shape index: {}]
  %s10 = inlined_call_operand.hbm [shape: bf16[1536,384], index: 10, kind: input, shape index: {}]
  %s11 = inlined_call_operand.hbm [shape: f32[1,384], index: 11, kind: input, shape index: {}]
  %s12 = inlined_call_operand.hbm [shape: f32[2,8,384], index: 12, kind: output, shape index: {}]
  %s13 = sld [smem:[#allocation0]]
  $region106: #{tpu_custom_call.1} parent=0
    _
  %s15 = ssub.s32 1, %s13
  %s16 = scalar_select 0, %s15, %s13
  $region1: #{tpu_custom_call.1} parent=0
    #allocation2 [shape = 'u8[24576]{0}', space=vmem, size = 0x6000, scoped, tag = 'input window, operand 0, single buffered']
    #allocation3 [shape = 's32[1]{0}', space=sflag, size = 0x4, scoped, tag = 'scoped memory for tpu_custom_call.1']
    #allocation4 [shape = 's32[1]{0}', space=sflag, size = 0x4, scoped, tag = 'scoped memory for tpu_custom_call.1']
    #allocation5 [shape = 'u8[1536]{0}', space=vmem, size = 0x800, scoped, tag = 'input window, operand 1, single buffered']
    #allocation6 [shape = 's32[1]{0}', space=sflag, size = 0x4, scoped, tag = 'scoped memory for tpu_custom_call.1']
    #allocation7 [shape = 'u8[1536]{0}', space=vmem, size = 0x800, scoped, tag = 'input window, operand 2, single buffered']
    #allocation8 [shape = 'u8[884736]{0}', space=vmem, size = 0xd8000, scoped, tag = 'input window, operand 3, single buffered']
    #allocation9 [shape = 's32[1]{0}', space=sflag, size = 0x4, scoped, tag = 'scoped memory for tpu_custom_call.1']
    #allocation10 [shape = 'u8[294912]{0}', space=vmem, size = 0x48000, scoped, tag = 'input window, operand 4, single buffered']
    #allocation11 [shape = 'u8[1536]{0}', space=vmem, size = 0x800, scoped, tag = 'input window, operand 5, single buffered']
    #allocation12 [shape = 's32[1]{0}', space=sflag, size = 0x4, scoped, tag = 'scoped memory for tpu_custom_call.1']
    #allocation13 [shape = 'u8[1536]{0}', space=vmem, size = 0x800, scoped, tag = 'input window, operand 6, single buffered']
    #allocation14 [shape = 'u8[1536]{0}', space=vmem, size = 0x800, scoped, tag = 'input window, operand 7, single buffered']
    #allocation15 [shape = 's32[1]{0}', space=sflag, size = 0x4, scoped, tag = 'scoped memory for tpu_custom_call.1']
    #allocation16 [shape = 'u8[1179648]{0}', space=vmem, size = 0x120000, scoped, tag = 'input window, operand 8, single buffered']
    #allocation17 [shape = 'u8[6144]{0}', space=vmem, size = 0x1800, scoped, tag = 'input window, operand 9, single buffered']
    #allocation18 [shape = 's32[1]{0}', space=sflag, size = 0x4, scoped, tag = 'scoped memory for tpu_custom_call.1']
    #allocation19 [shape = 'u8[1179648]{0}', space=vmem, size = 0x120000, scoped, tag = 'input window, operand 10, single buffered']
    #allocation20 [shape = 'u8[1536]{0}', space=vmem, size = 0x800, scoped, tag = 'input window, operand 11, single buffered']
    #allocation21 [shape = 's32[1]{0}', space=sflag, size = 0x4, scoped, tag = 'scoped memory for tpu_custom_call.1']
    #allocation22 [shape = 'u8[24576]{0}', space=vmem, size = 0x6000, scoped, tag = 'output window, operand 0, single buffered']
    %17 = vsyncpa [#allocation3], 0
    %18 = vsyncpa [#allocation6], 0
    %19 = vsyncpa [#allocation9], 0
    %20 = vsyncpa [#allocation12], 0
    %21 = vsyncpa [#allocation15], 0
    %22 = vsyncpa [#allocation18], 0
    %23 = vsyncpa [#allocation21], 0
    %24 = vsyncpa [#allocation4], 0
    // Predicated region
    $region2: #{tpu_custom_call.1} parent=1 // pred_check
      _
    $region3: #{tpu_custom_call.1} parent=1 // pred_check_branch
      %26 = sbr.rel (0) target = $region5
    $region4: #{tpu_custom_call.1} parent=1 // pred_region
      %s28 = ssub.s32 768, 768
      %29 = vsyncadd [#allocation3], %s28
      %s30 = sshll.u32 [#allocation2], 4
      %s31 = int_to_ptr.vmem [resolvable:$true] %s30
      %36 = dma.hbm_to_vmem [thread:$0]  %s0, 768, %s31, [#allocation3], 384, 384, 24
    $region5: #{tpu_custom_call.1} parent=1 // pred_fallthru
      _
    // Predicated region
    $region6: #{tpu_custom_call.1} parent=1 // pred_check
      _
    $region7: #{tpu_custom_call.1} parent=1 // pred_check_branch
      %38 = sbr.rel (0) target = $region9
    $region8: #{tpu_custom_call.1} parent=1 // pred_region
      %s40 = ssub.s32 48, 48
      %41 = vsyncadd [#allocation6], %s40
      %s43 = sshll.u32 [#allocation5], 4
      %s44 = int_to_ptr.vmem [resolvable:$true] %s43
      %46 = dma.hbm_to_vmem [thread:$0]  %s1, 48, %s44, [#allocation6]
    $region9: #{tpu_custom_call.1} parent=1 // pred_fallthru
      _
    // Predicated region
    $region10: #{tpu_custom_call.1} parent=1 // pred_check
      _
    $region11: #{tpu_custom_call.1} parent=1 // pred_check_branch
      %48 = sbr.rel (0) target = $region13
    $region12: #{tpu_custom_call.1} parent=1 // pred_region
      %s50 = ssub.s32 48, 48
      %51 = vsyncadd [#allocation6], %s50
      %s53 = sshll.u32 [#allocation7], 4
      %s54 = int_to_ptr.vmem [resolvable:$true] %s53
      %56 = dma.hbm_to_vmem [thread:$0]  %s2, 48, %s54, [#allocation6]
    $region13: #{tpu_custom_call.1} parent=1 // pred_fallthru
      _
    // Predicated region
    $region14: #{tpu_custom_call.1} parent=1 // pred_check
      _
    $region15: #{tpu_custom_call.1} parent=1 // pred_check_branch
      %58 = sbr.rel (0) target = $region17
    $region16: #{tpu_custom_call.1} parent=1 // pred_region
      %s60 = ssub.s32 27648, 27648
      %61 = vsyncadd [#allocation9], %s60
      %s62 = sshll.u32 [#allocation8], 4
      %s63 = int_to_ptr.vmem [resolvable:$true] %s62
      %68 = dma.hbm_to_vmem [thread:$0]  %s3, 27648, %s63, [#allocation9], 576, 576, 36
    $region17: #{tpu_custom_call.1} parent=1 // pred_fallthru
      _
    // Predicated region
    $region18: #{tpu_custom_call.1} parent=1 // pred_check
      _
    $region19: #{tpu_custom_call.1} parent=1 // pred_check_branch
      %70 = sbr.rel (0) target = $region21
    $region20: #{tpu_custom_call.1} parent=1 // pred_region
      %s72 = ssub.s32 9216, 9216
      %73 = vsyncadd [#allocation9], %s72
      %s74 = sshll.u32 [#allocation10], 4
      %s75 = int_to_ptr.vmem [resolvable:$true] %s74
      %80 = dma.hbm_to_vmem [thread:$0]  %s4, 9216, %s75, [#allocation9], 192, 192, 12
    $region21: #{tpu_custom_call.1} parent=1 // pred_fallthru
      _
    // Predicated region
    $region22: #{tpu_custom_call.1} parent=1 // pred_check
      _
    $region23: #{tpu_custom_call.1} parent=1 // pred_check_branch
      %82 = sbr.rel (0) target = $region25
    $region24: #{tpu_custom_call.1} parent=1 // pred_region
      %s84 = ssub.s32 48, 48
      %85 = vsyncadd [#allocation12], %s84
      %s87 = sshll.u32 [#allocation11], 4
      %s88 = int_to_ptr.vmem [resolvable:$true] %s87
      %90 = dma.hbm_to_vmem [thread:$0]  %s5, 48, %s88, [#allocation12]
    $region25: #{tpu_custom_call.1} parent=1 // pred_fallthru
      _
    // Predicated region
    $region26: #{tpu_custom_call.1} parent=1 // pred_check
      _
    $region27: #{tpu_custom_call.1} parent=1 // pred_check_branch
      %92 = sbr.rel (0) target = $region29
    $region28: #{tpu_custom_call.1} parent=1 // pred_region
      %s94 = ssub.s32 48, 48
      %95 = vsyncadd [#allocation12], %s94
      %s97 = sshll.u32 [#allocation13], 4
      %s98 = int_to_ptr.vmem [resolvable:$true] %s97
      %100 = dma.hbm_to_vmem [thread:$0]  %s6, 48, %s98, [#allocation12]
    $region29: #{tpu_custom_call.1} parent=1 // pred_fallthru
      _
    // Predicated region
    $region30: #{tpu_custom_call.1} parent=1 // pred_check
      _
    $region31: #{tpu_custom_call.1} parent=1 // pred_check_branch
      %102 = sbr.rel (0) target = $region33
    $region32: #{tpu_custom_call.1} parent=1 // pred_region
      %s104 = ssub.s32 48, 48
      %105 = vsyncadd [#allocation15], %s104
      %s107 = sshll.u32 [#allocation14], 4
      %s108 = int_to_ptr.vmem [resolvable:$true] %s107
      %110 = dma.hbm_to_vmem [thread:$0]  %s7, 48, %s108, [#allocation15]
    $region33: #{tpu_custom_call.1} parent=1 // pred_fallthru
      _
    // Predicated region
    $region34: #{tpu_custom_call.1} parent=1 // pred_check
      _
    $region35: #{tpu_custom_call.1} parent=1 // pred_check_branch
      %112 = sbr.rel (0) target = $region37
    $region36: #{tpu_custom_call.1} parent=1 // pred_region
      %s114 = ssub.s32 36864, 36864
      %115 = vsyncadd [#allocation15], %s114
      %s116 = sshll.u32 [#allocation16], 4
      %s117 = int_to_ptr.vmem [resolvable:$true] %s116
      %122 = dma.hbm_to_vmem [thread:$0]  %s8, 36864, %s117, [#allocation15], 768, 768, 48
    $region37: #{tpu_custom_call.1} parent=1 // pred_fallthru
      _
    // Predicated region
    $region38: #{tpu_custom_call.1} parent=1 // pred_check
      _
    $region39: #{tpu_custom_call.1} parent=1 // pred_check_branch
      %124 = sbr.rel (0) target = $region41
    $region40: #{tpu_custom_call.1} parent=1 // pred_region
      %s126 = ssub.s32 192, 192
      %127 = vsyncadd [#allocation18], %s126
      %s129 = sshll.u32 [#allocation17], 4
      %s130 = int_to_ptr.vmem [resolvable:$true] %s129
      %132 = dma.hbm_to_vmem [thread:$0]  %s9, 192, %s130, [#allocation18]
    $region41: #{tpu_custom_call.1} parent=1 // pred_fallthru
      _
    // Predicated region
    $region42: #{tpu_custom_call.1} parent=1 // pred_check
      _
    $region43: #{tpu_custom_call.1} parent=1 // pred_check_branch
      %134 = sbr.rel (0) target = $region45
    $region44: #{tpu_custom_call.1} parent=1 // pred_region
      %s136 = ssub.s32 36864, 36864
      %137 = vsyncadd [#allocation18], %s136
      %s138 = sshll.u32 [#allocation19], 4
      %s139 = int_to_ptr.vmem [resolvable:$true] %s138
      %144 = dma.hbm_to_vmem [thread:$0]  %s10, 36864, %s139, [#allocation18], 192, 192, 12
    $region45: #{tpu_custom_call.1} parent=1 // pred_fallthru
      _
    // Predicated region
    $region46: #{tpu_custom_call.1} parent=1 // pred_check
      _
    $region47: #{tpu_custom_call.1} parent=1 // pred_check_branch
      %146 = sbr.rel (0) target = $region49
    $region48: #{tpu_custom_call.1} parent=1 // pred_region
      %s148 = ssub.s32 48, 48
      %149 = vsyncadd [#allocation21], %s148
      %s151 = sshll.u32 [#allocation20], 4
      %s152 = int_to_ptr.vmem [resolvable:$true] %s151
      %154 = dma.hbm_to_vmem [thread:$0]  %s11, 48, %s152, [#allocation21]
    $region49: #{tpu_custom_call.1} parent=1 // pred_fallthru
      _
    // Predicated region
    $region50: #{tpu_custom_call.1} parent=1 // pred_check
      _
    $region51: #{tpu_custom_call.1} parent=1 // pred_check_branch
      %156 = sbr.rel (0) target = $region53
    $region52: #{tpu_custom_call.1} parent=1 // pred_region
      %157 = dma.done [#allocation3], 768
    $region53: #{tpu_custom_call.1} parent=1 // pred_fallthru
      _
    // Predicated region
    $region54: #{tpu_custom_call.1} parent=1 // pred_check
      _
    $region55: #{tpu_custom_call.1} parent=1 // pred_check_branch
      %159 = sbr.rel (0) target = $region57
    $region56: #{tpu_custom_call.1} parent=1 // pred_region
      %160 = dma.done [#allocation6], 48
    $region57: #{tpu_custom_call.1} parent=1 // pred_fallthru
      _
    // Predicated region
    $region58: #{tpu_custom_call.1} parent=1 // pred_check
      _
    $region59: #{tpu_custom_call.1} parent=1 // pred_check_branch
      %162 = sbr.rel (0) target = $region61
    $region60: #{tpu_custom_call.1} parent=1 // pred_region
      %163 = dma.done [#allocation6], 48
    $region61: #{tpu_custom_call.1} parent=1 // pred_fallthru
      _
    // Predicated region
    $region62: #{tpu_custom_call.1} parent=1 // pred_check
      _
    $region63: #{tpu_custom_call.1} parent=1 // pred_check_branch
      %165 = sbr.rel (0) target = $region65
    $region64: #{tpu_custom_call.1} parent=1 // pred_region
      %166 = dma.done [#allocation9], 27648
    $region65: #{tpu_custom_call.1} parent=1 // pred_fallthru
      _
    // Predicated region
    $region66: #{tpu_custom_call.1} parent=1 // pred_check
      _
    $region67: #{tpu_custom_call.1} parent=1 // pred_check_branch
      %168 = sbr.rel (0) target = $region69
    $region68: #{tpu_custom_call.1} parent=1 // pred_region
      %169 = dma.done [#allocation9], 9216
    $region69: #{tpu_custom_call.1} parent=1 // pred_fallthru
      _
    // Predicated region
    $region70: #{tpu_custom_call.1} parent=1 // pred_check
      _
    $region71: #{tpu_custom_call.1} parent=1 // pred_check_branch
      %171 = sbr.rel (0) target = $region73
    $region72: #{tpu_custom_call.1} parent=1 // pred_region
      %172 = dma.done [#allocation12], 48
    $region73: #{tpu_custom_call.1} parent=1 // pred_fallthru
      _
    // Predicated region
    $region74: #{tpu_custom_call.1} parent=1 // pred_check
      _
    $region75: #{tpu_custom_call.1} parent=1 // pred_check_branch
      %174 = sbr.rel (0) target = $region77
    $region76: #{tpu_custom_call.1} parent=1 // pred_region
      %175 = dma.done [#allocation12], 48
    $region77: #{tpu_custom_call.1} parent=1 // pred_fallthru
      _
    // Predicated region
    $region78: #{tpu_custom_call.1} parent=1 // pred_check
      _
    $region79: #{tpu_custom_call.1} parent=1 // pred_check_branch
      %177 = sbr.rel (0) target = $region81
    $region80: #{tpu_custom_call.1} parent=1 // pred_region
      %178 = dma.done [#allocation15], 48
    $region81: #{tpu_custom_call.1} parent=1 // pred_fallthru
      _
    // Predicated region
    $region82: #{tpu_custom_call.1} parent=1 // pred_check
      _
    $region83: #{tpu_custom_call.1} parent=1 // pred_check_branch
      %180 = sbr.rel (0) target = $region85
    $region84: #{tpu_custom_call.1} parent=1 // pred_region
      %181 = dma.done [#allocation15], 36864
    $region85: #{tpu_custom_call.1} parent=1 // pred_fallthru
      _
    // Predicated region
    $region86: #{tpu_custom_call.1} parent=1 // pred_check
      _
    $region87: #{tpu_custom_call.1} parent=1 // pred_check_branch
      %183 = sbr.rel (0) target = $region89
    $region88: #{tpu_custom_call.1} parent=1 // pred_region
      %184 = dma.done [#allocation18], 192
    $region89: #{tpu_custom_call.1} parent=1 // pred_fallthru
      _
    // Predicated region
    $region90: #{tpu_custom_call.1} parent=1 // pred_check
      _
    $region91: #{tpu_custom_call.1} parent=1 // pred_check_branch
      %186 = sbr.rel (0) target = $region93
    $region92: #{tpu_custom_call.1} parent=1 // pred_region
      %187 = dma.done [#allocation18], 36864
    $region93: #{tpu_custom_call.1} parent=1 // pred_fallthru
      _
    // Predicated region
    $region94: #{tpu_custom_call.1} parent=1 // pred_check
      _
    $region95: #{tpu_custom_call.1} parent=1 // pred_check_branch
      %189 = sbr.rel (0) target = $region97
    $region96: #{tpu_custom_call.1} parent=1 // pred_region
      %190 = dma.done [#allocation21], 48
    $region97: #{tpu_custom_call.1} parent=1 // pred_fallthru
      _
    %v192 = vld [vmem:[#allocation2] sm:$0xff]
    %v193 = vld [vmem:[#allocation2 + $0x8] sm:$0xff]
    %v194 = vld [vmem:[#allocation2 + $0x10] sm:$0xff]
    %v195 = vld [vmem:[#allocation2 + $0x18] sm:$0xff]
    %v196 = vld [vmem:[#allocation2 + $0x20] sm:$0xff]
    %v197 = vld [vmem:[#allocation2 + $0x28] sm:$0xff]
    %v198 = vld [vmem:[#allocation5] sm:$0x7]
    %v199 = vld [vmem:[#allocation7] sm:$0x7]
    %v200 = vadd.f32 %v192, %v193
    %v201 = vadd.f32 %v200, %v194
    %202 = vadd.xlane.f32.xlu0 %v201
    %v203 = vpop.xlane.xlu0 %202
    %v204 = vadd.f32 %v195, %v196
    %v205 = vadd.f32 %v204, %v197
    %206 = vadd.xlane.f32.xlu0 %v205
    %v207 = vpop.xlane.xlu0 %206
    %v208 = vrcp.pop 384.0
    %v209 = vmul.f32 %v203, %v208
    %v210 = vmul.f32 %v207, %v208
    %v211 = vsub.f32 %v192, %v209
    %v212 = vsub.f32 %v193, %v209
    %v213 = vsub.f32 %v194, %v209
    %v214 = vsub.f32 %v195, %v210
    %v215 = vsub.f32 %v196, %v210
    %v216 = vsub.f32 %v197, %v210
    %v217 = vmul.f32 %v211, %v211
    %v218 = vmul.f32 %v212, %v212
    %v219 = vmul.f32 %v213, %v213
    %v220 = vmul.f32 %v214, %v214
    %v221 = vmul.f32 %v215, %v215
    %v222 = vmul.f32 %v216, %v216
    %v223 = vadd.f32 %v217, %v218
    %v224 = vadd.f32 %v223, %v219
    %225 = vadd.xlane.f32.xlu0 %v224
    %v226 = vpop.xlane.xlu0 %225
    %v227 = vadd.f32 %v220, %v221
    %v228 = vadd.f32 %v227, %v222
    %229 = vadd.xlane.f32.xlu0 %v228
    %v230 = vpop.xlane.xlu0 %229
    %v231 = vmul.f32 %v226, %v208
    %v232 = vmul.f32 %v230, %v208
    %v233 = vadd.f32 %v231, 1e-05
    %v234 = vadd.f32 %v232, 1e-05
    %v235 = vrsqrt.pop %v233
    %v236 = vrsqrt.pop %v234
    %v237 = vmul.f32 %v211, %v235
    %v238 = vmul.f32 %v212, %v235
    %v239 = vmul.f32 %v213, %v235
    %v240 = vmul.f32 %v214, %v236
    %v241 = vmul.f32 %v215, %v236
    %v242 = vmul.f32 %v216, %v236
    %v244 = vlaneseq
    %v245 = vshrl.u32 %v244, 7
    %v246 = vsub.s32 0, %v245
    %v247 = vrot.slane %v198, %v246
    %v248 = vlaneseq
    %v249 = vshrl.u32 %v248, 7
    %v250 = vsub.s32 1, %v249
    %v251 = vrot.slane %v198, %v250
    %v252 = vlaneseq
    %v253 = vshrl.u32 %v252, 7
    %v254 = vsub.s32 2, %v253
    %v255 = vrot.slane %v198, %v254
    %v259 = vmul.f32 %v237, %v247
    %v260 = vmul.f32 %v238, %v251
    %v261 = vmul.f32 %v239, %v255
    %v262 = vmul.f32 %v240, %v247
    %v263 = vmul.f32 %v241, %v251
    %v264 = vmul.f32 %v242, %v255
    %v266 = vlaneseq
    %v267 = vshrl.u32 %v266, 7
    %v268 = vsub.s32 0, %v267
    %v269 = vrot.slane %v199, %v268
    %v270 = vlaneseq
    %v271 = vshrl.u32 %v270, 7
    %v272 = vsub.s32 1, %v271
    %v273 = vrot.slane %v199, %v272
    %v274 = vlaneseq
    %v275 = vshrl.u32 %v274, 7
    %v276 = vsub.s32 2, %v275
    %v277 = vrot.slane %v199, %v276
    %v281 = vadd.f32 %v259, %v269
    %v282 = vadd.f32 %v260, %v273
    %v283 = vadd.f32 %v261, %v277
    %v284 = vadd.f32 %v262, %v269
    %v285 = vadd.f32 %v263, %v273
    %v286 = vadd.f32 %v264, %v277
    %v287 = vpack.c.bf16 %v284, %v281
    %v288 = vpack.c.bf16 %v285, %v282
    %v289 = vpack.c.bf16 %v286, %v283
    %v290 = vld [vmem:[#allocation8] sm:$0xff]
    %v291 = vld [vmem:[#allocation8 + $0x8] sm:$0xff]
    %v292 = vld [vmem:[#allocation8 + $0x10] sm:$0xff]
    %v293 = vld [vmem:[#allocation8 + $0x18] sm:$0xff]
    %v294 = vld [vmem:[#allocation8 + $0x20] sm:$0xf]
    %v295 = vld [vmem:[#allocation8 + $0x24] sm:$0xff]
    %v296 = vld [vmem:[#allocation8 + $0x2c] sm:$0xff]
    %v297 = vld [vmem:[#allocation8 + $0x34] sm:$0xff]
    %v298 = vld [vmem:[#allocation8 + $0x3c] sm:$0xff]
    %v299 = vld [vmem:[#allocation8 + $0x44] sm:$0xf]
    %v300 = vld [vmem:[#allocation8 + $0x48] sm:$0xff]
    %v301 = vld [vmem:[#allocation8 + $0x50] sm:$0xff]
    %v302 = vld [vmem:[#allocation8 + $0x58] sm:$0xff]
    %v303 = vld [vmem:[#allocation8 + $0x60] sm:$0xff]
    %v304 = vld [vmem:[#allocation8 + $0x68] sm:$0xf]
    %v305 = vld [vmem:[#allocation8 + $0x6c] sm:$0xff]
    %v306 = vld [vmem:[#allocation8 + $0x74] sm:$0xff]
    %v307 = vld [vmem:[#allocation8 + $0x7c] sm:$0xff]
    %v308 = vld [vmem:[#allocation8 + $0x84] sm:$0xff]
    %v309 = vld [vmem:[#allocation8 + $0x8c] sm:$0xf]
    %v310 = vld [vmem:[#allocation8 + $0x90] sm:$0xff]
    %v311 = vld [vmem:[#allocation8 + $0x98] sm:$0xff]
    %v312 = vld [vmem:[#allocation8 + $0xa0] sm:$0xff]
    %v313 = vld [vmem:[#allocation8 + $0xa8] sm:$0xff]
    %v314 = vld [vmem:[#allocation8 + $0xb0] sm:$0xf]
    %v315 = vld [vmem:[#allocation8 + $0xb4] sm:$0xff]
    %v316 = vld [vmem:[#allocation8 + $0xbc] sm:$0xff]
    %v317 = vld [vmem:[#allocation8 + $0xc4] sm:$0xff]
    %v318 = vld [vmem:[#allocation8 + $0xcc] sm:$0xff]
    %v319 = vld [vmem:[#allocation8 + $0xd4] sm:$0xf]
    %v320 = vld [vmem:[#allocation8 + $0xd8] sm:$0xff]
    %v321 = vld [vmem:[#allocation8 + $0xe0] sm:$0xff]
    %v322 = vld [vmem:[#allocation8 + $0xe8] sm:$0xff]
    %v323 = vld [vmem:[#allocation8 + $0xf0] sm:$0xff]
    %v324 = vld [vmem:[#allocation8 + $0xf8] sm:$0xf]
    %v325 = vld [vmem:[#allocation8 + $0xfc] sm:$0xff]
    %v326 = vld [vmem:[#allocation8 + $0x104] sm:$0xff]
    %v327 = vld [vmem:[#allocation8 + $0x10c] sm:$0xff]
    %v328 = vld [vmem:[#allocation8 + $0x114] sm:$0xff]
    %v329 = vld [vmem:[#allocation8 + $0x11c] sm:$0xf]
    %v330 = vld [vmem:[#allocation8 + $0x120] sm:$0xff]
    %v331 = vld [vmem:[#allocation8 + $0x128] sm:$0xff]
    %v332 = vld [vmem:[#allocation8 + $0x130] sm:$0xff]
    %v333 = vld [vmem:[#allocation8 + $0x138] sm:$0xff]
    %v334 = vld [vmem:[#allocation8 + $0x140] sm:$0xf]
    %v335 = vld [vmem:[#allocation8 + $0x144] sm:$0xff]
    %v336 = vld [vmem:[#allocation8 + $0x14c] sm:$0xff]
    %v337 = vld [vmem:[#allocation8 + $0x154] sm:$0xff]
    %v338 = vld [vmem:[#allocation8 + $0x15c] sm:$0xff]
    %v339 = vld [vmem:[#allocation8 + $0x164] sm:$0xf]
    %v340 = vld [vmem:[#allocation8 + $0x168] sm:$0xff]
    %v341 = vld [vmem:[#allocation8 + $0x170] sm:$0xff]
    %v342 = vld [vmem:[#allocation8 + $0x178] sm:$0xff]
    %v343 = vld [vmem:[#allocation8 + $0x180] sm:$0xff]
    %v344 = vld [vmem:[#allocation8 + $0x188] sm:$0xf]
    %v345 = vld [vmem:[#allocation8 + $0x18c] sm:$0xff]
    %v346 = vld [vmem:[#allocation8 + $0x194] sm:$0xff]
    %v347 = vld [vmem:[#allocation8 + $0x19c] sm:$0xff]
    %v348 = vld [vmem:[#allocation8 + $0x1a4] sm:$0xff]
    %v349 = vld [vmem:[#allocation8 + $0x1ac] sm:$0xf]
    %v350 = vld [vmem:[#allocation8 + $0x1b0] sm:$0xff]
    %v351 = vld [vmem:[#allocation8 + $0x1b8] sm:$0xff]
    %v352 = vld [vmem:[#allocation8 + $0x1c0] sm:$0xff]
    %v353 = vld [vmem:[#allocation8 + $0x1c8] sm:$0xff]
    %v354 = vld [vmem:[#allocation8 + $0x1d0] sm:$0xf]
    %v355 = vld [vmem:[#allocation8 + $0x1d4] sm:$0xff]
    %v356 = vld [vmem:[#allocation8 + $0x1dc] sm:$0xff]
    %v357 = vld [vmem:[#allocation8 + $0x1e4] sm:$0xff]
    %v358 = vld [vmem:[#allocation8 + $0x1ec] sm:$0xff]
    %v359 = vld [vmem:[#allocation8 + $0x1f4] sm:$0xf]
    %v360 = vld [vmem:[#allocation8 + $0x1f8] sm:$0xff]
    %v361 = vld [vmem:[#allocation8 + $0x200] sm:$0xff]
    %v362 = vld [vmem:[#allocation8 + $0x208] sm:$0xff]
    %v363 = vld [vmem:[#allocation8 + $0x210] sm:$0xff]
    %v364 = vld [vmem:[#allocation8 + $0x218] sm:$0xf]
    %v365 = vld [vmem:[#allocation8 + $0x21c] sm:$0xff]
    %v366 = vld [vmem:[#allocation8 + $0x224] sm:$0xff]
    %v367 = vld [vmem:[#allocation8 + $0x22c] sm:$0xff]
    %v368 = vld [vmem:[#allocation8 + $0x234] sm:$0xff]
    %v369 = vld [vmem:[#allocation8 + $0x23c] sm:$0xf]
    %v370 = vld [vmem:[#allocation8 + $0x240] sm:$0xff]
    %v371 = vld [vmem:[#allocation8 + $0x248] sm:$0xff]
    %v372 = vld [vmem:[#allocation8 + $0x250] sm:$0xff]
    %v373 = vld [vmem:[#allocation8 + $0x258] sm:$0xff]
    %v374 = vld [vmem:[#allocation8 + $0x260] sm:$0xf]
    %v375 = vld [vmem:[#allocation8 + $0x264] sm:$0xff]
    %v376 = vld [vmem:[#allocation8 + $0x26c] sm:$0xff]
    %v377 = vld [vmem:[#allocation8 + $0x274] sm:$0xff]
    %v378 = vld [vmem:[#allocation8 + $0x27c] sm:$0xff]
    %v379 = vld [vmem:[#allocation8 + $0x284] sm:$0xf]
    %v380 = vld [vmem:[#allocation8 + $0x288] sm:$0xff]
    %v381 = vld [vmem:[#allocation8 + $0x290] sm:$0xff]
    %v382 = vld [vmem:[#allocation8 + $0x298] sm:$0xff]
    %v383 = vld [vmem:[#allocation8 + $0x2a0] sm:$0xff]
    %v384 = vld [vmem:[#allocation8 + $0x2a8] sm:$0xf]
    %v385 = vld [vmem:[#allocation8 + $0x2ac] sm:$0xff]
    %v386 = vld [vmem:[#allocation8 + $0x2b4] sm:$0xff]
    %v387 = vld [vmem:[#allocation8 + $0x2bc] sm:$0xff]
    %v388 = vld [vmem:[#allocation8 + $0x2c4] sm:$0xff]
    %v389 = vld [vmem:[#allocation8 + $0x2cc] sm:$0xf]
    %v390 = vld [vmem:[#allocation8 + $0x2d0] sm:$0xff]
    %v391 = vld [vmem:[#allocation8 + $0x2d8] sm:$0xff]
    %v392 = vld [vmem:[#allocation8 + $0x2e0] sm:$0xff]
    %v393 = vld [vmem:[#allocation8 + $0x2e8] sm:$0xff]
    %v394 = vld [vmem:[#allocation8 + $0x2f0] sm:$0xf]
    %v395 = vld [vmem:[#allocation8 + $0x2f4] sm:$0xff]
    %v396 = vld [vmem:[#allocation8 + $0x2fc] sm:$0xff]
    %v397 = vld [vmem:[#allocation8 + $0x304] sm:$0xff]
    %v398 = vld [vmem:[#allocation8 + $0x30c] sm:$0xff]
    %v399 = vld [vmem:[#allocation8 + $0x314] sm:$0xf]
    %v400 = vld [vmem:[#allocation8 + $0x318] sm:$0xff]
    %v401 = vld [vmem:[#allocation8 + $0x320] sm:$0xff]
    %v402 = vld [vmem:[#allocation8 + $0x328] sm:$0xff]
    %v403 = vld [vmem:[#allocation8 + $0x330] sm:$0xff]
    %v404 = vld [vmem:[#allocation8 + $0x338] sm:$0xf]
    %v405 = vld [vmem:[#allocation8 + $0x33c] sm:$0xff]
    %v406 = vld [vmem:[#allocation8 + $0x344] sm:$0xff]
    %v407 = vld [vmem:[#allocation8 + $0x34c] sm:$0xff]
    %v408 = vld [vmem:[#allocation8 + $0x354] sm:$0xff]
    %v409 = vld [vmem:[#allocation8 + $0x35c] sm:$0xf]
    %v410 = vld [vmem:[#allocation8 + $0x360] sm:$0xff]
    %v411 = vld [vmem:[#allocation8 + $0x368] sm:$0xff]
    %v412 = vld [vmem:[#allocation8 + $0x370] sm:$0xff]
    %v413 = vld [vmem:[#allocation8 + $0x378] sm:$0xff]
    %v414 = vld [vmem:[#allocation8 + $0x380] sm:$0xf]
    %v415 = vld [vmem:[#allocation8 + $0x384] sm:$0xff]
    %v416 = vld [vmem:[#allocation8 + $0x38c] sm:$0xff]
    %v417 = vld [vmem:[#allocation8 + $0x394] sm:$0xff]
    %v418 = vld [vmem:[#allocation8 + $0x39c] sm:$0xff]
    %v419 = vld [vmem:[#allocation8 + $0x3a4] sm:$0xf]
    %v420 = vld [vmem:[#allocation8 + $0x3a8] sm:$0xff]
    %v421 = vld [vmem:[#allocation8 + $0x3b0] sm:$0xff]
    %v422 = vld [vmem:[#allocation8 + $0x3b8] sm:$0xff]
    %v423 = vld [vmem:[#allocation8 + $0x3c0] sm:$0xff]
    %v424 = vld [vmem:[#allocation8 + $0x3c8] sm:$0xf]
    %v425 = vld [vmem:[#allocation8 + $0x3cc] sm:$0xff]
    %v426 = vld [vmem:[#allocation8 + $0x3d4] sm:$0xff]
    %v427 = vld [vmem:[#allocation8 + $0x3dc] sm:$0xff]
    %v428 = vld [vmem:[#allocation8 + $0x3e4] sm:$0xff]
    %v429 = vld [vmem:[#allocation8 + $0x3ec] sm:$0xf]
    %v430 = vld [vmem:[#allocation8 + $0x3f0] sm:$0xff]
    %v431 = vld [vmem:[#allocation8 + $0x3f8] sm:$0xff]
    %v432 = vld [vmem:[#allocation8 + $0x400] sm:$0xff]
    %v433 = vld [vmem:[#allocation8 + $0x408] sm:$0xff]
    %v434 = vld [vmem:[#allocation8 + $0x410] sm:$0xf]
    %v435 = vld [vmem:[#allocation8 + $0x414] sm:$0xff]
    %v436 = vld [vmem:[#allocation8 + $0x41c] sm:$0xff]
    %v437 = vld [vmem:[#allocation8 + $0x424] sm:$0xff]
    %v438 = vld [vmem:[#allocation8 + $0x42c] sm:$0xff]
    %v439 = vld [vmem:[#allocation8 + $0x434] sm:$0xf]
    %v440 = vld [vmem:[#allocation8 + $0x438] sm:$0xff]
    %v441 = vld [vmem:[#allocation8 + $0x440] sm:$0xff]
    %v442 = vld [vmem:[#allocation8 + $0x448] sm:$0xff]
    %v443 = vld [vmem:[#allocation8 + $0x450] sm:$0xff]
    %v444 = vld [vmem:[#allocation8 + $0x458] sm:$0xf]
    %v445 = vld [vmem:[#allocation8 + $0x45c] sm:$0xff]
    %v446 = vld [vmem:[#allocation8 + $0x464] sm:$0xff]
    %v447 = vld [vmem:[#allocation8 + $0x46c] sm:$0xff]
    %v448 = vld [vmem:[#allocation8 + $0x474] sm:$0xff]
    %v449 = vld [vmem:[#allocation8 + $0x47c] sm:$0xf]
    %v450 = vld [vmem:[#allocation8 + $0x480] sm:$0xff]
    %v451 = vld [vmem:[#allocation8 + $0x488] sm:$0xff]
    %v452 = vld [vmem:[#allocation8 + $0x490] sm:$0xff]
    %v453 = vld [vmem:[#allocation8 + $0x498] sm:$0xff]
    %v454 = vld [vmem:[#allocation8 + $0x4a0] sm:$0xf]
    %v455 = vld [vmem:[#allocation8 + $0x4a4] sm:$0xff]
    %v456 = vld [vmem:[#allocation8 + $0x4ac] sm:$0xff]
    %v457 = vld [vmem:[#allocation8 + $0x4b4] sm:$0xff]
    %v458 = vld [vmem:[#allocation8 + $0x4bc] sm:$0xff]
    %v459 = vld [vmem:[#allocation8 + $0x4c4] sm:$0xf]
    %v460 = vld [vmem:[#allocation8 + $0x4c8] sm:$0xff]
    %v461 = vld [vmem:[#allocation8 + $0x4d0] sm:$0xff]
    %v462 = vld [vmem:[#allocation8 + $0x4d8] sm:$0xff]
    %v463 = vld [vmem:[#allocation8 + $0x4e0] sm:$0xff]
    %v464 = vld [vmem:[#allocation8 + $0x4e8] sm:$0xf]
    %v465 = vld [vmem:[#allocation8 + $0x4ec] sm:$0xff]
    %v466 = vld [vmem:[#allocation8 + $0x4f4] sm:$0xff]
    %v467 = vld [vmem:[#allocation8 + $0x4fc] sm:$0xff]
    %v468 = vld [vmem:[#allocation8 + $0x504] sm:$0xff]
    %v469 = vld [vmem:[#allocation8 + $0x50c] sm:$0xf]
    %v470 = vld [vmem:[#allocation8 + $0x510] sm:$0xff]
    %v471 = vld [vmem:[#allocation8 + $0x518] sm:$0xff]
    %v472 = vld [vmem:[#allocation8 + $0x520] sm:$0xff]
    %v473 = vld [vmem:[#allocation8 + $0x528] sm:$0xff]
    %v474 = vld [vmem:[#allocation8 + $0x530] sm:$0xf]
    %v475 = vld [vmem:[#allocation8 + $0x534] sm:$0xff]
    %v476 = vld [vmem:[#allocation8 + $0x53c] sm:$0xff]
    %v477 = vld [vmem:[#allocation8 + $0x544] sm:$0xff]
    %v478 = vld [vmem:[#allocation8 + $0x54c] sm:$0xff]
    %v479 = vld [vmem:[#allocation8 + $0x554] sm:$0xf]
    %v480 = vld [vmem:[#allocation8 + $0x558] sm:$0xff]
    %v481 = vld [vmem:[#allocation8 + $0x560] sm:$0xff]
    %v482 = vld [vmem:[#allocation8 + $0x568] sm:$0xff]
    %v483 = vld [vmem:[#allocation8 + $0x570] sm:$0xff]
    %v484 = vld [vmem:[#allocation8 + $0x578] sm:$0xf]
    %v485 = vld [vmem:[#allocation8 + $0x57c] sm:$0xff]
    %v486 = vld [vmem:[#allocation8 + $0x584] sm:$0xff]
    %v487 = vld [vmem:[#allocation8 + $0x58c] sm:$0xff]
    %v488 = vld [vmem:[#allocation8 + $0x594] sm:$0xff]
    %v489 = vld [vmem:[#allocation8 + $0x59c] sm:$0xf]
    %v490 = vld [vmem:[#allocation8 + $0x5a0] sm:$0xff]
    %v491 = vld [vmem:[#allocation8 + $0x5a8] sm:$0xff]
    %v492 = vld [vmem:[#allocation8 + $0x5b0] sm:$0xff]
    %v493 = vld [vmem:[#allocation8 + $0x5b8] sm:$0xff]
    %v494 = vld [vmem:[#allocation8 + $0x5c0] sm:$0xf]
    %v495 = vld [vmem:[#allocation8 + $0x5c4] sm:$0xff]
    %v496 = vld [vmem:[#allocation8 + $0x5cc] sm:$0xff]
    %v497 = vld [vmem:[#allocation8 + $0x5d4] sm:$0xff]
    %v498 = vld [vmem:[#allocation8 + $0x5dc] sm:$0xff]
    %v499 = vld [vmem:[#allocation8 + $0x5e4] sm:$0xf]
    %v500 = vld [vmem:[#allocation8 + $0x5e8] sm:$0xff]
    %v501 = vld [vmem:[#allocation8 + $0x5f0] sm:$0xff]
    %v502 = vld [vmem:[#allocation8 + $0x5f8] sm:$0xff]
    %v503 = vld [vmem:[#allocation8 + $0x600] sm:$0xff]
    %v504 = vld [vmem:[#allocation8 + $0x608] sm:$0xf]
    %v505 = vld [vmem:[#allocation8 + $0x60c] sm:$0xff]
    %v506 = vld [vmem:[#allocation8 + $0x614] sm:$0xff]
    %v507 = vld [vmem:[#allocation8 + $0x61c] sm:$0xff]
    %v508 = vld [vmem:[#allocation8 + $0x624] sm:$0xff]
    %v509 = vld [vmem:[#allocation8 + $0x62c] sm:$0xf]
    %v510 = vld [vmem:[#allocation8 + $0x630] sm:$0xff]
    %v511 = vld [vmem:[#allocation8 + $0x638] sm:$0xff]
    %v512 = vld [vmem:[#allocation8 + $0x640] sm:$0xff]
    %v513 = vld [vmem:[#allocation8 + $0x648] sm:$0xff]
    %v514 = vld [vmem:[#allocation8 + $0x650] sm:$0xf]
    %v515 = vld [vmem:[#allocation8 + $0x654] sm:$0xff]
    %v516 = vld [vmem:[#allocation8 + $0x65c] sm:$0xff]
    %v517 = vld [vmem:[#allocation8 + $0x664] sm:$0xff]
    %v518 = vld [vmem:[#allocation8 + $0x66c] sm:$0xff]
    %v519 = vld [vmem:[#allocation8 + $0x674] sm:$0xf]
    %v520 = vld [vmem:[#allocation8 + $0x678] sm:$0xff]
    %v521 = vld [vmem:[#allocation8 + $0x680] sm:$0xff]
    %v522 = vld [vmem:[#allocation8 + $0x688] sm:$0xff]
    %v523 = vld [vmem:[#allocation8 + $0x690] sm:$0xff]
    %v524 = vld [vmem:[#allocation8 + $0x698] sm:$0xf]
    %v525 = vld [vmem:[#allocation8 + $0x69c] sm:$0xff]
    %v526 = vld [vmem:[#allocation8 + $0x6a4] sm:$0xff]
    %v527 = vld [vmem:[#allocation8 + $0x6ac] sm:$0xff]
    %v528 = vld [vmem:[#allocation8 + $0x6b4] sm:$0xff]
    %v529 = vld [vmem:[#allocation8 + $0x6bc] sm:$0xf]
    %v770 = vunpack.c.l.b16 %v290
    %v771 = vunpack.c.h.b16 %v290
    %v772 = vunpack.c.l.b16 %v291
    %v773 = vunpack.c.h.b16 %v291
    %v774 = vunpack.c.l.b16 %v292
    %v775 = vunpack.c.h.b16 %v292
    %v776 = vunpack.c.l.b16 %v293
    %v777 = vunpack.c.h.b16 %v293
    %v778 = vunpack.c.l.b16 %v294
    %v779 = vunpack.c.l.b16 %v295
    %v780 = vunpack.c.h.b16 %v295
    %v781 = vunpack.c.l.b16 %v296
    %v782 = vunpack.c.h.b16 %v296
    %v783 = vunpack.c.l.b16 %v297
    %v784 = vunpack.c.h.b16 %v297
    %v785 = vunpack.c.l.b16 %v298
    %v786 = vunpack.c.h.b16 %v298
    %v787 = vunpack.c.l.b16 %v299
    %v788 = vunpack.c.l.b16 %v300
    %v789 = vunpack.c.h.b16 %v300
    %v790 = vunpack.c.l.b16 %v301
    %v791 = vunpack.c.h.b16 %v301
    %v792 = vunpack.c.l.b16 %v302
    %v793 = vunpack.c.h.b16 %v302
    %v794 = vunpack.c.l.b16 %v303
    %v795 = vunpack.c.h.b16 %v303
    %v796 = vunpack.c.l.b16 %v304
    %v797 = vunpack.c.l.b16 %v305
    %v798 = vunpack.c.h.b16 %v305
    %v799 = vunpack.c.l.b16 %v306
    %v800 = vunpack.c.h.b16 %v306
    %v801 = vunpack.c.l.b16 %v307
    %v802 = vunpack.c.h.b16 %v307
    %v803 = vunpack.c.l.b16 %v308
    %v804 = vunpack.c.h.b16 %v308
    %v805 = vunpack.c.l.b16 %v309
    %v806 = vunpack.c.l.b16 %v310
    %v807 = vunpack.c.h.b16 %v310
    %v808 = vunpack.c.l.b16 %v311
    %v809 = vunpack.c.h.b16 %v311
    %v810 = vunpack.c.l.b16 %v312
    %v811 = vunpack.c.h.b16 %v312
    %v812 = vunpack.c.l.b16 %v313
    %v813 = vunpack.c.h.b16 %v313
    %v814 = vunpack.c.l.b16 %v314
    %v815 = vunpack.c.l.b16 %v315
    %v816 = vunpack.c.h.b16 %v315
    %v817 = vunpack.c.l.b16 %v316
    %v818 = vunpack.c.h.b16 %v316
    %v819 = vunpack.c.l.b16 %v317
    %v820 = vunpack.c.h.b16 %v317
    %v821 = vunpack.c.l.b16 %v318
    %v822 = vunpack.c.h.b16 %v318
    %v823 = vunpack.c.l.b16 %v319
    %v824 = vunpack.c.l.b16 %v320
    %v825 = vunpack.c.h.b16 %v320
    %v826 = vunpack.c.l.b16 %v321
    %v827 = vunpack.c.h.b16 %v321
    %v828 = vunpack.c.l.b16 %v322
    %v829 = vunpack.c.h.b16 %v322
    %v830 = vunpack.c.l.b16 %v323
    %v831 = vunpack.c.h.b16 %v323
    %v832 = vunpack.c.l.b16 %v324
    %v833 = vunpack.c.l.b16 %v325
    %v834 = vunpack.c.h.b16 %v325
    %v835 = vunpack.c.l.b16 %v326
    %v836 = vunpack.c.h.b16 %v326
    %v837 = vunpack.c.l.b16 %v327
    %v838 = vunpack.c.h.b16 %v327
    %v839 = vunpack.c.l.b16 %v328
    %v840 = vunpack.c.h.b16 %v328
    %v841 = vunpack.c.l.b16 %v329
    %v842 = vunpack.c.l.b16 %v330
    %v843 = vunpack.c.h.b16 %v330
    %v844 = vunpack.c.l.b16 %v331
    %v845 = vunpack.c.h.b16 %v331
    %v846 = vunpack.c.l.b16 %v332
    %v847 = vunpack.c.h.b16 %v332
    %v848 = vunpack.c.l.b16 %v333
    %v849 = vunpack.c.h.b16 %v333
    %v850 = vunpack.c.l.b16 %v334
    %v851 = vunpack.c.l.b16 %v335
    %v852 = vunpack.c.h.b16 %v335
    %v853 = vunpack.c.l.b16 %v336
    %v854 = vunpack.c.h.b16 %v336
    %v855 = vunpack.c.l.b16 %v337
    %v856 = vunpack.c.h.b16 %v337
    %v857 = vunpack.c.l.b16 %v338
    %v858 = vunpack.c.h.b16 %v338
    %v859 = vunpack.c.l.b16 %v339
    %v860 = vunpack.c.l.b16 %v340
    %v861 = vunpack.c.h.b16 %v340
    %v862 = vunpack.c.l.b16 %v341
    %v863 = vunpack.c.h.b16 %v341
    %v864 = vunpack.c.l.b16 %v342
    %v865 = vunpack.c.h.b16 %v342
    %v866 = vunpack.c.l.b16 %v343
    %v867 = vunpack.c.h.b16 %v343
    %v868 = vunpack.c.l.b16 %v344
    %v869 = vunpack.c.l.b16 %v345
    %v870 = vunpack.c.h.b16 %v345
    %v871 = vunpack.c.l.b16 %v346
    %v872 = vunpack.c.h.b16 %v346
    %v873 = vunpack.c.l.b16 %v347
    %v874 = vunpack.c.h.b16 %v347
    %v875 = vunpack.c.l.b16 %v348
    %v876 = vunpack.c.h.b16 %v348
    %v877 = vunpack.c.l.b16 %v349
    %v878 = vunpack.c.l.b16 %v350
    %v879 = vunpack.c.h.b16 %v350
    %v880 = vunpack.c.l.b16 %v351
    %v881 = vunpack.c.h.b16 %v351
    %v882 = vunpack.c.l.b16 %v352
    %v883 = vunpack.c.h.b16 %v352
    %v884 = vunpack.c.l.b16 %v353
    %v885 = vunpack.c.h.b16 %v353
    %v886 = vunpack.c.l.b16 %v354
    %v887 = vunpack.c.l.b16 %v355
    %v888 = vunpack.c.h.b16 %v355
    %v889 = vunpack.c.l.b16 %v356
    %v890 = vunpack.c.h.b16 %v356
    %v891 = vunpack.c.l.b16 %v357
    %v892 = vunpack.c.h.b16 %v357
    %v893 = vunpack.c.l.b16 %v358
    %v894 = vunpack.c.h.b16 %v358
    %v895 = vunpack.c.l.b16 %v359
    %v896 = vunpack.c.l.b16 %v360
    %v897 = vunpack.c.h.b16 %v360
    %v898 = vunpack.c.l.b16 %v361
    %v899 = vunpack.c.h.b16 %v361
    %v900 = vunpack.c.l.b16 %v362
    %v901 = vunpack.c.h.b16 %v362
    %v902 = vunpack.c.l.b16 %v363
    %v903 = vunpack.c.h.b16 %v363
    %v904 = vunpack.c.l.b16 %v364
    %v905 = vunpack.c.l.b16 %v365
    %v906 = vunpack.c.h.b16 %v365
    %v907 = vunpack.c.l.b16 %v366
    %v908 = vunpack.c.h.b16 %v366
    %v909 = vunpack.c.l.b16 %v367
    %v910 = vunpack.c.h.b16 %v367
    %v911 = vunpack.c.l.b16 %v368
    %v912 = vunpack.c.h.b16 %v368
    %v913 = vunpack.c.l.b16 %v369
    %v914 = vunpack.c.l.b16 %v370
    %v915 = vunpack.c.h.b16 %v370
    %v916 = vunpack.c.l.b16 %v371
    %v917 = vunpack.c.h.b16 %v371
    %v918 = vunpack.c.l.b16 %v372
    %v919 = vunpack.c.h.b16 %v372
    %v920 = vunpack.c.l.b16 %v373
    %v921 = vunpack.c.h.b16 %v373
    %v922 = vunpack.c.l.b16 %v374
    %v923 = vunpack.c.l.b16 %v375
    %v924 = vunpack.c.h.b16 %v375
    %v925 = vunpack.c.l.b16 %v376
    %v926 = vunpack.c.h.b16 %v376
    %v927 = vunpack.c.l.b16 %v377
    %v928 = vunpack.c.h.b16 %v377
    %v929 = vunpack.c.l.b16 %v378
    %v930 = vunpack.c.h.b16 %v378
    %v931 = vunpack.c.l.b16 %v379
    %v932 = vunpack.c.l.b16 %v380
    %v933 = vunpack.c.h.b16 %v380
    %v934 = vunpack.c.l.b16 %v381
    %v935 = vunpack.c.h.b16 %v381
    %v936 = vunpack.c.l.b16 %v382
    %v937 = vunpack.c.h.b16 %v382
    %v938 = vunpack.c.l.b16 %v383
    %v939 = vunpack.c.h.b16 %v383
    %v940 = vunpack.c.l.b16 %v384
    %v941 = vunpack.c.l.b16 %v385
    %v942 = vunpack.c.h.b16 %v385
    %v943 = vunpack.c.l.b16 %v386
    %v944 = vunpack.c.h.b16 %v386
    %v945 = vunpack.c.l.b16 %v387
    %v946 = vunpack.c.h.b16 %v387
    %v947 = vunpack.c.l.b16 %v388
    %v948 = vunpack.c.h.b16 %v388
    %v949 = vunpack.c.l.b16 %v389
    %v950 = vunpack.c.l.b16 %v390
    %v951 = vunpack.c.h.b16 %v390
    %v952 = vunpack.c.l.b16 %v391
    %v953 = vunpack.c.h.b16 %v391
    %v954 = vunpack.c.l.b16 %v392
    %v955 = vunpack.c.h.b16 %v392
    %v956 = vunpack.c.l.b16 %v393
    %v957 = vunpack.c.h.b16 %v393
    %v958 = vunpack.c.l.b16 %v394
    %v959 = vunpack.c.l.b16 %v395
    %v960 = vunpack.c.h.b16 %v395
    %v961 = vunpack.c.l.b16 %v396
    %v962 = vunpack.c.h.b16 %v396
    %v963 = vunpack.c.l.b16 %v397
    %v964 = vunpack.c.h.b16 %v397
    %v965 = vunpack.c.l.b16 %v398
    %v966 = vunpack.c.h.b16 %v398
    %v967 = vunpack.c.l.b16 %v399
    %v968 = vunpack.c.l.b16 %v400
    %v969 = vunpack.c.h.b16 %v400
    %v970 = vunpack.c.l.b16 %v401
    %v971 = vunpack.c.h.b16 %v401
    %v972 = vunpack.c.l.b16 %v402
    %v973 = vunpack.c.h.b16 %v402
    %v974 = vunpack.c.l.b16 %v403
    %v975 = vunpack.c.h.b16 %v403
    %v976 = vunpack.c.l.b16 %v404
    %v977 = vunpack.c.l.b16 %v405
    %v978 = vunpack.c.h.b16 %v405
    %v979 = vunpack.c.l.b16 %v406
    %v980 = vunpack.c.h.b16 %v406
    %v981 = vunpack.c.l.b16 %v407
    %v982 = vunpack.c.h.b16 %v407
    %v983 = vunpack.c.l.b16 %v408
    %v984 = vunpack.c.h.b16 %v408
    %v985 = vunpack.c.l.b16 %v409
    %v986 = vunpack.c.l.b16 %v410
    %v987 = vunpack.c.h.b16 %v410
    %v988 = vunpack.c.l.b16 %v411
    %v989 = vunpack.c.h.b16 %v411
    %v990 = vunpack.c.l.b16 %v412
    %v991 = vunpack.c.h.b16 %v412
    %v992 = vunpack.c.l.b16 %v413
    %v993 = vunpack.c.h.b16 %v413
    %v994 = vunpack.c.l.b16 %v414
    %v995 = vunpack.c.l.b16 %v415
    %v996 = vunpack.c.h.b16 %v415
    %v997 = vunpack.c.l.b16 %v416
    %v998 = vunpack.c.h.b16 %v416
    %v999 = vunpack.c.l.b16 %v417
    %v1000 = vunpack.c.h.b16 %v417
    %v1001 = vunpack.c.l.b16 %v418
    %v1002 = vunpack.c.h.b16 %v418
    %v1003 = vunpack.c.l.b16 %v419
    %v1004 = vunpack.c.l.b16 %v420
    %v1005 = vunpack.c.h.b16 %v420
    %v1006 = vunpack.c.l.b16 %v421
    %v1007 = vunpack.c.h.b16 %v421
    %v1008 = vunpack.c.l.b16 %v422
    %v1009 = vunpack.c.h.b16 %v422
    %v1010 = vunpack.c.l.b16 %v423
    %v1011 = vunpack.c.h.b16 %v423
    %v1012 = vunpack.c.l.b16 %v424
    %v1013 = vunpack.c.l.b16 %v425
    %v1014 = vunpack.c.h.b16 %v425
    %v1015 = vunpack.c.l.b16 %v426
    %v1016 = vunpack.c.h.b16 %v426
    %v1017 = vunpack.c.l.b16 %v427
    %v1018 = vunpack.c.h.b16 %v427
    %v1019 = vunpack.c.l.b16 %v428
    %v1020 = vunpack.c.h.b16 %v428
    %v1021 = vunpack.c.l.b16 %v429
    %v1022 = vunpack.c.l.b16 %v430
    %v1023 = vunpack.c.h.b16 %v430
    %v1024 = vunpack.c.l.b16 %v431
    %v1025 = vunpack.c.h.b16 %v431
    %v1026 = vunpack.c.l.b16 %v432
    %v1027 = vunpack.c.h.b16 %v432
    %v1028 = vunpack.c.l.b16 %v433
    %v1029 = vunpack.c.h.b16 %v433
    %v1030 = vunpack.c.l.b16 %v434
    %v1031 = vunpack.c.l.b16 %v435
    %v1032 = vunpack.c.h.b16 %v435
    %v1033 = vunpack.c.l.b16 %v436
    %v1034 = vunpack.c.h.b16 %v436
    %v1035 = vunpack.c.l.b16 %v437
    %v1036 = vunpack.c.h.b16 %v437
    %v1037 = vunpack.c.l.b16 %v438
    %v1038 = vunpack.c.h.b16 %v438
    %v1039 = vunpack.c.l.b16 %v439
    %v1040 = vunpack.c.l.b16 %v440
    %v1041 = vunpack.c.h.b16 %v440
    %v1042 = vunpack.c.l.b16 %v441
    %v1043 = vunpack.c.h.b16 %v441
    %v1044 = vunpack.c.l.b16 %v442
    %v1045 = vunpack.c.h.b16 %v442
    %v1046 = vunpack.c.l.b16 %v443
    %v1047 = vunpack.c.h.b16 %v443
    %v1048 = vunpack.c.l.b16 %v444
    %v1049 = vunpack.c.l.b16 %v445
    %v1050 = vunpack.c.h.b16 %v445
    %v1051 = vunpack.c.l.b16 %v446
    %v1052 = vunpack.c.h.b16 %v446
    %v1053 = vunpack.c.l.b16 %v447
    %v1054 = vunpack.c.h.b16 %v447
    %v1055 = vunpack.c.l.b16 %v448
    %v1056 = vunpack.c.h.b16 %v448
    %v1057 = vunpack.c.l.b16 %v449
    %v1058 = vunpack.c.l.b16 %v450
    %v1059 = vunpack.c.h.b16 %v450
    %v1060 = vunpack.c.l.b16 %v451
    %v1061 = vunpack.c.h.b16 %v451
    %v1062 = vunpack.c.l.b16 %v452
    %v1063 = vunpack.c.h.b16 %v452
    %v1064 = vunpack.c.l.b16 %v453
    %v1065 = vunpack.c.h.b16 %v453
    %v1066 = vunpack.c.l.b16 %v454
    %v1067 = vunpack.c.l.b16 %v455
    %v1068 = vunpack.c.h.b16 %v455
    %v1069 = vunpack.c.l.b16 %v456
    %v1070 = vunpack.c.h.b16 %v456
    %v1071 = vunpack.c.l.b16 %v457
    %v1072 = vunpack.c.h.b16 %v457
    %v1073 = vunpack.c.l.b16 %v458
    %v1074 = vunpack.c.h.b16 %v458
    %v1075 = vunpack.c.l.b16 %v459
    %v1076 = vunpack.c.l.b16 %v460
    %v1077 = vunpack.c.h.b16 %v460
    %v1078 = vunpack.c.l.b16 %v461
    %v1079 = vunpack.c.h.b16 %v461
    %v1080 = vunpack.c.l.b16 %v462
    %v1081 = vunpack.c.h.b16 %v462
    %v1082 = vunpack.c.l.b16 %v463
    %v1083 = vunpack.c.h.b16 %v463
    %v1084 = vunpack.c.l.b16 %v464
    %v1085 = vunpack.c.l.b16 %v465
    %v1086 = vunpack.c.h.b16 %v465
    %v1087 = vunpack.c.l.b16 %v466
    %v1088 = vunpack.c.h.b16 %v466
    %v1089 = vunpack.c.l.b16 %v467
    %v1090 = vunpack.c.h.b16 %v467
    %v1091 = vunpack.c.l.b16 %v468
    %v1092 = vunpack.c.h.b16 %v468
    %v1093 = vunpack.c.l.b16 %v469
    %v1094 = vunpack.c.l.b16 %v470
    %v1095 = vunpack.c.h.b16 %v470
    %v1096 = vunpack.c.l.b16 %v471
    %v1097 = vunpack.c.h.b16 %v471
    %v1098 = vunpack.c.l.b16 %v472
    %v1099 = vunpack.c.h.b16 %v472
    %v1100 = vunpack.c.l.b16 %v473
    %v1101 = vunpack.c.h.b16 %v473
    %v1102 = vunpack.c.l.b16 %v474
    %v1103 = vunpack.c.l.b16 %v475
    %v1104 = vunpack.c.h.b16 %v475
    %v1105 = vunpack.c.l.b16 %v476
    %v1106 = vunpack.c.h.b16 %v476
    %v1107 = vunpack.c.l.b16 %v477
    %v1108 = vunpack.c.h.b16 %v477
    %v1109 = vunpack.c.l.b16 %v478
    %v1110 = vunpack.c.h.b16 %v478
    %v1111 = vunpack.c.l.b16 %v479
    %v1112 = vunpack.c.l.b16 %v480
    %v1113 = vunpack.c.h.b16 %v480
    %v1114 = vunpack.c.l.b16 %v481
    %v1115 = vunpack.c.h.b16 %v481
    %v1116 = vunpack.c.l.b16 %v482
    %v1117 = vunpack.c.h.b16 %v482
    %v1118 = vunpack.c.l.b16 %v483
    %v1119 = vunpack.c.h.b16 %v483
    %v1120 = vunpack.c.l.b16 %v484
    %v1121 = vunpack.c.l.b16 %v485
    %v1122 = vunpack.c.h.b16 %v485
    %v1123 = vunpack.c.l.b16 %v486
    %v1124 = vunpack.c.h.b16 %v486
    %v1125 = vunpack.c.l.b16 %v487
    %v1126 = vunpack.c.h.b16 %v487
    %v1127 = vunpack.c.l.b16 %v488
    %v1128 = vunpack.c.h.b16 %v488
    %v1129 = vunpack.c.l.b16 %v489
    %v1130 = vunpack.c.l.b16 %v490
    %v1131 = vunpack.c.h.b16 %v490
    %v1132 = vunpack.c.l.b16 %v491
    %v1133 = vunpack.c.h.b16 %v491
    %v1134 = vunpack.c.l.b16 %v492
    %v1135 = vunpack.c.h.b16 %v492
    %v1136 = vunpack.c.l.b16 %v493
    %v1137 = vunpack.c.h.b16 %v493
    %v1138 = vunpack.c.l.b16 %v494
    %v1139 = vunpack.c.l.b16 %v495
    %v1140 = vunpack.c.h.b16 %v495
    %v1141 = vunpack.c.l.b16 %v496
    %v1142 = vunpack.c.h.b16 %v496
    %v1143 = vunpack.c.l.b16 %v497
    %v1144 = vunpack.c.h.b16 %v497
    %v1145 = vunpack.c.l.b16 %v498
    %v1146 = vunpack.c.h.b16 %v498
    %v1147 = vunpack.c.l.b16 %v499
    %v1148 = vunpack.c.l.b16 %v500
    %v1149 = vunpack.c.h.b16 %v500
    %v1150 = vunpack.c.l.b16 %v501
    %v1151 = vunpack.c.h.b16 %v501
    %v1152 = vunpack.c.l.b16 %v502
    %v1153 = vunpack.c.h.b16 %v502
    %v1154 = vunpack.c.l.b16 %v503
    %v1155 = vunpack.c.h.b16 %v503
    %v1156 = vunpack.c.l.b16 %v504
    %v1157 = vunpack.c.l.b16 %v505
    %v1158 = vunpack.c.h.b16 %v505
    %v1159 = vunpack.c.l.b16 %v506
    %v1160 = vunpack.c.h.b16 %v506
    %v1161 = vunpack.c.l.b16 %v507
    %v1162 = vunpack.c.h.b16 %v507
    %v1163 = vunpack.c.l.b16 %v508
    %v1164 = vunpack.c.h.b16 %v508
    %v1165 = vunpack.c.l.b16 %v509
    %v1166 = vunpack.c.l.b16 %v510
    %v1167 = vunpack.c.h.b16 %v510
    %v1168 = vunpack.c.l.b16 %v511
    %v1169 = vunpack.c.h.b16 %v511
    %v1170 = vunpack.c.l.b16 %v512
    %v1171 = vunpack.c.h.b16 %v512
    %v1172 = vunpack.c.l.b16 %v513
    %v1173 = vunpack.c.h.b16 %v513
    %v1174 = vunpack.c.l.b16 %v514
    %v1175 = vunpack.c.l.b16 %v515
    %v1176 = vunpack.c.h.b16 %v515
    %v1177 = vunpack.c.l.b16 %v516
    %v1178 = vunpack.c.h.b16 %v516
    %v1179 = vunpack.c.l.b16 %v517
    %v1180 = vunpack.c.h.b16 %v517
    %v1181 = vunpack.c.l.b16 %v518
    %v1182 = vunpack.c.h.b16 %v518
    %v1183 = vunpack.c.l.b16 %v519
    %v1184 = vunpack.c.l.b16 %v520
    %v1185 = vunpack.c.h.b16 %v520
    %v1186 = vunpack.c.l.b16 %v521
    %v1187 = vunpack.c.h.b16 %v521
    %v1188 = vunpack.c.l.b16 %v522
    %v1189 = vunpack.c.h.b16 %v522
    %v1190 = vunpack.c.l.b16 %v523
    %v1191 = vunpack.c.h.b16 %v523
    %v1192 = vunpack.c.l.b16 %v524
    %v1193 = vunpack.c.l.b16 %v525
    %v1194 = vunpack.c.h.b16 %v525
    %v1195 = vunpack.c.l.b16 %v526
    %v1196 = vunpack.c.h.b16 %v526
    %v1197 = vunpack.c.l.b16 %v527
    %v1198 = vunpack.c.h.b16 %v527
    %v1199 = vunpack.c.l.b16 %v528
    %v1200 = vunpack.c.h.b16 %v528
    %v1201 = vunpack.c.l.b16 %v529
    %v1202 = vpack.c.b16 %v779, %v770
    %v1203 = vpack.c.b16 %v780, %v771
    %v1204 = vpack.c.b16 %v781, %v772
    %v1205 = vpack.c.b16 %v782, %v773
    %v1206 = vpack.c.b16 %v783, %v774
    %v1207 = vpack.c.b16 %v784, %v775
    %v1208 = vpack.c.b16 %v785, %v776
    %v1209 = vpack.c.b16 %v786, %v777
    %v1210 = vpack.c.b16 %v787, %v778
    %v1211 = vpack.c.b16 %v797, %v788
    %v1212 = vpack.c.b16 %v798, %v789
    %v1213 = vpack.c.b16 %v799, %v790
    %v1214 = vpack.c.b16 %v800, %v791
    %v1215 = vpack.c.b16 %v801, %v792
    %v1216 = vpack.c.b16 %v802, %v793
    %v1217 = vpack.c.b16 %v803, %v794
    %v1218 = vpack.c.b16 %v804, %v795
    %v1219 = vpack.c.b16 %v805, %v796
    %v1220 = vpack.c.b16 %v815, %v806
    %v1221 = vpack.c.b16 %v816, %v807
    %v1222 = vpack.c.b16 %v817, %v808
    %v1223 = vpack.c.b16 %v818, %v809
    %v1224 = vpack.c.b16 %v819, %v810
    %v1225 = vpack.c.b16 %v820, %v811
    %v1226 = vpack.c.b16 %v821, %v812
    %v1227 = vpack.c.b16 %v822, %v813
    %v1228 = vpack.c.b16 %v823, %v814
    %v1229 = vpack.c.b16 %v833, %v824
    %v1230 = vpack.c.b16 %v834, %v825
    %v1231 = vpack.c.b16 %v835, %v826
    %v1232 = vpack.c.b16 %v836, %v827
    %v1233 = vpack.c.b16 %v837, %v828
    %v1234 = vpack.c.b16 %v838, %v829
    %v1235 = vpack.c.b16 %v839, %v830
    %v1236 = vpack.c.b16 %v840, %v831
    %v1237 = vpack.c.b16 %v841, %v832
    %v1238 = vpack.c.b16 %v851, %v842
    %v1239 = vpack.c.b16 %v852, %v843
    %v1240 = vpack.c.b16 %v853, %v844
    %v1241 = vpack.c.b16 %v854, %v845
    %v1242 = vpack.c.b16 %v855, %v846
    %v1243 = vpack.c.b16 %v856, %v847
    %v1244 = vpack.c.b16 %v857, %v848
    %v1245 = vpack.c.b16 %v858, %v849
    %v1246 = vpack.c.b16 %v859, %v850
    %v1247 = vpack.c.b16 %v869, %v860
    %v1248 = vpack.c.b16 %v870, %v861
    %v1249 = vpack.c.b16 %v871, %v862
    %v1250 = vpack.c.b16 %v872, %v863
    %v1251 = vpack.c.b16 %v873, %v864
    %v1252 = vpack.c.b16 %v874, %v865
    %v1253 = vpack.c.b16 %v875, %v866
    %v1254 = vpack.c.b16 %v876, %v867
    %v1255 = vpack.c.b16 %v877, %v868
    %v1256 = vpack.c.b16 %v887, %v878
    %v1257 = vpack.c.b16 %v888, %v879
    %v1258 = vpack.c.b16 %v889, %v880
    %v1259 = vpack.c.b16 %v890, %v881
    %v1260 = vpack.c.b16 %v891, %v882
    %v1261 = vpack.c.b16 %v892, %v883
    %v1262 = vpack.c.b16 %v893, %v884
    %v1263 = vpack.c.b16 %v894, %v885
    %v1264 = vpack.c.b16 %v895, %v886
    %v1265 = vpack.c.b16 %v905, %v896
    %v1266 = vpack.c.b16 %v906, %v897
    %v1267 = vpack.c.b16 %v907, %v898
    %v1268 = vpack.c.b16 %v908, %v899
    %v1269 = vpack.c.b16 %v909, %v900
    %v1270 = vpack.c.b16 %v910, %v901
    %v1271 = vpack.c.b16 %v911, %v902
    %v1272 = vpack.c.b16 %v912, %v903
    %v1273 = vpack.c.b16 %v913, %v904
    %v1274 = vpack.c.b16 %v923, %v914
    %v1275 = vpack.c.b16 %v924, %v915
    %v1276 = vpack.c.b16 %v925, %v916
    %v1277 = vpack.c.b16 %v926, %v917
    %v1278 = vpack.c.b16 %v927, %v918
    %v1279 = vpack.c.b16 %v928, %v919
    %v1280 = vpack.c.b16 %v929, %v920
    %v1281 = vpack.c.b16 %v930, %v921
    %v1282 = vpack.c.b16 %v931, %v922
    %v1283 = vpack.c.b16 %v941, %v932
    %v1284 = vpack.c.b16 %v942, %v933
    %v1285 = vpack.c.b16 %v943, %v934
    %v1286 = vpack.c.b16 %v944, %v935
    %v1287 = vpack.c.b16 %v945, %v936
    %v1288 = vpack.c.b16 %v946, %v937
    %v1289 = vpack.c.b16 %v947, %v938
    %v1290 = vpack.c.b16 %v948, %v939
    %v1291 = vpack.c.b16 %v949, %v940
    %v1292 = vpack.c.b16 %v959, %v950
    %v1293 = vpack.c.b16 %v960, %v951
    %v1294 = vpack.c.b16 %v961, %v952
    %v1295 = vpack.c.b16 %v962, %v953
    %v1296 = vpack.c.b16 %v963, %v954
    %v1297 = vpack.c.b16 %v964, %v955
    %v1298 = vpack.c.b16 %v965, %v956
    %v1299 = vpack.c.b16 %v966, %v957
    %v1300 = vpack.c.b16 %v967, %v958
    %v1301 = vpack.c.b16 %v977, %v968
    %v1302 = vpack.c.b16 %v978, %v969
    %v1303 = vpack.c.b16 %v979, %v970
    %v1304 = vpack.c.b16 %v980, %v971
    %v1305 = vpack.c.b16 %v981, %v972
    %v1306 = vpack.c.b16 %v982, %v973
    %v1307 = vpack.c.b16 %v983, %v974
    %v1308 = vpack.c.b16 %v984, %v975
    %v1309 = vpack.c.b16 %v985, %v976
    %v1310 = vpack.c.b16 %v995, %v986
    %v1311 = vpack.c.b16 %v996, %v987
    %v1312 = vpack.c.b16 %v997, %v988
    %v1313 = vpack.c.b16 %v998, %v989
    %v1314 = vpack.c.b16 %v999, %v990
    %v1315 = vpack.c.b16 %v1000, %v991
    %v1316 = vpack.c.b16 %v1001, %v992
    %v1317 = vpack.c.b16 %v1002, %v993
    %v1318 = vpack.c.b16 %v1003, %v994
    %v1319 = vpack.c.b16 %v1013, %v1004
    %v1320 = vpack.c.b16 %v1014, %v1005
    %v1321 = vpack.c.b16 %v1015, %v1006
    %v1322 = vpack.c.b16 %v1016, %v1007
    %v1323 = vpack.c.b16 %v1017, %v1008
    %v1324 = vpack.c.b16 %v1018, %v1009
    %v1325 = vpack.c.b16 %v1019, %v1010
    %v1326 = vpack.c.b16 %v1020, %v1011
    %v1327 = vpack.c.b16 %v1021, %v1012
    %v1328 = vpack.c.b16 %v1031, %v1022
    %v1329 = vpack.c.b16 %v1032, %v1023
    %v1330 = vpack.c.b16 %v1033, %v1024
    %v1331 = vpack.c.b16 %v1034, %v1025
    %v1332 = vpack.c.b16 %v1035, %v1026
    %v1333 = vpack.c.b16 %v1036, %v1027
    %v1334 = vpack.c.b16 %v1037, %v1028
    %v1335 = vpack.c.b16 %v1038, %v1029
    %v1336 = vpack.c.b16 %v1039, %v1030
    %v1337 = vpack.c.b16 %v1049, %v1040
    %v1338 = vpack.c.b16 %v1050, %v1041
    %v1339 = vpack.c.b16 %v1051, %v1042
    %v1340 = vpack.c.b16 %v1052, %v1043
    %v1341 = vpack.c.b16 %v1053, %v1044
    %v1342 = vpack.c.b16 %v1054, %v1045
    %v1343 = vpack.c.b16 %v1055, %v1046
    %v1344 = vpack.c.b16 %v1056, %v1047
    %v1345 = vpack.c.b16 %v1057, %v1048
    %v1346 = vpack.c.b16 %v1067, %v1058
    %v1347 = vpack.c.b16 %v1068, %v1059
    %v1348 = vpack.c.b16 %v1069, %v1060
    %v1349 = vpack.c.b16 %v1070, %v1061
    %v1350 = vpack.c.b16 %v1071, %v1062
    %v1351 = vpack.c.b16 %v1072, %v1063
    %v1352 = vpack.c.b16 %v1073, %v1064
    %v1353 = vpack.c.b16 %v1074, %v1065
    %v1354 = vpack.c.b16 %v1075, %v1066
    %v1355 = vpack.c.b16 %v1085, %v1076
    %v1356 = vpack.c.b16 %v1086, %v1077
    %v1357 = vpack.c.b16 %v1087, %v1078
    %v1358 = vpack.c.b16 %v1088, %v1079
    %v1359 = vpack.c.b16 %v1089, %v1080
    %v1360 = vpack.c.b16 %v1090, %v1081
    %v1361 = vpack.c.b16 %v1091, %v1082
    %v1362 = vpack.c.b16 %v1092, %v1083
    %v1363 = vpack.c.b16 %v1093, %v1084
    %v1364 = vpack.c.b16 %v1103, %v1094
    %v1365 = vpack.c.b16 %v1104, %v1095
    %v1366 = vpack.c.b16 %v1105, %v1096
    %v1367 = vpack.c.b16 %v1106, %v1097
    %v1368 = vpack.c.b16 %v1107, %v1098
    %v1369 = vpack.c.b16 %v1108, %v1099
    %v1370 = vpack.c.b16 %v1109, %v1100
    %v1371 = vpack.c.b16 %v1110, %v1101
    %v1372 = vpack.c.b16 %v1111, %v1102
    %v1373 = vpack.c.b16 %v1121, %v1112
    %v1374 = vpack.c.b16 %v1122, %v1113
    %v1375 = vpack.c.b16 %v1123, %v1114
    %v1376 = vpack.c.b16 %v1124, %v1115
    %v1377 = vpack.c.b16 %v1125, %v1116
    %v1378 = vpack.c.b16 %v1126, %v1117
    %v1379 = vpack.c.b16 %v1127, %v1118
    %v1380 = vpack.c.b16 %v1128, %v1119
    %v1381 = vpack.c.b16 %v1129, %v1120
    %v1382 = vpack.c.b16 %v1139, %v1130
    %v1383 = vpack.c.b16 %v1140, %v1131
    %v1384 = vpack.c.b16 %v1141, %v1132
    %v1385 = vpack.c.b16 %v1142, %v1133
    %v1386 = vpack.c.b16 %v1143, %v1134
    %v1387 = vpack.c.b16 %v1144, %v1135
    %v1388 = vpack.c.b16 %v1145, %v1136
    %v1389 = vpack.c.b16 %v1146, %v1137
    %v1390 = vpack.c.b16 %v1147, %v1138
    %v1391 = vpack.c.b16 %v1157, %v1148
    %v1392 = vpack.c.b16 %v1158, %v1149
    %v1393 = vpack.c.b16 %v1159, %v1150
    %v1394 = vpack.c.b16 %v1160, %v1151
    %v1395 = vpack.c.b16 %v1161, %v1152
    %v1396 = vpack.c.b16 %v1162, %v1153
    %v1397 = vpack.c.b16 %v1163, %v1154
    %v1398 = vpack.c.b16 %v1164, %v1155
    %v1399 = vpack.c.b16 %v1165, %v1156
    %v1400 = vpack.c.b16 %v1175, %v1166
    %v1401 = vpack.c.b16 %v1176, %v1167
    %v1402 = vpack.c.b16 %v1177, %v1168
    %v1403 = vpack.c.b16 %v1178, %v1169
    %v1404 = vpack.c.b16 %v1179, %v1170
    %v1405 = vpack.c.b16 %v1180, %v1171
    %v1406 = vpack.c.b16 %v1181, %v1172
    %v1407 = vpack.c.b16 %v1182, %v1173
    %v1408 = vpack.c.b16 %v1183, %v1174
    %v1409 = vpack.c.b16 %v1193, %v1184
    %v1410 = vpack.c.b16 %v1194, %v1185
    %v1411 = vpack.c.b16 %v1195, %v1186
    %v1412 = vpack.c.b16 %v1196, %v1187
    %v1413 = vpack.c.b16 %v1197, %v1188
    %v1414 = vpack.c.b16 %v1198, %v1189
    %v1415 = vpack.c.b16 %v1199, %v1190
    %v1416 = vpack.c.b16 %v1200, %v1191
    %v1417 = vpack.c.b16 %v1201, %v1192
    %1634 = vmatprep.subr.bf16.mxu0 %v1266
    %1635 = vmatpush1.bf16.msra.mxu0 %v1265
    %1636 = vmatprep.subr.bf16.mxu0 %v1257
    %1637 = vmatpush1.bf16.msra.mxu0 %v1256
    %1638 = vmatprep.subr.bf16.mxu0 %v1248
    %1639 = vmatpush1.bf16.msra.mxu0 %v1247
    %1640 = vmatprep.subr.bf16.mxu0 %v1239
    %1641 = vmatpush1.bf16.msra.mxu0 %v1238
    %1642 = vmatprep.subr.bf16.mxu0 %v1230
    %1643 = vmatpush1.bf16.msra.mxu0 %v1229
    %1644 = vmatprep.subr.bf16.mxu0 %v1221
    %1645 = vmatpush1.bf16.msra.mxu0 %v1220
    %1646 = vmatprep.subr.bf16.mxu0 %v1212
    %1647 = vmatpush1.bf16.msra.mxu0 %v1211
    %1648 = vmatprep.subr.bf16.mxu0 %v1203
    %1649 = vmatpush1.bf16.msra.mxu0 %v1202
    %1650 = vmatprep.subr.bf16.mxu0 %v1338
    %1651 = vmatpush2.bf16.msra.mxu0 %v1337
    %1652 = vmatprep.subr.bf16.mxu0 %v1329
    %1653 = vmatpush2.bf16.msra.mxu0 %v1328
    %1654 = vmatprep.subr.bf16.mxu0 %v1320
    %1655 = vmatpush2.bf16.msra.mxu0 %v1319
    %1656 = vmatprep.subr.bf16.mxu0 %v1311
    %1657 = vmatpush2.bf16.msra.mxu0 %v1310
    %1658 = vmatprep.subr.bf16.mxu0 %v1302
    %1659 = vmatpush2.bf16.msra.mxu0 %v1301
    %1660 = vmatprep.subr.bf16.mxu0 %v1293
    %1661 = vmatpush2.bf16.msra.mxu0 %v1292
    %1662 = vmatprep.subr.bf16.mxu0 %v1284
    %1663 = vmatpush2.bf16.msra.mxu0 %v1283
    %1664 = vmatprep.subr.bf16.mxu0 %v1275
    %1665 = vmatpush2.bf16.msra.mxu0 %v1274
    %1666 = vmatprep.mubr.bf16.mxu0 %v288
    %1667 = vmatmul.mubr.bf16.gmra.mxu0 %v287
    %v1668 = vpop.f32.mrf.mxu0
    %v1669 = vadd.f32 0.0, %v1668
    %v1670 = vpop.f32.mrf.mxu0
    %v1671 = vadd.f32 0.0, %v1670
    %v1672 = vpop.f32.mrf.mxu0
    %v1673 = vadd.f32 0.0, %v1672
    %v1674 = vpop.f32.mrf.mxu0
    %v1675 = vadd.f32 0.0, %v1674
    %1676 = vdwg.mxu0
    %1677 = vmatprep.subr.bf16.mxu0 %v1410
    %1678 = vmatpush1.bf16.msra.mxu0 %v1409
    %1679 = vmatprep.subr.bf16.mxu0 %v1401
    %1680 = vmatpush1.bf16.msra.mxu0 %v1400
    %1681 = vmatprep.subr.bf16.mxu0 %v1392
    %1682 = vmatpush1.bf16.msra.mxu0 %v1391
    %1683 = vmatprep.subr.bf16.mxu0 %v1383
    %1684 = vmatpush1.bf16.msra.mxu0 %v1382
    %1685 = vmatprep.subr.bf16.mxu0 %v1374
    %1686 = vmatpush1.bf16.msra.mxu0 %v1373
    %1687 = vmatprep.subr.bf16.mxu0 %v1365
    %1688 = vmatpush1.bf16.msra.mxu0 %v1364
    %1689 = vmatprep.subr.bf16.mxu0 %v1356
    %1690 = vmatpush1.bf16.msra.mxu0 %v1355
    %1691 = vmatprep.subr.bf16.mxu0 %v1347
    %1692 = vmatpush1.bf16.msra.mxu0 %v1346
    %1693 = vmatprep.subr.bf16.mxu0 0
    %1694 = vmatpush2.bf16.msra.mxu0 0
    %1695 = vmatprep.subr.bf16.mxu0 0
    %1696 = vmatpush2.bf16.msra.mxu0 0
    %1697 = vmatprep.subr.bf16.mxu0 0
    %1698 = vmatpush2.bf16.msra.mxu0 0
    %1699 = vmatprep.subr.bf16.mxu0 0
    %1700 = vmatpush2.bf16.msra.mxu0 0
    %1701 = vmatprep.subr.bf16.mxu0 0
    %1702 = vmatpush2.bf16.msra.mxu0 0
    %1703 = vmatprep.subr.bf16.mxu0 0
    %1704 = vmatpush2.bf16.msra.mxu0 0
    %1705 = vmatprep.subr.bf16.mxu0 0
    %1706 = vmatpush2.bf16.msra.mxu0 0
    %1707 = vmatprep.subr.bf16.mxu0 0
    %1708 = vmatpush2.bf16.msra.mxu0 0
    %1709 = vmatprep.mubr.bf16.mxu0 0
    %1710 = vmatmul.mubr.bf16.gmra.mxu0 %v289
    %v1711 = vpop.f32.mrf.mxu0
    %v1712 = vadd.f32 %v1669, %v1711
    %v1713 = vpop.f32.mrf.mxu0
    %v1714 = vadd.f32 %v1671, %v1713
    %v1715 = vpop.f32.mrf.mxu0
    %v1716 = vadd.f32 %v1673, %v1715
    %v1717 = vpop.f32.mrf.mxu0
    %v1718 = vadd.f32 %v1675, %v1717
    %1719 = vdwg.mxu0
    %1720 = vmatprep.subr.bf16.mxu0 %v1268
    %1721 = vmatpush1.bf16.msra.mxu0 %v1267
    %1722 = vmatprep.subr.bf16.mxu0 %v1259
    %1723 = vmatpush1.bf16.msra.mxu0 %v1258
    %1724 = vmatprep.subr.bf16.mxu0 %v1250
    %1725 = vmatpush1.bf16.msra.mxu0 %v1249
    %1726 = vmatprep.subr.bf16.mxu0 %v1241
    %1727 = vmatpush1.bf16.msra.mxu0 %v1240
    %1728 = vmatprep.subr.bf16.mxu0 %v1232
    %1729 = vmatpush1.bf16.msra.mxu0 %v1231
    %1730 = vmatprep.subr.bf16.mxu0 %v1223
    %1731 = vmatpush1.bf16.msra.mxu0 %v1222
    %1732 = vmatprep.subr.bf16.mxu0 %v1214
    %1733 = vmatpush1.bf16.msra.mxu0 %v1213
    %1734 = vmatprep.subr.bf16.mxu0 %v1205
    %1735 = vmatpush1.bf16.msra.mxu0 %v1204
    %1736 = vmatprep.subr.bf16.mxu0 %v1340
    %1737 = vmatpush2.bf16.msra.mxu0 %v1339
    %1738 = vmatprep.subr.bf16.mxu0 %v1331
    %1739 = vmatpush2.bf16.msra.mxu0 %v1330
    %1740 = vmatprep.subr.bf16.mxu0 %v1322
    %1741 = vmatpush2.bf16.msra.mxu0 %v1321
    %1742 = vmatprep.subr.bf16.mxu0 %v1313
    %1743 = vmatpush2.bf16.msra.mxu0 %v1312
    %1744 = vmatprep.subr.bf16.mxu0 %v1304
    %1745 = vmatpush2.bf16.msra.mxu0 %v1303
    %1746 = vmatprep.subr.bf16.mxu0 %v1295
    %1747 = vmatpush2.bf16.msra.mxu0 %v1294
    %1748 = vmatprep.subr.bf16.mxu0 %v1286
    %1749 = vmatpush2.bf16.msra.mxu0 %v1285
    %1750 = vmatprep.subr.bf16.mxu0 %v1277
    %1751 = vmatpush2.bf16.msra.mxu0 %v1276
    %1752 = vmatprep.mubr.bf16.mxu0 %v288
    %1753 = vmatmul.mubr.bf16.gmra.mxu0 %v287
    %v1754 = vpop.f32.mrf.mxu0
    %v1755 = vadd.f32 0.0, %v1754
    %v1756 = vpop.f32.mrf.mxu0
    %v1757 = vadd.f32 0.0, %v1756
    %v1758 = vpop.f32.mrf.mxu0
    %v1759 = vadd.f32 0.0, %v1758
    %v1760 = vpop.f32.mrf.mxu0
    %v1761 = vadd.f32 0.0, %v1760
    %1762 = vdwg.mxu0
    %1763 = vmatprep.subr.bf16.mxu0 %v1412
    %1764 = vmatpush1.bf16.msra.mxu0 %v1411
    %1765 = vmatprep.subr.bf16.mxu0 %v1403
    %1766 = vmatpush1.bf16.msra.mxu0 %v1402
    %1767 = vmatprep.subr.bf16.mxu0 %v1394
    %1768 = vmatpush1.bf16.msra.mxu0 %v1393
    %1769 = vmatprep.subr.bf16.mxu0 %v1385
    %1770 = vmatpush1.bf16.msra.mxu0 %v1384
    %1771 = vmatprep.subr.bf16.mxu0 %v1376
    %1772 = vmatpush1.bf16.msra.mxu0 %v1375
    %1773 = vmatprep.subr.bf16.mxu0 %v1367
    %1774 = vmatpush1.bf16.msra.mxu0 %v1366
    %1775 = vmatprep.subr.bf16.mxu0 %v1358
    %1776 = vmatpush1.bf16.msra.mxu0 %v1357
    %1777 = vmatprep.subr.bf16.mxu0 %v1349
    %1778 = vmatpush1.bf16.msra.mxu0 %v1348
    %1779 = vmatprep.subr.bf16.mxu0 0
    %1780 = vmatpush2.bf16.msra.mxu0 0
    %1781 = vmatprep.subr.bf16.mxu0 0
    %1782 = vmatpush2.bf16.msra.mxu0 0
    %1783 = vmatprep.subr.bf16.mxu0 0
    %1784 = vmatpush2.bf16.msra.mxu0 0
    %1785 = vmatprep.subr.bf16.mxu0 0
    %1786 = vmatpush2.bf16.msra.mxu0 0
    %1787 = vmatprep.subr.bf16.mxu0 0
    %1788 = vmatpush2.bf16.msra.mxu0 0
    %1789 = vmatprep.subr.bf16.mxu0 0
    %1790 = vmatpush2.bf16.msra.mxu0 0
    %1791 = vmatprep.subr.bf16.mxu0 0
    %1792 = vmatpush2.bf16.msra.mxu0 0
    %1793 = vmatprep.subr.bf16.mxu0 0
    %1794 = vmatpush2.bf16.msra.mxu0 0
    %1795 = vmatprep.mubr.bf16.mxu0 0
    %1796 = vmatmul.mubr.bf16.gmra.mxu0 %v289
    %v1797 = vpop.f32.mrf.mxu0
    %v1798 = vadd.f32 %v1755, %v1797
    %v1799 = vpop.f32.mrf.mxu0
    %v1800 = vadd.f32 %v1757, %v1799
    %v1801 = vpop.f32.mrf.mxu0
    %v1802 = vadd.f32 %v1759, %v1801
    %v1803 = vpop.f32.mrf.mxu0
    %v1804 = vadd.f32 %v1761, %v1803
    %1805 = vdwg.mxu0
    %1806 = vmatprep.subr.bf16.mxu0 %v1270
    %1807 = vmatpush1.bf16.msra.mxu0 %v1269
    %1808 = vmatprep.subr.bf16.mxu0 %v1261
    %1809 = vmatpush1.bf16.msra.mxu0 %v1260
    %1810 = vmatprep.subr.bf16.mxu0 %v1252
    %1811 = vmatpush1.bf16.msra.mxu0 %v1251
    %1812 = vmatprep.subr.bf16.mxu0 %v1243
    %1813 = vmatpush1.bf16.msra.mxu0 %v1242
    %1814 = vmatprep.subr.bf16.mxu0 %v1234
    %1815 = vmatpush1.bf16.msra.mxu0 %v1233
    %1816 = vmatprep.subr.bf16.mxu0 %v1225
    %1817 = vmatpush1.bf16.msra.mxu0 %v1224
    %1818 = vmatprep.subr.bf16.mxu0 %v1216
    %1819 = vmatpush1.bf16.msra.mxu0 %v1215
    %1820 = vmatprep.subr.bf16.mxu0 %v1207
    %1821 = vmatpush1.bf16.msra.mxu0 %v1206
    %1822 = vmatprep.subr.bf16.mxu0 %v1342
    %1823 = vmatpush2.bf16.msra.mxu0 %v1341
    %1824 = vmatprep.subr.bf16.mxu0 %v1333
    %1825 = vmatpush2.bf16.msra.mxu0 %v1332
    %1826 = vmatprep.subr.bf16.mxu0 %v1324
    %1827 = vmatpush2.bf16.msra.mxu0 %v1323
    %1828 = vmatprep.subr.bf16.mxu0 %v1315
    %1829 = vmatpush2.bf16.msra.mxu0 %v1314
    %1830 = vmatprep.subr.bf16.mxu0 %v1306
    %1831 = vmatpush2.bf16.msra.mxu0 %v1305
    %1832 = vmatprep.subr.bf16.mxu0 %v1297
    %1833 = vmatpush2.bf16.msra.mxu0 %v1296
    %1834 = vmatprep.subr.bf16.mxu0 %v1288
    %1835 = vmatpush2.bf16.msra.mxu0 %v1287
    %1836 = vmatprep.subr.bf16.mxu0 %v1279
    %1837 = vmatpush2.bf16.msra.mxu0 %v1278
    %1838 = vmatprep.mubr.bf16.mxu0 %v288
    %1839 = vmatmul.mubr.bf16.gmra.mxu0 %v287
    %v1840 = vpop.f32.mrf.mxu0
    %v1841 = vadd.f32 0.0, %v1840
    %v1842 = vpop.f32.mrf.mxu0
    %v1843 = vadd.f32 0.0, %v1842
    %v1844 = vpop.f32.mrf.mxu0
    %v1845 = vadd.f32 0.0, %v1844
    %v1846 = vpop.f32.mrf.mxu0
    %v1847 = vadd.f32 0.0, %v1846
    %1848 = vdwg.mxu0
    %1849 = vmatprep.subr.bf16.mxu0 %v1414
    %1850 = vmatpush1.bf16.msra.mxu0 %v1413
    %1851 = vmatprep.subr.bf16.mxu0 %v1405
    %1852 = vmatpush1.bf16.msra.mxu0 %v1404
    %1853 = vmatprep.subr.bf16.mxu0 %v1396
    %1854 = vmatpush1.bf16.msra.mxu0 %v1395
    %1855 = vmatprep.subr.bf16.mxu0 %v1387
    %1856 = vmatpush1.bf16.msra.mxu0 %v1386
    %1857 = vmatprep.subr.bf16.mxu0 %v1378
    %1858 = vmatpush1.bf16.msra.mxu0 %v1377
    %1859 = vmatprep.subr.bf16.mxu0 %v1369
    %1860 = vmatpush1.bf16.msra.mxu0 %v1368
    %1861 = vmatprep.subr.bf16.mxu0 %v1360
    %1862 = vmatpush1.bf16.msra.mxu0 %v1359
    %1863 = vmatprep.subr.bf16.mxu0 %v1351
    %1864 = vmatpush1.bf16.msra.mxu0 %v1350
    %1865 = vmatprep.subr.bf16.mxu0 0
    %1866 = vmatpush2.bf16.msra.mxu0 0
    %1867 = vmatprep.subr.bf16.mxu0 0
    %1868 = vmatpush2.bf16.msra.mxu0 0
    %1869 = vmatprep.subr.bf16.mxu0 0
    %1870 = vmatpush2.bf16.msra.mxu0 0
    %1871 = vmatprep.subr.bf16.mxu0 0
    %1872 = vmatpush2.bf16.msra.mxu0 0
    %1873 = vmatprep.subr.bf16.mxu0 0
    %1874 = vmatpush2.bf16.msra.mxu0 0
    %1875 = vmatprep.subr.bf16.mxu0 0
    %1876 = vmatpush2.bf16.msra.mxu0 0
    %1877 = vmatprep.subr.bf16.mxu0 0
    %1878 = vmatpush2.bf16.msra.mxu0 0
    %1879 = vmatprep.subr.bf16.mxu0 0
    %1880 = vmatpush2.bf16.msra.mxu0 0
    %1881 = vmatprep.mubr.bf16.mxu0 0
    %1882 = vmatmul.mubr.bf16.gmra.mxu0 %v289
    %v1883 = vpop.f32.mrf.mxu0
    %v1884 = vadd.f32 %v1841, %v1883
    %v1885 = vpop.f32.mrf.mxu0
    %v1886 = vadd.f32 %v1843, %v1885
    %v1887 = vpop.f32.mrf.mxu0
    %v1888 = vadd.f32 %v1845, %v1887
    %v1889 = vpop.f32.mrf.mxu0
    %v1890 = vadd.f32 %v1847, %v1889
    %1891 = vdwg.mxu0
    %1892 = vmatprep.subr.bf16.mxu0 %v1272
    %1893 = vmatpush1.bf16.msra.mxu0 %v1271
    %1894 = vmatprep.subr.bf16.mxu0 %v1263
    %1895 = vmatpush1.bf16.msra.mxu0 %v1262
    %1896 = vmatprep.subr.bf16.mxu0 %v1254
    %1897 = vmatpush1.bf16.msra.mxu0 %v1253
    %1898 = vmatprep.subr.bf16.mxu0 %v1245
    %1899 = vmatpush1.bf16.msra.mxu0 %v1244
    %1900 = vmatprep.subr.bf16.mxu0 %v1236
    %1901 = vmatpush1.bf16.msra.mxu0 %v1235
    %1902 = vmatprep.subr.bf16.mxu0 %v1227
    %1903 = vmatpush1.bf16.msra.mxu0 %v1226
    %1904 = vmatprep.subr.bf16.mxu0 %v1218
    %1905 = vmatpush1.bf16.msra.mxu0 %v1217
    %1906 = vmatprep.subr.bf16.mxu0 %v1209
    %1907 = vmatpush1.bf16.msra.mxu0 %v1208
    %1908 = vmatprep.subr.bf16.mxu0 %v1344
    %1909 = vmatpush2.bf16.msra.mxu0 %v1343
    %1910 = vmatprep.subr.bf16.mxu0 %v1335
    %1911 = vmatpush2.bf16.msra.mxu0 %v1334
    %1912 = vmatprep.subr.bf16.mxu0 %v1326
    %1913 = vmatpush2.bf16.msra.mxu0 %v1325
    %1914 = vmatprep.subr.bf16.mxu0 %v1317
    %1915 = vmatpush2.bf16.msra.mxu0 %v1316
    %1916 = vmatprep.subr.bf16.mxu0 %v1308
    %1917 = vmatpush2.bf16.msra.mxu0 %v1307
    %1918 = vmatprep.subr.bf16.mxu0 %v1299
    %1919 = vmatpush2.bf16.msra.mxu0 %v1298
    %1920 = vmatprep.subr.bf16.mxu0 %v1290
    %1921 = vmatpush2.bf16.msra.mxu0 %v1289
    %1922 = vmatprep.subr.bf16.mxu0 %v1281
    %1923 = vmatpush2.bf16.msra.mxu0 %v1280
    %1924 = vmatprep.mubr.bf16.mxu0 %v288
    %1925 = vmatmul.mubr.bf16.gmra.mxu0 %v287
    %v1926 = vpop.f32.mrf.mxu0
    %v1927 = vadd.f32 0.0, %v1926
    %v1928 = vpop.f32.mrf.mxu0
    %v1929 = vadd.f32 0.0, %v1928
    %v1930 = vpop.f32.mrf.mxu0
    %v1931 = vadd.f32 0.0, %v1930
    %v1932 = vpop.f32.mrf.mxu0
    %v1933 = vadd.f32 0.0, %v1932
    %1934 = vdwg.mxu0
    %1935 = vmatprep.subr.bf16.mxu0 %v1416
    %1936 = vmatpush1.bf16.msra.mxu0 %v1415
    %1937 = vmatprep.subr.bf16.mxu0 %v1407
    %1938 = vmatpush1.bf16.msra.mxu0 %v1406
    %1939 = vmatprep.subr.bf16.mxu0 %v1398
    %1940 = vmatpush1.bf16.msra.mxu0 %v1397
    %1941 = vmatprep.subr.bf16.mxu0 %v1389
    %1942 = vmatpush1.bf16.msra.mxu0 %v1388
    %1943 = vmatprep.subr.bf16.mxu0 %v1380
    %1944 = vmatpush1.bf16.msra.mxu0 %v1379
    %1945 = vmatprep.subr.bf16.mxu0 %v1371
    %1946 = vmatpush1.bf16.msra.mxu0 %v1370
    %1947 = vmatprep.subr.bf16.mxu0 %v1362
    %1948 = vmatpush1.bf16.msra.mxu0 %v1361
    %1949 = vmatprep.subr.bf16.mxu0 %v1353
    %1950 = vmatpush1.bf16.msra.mxu0 %v1352
    %1951 = vmatprep.subr.bf16.mxu0 0
    %1952 = vmatpush2.bf16.msra.mxu0 0
    %1953 = vmatprep.subr.bf16.mxu0 0
    %1954 = vmatpush2.bf16.msra.mxu0 0
    %1955 = vmatprep.subr.bf16.mxu0 0
    %1956 = vmatpush2.bf16.msra.mxu0 0
    %1957 = vmatprep.subr.bf16.mxu0 0
    %1958 = vmatpush2.bf16.msra.mxu0 0
    %1959 = vmatprep.subr.bf16.mxu0 0
    %1960 = vmatpush2.bf16.msra.mxu0 0
    %1961 = vmatprep.subr.bf16.mxu0 0
    %1962 = vmatpush2.bf16.msra.mxu0 0
    %1963 = vmatprep.subr.bf16.mxu0 0
    %1964 = vmatpush2.bf16.msra.mxu0 0
    %1965 = vmatprep.subr.bf16.mxu0 0
    %1966 = vmatpush2.bf16.msra.mxu0 0
    %1967 = vmatprep.mubr.bf16.mxu0 0
    %1968 = vmatmul.mubr.bf16.gmra.mxu0 %v289
    %v1969 = vpop.f32.mrf.mxu0
    %v1970 = vadd.f32 %v1927, %v1969
    %v1971 = vpop.f32.mrf.mxu0
    %v1972 = vadd.f32 %v1929, %v1971
    %v1973 = vpop.f32.mrf.mxu0
    %v1974 = vadd.f32 %v1931, %v1973
    %v1975 = vpop.f32.mrf.mxu0
    %v1976 = vadd.f32 %v1933, %v1975
    %1977 = vdwg.mxu0
    %1978 = vmatprep.subr.bf16.mxu0 0
    %1979 = vmatpush1.bf16.msra.mxu0 %v1273
    %1980 = vmatprep.subr.bf16.mxu0 0
    %1981 = vmatpush1.bf16.msra.mxu0 %v1264
    %1982 = vmatprep.subr.bf16.mxu0 0
    %1983 = vmatpush1.bf16.msra.mxu0 %v1255
    %1984 = vmatprep.subr.bf16.mxu0 0
    %1985 = vmatpush1.bf16.msra.mxu0 %v1246
    %1986 = vmatprep.subr.bf16.mxu0 0
    %1987 = vmatpush1.bf16.msra.mxu0 %v1237
    %1988 = vmatprep.subr.bf16.mxu0 0
    %1989 = vmatpush1.bf16.msra.mxu0 %v1228
    %1990 = vmatprep.subr.bf16.mxu0 0
    %1991 = vmatpush1.bf16.msra.mxu0 %v1219
    %1992 = vmatprep.subr.bf16.mxu0 0
    %1993 = vmatpush1.bf16.msra.mxu0 %v1210
    %1994 = vmatprep.subr.bf16.mxu0 0
    %1995 = vmatpush2.bf16.msra.mxu0 %v1345
    %1996 = vmatprep.subr.bf16.mxu0 0
    %1997 = vmatpush2.bf16.msra.mxu0 %v1336
    %1998 = vmatprep.subr.bf16.mxu0 0
    %1999 = vmatpush2.bf16.msra.mxu0 %v1327
    %2000 = vmatprep.subr.bf16.mxu0 0
    %2001 = vmatpush2.bf16.msra.mxu0 %v1318
    %2002 = vmatprep.subr.bf16.mxu0 0
    %2003 = vmatpush2.bf16.msra.mxu0 %v1309
    %2004 = vmatprep.subr.bf16.mxu0 0
    %2005 = vmatpush2.bf16.msra.mxu0 %v1300
    %2006 = vmatprep.subr.bf16.mxu0 0
    %2007 = vmatpush2.bf16.msra.mxu0 %v1291
    %2008 = vmatprep.subr.bf16.mxu0 0
    %2009 = vmatpush2.bf16.msra.mxu0 %v1282
    %2010 = vmatprep.mubr.bf16.mxu0 %v288
    %2011 = vmatmul.mubr.bf16.gmra.mxu0 %v287
    %v2012 = vpop.f32.mrf.mxu0
    %v2013 = vadd.f32 0.0, %v2012
    %v2014 = vpop.f32.mrf.mxu0
    %v2015 = vpop.f32.mrf.mxu0
    %v2016 = vadd.f32 0.0, %v2015
    %v2017 = vpop.f32.mrf.mxu0
    %2018 = vdwg.mxu0
    %2019 = vmatprep.subr.bf16.mxu0 0
    %2020 = vmatpush1.bf16.msra.mxu0 %v1417
    %2021 = vmatprep.subr.bf16.mxu0 0
    %2022 = vmatpush1.bf16.msra.mxu0 %v1408
    %2023 = vmatprep.subr.bf16.mxu0 0
    %2024 = vmatpush1.bf16.msra.mxu0 %v1399
    %2025 = vmatprep.subr.bf16.mxu0 0
    %2026 = vmatpush1.bf16.msra.mxu0 %v1390
    %2027 = vmatprep.subr.bf16.mxu0 0
    %2028 = vmatpush1.bf16.msra.mxu0 %v1381
    %2029 = vmatprep.subr.bf16.mxu0 0
    %2030 = vmatpush1.bf16.msra.mxu0 %v1372
    %2031 = vmatprep.subr.bf16.mxu0 0
    %2032 = vmatpush1.bf16.msra.mxu0 %v1363
    %2033 = vmatprep.subr.bf16.mxu0 0
    %2034 = vmatpush1.bf16.msra.mxu0 %v1354
    %2035 = vmatprep.subr.bf16.mxu0 0
    %2036 = vmatpush2.bf16.msra.mxu0 0
    %2037 = vmatprep.subr.bf16.mxu0 0
    %2038 = vmatpush2.bf16.msra.mxu0 0
    %2039 = vmatprep.subr.bf16.mxu0 0
    %2040 = vmatpush2.bf16.msra.mxu0 0
    %2041 = vmatprep.subr.bf16.mxu0 0
    %2042 = vmatpush2.bf16.msra.mxu0 0
    %2043 = vmatprep.subr.bf16.mxu0 0
    %2044 = vmatpush2.bf16.msra.mxu0 0
    %2045 = vmatprep.subr.bf16.mxu0 0
    %2046 = vmatpush2.bf16.msra.mxu0 0
    %2047 = vmatprep.subr.bf16.mxu0 0
    %2048 = vmatpush2.bf16.msra.mxu0 0
    %2049 = vmatprep.subr.bf16.mxu0 0
    %2050 = vmatpush2.bf16.msra.mxu0 0
    %2051 = vmatprep.mubr.bf16.mxu0 0
    %2052 = vmatmul.mubr.bf16.gmra.mxu0 %v289
    %v2053 = vpop.f32.mrf.mxu0
    %v2054 = vadd.f32 %v2013, %v2053
    %v2055 = vpop.f32.mrf.mxu0
    %v2056 = vpop.f32.mrf.mxu0
    %v2057 = vadd.f32 %v2016, %v2056
    %v2058 = vpop.f32.mrf.mxu0
    %2059 = vdwg.mxu0
    %2062 = vrot.lane.b32.xlu0 %v1712, 80
    %v2063 = vpop.permute.xlu0 %2062
    %2064 = vrot.lane.b32.xlu0 %v1716, 80
    %v2065 = vpop.permute.xlu0 %2064
    %2068 = vrot.lane.b32.xlu0 %v1712, 32
    %v2069 = vpop.permute.xlu0 %2068
    %2070 = vrot.lane.b32.xlu0 %v1714, 32
    %v2071 = vpop.permute.xlu0 %2070
    %2072 = vrot.lane.b32.xlu0 %v1716, 32
    %v2073 = vpop.permute.xlu0 %2072
    %2074 = vrot.lane.b32.xlu0 %v1718, 32
    %v2075 = vpop.permute.xlu0 %2074
    %vm2076 = vcmask 261120
    %v2077 = vsel %vm2076, %v2069, %v2071
    %v2078 = vsel %vm2076, %v2073, %v2075
    %2079 = vrot.lane.b32.xlu0 %v1714, 112
    %v2080 = vpop.permute.xlu0 %2079
    %2081 = vrot.lane.b32.xlu0 %v1718, 112
    %v2082 = vpop.permute.xlu0 %2081
    %2083 = vrot.lane.b32.xlu0 %v1714, 64
    %v2084 = vpop.permute.xlu0 %2083
    %2085 = vrot.lane.b32.xlu0 %v1718, 64
    %v2086 = vpop.permute.xlu0 %2085
    %2089 = vrot.lane.b32.xlu0 %v1714, 16
    %v2090 = vpop.permute.xlu0 %2089
    %2091 = vrot.lane.b32.xlu0 %v1798, 16
    %v2092 = vpop.permute.xlu0 %2091
    %2093 = vrot.lane.b32.xlu0 %v1718, 16
    %v2094 = vpop.permute.xlu0 %2093
    %2095 = vrot.lane.b32.xlu0 %v1802, 16
    %v2096 = vpop.permute.xlu0 %2095
    %vm2097 = vcmask 130048
    %v2098 = vsel %vm2097, %v2090, %v2092
    %v2099 = vsel %vm2097, %v2094, %v2096
    %2100 = vrot.lane.b32.xlu0 %v1798, 96
    %v2101 = vpop.permute.xlu0 %2100
    %2102 = vrot.lane.b32.xlu0 %v1802, 96
    %v2103 = vpop.permute.xlu0 %2102
    %2104 = vrot.lane.b32.xlu0 %v1798, 48
    %v2105 = vpop.permute.xlu0 %2104
    %2106 = vrot.lane.b32.xlu0 %v1802, 48
    %v2107 = vpop.permute.xlu0 %2106
    %2110 = vrot.lane.b32.xlu0 %v1800, 80
    %v2111 = vpop.permute.xlu0 %2110
    %2112 = vrot.lane.b32.xlu0 %v1804, 80
    %v2113 = vpop.permute.xlu0 %2112
    %2116 = vrot.lane.b32.xlu0 %v1800, 32
    %v2117 = vpop.permute.xlu0 %2116
    %2118 = vrot.lane.b32.xlu0 %v1884, 32
    %v2119 = vpop.permute.xlu0 %2118
    %2120 = vrot.lane.b32.xlu0 %v1804, 32
    %v2121 = vpop.permute.xlu0 %2120
    %2122 = vrot.lane.b32.xlu0 %v1888, 32
    %v2123 = vpop.permute.xlu0 %2122
    %v2124 = vsel %vm2076, %v2117, %v2119
    %v2125 = vsel %vm2076, %v2121, %v2123
    %2126 = vrot.lane.b32.xlu0 %v1884, 112
    %v2127 = vpop.permute.xlu0 %2126
    %2128 = vrot.lane.b32.xlu0 %v1888, 112
    %v2129 = vpop.permute.xlu0 %2128
    %2130 = vrot.lane.b32.xlu0 %v1884, 64
    %v2131 = vpop.permute.xlu0 %2130
    %2132 = vrot.lane.b32.xlu0 %v1888, 64
    %v2133 = vpop.permute.xlu0 %2132
    %2136 = vrot.lane.b32.xlu0 %v1884, 16
    %v2137 = vpop.permute.xlu0 %2136
    %2138 = vrot.lane.b32.xlu0 %v1886, 16
    %v2139 = vpop.permute.xlu0 %2138
    %2140 = vrot.lane.b32.xlu0 %v1888, 16
    %v2141 = vpop.permute.xlu0 %2140
    %2142 = vrot.lane.b32.xlu0 %v1890, 16
    %v2143 = vpop.permute.xlu0 %2142
    %v2144 = vsel %vm2097, %v2137, %v2139
    %v2145 = vsel %vm2097, %v2141, %v2143
    %2146 = vrot.lane.b32.xlu0 %v1886, 96
    %v2147 = vpop.permute.xlu0 %2146
    %2148 = vrot.lane.b32.xlu0 %v1890, 96
    %v2149 = vpop.permute.xlu0 %2148
    %2150 = vrot.lane.b32.xlu0 %v1886, 48
    %v2151 = vpop.permute.xlu0 %2150
    %2152 = vrot.lane.b32.xlu0 %v1890, 48
    %v2153 = vpop.permute.xlu0 %2152
    %2156 = vrot.lane.b32.xlu0 %v1970, 80
    %v2157 = vpop.permute.xlu0 %2156
    %2158 = vrot.lane.b32.xlu0 %v1974, 80
    %v2159 = vpop.permute.xlu0 %2158
    %2164 = vrot.lane.b32.xlu0 %v1970, 32
    %v2165 = vpop.permute.xlu0 %2164
    %2166 = vrot.lane.b32.xlu0 %v1972, 32
    %v2167 = vpop.permute.xlu0 %2166
    %2168 = vrot.lane.b32.xlu0 %v1974, 32
    %v2169 = vpop.permute.xlu0 %2168
    %2170 = vrot.lane.b32.xlu0 %v1976, 32
    %v2171 = vpop.permute.xlu0 %2170
    %v2172 = vsel %vm2076, %v2165, %v2167
    %v2173 = vsel %vm2076, %v2169, %v2171
    %2176 = vrot.lane.b32.xlu0 %v1972, 112
    %v2177 = vpop.permute.xlu0 %2176
    %2178 = vrot.lane.b32.xlu0 %v1976, 112
    %v2179 = vpop.permute.xlu0 %2178
    %2182 = vrot.lane.b32.xlu0 %v1972, 64
    %v2183 = vpop.permute.xlu0 %2182
    %2184 = vrot.lane.b32.xlu0 %v1976, 64
    %v2185 = vpop.permute.xlu0 %2184
    %2190 = vrot.lane.b32.xlu0 %v1972, 16
    %v2191 = vpop.permute.xlu0 %2190
    %2192 = vrot.lane.b32.xlu0 %v2054, 16
    %v2193 = vpop.permute.xlu0 %2192
    %2194 = vrot.lane.b32.xlu0 %v1976, 16
    %v2195 = vpop.permute.xlu0 %2194
    %2196 = vrot.lane.b32.xlu0 %v2057, 16
    %v2197 = vpop.permute.xlu0 %2196
    %v2198 = vsel %vm2097, %v2191, %v2193
    %v2199 = vsel %vm2097, %v2195, %v2197
    %2202 = vrot.lane.b32.xlu0 %v2054, 96
    %v2203 = vpop.permute.xlu0 %2202
    %2204 = vrot.lane.b32.xlu0 %v2057, 96
    %v2205 = vpop.permute.xlu0 %2204
    %2208 = vrot.lane.b32.xlu0 %v2054, 48
    %v2209 = vpop.permute.xlu0 %2208
    %2210 = vrot.lane.b32.xlu0 %v2057, 48
    %v2211 = vpop.permute.xlu0 %2210
    %vm2214 = vcmask 392192
    %v2215 = vsel %vm2214, %v1712, 0
    %v2217 = vsel %vm2214, %v1800, 0
    %2219 = vmatprep.subr.mxu0 0.0
    %2220 = vmatpush1.xpose.msra.mxu0 0.0
    %2221 = vmatprep.subr.mxu0 0.0
    %2222 = vmatpush1.xpose.msra.mxu0 0.0
    %2223 = vmatprep.subr.mxu0 0.0
    %2224 = vmatpush1.xpose.msra.mxu0 0.0
    %2225 = vmatprep.subr.mxu0 0.0
    %2226 = vmatpush1.xpose.msra.mxu0 0.0
    %2227 = vmatprep.subr.mxu0 0.0
    %2228 = vmatpush1.xpose.msra.mxu0 0.0
    %2229 = vmatprep.subr.mxu0 0.0
    %2230 = vmatpush1.xpose.msra.mxu0 0.0
    %2231 = vmatprep.subr.mxu0 0.0
    %2232 = vmatpush1.xpose.msra.mxu0 0.0
    %2233 = vmatprep.subr.mxu0 0.0
    %2234 = vmatpush1.xpose.msra.mxu0 0.0
    %2235 = vmatprep.subr.mxu0 0.0
    %2236 = vmatpush1.xpose.msra.mxu0 0.0
    %2237 = vmatprep.subr.mxu0 0.0
    %2238 = vmatpush1.xpose.msra.mxu0 0.0
    %2239 = vmatprep.subr.mxu0 0.0
    %2240 = vmatpush1.xpose.msra.mxu0 0.0
    %2241 = vmatprep.subr.mxu0 0.0
    %2242 = vmatpush1.xpose.msra.mxu0 0.0
    %2243 = vmatprep.subr.mxu0 0.0
    %2244 = vmatpush1.xpose.msra.mxu0 0.0
    %2245 = vmatprep.subr.mxu0 0.0
    %2246 = vmatpush1.xpose.msra.mxu0 0.0
    %2247 = vmatprep.subr.mxu0 0.0
    %2248 = vmatpush1.xpose.msra.mxu0 0.0
    %2249 = vmatprep.subr.mxu0 0.0
    %2250 = vmatpush1.xpose.msra.mxu0 %v2217
    %2251 = vmatprep.subr.mxu0 0.0
    %2252 = vmatpush2.xpose.msra.mxu0 0.0
    %2253 = vmatprep.subr.mxu0 0.0
    %2254 = vmatpush2.xpose.msra.mxu0 0.0
    %2255 = vmatprep.subr.mxu0 0.0
    %2256 = vmatpush2.xpose.msra.mxu0 0.0
    %2257 = vmatprep.subr.mxu0 0.0
    %2258 = vmatpush2.xpose.msra.mxu0 0.0
    %2259 = vmatprep.subr.mxu0 0.0
    %2260 = vmatpush2.xpose.msra.mxu0 0.0
    %2261 = vmatprep.subr.mxu0 0.0
    %2262 = vmatpush2.xpose.msra.mxu0 0.0
    %2263 = vmatprep.subr.mxu0 0.0
    %2264 = vmatpush2.xpose.msra.mxu0 0.0
    %2265 = vmatprep.subr.mxu0 0.0
    %2266 = vmatpush2.xpose.msra.mxu0 0.0
    %2267 = vmatprep.subr.mxu0 0.0
    %2268 = vmatpush2.xpose.msra.mxu0 0.0
    %2269 = vmatprep.subr.mxu0 0.0
    %2270 = vmatpush2.xpose.msra.mxu0 0.0
    %2271 = vmatprep.subr.mxu0 0.0
    %2272 = vmatpush2.xpose.msra.mxu0 0.0
    %2273 = vmatprep.subr.mxu0 0.0
    %2274 = vmatpush2.xpose.msra.mxu0 0.0
    %2275 = vmatprep.subr.mxu0 0.0
    %2276 = vmatpush2.xpose.msra.mxu0 0.0
    %2277 = vmatprep.subr.mxu0 0.0
    %2278 = vmatpush2.xpose.msra.mxu0 0.0
    %2279 = vmatprep.subr.mxu0 0.0
    %2280 = vmatpush2.xpose.msra.mxu0 0.0
    %2281 = vmatprep.subr.mxu0 0.0
    %2282 = vmatpush2.xpose.msra.mxu0 0.0
    %2283 = vmatprep.mubr.f32.mxu0 0.0
    %2284 = vmatmul.mubr.f32.gmra.mxu0 %v2215
    %v2285 = vpop.f32.mrf.mxu0
    %v2286 = vadd.f32 0.0, %v2285
    %v2287 = vpop.f32.mrf.mxu0
    %2288 = vdwg.mxu0
    %v2289 = vsel %vm2214, %v1716, 0
    %v2291 = vsel %vm2214, %v1804, 0
    %2293 = vmatprep.subr.mxu0 0.0
    %2294 = vmatpush1.xpose.msra.mxu0 0.0
    %2295 = vmatprep.subr.mxu0 0.0
    %2296 = vmatpush1.xpose.msra.mxu0 0.0
    %2297 = vmatprep.subr.mxu0 0.0
    %2298 = vmatpush1.xpose.msra.mxu0 0.0
    %2299 = vmatprep.subr.mxu0 0.0
    %2300 = vmatpush1.xpose.msra.mxu0 0.0
    %2301 = vmatprep.subr.mxu0 0.0
    %2302 = vmatpush1.xpose.msra.mxu0 0.0
    %2303 = vmatprep.subr.mxu0 0.0
    %2304 = vmatpush1.xpose.msra.mxu0 0.0
    %2305 = vmatprep.subr.mxu0 0.0
    %2306 = vmatpush1.xpose.msra.mxu0 0.0
    %2307 = vmatprep.subr.mxu0 0.0
    %2308 = vmatpush1.xpose.msra.mxu0 0.0
    %2309 = vmatprep.subr.mxu0 0.0
    %2310 = vmatpush1.xpose.msra.mxu0 0.0
    %2311 = vmatprep.subr.mxu0 0.0
    %2312 = vmatpush1.xpose.msra.mxu0 0.0
    %2313 = vmatprep.subr.mxu0 0.0
    %2314 = vmatpush1.xpose.msra.mxu0 0.0
    %2315 = vmatprep.subr.mxu0 0.0
    %2316 = vmatpush1.xpose.msra.mxu0 0.0
    %2317 = vmatprep.subr.mxu0 0.0
    %2318 = vmatpush1.xpose.msra.mxu0 0.0
    %2319 = vmatprep.subr.mxu0 0.0
    %2320 = vmatpush1.xpose.msra.mxu0 0.0
    %2321 = vmatprep.subr.mxu0 0.0
    %2322 = vmatpush1.xpose.msra.mxu0 0.0
    %2323 = vmatprep.subr.mxu0 0.0
    %2324 = vmatpush1.xpose.msra.mxu0 %v2291
    %2325 = vmatprep.subr.mxu0 0.0
    %2326 = vmatpush2.xpose.msra.mxu0 0.0
    %2327 = vmatprep.subr.mxu0 0.0
    %2328 = vmatpush2.xpose.msra.mxu0 0.0
    %2329 = vmatprep.subr.mxu0 0.0
    %2330 = vmatpush2.xpose.msra.mxu0 0.0
    %2331 = vmatprep.subr.mxu0 0.0
    %2332 = vmatpush2.xpose.msra.mxu0 0.0
    %2333 = vmatprep.subr.mxu0 0.0
    %2334 = vmatpush2.xpose.msra.mxu0 0.0
    %2335 = vmatprep.subr.mxu0 0.0
    %2336 = vmatpush2.xpose.msra.mxu0 0.0
    %2337 = vmatprep.subr.mxu0 0.0
    %2338 = vmatpush2.xpose.msra.mxu0 0.0
    %2339 = vmatprep.subr.mxu0 0.0
    %2340 = vmatpush2.xpose.msra.mxu0 0.0
    %2341 = vmatprep.subr.mxu0 0.0
    %2342 = vmatpush2.xpose.msra.mxu0 0.0
    %2343 = vmatprep.subr.mxu0 0.0
    %2344 = vmatpush2.xpose.msra.mxu0 0.0
    %2345 = vmatprep.subr.mxu0 0.0
    %2346 = vmatpush2.xpose.msra.mxu0 0.0
    %2347 = vmatprep.subr.mxu0 0.0
    %2348 = vmatpush2.xpose.msra.mxu0 0.0
    %2349 = vmatprep.subr.mxu0 0.0
    %2350 = vmatpush2.xpose.msra.mxu0 0.0
    %2351 = vmatprep.subr.mxu0 0.0
    %2352 = vmatpush2.xpose.msra.mxu0 0.0
    %2353 = vmatprep.subr.mxu0 0.0
    %2354 = vmatpush2.xpose.msra.mxu0 0.0
    %2355 = vmatprep.subr.mxu0 0.0
    %2356 = vmatpush2.xpose.msra.mxu0 0.0
    %2357 = vmatprep.mubr.f32.mxu0 0.0
    %2358 = vmatmul.mubr.f32.gmra.mxu0 %v2289
    %v2359 = vpop.f32.mrf.mxu0
    %v2360 = vadd.f32 0.0, %v2359
    %v2361 = vpop.f32.mrf.mxu0
    %2362 = vdwg.mxu0
    %v2363 = vsel %vm2214, %v2063, 0
    %v2365 = vsel %vm2214, %v2111, 0
    %2367 = vmatprep.subr.mxu0 0.0
    %2368 = vmatpush1.xpose.msra.mxu0 0.0
    %2369 = vmatprep.subr.mxu0 0.0
    %2370 = vmatpush1.xpose.msra.mxu0 0.0
    %2371 = vmatprep.subr.mxu0 0.0
    %2372 = vmatpush1.xpose.msra.mxu0 0.0
    %2373 = vmatprep.subr.mxu0 0.0
    %2374 = vmatpush1.xpose.msra.mxu0 0.0
    %2375 = vmatprep.subr.mxu0 0.0
    %2376 = vmatpush1.xpose.msra.mxu0 0.0
    %2377 = vmatprep.subr.mxu0 0.0
    %2378 = vmatpush1.xpose.msra.mxu0 0.0
    %2379 = vmatprep.subr.mxu0 0.0
    %2380 = vmatpush1.xpose.msra.mxu0 0.0
    %2381 = vmatprep.subr.mxu0 0.0
    %2382 = vmatpush1.xpose.msra.mxu0 0.0
    %2383 = vmatprep.subr.mxu0 0.0
    %2384 = vmatpush1.xpose.msra.mxu0 0.0
    %2385 = vmatprep.subr.mxu0 0.0
    %2386 = vmatpush1.xpose.msra.mxu0 0.0
    %2387 = vmatprep.subr.mxu0 0.0
    %2388 = vmatpush1.xpose.msra.mxu0 0.0
    %2389 = vmatprep.subr.mxu0 0.0
    %2390 = vmatpush1.xpose.msra.mxu0 0.0
    %2391 = vmatprep.subr.mxu0 0.0
    %2392 = vmatpush1.xpose.msra.mxu0 0.0
    %2393 = vmatprep.subr.mxu0 0.0
    %2394 = vmatpush1.xpose.msra.mxu0 0.0
    %2395 = vmatprep.subr.mxu0 0.0
    %2396 = vmatpush1.xpose.msra.mxu0 0.0
    %2397 = vmatprep.subr.mxu0 0.0
    %2398 = vmatpush1.xpose.msra.mxu0 %v2365
    %2399 = vmatprep.subr.mxu0 0.0
    %2400 = vmatpush2.xpose.msra.mxu0 0.0
    %2401 = vmatprep.subr.mxu0 0.0
    %2402 = vmatpush2.xpose.msra.mxu0 0.0
    %2403 = vmatprep.subr.mxu0 0.0
    %2404 = vmatpush2.xpose.msra.mxu0 0.0
    %2405 = vmatprep.subr.mxu0 0.0
    %2406 = vmatpush2.xpose.msra.mxu0 0.0
    %2407 = vmatprep.subr.mxu0 0.0
    %2408 = vmatpush2.xpose.msra.mxu0 0.0
    %2409 = vmatprep.subr.mxu0 0.0
    %2410 = vmatpush2.xpose.msra.mxu0 0.0
    %2411 = vmatprep.subr.mxu0 0.0
    %2412 = vmatpush2.xpose.msra.mxu0 0.0
    %2413 = vmatprep.subr.mxu0 0.0
    %2414 = vmatpush2.xpose.msra.mxu0 0.0
    %2415 = vmatprep.subr.mxu0 0.0
    %2416 = vmatpush2.xpose.msra.mxu0 0.0
    %2417 = vmatprep.subr.mxu0 0.0
    %2418 = vmatpush2.xpose.msra.mxu0 0.0
    %2419 = vmatprep.subr.mxu0 0.0
    %2420 = vmatpush2.xpose.msra.mxu0 0.0
    %2421 = vmatprep.subr.mxu0 0.0
    %2422 = vmatpush2.xpose.msra.mxu0 0.0
    %2423 = vmatprep.subr.mxu0 0.0
    %2424 = vmatpush2.xpose.msra.mxu0 0.0
    %2425 = vmatprep.subr.mxu0 0.0
    %2426 = vmatpush2.xpose.msra.mxu0 0.0
    %2427 = vmatprep.subr.mxu0 0.0
    %2428 = vmatpush2.xpose.msra.mxu0 0.0
    %2429 = vmatprep.subr.mxu0 0.0
    %2430 = vmatpush2.xpose.msra.mxu0 0.0
    %2431 = vmatprep.mubr.f32.mxu0 0.0
    %2432 = vmatmul.mubr.f32.gmra.mxu0 %v2363
    %v2433 = vpop.f32.mrf.mxu0
    %v2434 = vadd.f32 0.0, %v2433
    %v2435 = vpop.f32.mrf.mxu0
    %2436 = vdwg.mxu0
    %v2437 = vsel %vm2214, %v2065, 0
    %v2439 = vsel %vm2214, %v2113, 0
    %2441 = vmatprep.subr.mxu0 0.0
    %2442 = vmatpush1.xpose.msra.mxu0 0.0
    %2443 = vmatprep.subr.mxu0 0.0
    %2444 = vmatpush1.xpose.msra.mxu0 0.0
    %2445 = vmatprep.subr.mxu0 0.0
    %2446 = vmatpush1.xpose.msra.mxu0 0.0
    %2447 = vmatprep.subr.mxu0 0.0
    %2448 = vmatpush1.xpose.msra.mxu0 0.0
    %2449 = vmatprep.subr.mxu0 0.0
    %2450 = vmatpush1.xpose.msra.mxu0 0.0
    %2451 = vmatprep.subr.mxu0 0.0
    %2452 = vmatpush1.xpose.msra.mxu0 0.0
    %2453 = vmatprep.subr.mxu0 0.0
    %2454 = vmatpush1.xpose.msra.mxu0 0.0
    %2455 = vmatprep.subr.mxu0 0.0
    %2456 = vmatpush1.xpose.msra.mxu0 0.0
    %2457 = vmatprep.subr.mxu0 0.0
    %2458 = vmatpush1.xpose.msra.mxu0 0.0
    %2459 = vmatprep.subr.mxu0 0.0
    %2460 = vmatpush1.xpose.msra.mxu0 0.0
    %2461 = vmatprep.subr.mxu0 0.0
    %2462 = vmatpush1.xpose.msra.mxu0 0.0
    %2463 = vmatprep.subr.mxu0 0.0
    %2464 = vmatpush1.xpose.msra.mxu0 0.0
    %2465 = vmatprep.subr.mxu0 0.0
    %2466 = vmatpush1.xpose.msra.mxu0 0.0
    %2467 = vmatprep.subr.mxu0 0.0
    %2468 = vmatpush1.xpose.msra.mxu0 0.0
    %2469 = vmatprep.subr.mxu0 0.0
    %2470 = vmatpush1.xpose.msra.mxu0 0.0
    %2471 = vmatprep.subr.mxu0 0.0
    %2472 = vmatpush1.xpose.msra.mxu0 %v2439
    %2473 = vmatprep.subr.mxu0 0.0
    %2474 = vmatpush2.xpose.msra.mxu0 0.0
    %2475 = vmatprep.subr.mxu0 0.0
    %2476 = vmatpush2.xpose.msra.mxu0 0.0
    %2477 = vmatprep.subr.mxu0 0.0
    %2478 = vmatpush2.xpose.msra.mxu0 0.0
    %2479 = vmatprep.subr.mxu0 0.0
    %2480 = vmatpush2.xpose.msra.mxu0 0.0
    %2481 = vmatprep.subr.mxu0 0.0
    %2482 = vmatpush2.xpose.msra.mxu0 0.0
    %2483 = vmatprep.subr.mxu0 0.0
    %2484 = vmatpush2.xpose.msra.mxu0 0.0
    %2485 = vmatprep.subr.mxu0 0.0
    %2486 = vmatpush2.xpose.msra.mxu0 0.0
    %2487 = vmatprep.subr.mxu0 0.0
    %2488 = vmatpush2.xpose.msra.mxu0 0.0
    %2489 = vmatprep.subr.mxu0 0.0
    %2490 = vmatpush2.xpose.msra.mxu0 0.0
    %2491 = vmatprep.subr.mxu0 0.0
    %2492 = vmatpush2.xpose.msra.mxu0 0.0
    %2493 = vmatprep.subr.mxu0 0.0
    %2494 = vmatpush2.xpose.msra.mxu0 0.0
    %2495 = vmatprep.subr.mxu0 0.0
    %2496 = vmatpush2.xpose.msra.mxu0 0.0
    %2497 = vmatprep.subr.mxu0 0.0
    %2498 = vmatpush2.xpose.msra.mxu0 0.0
    %2499 = vmatprep.subr.mxu0 0.0
    %2500 = vmatpush2.xpose.msra.mxu0 0.0
    %2501 = vmatprep.subr.mxu0 0.0
    %2502 = vmatpush2.xpose.msra.mxu0 0.0
    %2503 = vmatprep.subr.mxu0 0.0
    %2504 = vmatpush2.xpose.msra.mxu0 0.0
    %2505 = vmatprep.mubr.f32.mxu0 0.0
    %2506 = vmatmul.mubr.f32.gmra.mxu0 %v2437
    %v2507 = vpop.f32.mrf.mxu0
    %v2508 = vadd.f32 0.0, %v2507
    %v2509 = vpop.f32.mrf.mxu0
    %2510 = vdwg.mxu0
    %v2511 = vsel %vm2214, %v2077, 0
    %v2513 = vsel %vm2214, %v2124, 0
    %2515 = vmatprep.subr.mxu0 0.0
    %2516 = vmatpush1.xpose.msra.mxu0 0.0
    %2517 = vmatprep.subr.mxu0 0.0
    %2518 = vmatpush1.xpose.msra.mxu0 0.0
    %2519 = vmatprep.subr.mxu0 0.0
    %2520 = vmatpush1.xpose.msra.mxu0 0.0
    %2521 = vmatprep.subr.mxu0 0.0
    %2522 = vmatpush1.xpose.msra.mxu0 0.0
    %2523 = vmatprep.subr.mxu0 0.0
    %2524 = vmatpush1.xpose.msra.mxu0 0.0
    %2525 = vmatprep.subr.mxu0 0.0
    %2526 = vmatpush1.xpose.msra.mxu0 0.0
    %2527 = vmatprep.subr.mxu0 0.0
    %2528 = vmatpush1.xpose.msra.mxu0 0.0
    %2529 = vmatprep.subr.mxu0 0.0
    %2530 = vmatpush1.xpose.msra.mxu0 0.0
    %2531 = vmatprep.subr.mxu0 0.0
    %2532 = vmatpush1.xpose.msra.mxu0 0.0
    %2533 = vmatprep.subr.mxu0 0.0
    %2534 = vmatpush1.xpose.msra.mxu0 0.0
    %2535 = vmatprep.subr.mxu0 0.0
    %2536 = vmatpush1.xpose.msra.mxu0 0.0
    %2537 = vmatprep.subr.mxu0 0.0
    %2538 = vmatpush1.xpose.msra.mxu0 0.0
    %2539 = vmatprep.subr.mxu0 0.0
    %2540 = vmatpush1.xpose.msra.mxu0 0.0
    %2541 = vmatprep.subr.mxu0 0.0
    %2542 = vmatpush1.xpose.msra.mxu0 0.0
    %2543 = vmatprep.subr.mxu0 0.0
    %2544 = vmatpush1.xpose.msra.mxu0 0.0
    %2545 = vmatprep.subr.mxu0 0.0
    %2546 = vmatpush1.xpose.msra.mxu0 %v2513
    %2547 = vmatprep.subr.mxu0 0.0
    %2548 = vmatpush2.xpose.msra.mxu0 0.0
    %2549 = vmatprep.subr.mxu0 0.0
    %2550 = vmatpush2.xpose.msra.mxu0 0.0
    %2551 = vmatprep.subr.mxu0 0.0
    %2552 = vmatpush2.xpose.msra.mxu0 0.0
    %2553 = vmatprep.subr.mxu0 0.0
    %2554 = vmatpush2.xpose.msra.mxu0 0.0
    %2555 = vmatprep.subr.mxu0 0.0
    %2556 = vmatpush2.xpose.msra.mxu0 0.0
    %2557 = vmatprep.subr.mxu0 0.0
    %2558 = vmatpush2.xpose.msra.mxu0 0.0
    %2559 = vmatprep.subr.mxu0 0.0
    %2560 = vmatpush2.xpose.msra.mxu0 0.0
    %2561 = vmatprep.subr.mxu0 0.0
    %2562 = vmatpush2.xpose.msra.mxu0 0.0
    %2563 = vmatprep.subr.mxu0 0.0
    %2564 = vmatpush2.xpose.msra.mxu0 0.0
    %2565 = vmatprep.subr.mxu0 0.0
    %2566 = vmatpush2.xpose.msra.mxu0 0.0
    %2567 = vmatprep.subr.mxu0 0.0
    %2568 = vmatpush2.xpose.msra.mxu0 0.0
    %2569 = vmatprep.subr.mxu0 0.0
    %2570 = vmatpush2.xpose.msra.mxu0 0.0
    %2571 = vmatprep.subr.mxu0 0.0
    %2572 = vmatpush2.xpose.msra.mxu0 0.0
    %2573 = vmatprep.subr.mxu0 0.0
    %2574 = vmatpush2.xpose.msra.mxu0 0.0
    %2575 = vmatprep.subr.mxu0 0.0
    %2576 = vmatpush2.xpose.msra.mxu0 0.0
    %2577 = vmatprep.subr.mxu0 0.0
    %2578 = vmatpush2.xpose.msra.mxu0 0.0
    %2579 = vmatprep.mubr.f32.mxu0 0.0
    %2580 = vmatmul.mubr.f32.gmra.mxu0 %v2511
    %v2581 = vpop.f32.mrf.mxu0
    %v2582 = vadd.f32 0.0, %v2581
    %v2583 = vpop.f32.mrf.mxu0
    %2584 = vdwg.mxu0
    %v2585 = vsel %vm2214, %v2078, 0
    %v2587 = vsel %vm2214, %v2125, 0
    %2589 = vmatprep.subr.mxu0 0.0
    %2590 = vmatpush1.xpose.msra.mxu0 0.0
    %2591 = vmatprep.subr.mxu0 0.0
    %2592 = vmatpush1.xpose.msra.mxu0 0.0
    %2593 = vmatprep.subr.mxu0 0.0
    %2594 = vmatpush1.xpose.msra.mxu0 0.0
    %2595 = vmatprep.subr.mxu0 0.0
    %2596 = vmatpush1.xpose.msra.mxu0 0.0
    %2597 = vmatprep.subr.mxu0 0.0
    %2598 = vmatpush1.xpose.msra.mxu0 0.0
    %2599 = vmatprep.subr.mxu0 0.0
    %2600 = vmatpush1.xpose.msra.mxu0 0.0
    %2601 = vmatprep.subr.mxu0 0.0
    %2602 = vmatpush1.xpose.msra.mxu0 0.0
    %2603 = vmatprep.subr.mxu0 0.0
    %2604 = vmatpush1.xpose.msra.mxu0 0.0
    %2605 = vmatprep.subr.mxu0 0.0
    %2606 = vmatpush1.xpose.msra.mxu0 0.0
    %2607 = vmatprep.subr.mxu0 0.0
    %2608 = vmatpush1.xpose.msra.mxu0 0.0
    %2609 = vmatprep.subr.mxu0 0.0
    %2610 = vmatpush1.xpose.msra.mxu0 0.0
    %2611 = vmatprep.subr.mxu0 0.0
    %2612 = vmatpush1.xpose.msra.mxu0 0.0
    %2613 = vmatprep.subr.mxu0 0.0
    %2614 = vmatpush1.xpose.msra.mxu0 0.0
    %2615 = vmatprep.subr.mxu0 0.0
    %2616 = vmatpush1.xpose.msra.mxu0 0.0
    %2617 = vmatprep.subr.mxu0 0.0
    %2618 = vmatpush1.xpose.msra.mxu0 0.0
    %2619 = vmatprep.subr.mxu0 0.0
    %2620 = vmatpush1.xpose.msra.mxu0 %v2587
    %2621 = vmatprep.subr.mxu0 0.0
    %2622 = vmatpush2.xpose.msra.mxu0 0.0
    %2623 = vmatprep.subr.mxu0 0.0
    %2624 = vmatpush2.xpose.msra.mxu0 0.0
    %2625 = vmatprep.subr.mxu0 0.0
    %2626 = vmatpush2.xpose.msra.mxu0 0.0
    %2627 = vmatprep.subr.mxu0 0.0
    %2628 = vmatpush2.xpose.msra.mxu0 0.0
    %2629 = vmatprep.subr.mxu0 0.0
    %2630 = vmatpush2.xpose.msra.mxu0 0.0
    %2631 = vmatprep.subr.mxu0 0.0
    %2632 = vmatpush2.xpose.msra.mxu0 0.0
    %2633 = vmatprep.subr.mxu0 0.0
    %2634 = vmatpush2.xpose.msra.mxu0 0.0
    %2635 = vmatprep.subr.mxu0 0.0
    %2636 = vmatpush2.xpose.msra.mxu0 0.0
    %2637 = vmatprep.subr.mxu0 0.0
    %2638 = vmatpush2.xpose.msra.mxu0 0.0
    %2639 = vmatprep.subr.mxu0 0.0
    %2640 = vmatpush2.xpose.msra.mxu0 0.0
    %2641 = vmatprep.subr.mxu0 0.0
    %2642 = vmatpush2.xpose.msra.mxu0 0.0
    %2643 = vmatprep.subr.mxu0 0.0
    %2644 = vmatpush2.xpose.msra.mxu0 0.0
    %2645 = vmatprep.subr.mxu0 0.0
    %2646 = vmatpush2.xpose.msra.mxu0 0.0
    %2647 = vmatprep.subr.mxu0 0.0
    %2648 = vmatpush2.xpose.msra.mxu0 0.0
    %2649 = vmatprep.subr.mxu0 0.0
    %2650 = vmatpush2.xpose.msra.mxu0 0.0
    %2651 = vmatprep.subr.mxu0 0.0
    %2652 = vmatpush2.xpose.msra.mxu0 0.0
    %2653 = vmatprep.mubr.f32.mxu0 0.0
    %2654 = vmatmul.mubr.f32.gmra.mxu0 %v2585
    %v2655 = vpop.f32.mrf.mxu0
    %v2656 = vadd.f32 0.0, %v2655
    %v2657 = vpop.f32.mrf.mxu0
    %2658 = vdwg.mxu0
    %v2659 = vsel %vm2214, %v2080, 0
    %v2661 = vsel %vm2214, %v2127, 0
    %2663 = vmatprep.subr.mxu0 0.0
    %2664 = vmatpush1.xpose.msra.mxu0 0.0
    %2665 = vmatprep.subr.mxu0 0.0
    %2666 = vmatpush1.xpose.msra.mxu0 0.0
    %2667 = vmatprep.subr.mxu0 0.0
    %2668 = vmatpush1.xpose.msra.mxu0 0.0
    %2669 = vmatprep.subr.mxu0 0.0
    %2670 = vmatpush1.xpose.msra.mxu0 0.0
    %2671 = vmatprep.subr.mxu0 0.0
    %2672 = vmatpush1.xpose.msra.mxu0 0.0
    %2673 = vmatprep.subr.mxu0 0.0
    %2674 = vmatpush1.xpose.msra.mxu0 0.0
    %2675 = vmatprep.subr.mxu0 0.0
    %2676 = vmatpush1.xpose.msra.mxu0 0.0
    %2677 = vmatprep.subr.mxu0 0.0
    %2678 = vmatpush1.xpose.msra.mxu0 0.0
    %2679 = vmatprep.subr.mxu0 0.0
    %2680 = vmatpush1.xpose.msra.mxu0 0.0
    %2681 = vmatprep.subr.mxu0 0.0
    %2682 = vmatpush1.xpose.msra.mxu0 0.0
    %2683 = vmatprep.subr.mxu0 0.0
    %2684 = vmatpush1.xpose.msra.mxu0 0.0
    %2685 = vmatprep.subr.mxu0 0.0
    %2686 = vmatpush1.xpose.msra.mxu0 0.0
    %2687 = vmatprep.subr.mxu0 0.0
    %2688 = vmatpush1.xpose.msra.mxu0 0.0
    %2689 = vmatprep.subr.mxu0 0.0
    %2690 = vmatpush1.xpose.msra.mxu0 0.0
    %2691 = vmatprep.subr.mxu0 0.0
    %2692 = vmatpush1.xpose.msra.mxu0 0.0
    %2693 = vmatprep.subr.mxu0 0.0
    %2694 = vmatpush1.xpose.msra.mxu0 %v2661
    %2695 = vmatprep.subr.mxu0 0.0
    %2696 = vmatpush2.xpose.msra.mxu0 0.0
    %2697 = vmatprep.subr.mxu0 0.0
    %2698 = vmatpush2.xpose.msra.mxu0 0.0
    %2699 = vmatprep.subr.mxu0 0.0
    %2700 = vmatpush2.xpose.msra.mxu0 0.0
    %2701 = vmatprep.subr.mxu0 0.0
    %2702 = vmatpush2.xpose.msra.mxu0 0.0
    %2703 = vmatprep.subr.mxu0 0.0
    %2704 = vmatpush2.xpose.msra.mxu0 0.0
    %2705 = vmatprep.subr.mxu0 0.0
    %2706 = vmatpush2.xpose.msra.mxu0 0.0
    %2707 = vmatprep.subr.mxu0 0.0
    %2708 = vmatpush2.xpose.msra.mxu0 0.0
    %2709 = vmatprep.subr.mxu0 0.0
    %2710 = vmatpush2.xpose.msra.mxu0 0.0
    %2711 = vmatprep.subr.mxu0 0.0
    %2712 = vmatpush2.xpose.msra.mxu0 0.0
    %2713 = vmatprep.subr.mxu0 0.0
    %2714 = vmatpush2.xpose.msra.mxu0 0.0
    %2715 = vmatprep.subr.mxu0 0.0
    %2716 = vmatpush2.xpose.msra.mxu0 0.0
    %2717 = vmatprep.subr.mxu0 0.0
    %2718 = vmatpush2.xpose.msra.mxu0 0.0
    %2719 = vmatprep.subr.mxu0 0.0
    %2720 = vmatpush2.xpose.msra.mxu0 0.0
    %2721 = vmatprep.subr.mxu0 0.0
    %2722 = vmatpush2.xpose.msra.mxu0 0.0
    %2723 = vmatprep.subr.mxu0 0.0
    %2724 = vmatpush2.xpose.msra.mxu0 0.0
    %2725 = vmatprep.subr.mxu0 0.0
    %2726 = vmatpush2.xpose.msra.mxu0 0.0
    %2727 = vmatprep.mubr.f32.mxu0 0.0
    %2728 = vmatmul.mubr.f32.gmra.mxu0 %v2659
    %v2729 = vpop.f32.mrf.mxu0
    %v2730 = vadd.f32 0.0, %v2729
    %v2731 = vpop.f32.mrf.mxu0
    %2732 = vdwg.mxu0
    %v2733 = vsel %vm2214, %v2082, 0
    %v2735 = vsel %vm2214, %v2129, 0
    %2737 = vmatprep.subr.mxu0 0.0
    %2738 = vmatpush1.xpose.msra.mxu0 0.0
    %2739 = vmatprep.subr.mxu0 0.0
    %2740 = vmatpush1.xpose.msra.mxu0 0.0
    %2741 = vmatprep.subr.mxu0 0.0
    %2742 = vmatpush1.xpose.msra.mxu0 0.0
    %2743 = vmatprep.subr.mxu0 0.0
    %2744 = vmatpush1.xpose.msra.mxu0 0.0
    %2745 = vmatprep.subr.mxu0 0.0
    %2746 = vmatpush1.xpose.msra.mxu0 0.0
    %2747 = vmatprep.subr.mxu0 0.0
    %2748 = vmatpush1.xpose.msra.mxu0 0.0
    %2749 = vmatprep.subr.mxu0 0.0
    %2750 = vmatpush1.xpose.msra.mxu0 0.0
    %2751 = vmatprep.subr.mxu0 0.0
    %2752 = vmatpush1.xpose.msra.mxu0 0.0
    %2753 = vmatprep.subr.mxu0 0.0
    %2754 = vmatpush1.xpose.msra.mxu0 0.0
    %2755 = vmatprep.subr.mxu0 0.0
    %2756 = vmatpush1.xpose.msra.mxu0 0.0
    %2757 = vmatprep.subr.mxu0 0.0
    %2758 = vmatpush1.xpose.msra.mxu0 0.0
    %2759 = vmatprep.subr.mxu0 0.0
    %2760 = vmatpush1.xpose.msra.mxu0 0.0
    %2761 = vmatprep.subr.mxu0 0.0
    %2762 = vmatpush1.xpose.msra.mxu0 0.0
    %2763 = vmatprep.subr.mxu0 0.0
    %2764 = vmatpush1.xpose.msra.mxu0 0.0
    %2765 = vmatprep.subr.mxu0 0.0
    %2766 = vmatpush1.xpose.msra.mxu0 0.0
    %2767 = vmatprep.subr.mxu0 0.0
    %2768 = vmatpush1.xpose.msra.mxu0 %v2735
    %2769 = vmatprep.subr.mxu0 0.0
    %2770 = vmatpush2.xpose.msra.mxu0 0.0
    %2771 = vmatprep.subr.mxu0 0.0
    %2772 = vmatpush2.xpose.msra.mxu0 0.0
    %2773 = vmatprep.subr.mxu0 0.0
    %2774 = vmatpush2.xpose.msra.mxu0 0.0
    %2775 = vmatprep.subr.mxu0 0.0
    %2776 = vmatpush2.xpose.msra.mxu0 0.0
    %2777 = vmatprep.subr.mxu0 0.0
    %2778 = vmatpush2.xpose.msra.mxu0 0.0
    %2779 = vmatprep.subr.mxu0 0.0
    %2780 = vmatpush2.xpose.msra.mxu0 0.0
    %2781 = vmatprep.subr.mxu0 0.0
    %2782 = vmatpush2.xpose.msra.mxu0 0.0
    %2783 = vmatprep.subr.mxu0 0.0
    %2784 = vmatpush2.xpose.msra.mxu0 0.0
    %2785 = vmatprep.subr.mxu0 0.0
    %2786 = vmatpush2.xpose.msra.mxu0 0.0
    %2787 = vmatprep.subr.mxu0 0.0
    %2788 = vmatpush2.xpose.msra.mxu0 0.0
    %2789 = vmatprep.subr.mxu0 0.0
    %2790 = vmatpush2.xpose.msra.mxu0 0.0
    %2791 = vmatprep.subr.mxu0 0.0
    %2792 = vmatpush2.xpose.msra.mxu0 0.0
    %2793 = vmatprep.subr.mxu0 0.0
    %2794 = vmatpush2.xpose.msra.mxu0 0.0
    %2795 = vmatprep.subr.mxu0 0.0
    %2796 = vmatpush2.xpose.msra.mxu0 0.0
    %2797 = vmatprep.subr.mxu0 0.0
    %2798 = vmatpush2.xpose.msra.mxu0 0.0
    %2799 = vmatprep.subr.mxu0 0.0
    %2800 = vmatpush2.xpose.msra.mxu0 0.0
    %2801 = vmatprep.mubr.f32.mxu0 0.0
    %2802 = vmatmul.mubr.f32.gmra.mxu0 %v2733
    %v2803 = vpop.f32.mrf.mxu0
    %v2804 = vadd.f32 0.0, %v2803
    %v2805 = vpop.f32.mrf.mxu0
    %2806 = vdwg.mxu0
    %v2807 = vsel %vm2214, %v2084, 0
    %v2809 = vsel %vm2214, %v2131, 0
    %2811 = vmatprep.subr.mxu0 0.0
    %2812 = vmatpush1.xpose.msra.mxu0 0.0
    %2813 = vmatprep.subr.mxu0 0.0
    %2814 = vmatpush1.xpose.msra.mxu0 0.0
    %2815 = vmatprep.subr.mxu0 0.0
    %2816 = vmatpush1.xpose.msra.mxu0 0.0
    %2817 = vmatprep.subr.mxu0 0.0
    %2818 = vmatpush1.xpose.msra.mxu0 0.0
    %2819 = vmatprep.subr.mxu0 0.0
    %2820 = vmatpush1.xpose.msra.mxu0 0.0
    %2821 = vmatprep.subr.mxu0 0.0
    %2822 = vmatpush1.xpose.msra.mxu0 0.0
    %2823 = vmatprep.subr.mxu0 0.0
    %2824 = vmatpush1.xpose.msra.mxu0 0.0
    %2825 = vmatprep.subr.mxu0 0.0
    %2826 = vmatpush1.xpose.msra.mxu0 0.0
    %2827 = vmatprep.subr.mxu0 0.0
    %2828 = vmatpush1.xpose.msra.mxu0 0.0
    %2829 = vmatprep.subr.mxu0 0.0
    %2830 = vmatpush1.xpose.msra.mxu0 0.0
    %2831 = vmatprep.subr.mxu0 0.0
    %2832 = vmatpush1.xpose.msra.mxu0 0.0
    %2833 = vmatprep.subr.mxu0 0.0
    %2834 = vmatpush1.xpose.msra.mxu0 0.0
    %2835 = vmatprep.subr.mxu0 0.0
    %2836 = vmatpush1.xpose.msra.mxu0 0.0
    %2837 = vmatprep.subr.mxu0 0.0
    %2838 = vmatpush1.xpose.msra.mxu0 0.0
    %2839 = vmatprep.subr.mxu0 0.0
    %2840 = vmatpush1.xpose.msra.mxu0 0.0
    %2841 = vmatprep.subr.mxu0 0.0
    %2842 = vmatpush1.xpose.msra.mxu0 %v2809
    %2843 = vmatprep.subr.mxu0 0.0
    %2844 = vmatpush2.xpose.msra.mxu0 0.0
    %2845 = vmatprep.subr.mxu0 0.0
    %2846 = vmatpush2.xpose.msra.mxu0 0.0
    %2847 = vmatprep.subr.mxu0 0.0
    %2848 = vmatpush2.xpose.msra.mxu0 0.0
    %2849 = vmatprep.subr.mxu0 0.0
    %2850 = vmatpush2.xpose.msra.mxu0 0.0
    %2851 = vmatprep.subr.mxu0 0.0
    %2852 = vmatpush2.xpose.msra.mxu0 0.0
    %2853 = vmatprep.subr.mxu0 0.0
    %2854 = vmatpush2.xpose.msra.mxu0 0.0
    %2855 = vmatprep.subr.mxu0 0.0
    %2856 = vmatpush2.xpose.msra.mxu0 0.0
    %2857 = vmatprep.subr.mxu0 0.0
    %2858 = vmatpush2.xpose.msra.mxu0 0.0
    %2859 = vmatprep.subr.mxu0 0.0
    %2860 = vmatpush2.xpose.msra.mxu0 0.0
    %2861 = vmatprep.subr.mxu0 0.0
    %2862 = vmatpush2.xpose.msra.mxu0 0.0
    %2863 = vmatprep.subr.mxu0 0.0
    %2864 = vmatpush2.xpose.msra.mxu0 0.0
    %2865 = vmatprep.subr.mxu0 0.0
    %2866 = vmatpush2.xpose.msra.mxu0 0.0
    %2867 = vmatprep.subr.mxu0 0.0
    %2868 = vmatpush2.xpose.msra.mxu0 0.0
    %2869 = vmatprep.subr.mxu0 0.0
    %2870 = vmatpush2.xpose.msra.mxu0 0.0
    %2871 = vmatprep.subr.mxu0 0.0
    %2872 = vmatpush2.xpose.msra.mxu0 0.0
    %2873 = vmatprep.subr.mxu0 0.0
    %2874 = vmatpush2.xpose.msra.mxu0 0.0
    %2875 = vmatprep.mubr.f32.mxu0 0.0
    %2876 = vmatmul.mubr.f32.gmra.mxu0 %v2807
    %v2877 = vpop.f32.mrf.mxu0
    %v2878 = vadd.f32 0.0, %v2877
    %v2879 = vpop.f32.mrf.mxu0
    %2880 = vdwg.mxu0
    %v2881 = vsel %vm2214, %v2086, 0
    %v2883 = vsel %vm2214, %v2133, 0
    %2885 = vmatprep.subr.mxu0 0.0
    %2886 = vmatpush1.xpose.msra.mxu0 0.0
    %2887 = vmatprep.subr.mxu0 0.0
    %2888 = vmatpush1.xpose.msra.mxu0 0.0
    %2889 = vmatprep.subr.mxu0 0.0
    %2890 = vmatpush1.xpose.msra.mxu0 0.0
    %2891 = vmatprep.subr.mxu0 0.0
    %2892 = vmatpush1.xpose.msra.mxu0 0.0
    %2893 = vmatprep.subr.mxu0 0.0
    %2894 = vmatpush1.xpose.msra.mxu0 0.0
    %2895 = vmatprep.subr.mxu0 0.0
    %2896 = vmatpush1.xpose.msra.mxu0 0.0
    %2897 = vmatprep.subr.mxu0 0.0
    %2898 = vmatpush1.xpose.msra.mxu0 0.0
    %2899 = vmatprep.subr.mxu0 0.0
    %2900 = vmatpush1.xpose.msra.mxu0 0.0
    %2901 = vmatprep.subr.mxu0 0.0
    %2902 = vmatpush1.xpose.msra.mxu0 0.0
    %2903 = vmatprep.subr.mxu0 0.0
    %2904 = vmatpush1.xpose.msra.mxu0 0.0
    %2905 = vmatprep.subr.mxu0 0.0
    %2906 = vmatpush1.xpose.msra.mxu0 0.0
    %2907 = vmatprep.subr.mxu0 0.0
    %2908 = vmatpush1.xpose.msra.mxu0 0.0
    %2909 = vmatprep.subr.mxu0 0.0
    %2910 = vmatpush1.xpose.msra.mxu0 0.0
    %2911 = vmatprep.subr.mxu0 0.0
    %2912 = vmatpush1.xpose.msra.mxu0 0.0
    %2913 = vmatprep.subr.mxu0 0.0
    %2914 = vmatpush1.xpose.msra.mxu0 0.0
    %2915 = vmatprep.subr.mxu0 0.0
    %2916 = vmatpush1.xpose.msra.mxu0 %v2883
    %2917 = vmatprep.subr.mxu0 0.0
    %2918 = vmatpush2.xpose.msra.mxu0 0.0
    %2919 = vmatprep.subr.mxu0 0.0
    %2920 = vmatpush2.xpose.msra.mxu0 0.0
    %2921 = vmatprep.subr.mxu0 0.0
    %2922 = vmatpush2.xpose.msra.mxu0 0.0
    %2923 = vmatprep.subr.mxu0 0.0
    %2924 = vmatpush2.xpose.msra.mxu0 0.0
    %2925 = vmatprep.subr.mxu0 0.0
    %2926 = vmatpush2.xpose.msra.mxu0 0.0
    %2927 = vmatprep.subr.mxu0 0.0
    %2928 = vmatpush2.xpose.msra.mxu0 0.0
    %2929 = vmatprep.subr.mxu0 0.0
    %2930 = vmatpush2.xpose.msra.mxu0 0.0
    %2931 = vmatprep.subr.mxu0 0.0
    %2932 = vmatpush2.xpose.msra.mxu0 0.0
    %2933 = vmatprep.subr.mxu0 0.0
    %2934 = vmatpush2.xpose.msra.mxu0 0.0
    %2935 = vmatprep.subr.mxu0 0.0
    %2936 = vmatpush2.xpose.msra.mxu0 0.0
    %2937 = vmatprep.subr.mxu0 0.0
    %2938 = vmatpush2.xpose.msra.mxu0 0.0
    %2939 = vmatprep.subr.mxu0 0.0
    %2940 = vmatpush2.xpose.msra.mxu0 0.0
    %2941 = vmatprep.subr.mxu0 0.0
    %2942 = vmatpush2.xpose.msra.mxu0 0.0
    %2943 = vmatprep.subr.mxu0 0.0
    %2944 = vmatpush2.xpose.msra.mxu0 0.0
    %2945 = vmatprep.subr.mxu0 0.0
    %2946 = vmatpush2.xpose.msra.mxu0 0.0
    %2947 = vmatprep.subr.mxu0 0.0
    %2948 = vmatpush2.xpose.msra.mxu0 0.0
    %2949 = vmatprep.mubr.f32.mxu0 0.0
    %2950 = vmatmul.mubr.f32.gmra.mxu0 %v2881
    %v2951 = vpop.f32.mrf.mxu0
    %v2952 = vadd.f32 0.0, %v2951
    %v2953 = vpop.f32.mrf.mxu0
    %2954 = vdwg.mxu0
    %v2955 = vsel %vm2214, %v2098, 0
    %v2957 = vsel %vm2214, %v2144, 0
    %2959 = vmatprep.subr.mxu0 0.0
    %2960 = vmatpush1.xpose.msra.mxu0 0.0
    %2961 = vmatprep.subr.mxu0 0.0
    %2962 = vmatpush1.xpose.msra.mxu0 0.0
    %2963 = vmatprep.subr.mxu0 0.0
    %2964 = vmatpush1.xpose.msra.mxu0 0.0
    %2965 = vmatprep.subr.mxu0 0.0
    %2966 = vmatpush1.xpose.msra.mxu0 0.0
    %2967 = vmatprep.subr.mxu0 0.0
    %2968 = vmatpush1.xpose.msra.mxu0 0.0
    %2969 = vmatprep.subr.mxu0 0.0
    %2970 = vmatpush1.xpose.msra.mxu0 0.0
    %2971 = vmatprep.subr.mxu0 0.0
    %2972 = vmatpush1.xpose.msra.mxu0 0.0
    %2973 = vmatprep.subr.mxu0 0.0
    %2974 = vmatpush1.xpose.msra.mxu0 0.0
    %2975 = vmatprep.subr.mxu0 0.0
    %2976 = vmatpush1.xpose.msra.mxu0 0.0
    %2977 = vmatprep.subr.mxu0 0.0
    %2978 = vmatpush1.xpose.msra.mxu0 0.0
    %2979 = vmatprep.subr.mxu0 0.0
    %2980 = vmatpush1.xpose.msra.mxu0 0.0
    %2981 = vmatprep.subr.mxu0 0.0
    %2982 = vmatpush1.xpose.msra.mxu0 0.0
    %2983 = vmatprep.subr.mxu0 0.0
    %2984 = vmatpush1.xpose.msra.mxu0 0.0
    %2985 = vmatprep.subr.mxu0 0.0
    %2986 = vmatpush1.xpose.msra.mxu0 0.0
    %2987 = vmatprep.subr.mxu0 0.0
    %2988 = vmatpush1.xpose.msra.mxu0 0.0
    %2989 = vmatprep.subr.mxu0 0.0
    %2990 = vmatpush1.xpose.msra.mxu0 %v2957
    %2991 = vmatprep.subr.mxu0 0.0
    %2992 = vmatpush2.xpose.msra.mxu0 0.0
    %2993 = vmatprep.subr.mxu0 0.0
    %2994 = vmatpush2.xpose.msra.mxu0 0.0
    %2995 = vmatprep.subr.mxu0 0.0
    %2996 = vmatpush2.xpose.msra.mxu0 0.0
    %2997 = vmatprep.subr.mxu0 0.0
    %2998 = vmatpush2.xpose.msra.mxu0 0.0
    %2999 = vmatprep.subr.mxu0 0.0
    %3000 = vmatpush2.xpose.msra.mxu0 0.0
    %3001 = vmatprep.subr.mxu0 0.0
    %3002 = vmatpush2.xpose.msra.mxu0 0.0
    %3003 = vmatprep.subr.mxu0 0.0
    %3004 = vmatpush2.xpose.msra.mxu0 0.0
    %3005 = vmatprep.subr.mxu0 0.0
    %3006 = vmatpush2.xpose.msra.mxu0 0.0
    %3007 = vmatprep.subr.mxu0 0.0
    %3008 = vmatpush2.xpose.msra.mxu0 0.0
    %3009 = vmatprep.subr.mxu0 0.0
    %3010 = vmatpush2.xpose.msra.mxu0 0.0
    %3011 = vmatprep.subr.mxu0 0.0
    %3012 = vmatpush2.xpose.msra.mxu0 0.0
    %3013 = vmatprep.subr.mxu0 0.0
    %3014 = vmatpush2.xpose.msra.mxu0 0.0
    %3015 = vmatprep.subr.mxu0 0.0
    %3016 = vmatpush2.xpose.msra.mxu0 0.0
    %3017 = vmatprep.subr.mxu0 0.0
    %3018 = vmatpush2.xpose.msra.mxu0 0.0
    %3019 = vmatprep.subr.mxu0 0.0
    %3020 = vmatpush2.xpose.msra.mxu0 0.0
    %3021 = vmatprep.subr.mxu0 0.0
    %3022 = vmatpush2.xpose.msra.mxu0 0.0
    %3023 = vmatprep.mubr.f32.mxu0 0.0
    %3024 = vmatmul.mubr.f32.gmra.mxu0 %v2955
    %v3025 = vpop.f32.mrf.mxu0
    %v3026 = vadd.f32 0.0, %v3025
    %v3027 = vpop.f32.mrf.mxu0
    %3028 = vdwg.mxu0
    %v3029 = vsel %vm2214, %v2099, 0
    %v3031 = vsel %vm2214, %v2145, 0
    %3033 = vmatprep.subr.mxu0 0.0
    %3034 = vmatpush1.xpose.msra.mxu0 0.0
    %3035 = vmatprep.subr.mxu0 0.0
    %3036 = vmatpush1.xpose.msra.mxu0 0.0
    %3037 = vmatprep.subr.mxu0 0.0
    %3038 = vmatpush1.xpose.msra.mxu0 0.0
    %3039 = vmatprep.subr.mxu0 0.0
    %3040 = vmatpush1.xpose.msra.mxu0 0.0
    %3041 = vmatprep.subr.mxu0 0.0
    %3042 = vmatpush1.xpose.msra.mxu0 0.0
    %3043 = vmatprep.subr.mxu0 0.0
    %3044 = vmatpush1.xpose.msra.mxu0 0.0
    %3045 = vmatprep.subr.mxu0 0.0
    %3046 = vmatpush1.xpose.msra.mxu0 0.0
    %3047 = vmatprep.subr.mxu0 0.0
    %3048 = vmatpush1.xpose.msra.mxu0 0.0
    %3049 = vmatprep.subr.mxu0 0.0
    %3050 = vmatpush1.xpose.msra.mxu0 0.0
    %3051 = vmatprep.subr.mxu0 0.0
    %3052 = vmatpush1.xpose.msra.mxu0 0.0
    %3053 = vmatprep.subr.mxu0 0.0
    %3054 = vmatpush1.xpose.msra.mxu0 0.0
    %3055 = vmatprep.subr.mxu0 0.0
    %3056 = vmatpush1.xpose.msra.mxu0 0.0
    %3057 = vmatprep.subr.mxu0 0.0
    %3058 = vmatpush1.xpose.msra.mxu0 0.0
    %3059 = vmatprep.subr.mxu0 0.0
    %3060 = vmatpush1.xpose.msra.mxu0 0.0
    %3061 = vmatprep.subr.mxu0 0.0
    %3062 = vmatpush1.xpose.msra.mxu0 0.0
    %3063 = vmatprep.subr.mxu0 0.0
    %3064 = vmatpush1.xpose.msra.mxu0 %v3031
    %3065 = vmatprep.subr.mxu0 0.0
    %3066 = vmatpush2.xpose.msra.mxu0 0.0
    %3067 = vmatprep.subr.mxu0 0.0
    %3068 = vmatpush2.xpose.msra.mxu0 0.0
    %3069 = vmatprep.subr.mxu0 0.0
    %3070 = vmatpush2.xpose.msra.mxu0 0.0
    %3071 = vmatprep.subr.mxu0 0.0
    %3072 = vmatpush2.xpose.msra.mxu0 0.0
    %3073 = vmatprep.subr.mxu0 0.0
    %3074 = vmatpush2.xpose.msra.mxu0 0.0
    %3075 = vmatprep.subr.mxu0 0.0
    %3076 = vmatpush2.xpose.msra.mxu0 0.0
    %3077 = vmatprep.subr.mxu0 0.0
    %3078 = vmatpush2.xpose.msra.mxu0 0.0
    %3079 = vmatprep.subr.mxu0 0.0
    %3080 = vmatpush2.xpose.msra.mxu0 0.0
    %3081 = vmatprep.subr.mxu0 0.0
    %3082 = vmatpush2.xpose.msra.mxu0 0.0
    %3083 = vmatprep.subr.mxu0 0.0
    %3084 = vmatpush2.xpose.msra.mxu0 0.0
    %3085 = vmatprep.subr.mxu0 0.0
    %3086 = vmatpush2.xpose.msra.mxu0 0.0
    %3087 = vmatprep.subr.mxu0 0.0
    %3088 = vmatpush2.xpose.msra.mxu0 0.0
    %3089 = vmatprep.subr.mxu0 0.0
    %3090 = vmatpush2.xpose.msra.mxu0 0.0
    %3091 = vmatprep.subr.mxu0 0.0
    %3092 = vmatpush2.xpose.msra.mxu0 0.0
    %3093 = vmatprep.subr.mxu0 0.0
    %3094 = vmatpush2.xpose.msra.mxu0 0.0
    %3095 = vmatprep.subr.mxu0 0.0
    %3096 = vmatpush2.xpose.msra.mxu0 0.0
    %3097 = vmatprep.mubr.f32.mxu0 0.0
    %3098 = vmatmul.mubr.f32.gmra.mxu0 %v3029
    %v3099 = vpop.f32.mrf.mxu0
    %v3100 = vadd.f32 0.0, %v3099
    %v3101 = vpop.f32.mrf.mxu0
    %3102 = vdwg.mxu0
    %v3103 = vsel %vm2214, %v2101, 0
    %v3105 = vsel %vm2214, %v2147, 0
    %3107 = vmatprep.subr.mxu0 0.0
    %3108 = vmatpush1.xpose.msra.mxu0 0.0
    %3109 = vmatprep.subr.mxu0 0.0
    %3110 = vmatpush1.xpose.msra.mxu0 0.0
    %3111 = vmatprep.subr.mxu0 0.0
    %3112 = vmatpush1.xpose.msra.mxu0 0.0
    %3113 = vmatprep.subr.mxu0 0.0
    %3114 = vmatpush1.xpose.msra.mxu0 0.0
    %3115 = vmatprep.subr.mxu0 0.0
    %3116 = vmatpush1.xpose.msra.mxu0 0.0
    %3117 = vmatprep.subr.mxu0 0.0
    %3118 = vmatpush1.xpose.msra.mxu0 0.0
    %3119 = vmatprep.subr.mxu0 0.0
    %3120 = vmatpush1.xpose.msra.mxu0 0.0
    %3121 = vmatprep.subr.mxu0 0.0
    %3122 = vmatpush1.xpose.msra.mxu0 0.0
    %3123 = vmatprep.subr.mxu0 0.0
    %3124 = vmatpush1.xpose.msra.mxu0 0.0
    %3125 = vmatprep.subr.mxu0 0.0
    %3126 = vmatpush1.xpose.msra.mxu0 0.0
    %3127 = vmatprep.subr.mxu0 0.0
    %3128 = vmatpush1.xpose.msra.mxu0 0.0
    %3129 = vmatprep.subr.mxu0 0.0
    %3130 = vmatpush1.xpose.msra.mxu0 0.0
    %3131 = vmatprep.subr.mxu0 0.0
    %3132 = vmatpush1.xpose.msra.mxu0 0.0
    %3133 = vmatprep.subr.mxu0 0.0
    %3134 = vmatpush1.xpose.msra.mxu0 0.0
    %3135 = vmatprep.subr.mxu0 0.0
    %3136 = vmatpush1.xpose.msra.mxu0 0.0
    %3137 = vmatprep.subr.mxu0 0.0
    %3138 = vmatpush1.xpose.msra.mxu0 %v3105
    %3139 = vmatprep.subr.mxu0 0.0
    %3140 = vmatpush2.xpose.msra.mxu0 0.0
    %3141 = vmatprep.subr.mxu0 0.0
    %3142 = vmatpush2.xpose.msra.mxu0 0.0
    %3143 = vmatprep.subr.mxu0 0.0
    %3144 = vmatpush2.xpose.msra.mxu0 0.0
    %3145 = vmatprep.subr.mxu0 0.0
    %3146 = vmatpush2.xpose.msra.mxu0 0.0
    %3147 = vmatprep.subr.mxu0 0.0
    %3148 = vmatpush2.xpose.msra.mxu0 0.0
    %3149 = vmatprep.subr.mxu0 0.0
    %3150 = vmatpush2.xpose.msra.mxu0 0.0
    %3151 = vmatprep.subr.mxu0 0.0
    %3152 = vmatpush2.xpose.msra.mxu0 0.0
    %3153 = vmatprep.subr.mxu0 0.0
    %3154 = vmatpush2.xpose.msra.mxu0 0.0
    %3155 = vmatprep.subr.mxu0 0.0
    %3156 = vmatpush2.xpose.msra.mxu0 0.0
    %3157 = vmatprep.subr.mxu0 0.0
    %3158 = vmatpush2.xpose.msra.mxu0 0.0
    %3159 = vmatprep.subr.mxu0 0.0
    %3160 = vmatpush2.xpose.msra.mxu0 0.0
    %3161 = vmatprep.subr.mxu0 0.0
    %3162 = vmatpush2.xpose.msra.mxu0 0.0
    %3163 = vmatprep.subr.mxu0 0.0
    %3164 = vmatpush2.xpose.msra.mxu0 0.0
    %3165 = vmatprep.subr.mxu0 0.0
    %3166 = vmatpush2.xpose.msra.mxu0 0.0
    %3167 = vmatprep.subr.mxu0 0.0
    %3168 = vmatpush2.xpose.msra.mxu0 0.0
    %3169 = vmatprep.subr.mxu0 0.0
    %3170 = vmatpush2.xpose.msra.mxu0 0.0
    %3171 = vmatprep.mubr.f32.mxu0 0.0
    %3172 = vmatmul.mubr.f32.gmra.mxu0 %v3103
    %v3173 = vpop.f32.mrf.mxu0
    %v3174 = vadd.f32 0.0, %v3173
    %v3175 = vpop.f32.mrf.mxu0
    %3176 = vdwg.mxu0
    %v3177 = vsel %vm2214, %v2103, 0
    %v3179 = vsel %vm2214, %v2149, 0
    %3181 = vmatprep.subr.mxu0 0.0
    %3182 = vmatpush1.xpose.msra.mxu0 0.0
    %3183 = vmatprep.subr.mxu0 0.0
    %3184 = vmatpush1.xpose.msra.mxu0 0.0
    %3185 = vmatprep.subr.mxu0 0.0
    %3186 = vmatpush1.xpose.msra.mxu0 0.0
    %3187 = vmatprep.subr.mxu0 0.0
    %3188 = vmatpush1.xpose.msra.mxu0 0.0
    %3189 = vmatprep.subr.mxu0 0.0
    %3190 = vmatpush1.xpose.msra.mxu0 0.0
    %3191 = vmatprep.subr.mxu0 0.0
    %3192 = vmatpush1.xpose.msra.mxu0 0.0
    %3193 = vmatprep.subr.mxu0 0.0
    %3194 = vmatpush1.xpose.msra.mxu0 0.0
    %3195 = vmatprep.subr.mxu0 0.0
    %3196 = vmatpush1.xpose.msra.mxu0 0.0
    %3197 = vmatprep.subr.mxu0 0.0
    %3198 = vmatpush1.xpose.msra.mxu0 0.0
    %3199 = vmatprep.subr.mxu0 0.0
    %3200 = vmatpush1.xpose.msra.mxu0 0.0
    %3201 = vmatprep.subr.mxu0 0.0
    %3202 = vmatpush1.xpose.msra.mxu0 0.0
    %3203 = vmatprep.subr.mxu0 0.0
    %3204 = vmatpush1.xpose.msra.mxu0 0.0
    %3205 = vmatprep.subr.mxu0 0.0
    %3206 = vmatpush1.xpose.msra.mxu0 0.0
    %3207 = vmatprep.subr.mxu0 0.0
    %3208 = vmatpush1.xpose.msra.mxu0 0.0
    %3209 = vmatprep.subr.mxu0 0.0
    %3210 = vmatpush1.xpose.msra.mxu0 0.0
    %3211 = vmatprep.subr.mxu0 0.0
    %3212 = vmatpush1.xpose.msra.mxu0 %v3179
    %3213 = vmatprep.subr.mxu0 0.0
    %3214 = vmatpush2.xpose.msra.mxu0 0.0
    %3215 = vmatprep.subr.mxu0 0.0
    %3216 = vmatpush2.xpose.msra.mxu0 0.0
    %3217 = vmatprep.subr.mxu0 0.0
    %3218 = vmatpush2.xpose.msra.mxu0 0.0
    %3219 = vmatprep.subr.mxu0 0.0
    %3220 = vmatpush2.xpose.msra.mxu0 0.0
    %3221 = vmatprep.subr.mxu0 0.0
    %3222 = vmatpush2.xpose.msra.mxu0 0.0
    %3223 = vmatprep.subr.mxu0 0.0
    %3224 = vmatpush2.xpose.msra.mxu0 0.0
    %3225 = vmatprep.subr.mxu0 0.0
    %3226 = vmatpush2.xpose.msra.mxu0 0.0
    %3227 = vmatprep.subr.mxu0 0.0
    %3228 = vmatpush2.xpose.msra.mxu0 0.0
    %3229 = vmatprep.subr.mxu0 0.0
    %3230 = vmatpush2.xpose.msra.mxu0 0.0
    %3231 = vmatprep.subr.mxu0 0.0
    %3232 = vmatpush2.xpose.msra.mxu0 0.0
    %3233 = vmatprep.subr.mxu0 0.0
    %3234 = vmatpush2.xpose.msra.mxu0 0.0
    %3235 = vmatprep.subr.mxu0 0.0
    %3236 = vmatpush2.xpose.msra.mxu0 0.0
    %3237 = vmatprep.subr.mxu0 0.0
    %3238 = vmatpush2.xpose.msra.mxu0 0.0
    %3239 = vmatprep.subr.mxu0 0.0
    %3240 = vmatpush2.xpose.msra.mxu0 0.0
    %3241 = vmatprep.subr.mxu0 0.0
    %3242 = vmatpush2.xpose.msra.mxu0 0.0
    %3243 = vmatprep.subr.mxu0 0.0
    %3244 = vmatpush2.xpose.msra.mxu0 0.0
    %3245 = vmatprep.mubr.f32.mxu0 0.0
    %3246 = vmatmul.mubr.f32.gmra.mxu0 %v3177
    %v3247 = vpop.f32.mrf.mxu0
    %v3248 = vadd.f32 0.0, %v3247
    %v3249 = vpop.f32.mrf.mxu0
    %3250 = vdwg.mxu0
    %v3251 = vsel %vm2214, %v2105, 0
    %v3253 = vsel %vm2214, %v2151, 0
    %3255 = vmatprep.subr.mxu0 0.0
    %3256 = vmatpush1.xpose.msra.mxu0 0.0
    %3257 = vmatprep.subr.mxu0 0.0
    %3258 = vmatpush1.xpose.msra.mxu0 0.0
    %3259 = vmatprep.subr.mxu0 0.0
    %3260 = vmatpush1.xpose.msra.mxu0 0.0
    %3261 = vmatprep.subr.mxu0 0.0
    %3262 = vmatpush1.xpose.msra.mxu0 0.0
    %3263 = vmatprep.subr.mxu0 0.0
    %3264 = vmatpush1.xpose.msra.mxu0 0.0
    %3265 = vmatprep.subr.mxu0 0.0
    %3266 = vmatpush1.xpose.msra.mxu0 0.0
    %3267 = vmatprep.subr.mxu0 0.0
    %3268 = vmatpush1.xpose.msra.mxu0 0.0
    %3269 = vmatprep.subr.mxu0 0.0
    %3270 = vmatpush1.xpose.msra.mxu0 0.0
    %3271 = vmatprep.subr.mxu0 0.0
    %3272 = vmatpush1.xpose.msra.mxu0 0.0
    %3273 = vmatprep.subr.mxu0 0.0
    %3274 = vmatpush1.xpose.msra.mxu0 0.0
    %3275 = vmatprep.subr.mxu0 0.0
    %3276 = vmatpush1.xpose.msra.mxu0 0.0
    %3277 = vmatprep.subr.mxu0 0.0
    %3278 = vmatpush1.xpose.msra.mxu0 0.0
    %3279 = vmatprep.subr.mxu0 0.0
    %3280 = vmatpush1.xpose.msra.mxu0 0.0
    %3281 = vmatprep.subr.mxu0 0.0
    %3282 = vmatpush1.xpose.msra.mxu0 0.0
    %3283 = vmatprep.subr.mxu0 0.0
    %3284 = vmatpush1.xpose.msra.mxu0 0.0
    %3285 = vmatprep.subr.mxu0 0.0
    %3286 = vmatpush1.xpose.msra.mxu0 %v3253
    %3287 = vmatprep.subr.mxu0 0.0
    %3288 = vmatpush2.xpose.msra.mxu0 0.0
    %3289 = vmatprep.subr.mxu0 0.0
    %3290 = vmatpush2.xpose.msra.mxu0 0.0
    %3291 = vmatprep.subr.mxu0 0.0
    %3292 = vmatpush2.xpose.msra.mxu0 0.0
    %3293 = vmatprep.subr.mxu0 0.0
    %3294 = vmatpush2.xpose.msra.mxu0 0.0
    %3295 = vmatprep.subr.mxu0 0.0
    %3296 = vmatpush2.xpose.msra.mxu0 0.0
    %3297 = vmatprep.subr.mxu0 0.0
    %3298 = vmatpush2.xpose.msra.mxu0 0.0
    %3299 = vmatprep.subr.mxu0 0.0
    %3300 = vmatpush2.xpose.msra.mxu0 0.0
    %3301 = vmatprep.subr.mxu0 0.0
    %3302 = vmatpush2.xpose.msra.mxu0 0.0
    %3303 = vmatprep.subr.mxu0 0.0
    %3304 = vmatpush2.xpose.msra.mxu0 0.0
    %3305 = vmatprep.subr.mxu0 0.0
    %3306 = vmatpush2.xpose.msra.mxu0 0.0
    %3307 = vmatprep.subr.mxu0 0.0
    %3308 = vmatpush2.xpose.msra.mxu0 0.0
    %3309 = vmatprep.subr.mxu0 0.0
    %3310 = vmatpush2.xpose.msra.mxu0 0.0
    %3311 = vmatprep.subr.mxu0 0.0
    %3312 = vmatpush2.xpose.msra.mxu0 0.0
    %3313 = vmatprep.subr.mxu0 0.0
    %3314 = vmatpush2.xpose.msra.mxu0 0.0
    %3315 = vmatprep.subr.mxu0 0.0
    %3316 = vmatpush2.xpose.msra.mxu0 0.0
    %3317 = vmatprep.subr.mxu0 0.0
    %3318 = vmatpush2.xpose.msra.mxu0 0.0
    %3319 = vmatprep.mubr.f32.mxu0 0.0
    %3320 = vmatmul.mubr.f32.gmra.mxu0 %v3251
    %v3321 = vpop.f32.mrf.mxu0
    %v3322 = vadd.f32 0.0, %v3321
    %v3323 = vpop.f32.mrf.mxu0
    %3324 = vdwg.mxu0
    %v3325 = vsel %vm2214, %v2107, 0
    %v3327 = vsel %vm2214, %v2153, 0
    %3329 = vmatprep.subr.mxu0 0.0
    %3330 = vmatpush1.xpose.msra.mxu0 0.0
    %3331 = vmatprep.subr.mxu0 0.0
    %3332 = vmatpush1.xpose.msra.mxu0 0.0
    %3333 = vmatprep.subr.mxu0 0.0
    %3334 = vmatpush1.xpose.msra.mxu0 0.0
    %3335 = vmatprep.subr.mxu0 0.0
    %3336 = vmatpush1.xpose.msra.mxu0 0.0
    %3337 = vmatprep.subr.mxu0 0.0
    %3338 = vmatpush1.xpose.msra.mxu0 0.0
    %3339 = vmatprep.subr.mxu0 0.0
    %3340 = vmatpush1.xpose.msra.mxu0 0.0
    %3341 = vmatprep.subr.mxu0 0.0
    %3342 = vmatpush1.xpose.msra.mxu0 0.0
    %3343 = vmatprep.subr.mxu0 0.0
    %3344 = vmatpush1.xpose.msra.mxu0 0.0
    %3345 = vmatprep.subr.mxu0 0.0
    %3346 = vmatpush1.xpose.msra.mxu0 0.0
    %3347 = vmatprep.subr.mxu0 0.0
    %3348 = vmatpush1.xpose.msra.mxu0 0.0
    %3349 = vmatprep.subr.mxu0 0.0
    %3350 = vmatpush1.xpose.msra.mxu0 0.0
    %3351 = vmatprep.subr.mxu0 0.0
    %3352 = vmatpush1.xpose.msra.mxu0 0.0
    %3353 = vmatprep.subr.mxu0 0.0
    %3354 = vmatpush1.xpose.msra.mxu0 0.0
    %3355 = vmatprep.subr.mxu0 0.0
    %3356 = vmatpush1.xpose.msra.mxu0 0.0
    %3357 = vmatprep.subr.mxu0 0.0
    %3358 = vmatpush1.xpose.msra.mxu0 0.0
    %3359 = vmatprep.subr.mxu0 0.0
    %3360 = vmatpush1.xpose.msra.mxu0 %v3327
    %3361 = vmatprep.subr.mxu0 0.0
    %3362 = vmatpush2.xpose.msra.mxu0 0.0
    %3363 = vmatprep.subr.mxu0 0.0
    %3364 = vmatpush2.xpose.msra.mxu0 0.0
    %3365 = vmatprep.subr.mxu0 0.0
    %3366 = vmatpush2.xpose.msra.mxu0 0.0
    %3367 = vmatprep.subr.mxu0 0.0
    %3368 = vmatpush2.xpose.msra.mxu0 0.0
    %3369 = vmatprep.subr.mxu0 0.0
    %3370 = vmatpush2.xpose.msra.mxu0 0.0
    %3371 = vmatprep.subr.mxu0 0.0
    %3372 = vmatpush2.xpose.msra.mxu0 0.0
    %3373 = vmatprep.subr.mxu0 0.0
    %3374 = vmatpush2.xpose.msra.mxu0 0.0
    %3375 = vmatprep.subr.mxu0 0.0
    %3376 = vmatpush2.xpose.msra.mxu0 0.0
    %3377 = vmatprep.subr.mxu0 0.0
    %3378 = vmatpush2.xpose.msra.mxu0 0.0
    %3379 = vmatprep.subr.mxu0 0.0
    %3380 = vmatpush2.xpose.msra.mxu0 0.0
    %3381 = vmatprep.subr.mxu0 0.0
    %3382 = vmatpush2.xpose.msra.mxu0 0.0
    %3383 = vmatprep.subr.mxu0 0.0
    %3384 = vmatpush2.xpose.msra.mxu0 0.0
    %3385 = vmatprep.subr.mxu0 0.0
    %3386 = vmatpush2.xpose.msra.mxu0 0.0
    %3387 = vmatprep.subr.mxu0 0.0
    %3388 = vmatpush2.xpose.msra.mxu0 0.0
    %3389 = vmatprep.subr.mxu0 0.0
    %3390 = vmatpush2.xpose.msra.mxu0 0.0
    %3391 = vmatprep.subr.mxu0 0.0
    %3392 = vmatpush2.xpose.msra.mxu0 0.0
    %3393 = vmatprep.mubr.f32.mxu0 0.0
    %3394 = vmatmul.mubr.f32.gmra.mxu0 %v3325
    %v3395 = vpop.f32.mrf.mxu0
    %v3396 = vadd.f32 0.0, %v3395
    %v3397 = vpop.f32.mrf.mxu0
    %3398 = vdwg.mxu0
    %v3399 = vmul.f32 %v2286, 0.05103104
    %v3400 = vmul.f32 %v2360, 0.05103104
    %v3401 = vmul.f32 %v2434, 0.05103104
    %v3402 = vmul.f32 %v2508, 0.05103104
    %v3403 = vmul.f32 %v2582, 0.05103104
    %v3404 = vmul.f32 %v2656, 0.05103104
    %v3405 = vmul.f32 %v2730, 0.05103104
    %v3406 = vmul.f32 %v2804, 0.05103104
    %v3407 = vmul.f32 %v2878, 0.05103104
    %v3408 = vmul.f32 %v2952, 0.05103104
    %v3409 = vmul.f32 %v3026, 0.05103104
    %v3410 = vmul.f32 %v3100, 0.05103104
    %v3411 = vmul.f32 %v3174, 0.05103104
    %v3412 = vmul.f32 %v3248, 0.05103104
    %v3413 = vmul.f32 %v3322, 0.05103104
    %v3414 = vmul.f32 %v3396, 0.05103104
    %v3415 = vlaneseq
    %v3416 = vshrl.u32 %v3415, 7
    %v3417 = vlaneseq
    %v3418 = vand.u32 %v3417, 127
    %vm3419 = vcmp.ge.s32.totalorder %v3416, %v3418
    %v3420 = vsel %vm3419, 1, 0
    %vm3421 = vcmp.eq.s32.totalorder %v3420, 1
    %v3422 = vsel %vm3421, %v3399, -1e+30
    %v3423 = vsel %vm3421, %v3400, -1e+30
    %v3424 = vsel %vm3421, %v3401, -1e+30
    %v3425 = vsel %vm3421, %v3402, -1e+30
    %v3426 = vsel %vm3421, %v3403, -1e+30
    %v3427 = vsel %vm3421, %v3404, -1e+30
    %v3428 = vsel %vm3421, %v3405, -1e+30
    %v3429 = vsel %vm3421, %v3406, -1e+30
    %v3430 = vsel %vm3421, %v3407, -1e+30
    %v3431 = vsel %vm3421, %v3408, -1e+30
    %v3432 = vsel %vm3421, %v3409, -1e+30
    %v3433 = vsel %vm3421, %v3410, -1e+30
    %v3434 = vsel %vm3421, %v3411, -1e+30
    %v3435 = vsel %vm3421, %v3412, -1e+30
    %v3436 = vsel %vm3421, %v3413, -1e+30
    %v3437 = vsel %vm3421, %v3414, -1e+30
    %vm3438 = vcmask 64512
    %v3439 = vsel %vm3438, %v3422, -inf
    %3440 = vmax.xlane.f32.xlu0 %v3439
    %v3441 = vpop.xlane.xlu0 %3440
    %v3442 = vsel %vm3438, %v3423, -inf
    %3443 = vmax.xlane.f32.xlu0 %v3442
    %v3444 = vpop.xlane.xlu0 %3443
    %v3445 = vsel %vm3438, %v3424, -inf
    %3446 = vmax.xlane.f32.xlu0 %v3445
    %v3447 = vpop.xlane.xlu0 %3446
    %v3448 = vsel %vm3438, %v3425, -inf
    %3449 = vmax.xlane.f32.xlu0 %v3448
    %v3450 = vpop.xlane.xlu0 %3449
    %v3451 = vsel %vm3438, %v3426, -inf
    %3452 = vmax.xlane.f32.xlu0 %v3451
    %v3453 = vpop.xlane.xlu0 %3452
    %v3454 = vsel %vm3438, %v3427, -inf
    %3455 = vmax.xlane.f32.xlu0 %v3454
    %v3456 = vpop.xlane.xlu0 %3455
    %v3457 = vsel %vm3438, %v3428, -inf
    %3458 = vmax.xlane.f32.xlu0 %v3457
    %v3459 = vpop.xlane.xlu0 %3458
    %v3460 = vsel %vm3438, %v3429, -inf
    %3461 = vmax.xlane.f32.xlu0 %v3460
    %v3462 = vpop.xlane.xlu0 %3461
    %v3463 = vsel %vm3438, %v3430, -inf
    %3464 = vmax.xlane.f32.xlu0 %v3463
    %v3465 = vpop.xlane.xlu0 %3464
    %v3466 = vsel %vm3438, %v3431, -inf
    %3467 = vmax.xlane.f32.xlu0 %v3466
    %v3468 = vpop.xlane.xlu0 %3467
    %v3469 = vsel %vm3438, %v3432, -inf
    %3470 = vmax.xlane.f32.xlu0 %v3469
    %v3471 = vpop.xlane.xlu0 %3470
    %v3472 = vsel %vm3438, %v3433, -inf
    %3473 = vmax.xlane.f32.xlu0 %v3472
    %v3474 = vpop.xlane.xlu0 %3473
    %v3475 = vsel %vm3438, %v3434, -inf
    %3476 = vmax.xlane.f32.xlu0 %v3475
    %v3477 = vpop.xlane.xlu0 %3476
    %v3478 = vsel %vm3438, %v3435, -inf
    %3479 = vmax.xlane.f32.xlu0 %v3478
    %v3480 = vpop.xlane.xlu0 %3479
    %v3481 = vsel %vm3438, %v3436, -inf
    %3482 = vmax.xlane.f32.xlu0 %v3481
    %v3483 = vpop.xlane.xlu0 %3482
    %v3484 = vsel %vm3438, %v3437, -inf
    %3485 = vmax.xlane.f32.xlu0 %v3484
    %v3486 = vpop.xlane.xlu0 %3485
    %v3487 = vsub.f32 %v3422, %v3441
    %v3488 = vsub.f32 %v3423, %v3444
    %v3489 = vsub.f32 %v3424, %v3447
    %v3490 = vsub.f32 %v3425, %v3450
    %v3491 = vsub.f32 %v3426, %v3453
    %v3492 = vsub.f32 %v3427, %v3456
    %v3493 = vsub.f32 %v3428, %v3459
    %v3494 = vsub.f32 %v3429, %v3462
    %v3495 = vsub.f32 %v3430, %v3465
    %v3496 = vsub.f32 %v3431, %v3468
    %v3497 = vsub.f32 %v3432, %v3471
    %v3498 = vsub.f32 %v3433, %v3474
    %v3499 = vsub.f32 %v3434, %v3477
    %v3500 = vsub.f32 %v3435, %v3480
    %v3501 = vsub.f32 %v3436, %v3483
    %v3502 = vsub.f32 %v3437, %v3486
    %v3503 = vmul.f32 %v3487, 1.442695
    %v3504 = vpow.pop %v3503
    %v3505 = vmul.f32 %v3488, 1.442695
    %v3506 = vpow.pop %v3505
    %v3507 = vmul.f32 %v3489, 1.442695
    %v3508 = vpow.pop %v3507
    %v3509 = vmul.f32 %v3490, 1.442695
    %v3510 = vpow.pop %v3509
    %v3511 = vmul.f32 %v3491, 1.442695
    %v3512 = vpow.pop %v3511
    %v3513 = vmul.f32 %v3492, 1.442695
    %v3514 = vpow.pop %v3513
    %v3515 = vmul.f32 %v3493, 1.442695
    %v3516 = vpow.pop %v3515
    %v3517 = vmul.f32 %v3494, 1.442695
    %v3518 = vpow.pop %v3517
    %v3519 = vmul.f32 %v3495, 1.442695
    %v3520 = vpow.pop %v3519
    %v3521 = vmul.f32 %v3496, 1.442695
    %v3522 = vpow.pop %v3521
    %v3523 = vmul.f32 %v3497, 1.442695
    %v3524 = vpow.pop %v3523
    %v3525 = vmul.f32 %v3498, 1.442695
    %v3526 = vpow.pop %v3525
    %v3527 = vmul.f32 %v3499, 1.442695
    %v3528 = vpow.pop %v3527
    %v3529 = vmul.f32 %v3500, 1.442695
    %v3530 = vpow.pop %v3529
    %v3531 = vmul.f32 %v3501, 1.442695
    %v3532 = vpow.pop %v3531
    %v3533 = vmul.f32 %v3502, 1.442695
    %v3534 = vpow.pop %v3533
    %v3535 = vsel %vm3438, %v3504, 0.0
    %3536 = vadd.xlane.f32.xlu0 %v3535
    %v3537 = vpop.xlane.xlu0 %3536
    %v3538 = vsel %vm3438, %v3506, 0.0
    %3539 = vadd.xlane.f32.xlu0 %v3538
    %v3540 = vpop.xlane.xlu0 %3539
    %v3541 = vsel %vm3438, %v3508, 0.0
    %3542 = vadd.xlane.f32.xlu0 %v3541
    %v3543 = vpop.xlane.xlu0 %3542
    %v3544 = vsel %vm3438, %v3510, 0.0
    %3545 = vadd.xlane.f32.xlu0 %v3544
    %v3546 = vpop.xlane.xlu0 %3545
    %v3547 = vsel %vm3438, %v3512, 0.0
    %3548 = vadd.xlane.f32.xlu0 %v3547
    %v3549 = vpop.xlane.xlu0 %3548
    %v3550 = vsel %vm3438, %v3514, 0.0
    %3551 = vadd.xlane.f32.xlu0 %v3550
    %v3552 = vpop.xlane.xlu0 %3551
    %v3553 = vsel %vm3438, %v3516, 0.0
    %3554 = vadd.xlane.f32.xlu0 %v3553
    %v3555 = vpop.xlane.xlu0 %3554
    %v3556 = vsel %vm3438, %v3518, 0.0
    %3557 = vadd.xlane.f32.xlu0 %v3556
    %v3558 = vpop.xlane.xlu0 %3557
    %v3559 = vsel %vm3438, %v3520, 0.0
    %3560 = vadd.xlane.f32.xlu0 %v3559
    %v3561 = vpop.xlane.xlu0 %3560
    %v3562 = vsel %vm3438, %v3522, 0.0
    %3563 = vadd.xlane.f32.xlu0 %v3562
    %v3564 = vpop.xlane.xlu0 %3563
    %v3565 = vsel %vm3438, %v3524, 0.0
    %3566 = vadd.xlane.f32.xlu0 %v3565
    %v3567 = vpop.xlane.xlu0 %3566
    %v3568 = vsel %vm3438, %v3526, 0.0
    %3569 = vadd.xlane.f32.xlu0 %v3568
    %v3570 = vpop.xlane.xlu0 %3569
    %v3571 = vsel %vm3438, %v3528, 0.0
    %3572 = vadd.xlane.f32.xlu0 %v3571
    %v3573 = vpop.xlane.xlu0 %3572
    %v3574 = vsel %vm3438, %v3530, 0.0
    %3575 = vadd.xlane.f32.xlu0 %v3574
    %v3576 = vpop.xlane.xlu0 %3575
    %v3577 = vsel %vm3438, %v3532, 0.0
    %3578 = vadd.xlane.f32.xlu0 %v3577
    %v3579 = vpop.xlane.xlu0 %3578
    %v3580 = vsel %vm3438, %v3534, 0.0
    %3581 = vadd.xlane.f32.xlu0 %v3580
    %v3582 = vpop.xlane.xlu0 %3581
    %v3583 = vrcp.pop %v3537
    %v3584 = vmul.f32 %v3504, %v3583
    %v3585 = vrcp.pop %v3540
    %v3586 = vmul.f32 %v3506, %v3585
    %v3587 = vrcp.pop %v3543
    %v3588 = vmul.f32 %v3508, %v3587
    %v3589 = vrcp.pop %v3546
    %v3590 = vmul.f32 %v3510, %v3589
    %v3591 = vrcp.pop %v3549
    %v3592 = vmul.f32 %v3512, %v3591
    %v3593 = vrcp.pop %v3552
    %v3594 = vmul.f32 %v3514, %v3593
    %v3595 = vrcp.pop %v3555
    %v3596 = vmul.f32 %v3516, %v3595
    %v3597 = vrcp.pop %v3558
    %v3598 = vmul.f32 %v3518, %v3597
    %v3599 = vrcp.pop %v3561
    %v3600 = vmul.f32 %v3520, %v3599
    %v3601 = vrcp.pop %v3564
    %v3602 = vmul.f32 %v3522, %v3601
    %v3603 = vrcp.pop %v3567
    %v3604 = vmul.f32 %v3524, %v3603
    %v3605 = vrcp.pop %v3570
    %v3606 = vmul.f32 %v3526, %v3605
    %v3607 = vrcp.pop %v3573
    %v3608 = vmul.f32 %v3528, %v3607
    %v3609 = vrcp.pop %v3576
    %v3610 = vmul.f32 %v3530, %v3609
    %v3611 = vrcp.pop %v3579
    %v3612 = vmul.f32 %v3532, %v3611
    %v3613 = vrcp.pop %v3582
    %v3614 = vmul.f32 %v3534, %v3613
    %v3616 = vsel %vm3438, %v3584, 0
    %3618 = vmatprep.subr.mxu0 0.0
    %3619 = vmatpush1.msra.mxu0 0.0
    %3620 = vmatprep.subr.mxu0 0.0
    %3621 = vmatpush1.msra.mxu0 0.0
    %3622 = vmatprep.subr.mxu0 0.0
    %3623 = vmatpush1.msra.mxu0 0.0
    %3624 = vmatprep.subr.mxu0 0.0
    %3625 = vmatpush1.msra.mxu0 0.0
    %3626 = vmatprep.subr.mxu0 0.0
    %3627 = vmatpush1.msra.mxu0 0.0
    %3628 = vmatprep.subr.mxu0 0.0
    %3629 = vmatpush1.msra.mxu0 0.0
    %3630 = vmatprep.subr.mxu0 0.0
    %3631 = vmatpush1.msra.mxu0 0.0
    %3632 = vmatprep.subr.mxu0 0.0
    %3633 = vmatpush1.msra.mxu0 0.0
    %3634 = vmatprep.subr.mxu0 0.0
    %3635 = vmatpush1.msra.mxu0 0.0
    %3636 = vmatprep.subr.mxu0 0.0
    %3637 = vmatpush1.msra.mxu0 0.0
    %3638 = vmatprep.subr.mxu0 0.0
    %3639 = vmatpush1.msra.mxu0 0.0
    %3640 = vmatprep.subr.mxu0 0.0
    %3641 = vmatpush1.msra.mxu0 0.0
    %3642 = vmatprep.subr.mxu0 0.0
    %3643 = vmatpush1.msra.mxu0 0.0
    %3644 = vmatprep.subr.mxu0 0.0
    %3645 = vmatpush1.msra.mxu0 0.0
    %3646 = vmatprep.subr.mxu0 0.0
    %3647 = vmatpush1.msra.mxu0 0.0
    %3648 = vmatprep.subr.mxu0 0.0
    %3649 = vmatpush1.msra.mxu0 %v1970
    %3650 = vmatprep.subr.mxu0 0.0
    %3651 = vmatpush2.msra.mxu0 0.0
    %3652 = vmatprep.subr.mxu0 0.0
    %3653 = vmatpush2.msra.mxu0 0.0
    %3654 = vmatprep.subr.mxu0 0.0
    %3655 = vmatpush2.msra.mxu0 0.0
    %3656 = vmatprep.subr.mxu0 0.0
    %3657 = vmatpush2.msra.mxu0 0.0
    %3658 = vmatprep.subr.mxu0 0.0
    %3659 = vmatpush2.msra.mxu0 0.0
    %3660 = vmatprep.subr.mxu0 0.0
    %3661 = vmatpush2.msra.mxu0 0.0
    %3662 = vmatprep.subr.mxu0 0.0
    %3663 = vmatpush2.msra.mxu0 0.0
    %3664 = vmatprep.subr.mxu0 0.0
    %3665 = vmatpush2.msra.mxu0 0.0
    %3666 = vmatprep.subr.mxu0 0.0
    %3667 = vmatpush2.msra.mxu0 0.0
    %3668 = vmatprep.subr.mxu0 0.0
    %3669 = vmatpush2.msra.mxu0 0.0
    %3670 = vmatprep.subr.mxu0 0.0
    %3671 = vmatpush2.msra.mxu0 0.0
    %3672 = vmatprep.subr.mxu0 0.0
    %3673 = vmatpush2.msra.mxu0 0.0
    %3674 = vmatprep.subr.mxu0 0.0
    %3675 = vmatpush2.msra.mxu0 0.0
    %3676 = vmatprep.subr.mxu0 0.0
    %3677 = vmatpush2.msra.mxu0 0.0
    %3678 = vmatprep.subr.mxu0 0.0
    %3679 = vmatpush2.msra.mxu0 0.0
    %3680 = vmatprep.subr.mxu0 0.0
    %3681 = vmatpush2.msra.mxu0 0.0
    %3682 = vmatprep.mubr.f32.mxu0 0.0
    %3683 = vmatmul.mubr.f32.gmra.mxu0 %v3616
    %v3684 = vpop.f32.mrf.mxu0
    %v3685 = vadd.f32 0.0, %v3684
    %v3686 = vpop.f32.mrf.mxu0
    %3687 = vdwg.mxu0
    %v3689 = vsel %vm3438, %v3586, 0
    %3691 = vmatprep.subr.mxu0 0.0
    %3692 = vmatpush1.msra.mxu0 0.0
    %3693 = vmatprep.subr.mxu0 0.0
    %3694 = vmatpush1.msra.mxu0 0.0
    %3695 = vmatprep.subr.mxu0 0.0
    %3696 = vmatpush1.msra.mxu0 0.0
    %3697 = vmatprep.subr.mxu0 0.0
    %3698 = vmatpush1.msra.mxu0 0.0
    %3699 = vmatprep.subr.mxu0 0.0
    %3700 = vmatpush1.msra.mxu0 0.0
    %3701 = vmatprep.subr.mxu0 0.0
    %3702 = vmatpush1.msra.mxu0 0.0
    %3703 = vmatprep.subr.mxu0 0.0
    %3704 = vmatpush1.msra.mxu0 0.0
    %3705 = vmatprep.subr.mxu0 0.0
    %3706 = vmatpush1.msra.mxu0 0.0
    %3707 = vmatprep.subr.mxu0 0.0
    %3708 = vmatpush1.msra.mxu0 0.0
    %3709 = vmatprep.subr.mxu0 0.0
    %3710 = vmatpush1.msra.mxu0 0.0
    %3711 = vmatprep.subr.mxu0 0.0
    %3712 = vmatpush1.msra.mxu0 0.0
    %3713 = vmatprep.subr.mxu0 0.0
    %3714 = vmatpush1.msra.mxu0 0.0
    %3715 = vmatprep.subr.mxu0 0.0
    %3716 = vmatpush1.msra.mxu0 0.0
    %3717 = vmatprep.subr.mxu0 0.0
    %3718 = vmatpush1.msra.mxu0 0.0
    %3719 = vmatprep.subr.mxu0 0.0
    %3720 = vmatpush1.msra.mxu0 0.0
    %3721 = vmatprep.subr.mxu0 0.0
    %3722 = vmatpush1.msra.mxu0 %v1974
    %3723 = vmatprep.subr.mxu0 0.0
    %3724 = vmatpush2.msra.mxu0 0.0
    %3725 = vmatprep.subr.mxu0 0.0
    %3726 = vmatpush2.msra.mxu0 0.0
    %3727 = vmatprep.subr.mxu0 0.0
    %3728 = vmatpush2.msra.mxu0 0.0
    %3729 = vmatprep.subr.mxu0 0.0
    %3730 = vmatpush2.msra.mxu0 0.0
    %3731 = vmatprep.subr.mxu0 0.0
    %3732 = vmatpush2.msra.mxu0 0.0
    %3733 = vmatprep.subr.mxu0 0.0
    %3734 = vmatpush2.msra.mxu0 0.0
    %3735 = vmatprep.subr.mxu0 0.0
    %3736 = vmatpush2.msra.mxu0 0.0
    %3737 = vmatprep.subr.mxu0 0.0
    %3738 = vmatpush2.msra.mxu0 0.0
    %3739 = vmatprep.subr.mxu0 0.0
    %3740 = vmatpush2.msra.mxu0 0.0
    %3741 = vmatprep.subr.mxu0 0.0
    %3742 = vmatpush2.msra.mxu0 0.0
    %3743 = vmatprep.subr.mxu0 0.0
    %3744 = vmatpush2.msra.mxu0 0.0
    %3745 = vmatprep.subr.mxu0 0.0
    %3746 = vmatpush2.msra.mxu0 0.0
    %3747 = vmatprep.subr.mxu0 0.0
    %3748 = vmatpush2.msra.mxu0 0.0
    %3749 = vmatprep.subr.mxu0 0.0
    %3750 = vmatpush2.msra.mxu0 0.0
    %3751 = vmatprep.subr.mxu0 0.0
    %3752 = vmatpush2.msra.mxu0 0.0
    %3753 = vmatprep.subr.mxu0 0.0
    %3754 = vmatpush2.msra.mxu0 0.0
    %3755 = vmatprep.mubr.f32.mxu0 0.0
    %3756 = vmatmul.mubr.f32.gmra.mxu0 %v3689
    %v3757 = vpop.f32.mrf.mxu0
    %v3758 = vadd.f32 0.0, %v3757
    %v3759 = vpop.f32.mrf.mxu0
    %3760 = vdwg.mxu0
    %v3762 = vsel %vm3438, %v3588, 0
    %3764 = vmatprep.subr.mxu0 0.0
    %3765 = vmatpush1.msra.mxu0 0.0
    %3766 = vmatprep.subr.mxu0 0.0
    %3767 = vmatpush1.msra.mxu0 0.0
    %3768 = vmatprep.subr.mxu0 0.0
    %3769 = vmatpush1.msra.mxu0 0.0
    %3770 = vmatprep.subr.mxu0 0.0
    %3771 = vmatpush1.msra.mxu0 0.0
    %3772 = vmatprep.subr.mxu0 0.0
    %3773 = vmatpush1.msra.mxu0 0.0
    %3774 = vmatprep.subr.mxu0 0.0
    %3775 = vmatpush1.msra.mxu0 0.0
    %3776 = vmatprep.subr.mxu0 0.0
    %3777 = vmatpush1.msra.mxu0 0.0
    %3778 = vmatprep.subr.mxu0 0.0
    %3779 = vmatpush1.msra.mxu0 0.0
    %3780 = vmatprep.subr.mxu0 0.0
    %3781 = vmatpush1.msra.mxu0 0.0
    %3782 = vmatprep.subr.mxu0 0.0
    %3783 = vmatpush1.msra.mxu0 0.0
    %3784 = vmatprep.subr.mxu0 0.0
    %3785 = vmatpush1.msra.mxu0 0.0
    %3786 = vmatprep.subr.mxu0 0.0
    %3787 = vmatpush1.msra.mxu0 0.0
    %3788 = vmatprep.subr.mxu0 0.0
    %3789 = vmatpush1.msra.mxu0 0.0
    %3790 = vmatprep.subr.mxu0 0.0
    %3791 = vmatpush1.msra.mxu0 0.0
    %3792 = vmatprep.subr.mxu0 0.0
    %3793 = vmatpush1.msra.mxu0 0.0
    %3794 = vmatprep.subr.mxu0 0.0
    %3795 = vmatpush1.msra.mxu0 %v2157
    %3796 = vmatprep.subr.mxu0 0.0
    %3797 = vmatpush2.msra.mxu0 0.0
    %3798 = vmatprep.subr.mxu0 0.0
    %3799 = vmatpush2.msra.mxu0 0.0
    %3800 = vmatprep.subr.mxu0 0.0
    %3801 = vmatpush2.msra.mxu0 0.0
    %3802 = vmatprep.subr.mxu0 0.0
    %3803 = vmatpush2.msra.mxu0 0.0
    %3804 = vmatprep.subr.mxu0 0.0
    %3805 = vmatpush2.msra.mxu0 0.0
    %3806 = vmatprep.subr.mxu0 0.0
    %3807 = vmatpush2.msra.mxu0 0.0
    %3808 = vmatprep.subr.mxu0 0.0
    %3809 = vmatpush2.msra.mxu0 0.0
    %3810 = vmatprep.subr.mxu0 0.0
    %3811 = vmatpush2.msra.mxu0 0.0
    %3812 = vmatprep.subr.mxu0 0.0
    %3813 = vmatpush2.msra.mxu0 0.0
    %3814 = vmatprep.subr.mxu0 0.0
    %3815 = vmatpush2.msra.mxu0 0.0
    %3816 = vmatprep.subr.mxu0 0.0
    %3817 = vmatpush2.msra.mxu0 0.0
    %3818 = vmatprep.subr.mxu0 0.0
    %3819 = vmatpush2.msra.mxu0 0.0
    %3820 = vmatprep.subr.mxu0 0.0
    %3821 = vmatpush2.msra.mxu0 0.0
    %3822 = vmatprep.subr.mxu0 0.0
    %3823 = vmatpush2.msra.mxu0 0.0
    %3824 = vmatprep.subr.mxu0 0.0
    %3825 = vmatpush2.msra.mxu0 0.0
    %3826 = vmatprep.subr.mxu0 0.0
    %3827 = vmatpush2.msra.mxu0 0.0
    %3828 = vmatprep.mubr.f32.mxu0 0.0
    %3829 = vmatmul.mubr.f32.gmra.mxu0 %v3762
    %v3830 = vpop.f32.mrf.mxu0
    %v3831 = vadd.f32 0.0, %v3830
    %v3832 = vpop.f32.mrf.mxu0
    %3833 = vdwg.mxu0
    %v3835 = vsel %vm3438, %v3590, 0
    %3837 = vmatprep.subr.mxu0 0.0
    %3838 = vmatpush1.msra.mxu0 0.0
    %3839 = vmatprep.subr.mxu0 0.0
    %3840 = vmatpush1.msra.mxu0 0.0
    %3841 = vmatprep.subr.mxu0 0.0
    %3842 = vmatpush1.msra.mxu0 0.0
    %3843 = vmatprep.subr.mxu0 0.0
    %3844 = vmatpush1.msra.mxu0 0.0
    %3845 = vmatprep.subr.mxu0 0.0
    %3846 = vmatpush1.msra.mxu0 0.0
    %3847 = vmatprep.subr.mxu0 0.0
    %3848 = vmatpush1.msra.mxu0 0.0
    %3849 = vmatprep.subr.mxu0 0.0
    %3850 = vmatpush1.msra.mxu0 0.0
    %3851 = vmatprep.subr.mxu0 0.0
    %3852 = vmatpush1.msra.mxu0 0.0
    %3853 = vmatprep.subr.mxu0 0.0
    %3854 = vmatpush1.msra.mxu0 0.0
    %3855 = vmatprep.subr.mxu0 0.0
    %3856 = vmatpush1.msra.mxu0 0.0
    %3857 = vmatprep.subr.mxu0 0.0
    %3858 = vmatpush1.msra.mxu0 0.0
    %3859 = vmatprep.subr.mxu0 0.0
    %3860 = vmatpush1.msra.mxu0 0.0
    %3861 = vmatprep.subr.mxu0 0.0
    %3862 = vmatpush1.msra.mxu0 0.0
    %3863 = vmatprep.subr.mxu0 0.0
    %3864 = vmatpush1.msra.mxu0 0.0
    %3865 = vmatprep.subr.mxu0 0.0
    %3866 = vmatpush1.msra.mxu0 0.0
    %3867 = vmatprep.subr.mxu0 0.0
    %3868 = vmatpush1.msra.mxu0 %v2159
    %3869 = vmatprep.subr.mxu0 0.0
    %3870 = vmatpush2.msra.mxu0 0.0
    %3871 = vmatprep.subr.mxu0 0.0
    %3872 = vmatpush2.msra.mxu0 0.0
    %3873 = vmatprep.subr.mxu0 0.0
    %3874 = vmatpush2.msra.mxu0 0.0
    %3875 = vmatprep.subr.mxu0 0.0
    %3876 = vmatpush2.msra.mxu0 0.0
    %3877 = vmatprep.subr.mxu0 0.0
    %3878 = vmatpush2.msra.mxu0 0.0
    %3879 = vmatprep.subr.mxu0 0.0
    %3880 = vmatpush2.msra.mxu0 0.0
    %3881 = vmatprep.subr.mxu0 0.0
    %3882 = vmatpush2.msra.mxu0 0.0
    %3883 = vmatprep.subr.mxu0 0.0
    %3884 = vmatpush2.msra.mxu0 0.0
    %3885 = vmatprep.subr.mxu0 0.0
    %3886 = vmatpush2.msra.mxu0 0.0
    %3887 = vmatprep.subr.mxu0 0.0
    %3888 = vmatpush2.msra.mxu0 0.0
    %3889 = vmatprep.subr.mxu0 0.0
    %3890 = vmatpush2.msra.mxu0 0.0
    %3891 = vmatprep.subr.mxu0 0.0
    %3892 = vmatpush2.msra.mxu0 0.0
    %3893 = vmatprep.subr.mxu0 0.0
    %3894 = vmatpush2.msra.mxu0 0.0
    %3895 = vmatprep.subr.mxu0 0.0
    %3896 = vmatpush2.msra.mxu0 0.0
    %3897 = vmatprep.subr.mxu0 0.0
    %3898 = vmatpush2.msra.mxu0 0.0
    %3899 = vmatprep.subr.mxu0 0.0
    %3900 = vmatpush2.msra.mxu0 0.0
    %3901 = vmatprep.mubr.f32.mxu0 0.0
    %3902 = vmatmul.mubr.f32.gmra.mxu0 %v3835
    %v3903 = vpop.f32.mrf.mxu0
    %v3904 = vadd.f32 0.0, %v3903
    %v3905 = vpop.f32.mrf.mxu0
    %3906 = vdwg.mxu0
    %v3908 = vsel %vm3438, %v3592, 0
    %3910 = vmatprep.subr.mxu0 0.0
    %3911 = vmatpush1.msra.mxu0 0.0
    %3912 = vmatprep.subr.mxu0 0.0
    %3913 = vmatpush1.msra.mxu0 0.0
    %3914 = vmatprep.subr.mxu0 0.0
    %3915 = vmatpush1.msra.mxu0 0.0
    %3916 = vmatprep.subr.mxu0 0.0
    %3917 = vmatpush1.msra.mxu0 0.0
    %3918 = vmatprep.subr.mxu0 0.0
    %3919 = vmatpush1.msra.mxu0 0.0
    %3920 = vmatprep.subr.mxu0 0.0
    %3921 = vmatpush1.msra.mxu0 0.0
    %3922 = vmatprep.subr.mxu0 0.0
    %3923 = vmatpush1.msra.mxu0 0.0
    %3924 = vmatprep.subr.mxu0 0.0
    %3925 = vmatpush1.msra.mxu0 0.0
    %3926 = vmatprep.subr.mxu0 0.0
    %3927 = vmatpush1.msra.mxu0 0.0
    %3928 = vmatprep.subr.mxu0 0.0
    %3929 = vmatpush1.msra.mxu0 0.0
    %3930 = vmatprep.subr.mxu0 0.0
    %3931 = vmatpush1.msra.mxu0 0.0
    %3932 = vmatprep.subr.mxu0 0.0
    %3933 = vmatpush1.msra.mxu0 0.0
    %3934 = vmatprep.subr.mxu0 0.0
    %3935 = vmatpush1.msra.mxu0 0.0
    %3936 = vmatprep.subr.mxu0 0.0
    %3937 = vmatpush1.msra.mxu0 0.0
    %3938 = vmatprep.subr.mxu0 0.0
    %3939 = vmatpush1.msra.mxu0 0.0
    %3940 = vmatprep.subr.mxu0 0.0
    %3941 = vmatpush1.msra.mxu0 %v2172
    %3942 = vmatprep.subr.mxu0 0.0
    %3943 = vmatpush2.msra.mxu0 0.0
    %3944 = vmatprep.subr.mxu0 0.0
    %3945 = vmatpush2.msra.mxu0 0.0
    %3946 = vmatprep.subr.mxu0 0.0
    %3947 = vmatpush2.msra.mxu0 0.0
    %3948 = vmatprep.subr.mxu0 0.0
    %3949 = vmatpush2.msra.mxu0 0.0
    %3950 = vmatprep.subr.mxu0 0.0
    %3951 = vmatpush2.msra.mxu0 0.0
    %3952 = vmatprep.subr.mxu0 0.0
    %3953 = vmatpush2.msra.mxu0 0.0
    %3954 = vmatprep.subr.mxu0 0.0
    %3955 = vmatpush2.msra.mxu0 0.0
    %3956 = vmatprep.subr.mxu0 0.0
    %3957 = vmatpush2.msra.mxu0 0.0
    %3958 = vmatprep.subr.mxu0 0.0
    %3959 = vmatpush2.msra.mxu0 0.0
    %3960 = vmatprep.subr.mxu0 0.0
    %3961 = vmatpush2.msra.mxu0 0.0
    %3962 = vmatprep.subr.mxu0 0.0
    %3963 = vmatpush2.msra.mxu0 0.0
    %3964 = vmatprep.subr.mxu0 0.0
    %3965 = vmatpush2.msra.mxu0 0.0
    %3966 = vmatprep.subr.mxu0 0.0
    %3967 = vmatpush2.msra.mxu0 0.0
    %3968 = vmatprep.subr.mxu0 0.0
    %3969 = vmatpush2.msra.mxu0 0.0
    %3970 = vmatprep.subr.mxu0 0.0
    %3971 = vmatpush2.msra.mxu0 0.0
    %3972 = vmatprep.subr.mxu0 0.0
    %3973 = vmatpush2.msra.mxu0 0.0
    %3974 = vmatprep.mubr.f32.mxu0 0.0
    %3975 = vmatmul.mubr.f32.gmra.mxu0 %v3908
    %v3976 = vpop.f32.mrf.mxu0
    %v3977 = vadd.f32 0.0, %v3976
    %v3978 = vpop.f32.mrf.mxu0
    %3979 = vdwg.mxu0
    %v3981 = vsel %vm3438, %v3594, 0
    %3983 = vmatprep.subr.mxu0 0.0
    %3984 = vmatpush1.msra.mxu0 0.0
    %3985 = vmatprep.subr.mxu0 0.0
    %3986 = vmatpush1.msra.mxu0 0.0
    %3987 = vmatprep.subr.mxu0 0.0
    %3988 = vmatpush1.msra.mxu0 0.0
    %3989 = vmatprep.subr.mxu0 0.0
    %3990 = vmatpush1.msra.mxu0 0.0
    %3991 = vmatprep.subr.mxu0 0.0
    %3992 = vmatpush1.msra.mxu0 0.0
    %3993 = vmatprep.subr.mxu0 0.0
    %3994 = vmatpush1.msra.mxu0 0.0
    %3995 = vmatprep.subr.mxu0 0.0
    %3996 = vmatpush1.msra.mxu0 0.0
    %3997 = vmatprep.subr.mxu0 0.0
    %3998 = vmatpush1.msra.mxu0 0.0
    %3999 = vmatprep.subr.mxu0 0.0
    %4000 = vmatpush1.msra.mxu0 0.0
    %4001 = vmatprep.subr.mxu0 0.0
    %4002 = vmatpush1.msra.mxu0 0.0
    %4003 = vmatprep.subr.mxu0 0.0
    %4004 = vmatpush1.msra.mxu0 0.0
    %4005 = vmatprep.subr.mxu0 0.0
    %4006 = vmatpush1.msra.mxu0 0.0
    %4007 = vmatprep.subr.mxu0 0.0
    %4008 = vmatpush1.msra.mxu0 0.0
    %4009 = vmatprep.subr.mxu0 0.0
    %4010 = vmatpush1.msra.mxu0 0.0
    %4011 = vmatprep.subr.mxu0 0.0
    %4012 = vmatpush1.msra.mxu0 0.0
    %4013 = vmatprep.subr.mxu0 0.0
    %4014 = vmatpush1.msra.mxu0 %v2173
    %4015 = vmatprep.subr.mxu0 0.0
    %4016 = vmatpush2.msra.mxu0 0.0
    %4017 = vmatprep.subr.mxu0 0.0
    %4018 = vmatpush2.msra.mxu0 0.0
    %4019 = vmatprep.subr.mxu0 0.0
    %4020 = vmatpush2.msra.mxu0 0.0
    %4021 = vmatprep.subr.mxu0 0.0
    %4022 = vmatpush2.msra.mxu0 0.0
    %4023 = vmatprep.subr.mxu0 0.0
    %4024 = vmatpush2.msra.mxu0 0.0
    %4025 = vmatprep.subr.mxu0 0.0
    %4026 = vmatpush2.msra.mxu0 0.0
    %4027 = vmatprep.subr.mxu0 0.0
    %4028 = vmatpush2.msra.mxu0 0.0
    %4029 = vmatprep.subr.mxu0 0.0
    %4030 = vmatpush2.msra.mxu0 0.0
    %4031 = vmatprep.subr.mxu0 0.0
    %4032 = vmatpush2.msra.mxu0 0.0
    %4033 = vmatprep.subr.mxu0 0.0
    %4034 = vmatpush2.msra.mxu0 0.0
    %4035 = vmatprep.subr.mxu0 0.0
    %4036 = vmatpush2.msra.mxu0 0.0
    %4037 = vmatprep.subr.mxu0 0.0
    %4038 = vmatpush2.msra.mxu0 0.0
    %4039 = vmatprep.subr.mxu0 0.0
    %4040 = vmatpush2.msra.mxu0 0.0
    %4041 = vmatprep.subr.mxu0 0.0
    %4042 = vmatpush2.msra.mxu0 0.0
    %4043 = vmatprep.subr.mxu0 0.0
    %4044 = vmatpush2.msra.mxu0 0.0
    %4045 = vmatprep.subr.mxu0 0.0
    %4046 = vmatpush2.msra.mxu0 0.0
    %4047 = vmatprep.mubr.f32.mxu0 0.0
    %4048 = vmatmul.mubr.f32.gmra.mxu0 %v3981
    %v4049 = vpop.f32.mrf.mxu0
    %v4050 = vadd.f32 0.0, %v4049
    %v4051 = vpop.f32.mrf.mxu0
    %4052 = vdwg.mxu0
    %v4054 = vsel %vm3438, %v3596, 0
    %4056 = vmatprep.subr.mxu0 0.0
    %4057 = vmatpush1.msra.mxu0 0.0
    %4058 = vmatprep.subr.mxu0 0.0
    %4059 = vmatpush1.msra.mxu0 0.0
    %4060 = vmatprep.subr.mxu0 0.0
    %4061 = vmatpush1.msra.mxu0 0.0
    %4062 = vmatprep.subr.mxu0 0.0
    %4063 = vmatpush1.msra.mxu0 0.0
    %4064 = vmatprep.subr.mxu0 0.0
    %4065 = vmatpush1.msra.mxu0 0.0
    %4066 = vmatprep.subr.mxu0 0.0
    %4067 = vmatpush1.msra.mxu0 0.0
    %4068 = vmatprep.subr.mxu0 0.0
    %4069 = vmatpush1.msra.mxu0 0.0
    %4070 = vmatprep.subr.mxu0 0.0
    %4071 = vmatpush1.msra.mxu0 0.0
    %4072 = vmatprep.subr.mxu0 0.0
    %4073 = vmatpush1.msra.mxu0 0.0
    %4074 = vmatprep.subr.mxu0 0.0
    %4075 = vmatpush1.msra.mxu0 0.0
    %4076 = vmatprep.subr.mxu0 0.0
    %4077 = vmatpush1.msra.mxu0 0.0
    %4078 = vmatprep.subr.mxu0 0.0
    %4079 = vmatpush1.msra.mxu0 0.0
    %4080 = vmatprep.subr.mxu0 0.0
    %4081 = vmatpush1.msra.mxu0 0.0
    %4082 = vmatprep.subr.mxu0 0.0
    %4083 = vmatpush1.msra.mxu0 0.0
    %4084 = vmatprep.subr.mxu0 0.0
    %4085 = vmatpush1.msra.mxu0 0.0
    %4086 = vmatprep.subr.mxu0 0.0
    %4087 = vmatpush1.msra.mxu0 %v2177
    %4088 = vmatprep.subr.mxu0 0.0
    %4089 = vmatpush2.msra.mxu0 0.0
    %4090 = vmatprep.subr.mxu0 0.0
    %4091 = vmatpush2.msra.mxu0 0.0
    %4092 = vmatprep.subr.mxu0 0.0
    %4093 = vmatpush2.msra.mxu0 0.0
    %4094 = vmatprep.subr.mxu0 0.0
    %4095 = vmatpush2.msra.mxu0 0.0
    %4096 = vmatprep.subr.mxu0 0.0
    %4097 = vmatpush2.msra.mxu0 0.0
    %4098 = vmatprep.subr.mxu0 0.0
    %4099 = vmatpush2.msra.mxu0 0.0
    %4100 = vmatprep.subr.mxu0 0.0
    %4101 = vmatpush2.msra.mxu0 0.0
    %4102 = vmatprep.subr.mxu0 0.0
    %4103 = vmatpush2.msra.mxu0 0.0
    %4104 = vmatprep.subr.mxu0 0.0
    %4105 = vmatpush2.msra.mxu0 0.0
    %4106 = vmatprep.subr.mxu0 0.0
    %4107 = vmatpush2.msra.mxu0 0.0
    %4108 = vmatprep.subr.mxu0 0.0
    %4109 = vmatpush2.msra.mxu0 0.0
    %4110 = vmatprep.subr.mxu0 0.0
    %4111 = vmatpush2.msra.mxu0 0.0
    %4112 = vmatprep.subr.mxu0 0.0
    %4113 = vmatpush2.msra.mxu0 0.0
    %4114 = vmatprep.subr.mxu0 0.0
    %4115 = vmatpush2.msra.mxu0 0.0
    %4116 = vmatprep.subr.mxu0 0.0
    %4117 = vmatpush2.msra.mxu0 0.0
    %4118 = vmatprep.subr.mxu0 0.0
    %4119 = vmatpush2.msra.mxu0 0.0
    %4120 = vmatprep.mubr.f32.mxu0 0.0
    %4121 = vmatmul.mubr.f32.gmra.mxu0 %v4054
    %v4122 = vpop.f32.mrf.mxu0
    %v4123 = vadd.f32 0.0, %v4122
    %v4124 = vpop.f32.mrf.mxu0
    %4125 = vdwg.mxu0
    %v4127 = vsel %vm3438, %v3598, 0
    %4129 = vmatprep.subr.mxu0 0.0
    %4130 = vmatpush1.msra.mxu0 0.0
    %4131 = vmatprep.subr.mxu0 0.0
    %4132 = vmatpush1.msra.mxu0 0.0
    %4133 = vmatprep.subr.mxu0 0.0
    %4134 = vmatpush1.msra.mxu0 0.0
    %4135 = vmatprep.subr.mxu0 0.0
    %4136 = vmatpush1.msra.mxu0 0.0
    %4137 = vmatprep.subr.mxu0 0.0
    %4138 = vmatpush1.msra.mxu0 0.0
    %4139 = vmatprep.subr.mxu0 0.0
    %4140 = vmatpush1.msra.mxu0 0.0
    %4141 = vmatprep.subr.mxu0 0.0
    %4142 = vmatpush1.msra.mxu0 0.0
    %4143 = vmatprep.subr.mxu0 0.0
    %4144 = vmatpush1.msra.mxu0 0.0
    %4145 = vmatprep.subr.mxu0 0.0
    %4146 = vmatpush1.msra.mxu0 0.0
    %4147 = vmatprep.subr.mxu0 0.0
    %4148 = vmatpush1.msra.mxu0 0.0
    %4149 = vmatprep.subr.mxu0 0.0
    %4150 = vmatpush1.msra.mxu0 0.0
    %4151 = vmatprep.subr.mxu0 0.0
    %4152 = vmatpush1.msra.mxu0 0.0
    %4153 = vmatprep.subr.mxu0 0.0
    %4154 = vmatpush1.msra.mxu0 0.0
    %4155 = vmatprep.subr.mxu0 0.0
    %4156 = vmatpush1.msra.mxu0 0.0
    %4157 = vmatprep.subr.mxu0 0.0
    %4158 = vmatpush1.msra.mxu0 0.0
    %4159 = vmatprep.subr.mxu0 0.0
    %4160 = vmatpush1.msra.mxu0 %v2179
    %4161 = vmatprep.subr.mxu0 0.0
    %4162 = vmatpush2.msra.mxu0 0.0
    %4163 = vmatprep.subr.mxu0 0.0
    %4164 = vmatpush2.msra.mxu0 0.0
    %4165 = vmatprep.subr.mxu0 0.0
    %4166 = vmatpush2.msra.mxu0 0.0
    %4167 = vmatprep.subr.mxu0 0.0
    %4168 = vmatpush2.msra.mxu0 0.0
    %4169 = vmatprep.subr.mxu0 0.0
    %4170 = vmatpush2.msra.mxu0 0.0
    %4171 = vmatprep.subr.mxu0 0.0
    %4172 = vmatpush2.msra.mxu0 0.0
    %4173 = vmatprep.subr.mxu0 0.0
    %4174 = vmatpush2.msra.mxu0 0.0
    %4175 = vmatprep.subr.mxu0 0.0
    %4176 = vmatpush2.msra.mxu0 0.0
    %4177 = vmatprep.subr.mxu0 0.0
    %4178 = vmatpush2.msra.mxu0 0.0
    %4179 = vmatprep.subr.mxu0 0.0
    %4180 = vmatpush2.msra.mxu0 0.0
    %4181 = vmatprep.subr.mxu0 0.0
    %4182 = vmatpush2.msra.mxu0 0.0
    %4183 = vmatprep.subr.mxu0 0.0
    %4184 = vmatpush2.msra.mxu0 0.0
    %4185 = vmatprep.subr.mxu0 0.0
    %4186 = vmatpush2.msra.mxu0 0.0
    %4187 = vmatprep.subr.mxu0 0.0
    %4188 = vmatpush2.msra.mxu0 0.0
    %4189 = vmatprep.subr.mxu0 0.0
    %4190 = vmatpush2.msra.mxu0 0.0
    %4191 = vmatprep.subr.mxu0 0.0
    %4192 = vmatpush2.msra.mxu0 0.0
    %4193 = vmatprep.mubr.f32.mxu0 0.0
    %4194 = vmatmul.mubr.f32.gmra.mxu0 %v4127
    %v4195 = vpop.f32.mrf.mxu0
    %v4196 = vadd.f32 0.0, %v4195
    %v4197 = vpop.f32.mrf.mxu0
    %4198 = vdwg.mxu0
    %v4200 = vsel %vm3438, %v3600, 0
    %4202 = vmatprep.subr.mxu0 0.0
    %4203 = vmatpush1.msra.mxu0 0.0
    %4204 = vmatprep.subr.mxu0 0.0
    %4205 = vmatpush1.msra.mxu0 0.0
    %4206 = vmatprep.subr.mxu0 0.0
    %4207 = vmatpush1.msra.mxu0 0.0
    %4208 = vmatprep.subr.mxu0 0.0
    %4209 = vmatpush1.msra.mxu0 0.0
    %4210 = vmatprep.subr.mxu0 0.0
    %4211 = vmatpush1.msra.mxu0 0.0
    %4212 = vmatprep.subr.mxu0 0.0
    %4213 = vmatpush1.msra.mxu0 0.0
    %4214 = vmatprep.subr.mxu0 0.0
    %4215 = vmatpush1.msra.mxu0 0.0
    %4216 = vmatprep.subr.mxu0 0.0
    %4217 = vmatpush1.msra.mxu0 0.0
    %4218 = vmatprep.subr.mxu0 0.0
    %4219 = vmatpush1.msra.mxu0 0.0
    %4220 = vmatprep.subr.mxu0 0.0
    %4221 = vmatpush1.msra.mxu0 0.0
    %4222 = vmatprep.subr.mxu0 0.0
    %4223 = vmatpush1.msra.mxu0 0.0
    %4224 = vmatprep.subr.mxu0 0.0
    %4225 = vmatpush1.msra.mxu0 0.0
    %4226 = vmatprep.subr.mxu0 0.0
    %4227 = vmatpush1.msra.mxu0 0.0
    %4228 = vmatprep.subr.mxu0 0.0
    %4229 = vmatpush1.msra.mxu0 0.0
    %4230 = vmatprep.subr.mxu0 0.0
    %4231 = vmatpush1.msra.mxu0 0.0
    %4232 = vmatprep.subr.mxu0 0.0
    %4233 = vmatpush1.msra.mxu0 %v2183
    %4234 = vmatprep.subr.mxu0 0.0
    %4235 = vmatpush2.msra.mxu0 0.0
    %4236 = vmatprep.subr.mxu0 0.0
    %4237 = vmatpush2.msra.mxu0 0.0
    %4238 = vmatprep.subr.mxu0 0.0
    %4239 = vmatpush2.msra.mxu0 0.0
    %4240 = vmatprep.subr.mxu0 0.0
    %4241 = vmatpush2.msra.mxu0 0.0
    %4242 = vmatprep.subr.mxu0 0.0
    %4243 = vmatpush2.msra.mxu0 0.0
    %4244 = vmatprep.subr.mxu0 0.0
    %4245 = vmatpush2.msra.mxu0 0.0
    %4246 = vmatprep.subr.mxu0 0.0
    %4247 = vmatpush2.msra.mxu0 0.0
    %4248 = vmatprep.subr.mxu0 0.0
    %4249 = vmatpush2.msra.mxu0 0.0
    %4250 = vmatprep.subr.mxu0 0.0
    %4251 = vmatpush2.msra.mxu0 0.0
    %4252 = vmatprep.subr.mxu0 0.0
    %4253 = vmatpush2.msra.mxu0 0.0
    %4254 = vmatprep.subr.mxu0 0.0
    %4255 = vmatpush2.msra.mxu0 0.0
    %4256 = vmatprep.subr.mxu0 0.0
    %4257 = vmatpush2.msra.mxu0 0.0
    %4258 = vmatprep.subr.mxu0 0.0
    %4259 = vmatpush2.msra.mxu0 0.0
    %4260 = vmatprep.subr.mxu0 0.0
    %4261 = vmatpush2.msra.mxu0 0.0
    %4262 = vmatprep.subr.mxu0 0.0
    %4263 = vmatpush2.msra.mxu0 0.0
    %4264 = vmatprep.subr.mxu0 0.0
    %4265 = vmatpush2.msra.mxu0 0.0
    %4266 = vmatprep.mubr.f32.mxu0 0.0
    %4267 = vmatmul.mubr.f32.gmra.mxu0 %v4200
    %v4268 = vpop.f32.mrf.mxu0
    %v4269 = vadd.f32 0.0, %v4268
    %v4270 = vpop.f32.mrf.mxu0
    %4271 = vdwg.mxu0
    %v4273 = vsel %vm3438, %v3602, 0
    %4275 = vmatprep.subr.mxu0 0.0
    %4276 = vmatpush1.msra.mxu0 0.0
    %4277 = vmatprep.subr.mxu0 0.0
    %4278 = vmatpush1.msra.mxu0 0.0
    %4279 = vmatprep.subr.mxu0 0.0
    %4280 = vmatpush1.msra.mxu0 0.0
    %4281 = vmatprep.subr.mxu0 0.0
    %4282 = vmatpush1.msra.mxu0 0.0
    %4283 = vmatprep.subr.mxu0 0.0
    %4284 = vmatpush1.msra.mxu0 0.0
    %4285 = vmatprep.subr.mxu0 0.0
    %4286 = vmatpush1.msra.mxu0 0.0
    %4287 = vmatprep.subr.mxu0 0.0
    %4288 = vmatpush1.msra.mxu0 0.0
    %4289 = vmatprep.subr.mxu0 0.0
    %4290 = vmatpush1.msra.mxu0 0.0
    %4291 = vmatprep.subr.mxu0 0.0
    %4292 = vmatpush1.msra.mxu0 0.0
    %4293 = vmatprep.subr.mxu0 0.0
    %4294 = vmatpush1.msra.mxu0 0.0
    %4295 = vmatprep.subr.mxu0 0.0
    %4296 = vmatpush1.msra.mxu0 0.0
    %4297 = vmatprep.subr.mxu0 0.0
    %4298 = vmatpush1.msra.mxu0 0.0
    %4299 = vmatprep.subr.mxu0 0.0
    %4300 = vmatpush1.msra.mxu0 0.0
    %4301 = vmatprep.subr.mxu0 0.0
    %4302 = vmatpush1.msra.mxu0 0.0
    %4303 = vmatprep.subr.mxu0 0.0
    %4304 = vmatpush1.msra.mxu0 0.0
    %4305 = vmatprep.subr.mxu0 0.0
    %4306 = vmatpush1.msra.mxu0 %v2185
    %4307 = vmatprep.subr.mxu0 0.0
    %4308 = vmatpush2.msra.mxu0 0.0
    %4309 = vmatprep.subr.mxu0 0.0
    %4310 = vmatpush2.msra.mxu0 0.0
    %4311 = vmatprep.subr.mxu0 0.0
    %4312 = vmatpush2.msra.mxu0 0.0
    %4313 = vmatprep.subr.mxu0 0.0
    %4314 = vmatpush2.msra.mxu0 0.0
    %4315 = vmatprep.subr.mxu0 0.0
    %4316 = vmatpush2.msra.mxu0 0.0
    %4317 = vmatprep.subr.mxu0 0.0
    %4318 = vmatpush2.msra.mxu0 0.0
    %4319 = vmatprep.subr.mxu0 0.0
    %4320 = vmatpush2.msra.mxu0 0.0
    %4321 = vmatprep.subr.mxu0 0.0
    %4322 = vmatpush2.msra.mxu0 0.0
    %4323 = vmatprep.subr.mxu0 0.0
    %4324 = vmatpush2.msra.mxu0 0.0
    %4325 = vmatprep.subr.mxu0 0.0
    %4326 = vmatpush2.msra.mxu0 0.0
    %4327 = vmatprep.subr.mxu0 0.0
    %4328 = vmatpush2.msra.mxu0 0.0
    %4329 = vmatprep.subr.mxu0 0.0
    %4330 = vmatpush2.msra.mxu0 0.0
    %4331 = vmatprep.subr.mxu0 0.0
    %4332 = vmatpush2.msra.mxu0 0.0
    %4333 = vmatprep.subr.mxu0 0.0
    %4334 = vmatpush2.msra.mxu0 0.0
    %4335 = vmatprep.subr.mxu0 0.0
    %4336 = vmatpush2.msra.mxu0 0.0
    %4337 = vmatprep.subr.mxu0 0.0
    %4338 = vmatpush2.msra.mxu0 0.0
    %4339 = vmatprep.mubr.f32.mxu0 0.0
    %4340 = vmatmul.mubr.f32.gmra.mxu0 %v4273
    %v4341 = vpop.f32.mrf.mxu0
    %v4342 = vadd.f32 0.0, %v4341
    %v4343 = vpop.f32.mrf.mxu0
    %4344 = vdwg.mxu0
    %v4346 = vsel %vm3438, %v3604, 0
    %4348 = vmatprep.subr.mxu0 0.0
    %4349 = vmatpush1.msra.mxu0 0.0
    %4350 = vmatprep.subr.mxu0 0.0
    %4351 = vmatpush1.msra.mxu0 0.0
    %4352 = vmatprep.subr.mxu0 0.0
    %4353 = vmatpush1.msra.mxu0 0.0
    %4354 = vmatprep.subr.mxu0 0.0
    %4355 = vmatpush1.msra.mxu0 0.0
    %4356 = vmatprep.subr.mxu0 0.0
    %4357 = vmatpush1.msra.mxu0 0.0
    %4358 = vmatprep.subr.mxu0 0.0
    %4359 = vmatpush1.msra.mxu0 0.0
    %4360 = vmatprep.subr.mxu0 0.0
    %4361 = vmatpush1.msra.mxu0 0.0
    %4362 = vmatprep.subr.mxu0 0.0
    %4363 = vmatpush1.msra.mxu0 0.0
    %4364 = vmatprep.subr.mxu0 0.0
    %4365 = vmatpush1.msra.mxu0 0.0
    %4366 = vmatprep.subr.mxu0 0.0
    %4367 = vmatpush1.msra.mxu0 0.0
    %4368 = vmatprep.subr.mxu0 0.0
    %4369 = vmatpush1.msra.mxu0 0.0
    %4370 = vmatprep.subr.mxu0 0.0
    %4371 = vmatpush1.msra.mxu0 0.0
    %4372 = vmatprep.subr.mxu0 0.0
    %4373 = vmatpush1.msra.mxu0 0.0
    %4374 = vmatprep.subr.mxu0 0.0
    %4375 = vmatpush1.msra.mxu0 0.0
    %4376 = vmatprep.subr.mxu0 0.0
    %4377 = vmatpush1.msra.mxu0 0.0
    %4378 = vmatprep.subr.mxu0 0.0
    %4379 = vmatpush1.msra.mxu0 %v2198
    %4380 = vmatprep.subr.mxu0 0.0
    %4381 = vmatpush2.msra.mxu0 0.0
    %4382 = vmatprep.subr.mxu0 0.0
    %4383 = vmatpush2.msra.mxu0 0.0
    %4384 = vmatprep.subr.mxu0 0.0
    %4385 = vmatpush2.msra.mxu0 0.0
    %4386 = vmatprep.subr.mxu0 0.0
    %4387 = vmatpush2.msra.mxu0 0.0
    %4388 = vmatprep.subr.mxu0 0.0
    %4389 = vmatpush2.msra.mxu0 0.0
    %4390 = vmatprep.subr.mxu0 0.0
    %4391 = vmatpush2.msra.mxu0 0.0
    %4392 = vmatprep.subr.mxu0 0.0
    %4393 = vmatpush2.msra.mxu0 0.0
    %4394 = vmatprep.subr.mxu0 0.0
    %4395 = vmatpush2.msra.mxu0 0.0
    %4396 = vmatprep.subr.mxu0 0.0
    %4397 = vmatpush2.msra.mxu0 0.0
    %4398 = vmatprep.subr.mxu0 0.0
    %4399 = vmatpush2.msra.mxu0 0.0
    %4400 = vmatprep.subr.mxu0 0.0
    %4401 = vmatpush2.msra.mxu0 0.0
    %4402 = vmatprep.subr.mxu0 0.0
    %4403 = vmatpush2.msra.mxu0 0.0
    %4404 = vmatprep.subr.mxu0 0.0
    %4405 = vmatpush2.msra.mxu0 0.0
    %4406 = vmatprep.subr.mxu0 0.0
    %4407 = vmatpush2.msra.mxu0 0.0
    %4408 = vmatprep.subr.mxu0 0.0
    %4409 = vmatpush2.msra.mxu0 0.0
    %4410 = vmatprep.subr.mxu0 0.0
    %4411 = vmatpush2.msra.mxu0 0.0
    %4412 = vmatprep.mubr.f32.mxu0 0.0
    %4413 = vmatmul.mubr.f32.gmra.mxu0 %v4346
    %v4414 = vpop.f32.mrf.mxu0
    %v4415 = vadd.f32 0.0, %v4414
    %v4416 = vpop.f32.mrf.mxu0
    %4417 = vdwg.mxu0
    %v4419 = vsel %vm3438, %v3606, 0
    %4421 = vmatprep.subr.mxu0 0.0
    %4422 = vmatpush1.msra.mxu0 0.0
    %4423 = vmatprep.subr.mxu0 0.0
    %4424 = vmatpush1.msra.mxu0 0.0
    %4425 = vmatprep.subr.mxu0 0.0
    %4426 = vmatpush1.msra.mxu0 0.0
    %4427 = vmatprep.subr.mxu0 0.0
    %4428 = vmatpush1.msra.mxu0 0.0
    %4429 = vmatprep.subr.mxu0 0.0
    %4430 = vmatpush1.msra.mxu0 0.0
    %4431 = vmatprep.subr.mxu0 0.0
    %4432 = vmatpush1.msra.mxu0 0.0
    %4433 = vmatprep.subr.mxu0 0.0
    %4434 = vmatpush1.msra.mxu0 0.0
    %4435 = vmatprep.subr.mxu0 0.0
    %4436 = vmatpush1.msra.mxu0 0.0
    %4437 = vmatprep.subr.mxu0 0.0
    %4438 = vmatpush1.msra.mxu0 0.0
    %4439 = vmatprep.subr.mxu0 0.0
    %4440 = vmatpush1.msra.mxu0 0.0
    %4441 = vmatprep.subr.mxu0 0.0
    %4442 = vmatpush1.msra.mxu0 0.0
    %4443 = vmatprep.subr.mxu0 0.0
    %4444 = vmatpush1.msra.mxu0 0.0
    %4445 = vmatprep.subr.mxu0 0.0
    %4446 = vmatpush1.msra.mxu0 0.0
    %4447 = vmatprep.subr.mxu0 0.0
    %4448 = vmatpush1.msra.mxu0 0.0
    %4449 = vmatprep.subr.mxu0 0.0
    %4450 = vmatpush1.msra.mxu0 0.0
    %4451 = vmatprep.subr.mxu0 0.0
    %4452 = vmatpush1.msra.mxu0 %v2199
    %4453 = vmatprep.subr.mxu0 0.0
    %4454 = vmatpush2.msra.mxu0 0.0
    %4455 = vmatprep.subr.mxu0 0.0
    %4456 = vmatpush2.msra.mxu0 0.0
    %4457 = vmatprep.subr.mxu0 0.0
    %4458 = vmatpush2.msra.mxu0 0.0
    %4459 = vmatprep.subr.mxu0 0.0
    %4460 = vmatpush2.msra.mxu0 0.0
    %4461 = vmatprep.subr.mxu0 0.0
    %4462 = vmatpush2.msra.mxu0 0.0
    %4463 = vmatprep.subr.mxu0 0.0
    %4464 = vmatpush2.msra.mxu0 0.0
    %4465 = vmatprep.subr.mxu0 0.0
    %4466 = vmatpush2.msra.mxu0 0.0
    %4467 = vmatprep.subr.mxu0 0.0
    %4468 = vmatpush2.msra.mxu0 0.0
    %4469 = vmatprep.subr.mxu0 0.0
    %4470 = vmatpush2.msra.mxu0 0.0
    %4471 = vmatprep.subr.mxu0 0.0
    %4472 = vmatpush2.msra.mxu0 0.0
    %4473 = vmatprep.subr.mxu0 0.0
    %4474 = vmatpush2.msra.mxu0 0.0
    %4475 = vmatprep.subr.mxu0 0.0
    %4476 = vmatpush2.msra.mxu0 0.0
    %4477 = vmatprep.subr.mxu0 0.0
    %4478 = vmatpush2.msra.mxu0 0.0
    %4479 = vmatprep.subr.mxu0 0.0
    %4480 = vmatpush2.msra.mxu0 0.0
    %4481 = vmatprep.subr.mxu0 0.0
    %4482 = vmatpush2.msra.mxu0 0.0
    %4483 = vmatprep.subr.mxu0 0.0
    %4484 = vmatpush2.msra.mxu0 0.0
    %4485 = vmatprep.mubr.f32.mxu0 0.0
    %4486 = vmatmul.mubr.f32.gmra.mxu0 %v4419
    %v4487 = vpop.f32.mrf.mxu0
    %v4488 = vadd.f32 0.0, %v4487
    %v4489 = vpop.f32.mrf.mxu0
    %4490 = vdwg.mxu0
    %v4492 = vsel %vm3438, %v3608, 0
    %4494 = vmatprep.subr.mxu0 0.0
    %4495 = vmatpush1.msra.mxu0 0.0
    %4496 = vmatprep.subr.mxu0 0.0
    %4497 = vmatpush1.msra.mxu0 0.0
    %4498 = vmatprep.subr.mxu0 0.0
    %4499 = vmatpush1.msra.mxu0 0.0
    %4500 = vmatprep.subr.mxu0 0.0
    %4501 = vmatpush1.msra.mxu0 0.0
    %4502 = vmatprep.subr.mxu0 0.0
    %4503 = vmatpush1.msra.mxu0 0.0
    %4504 = vmatprep.subr.mxu0 0.0
    %4505 = vmatpush1.msra.mxu0 0.0
    %4506 = vmatprep.subr.mxu0 0.0
    %4507 = vmatpush1.msra.mxu0 0.0
    %4508 = vmatprep.subr.mxu0 0.0
    %4509 = vmatpush1.msra.mxu0 0.0
    %4510 = vmatprep.subr.mxu0 0.0
    %4511 = vmatpush1.msra.mxu0 0.0
    %4512 = vmatprep.subr.mxu0 0.0
    %4513 = vmatpush1.msra.mxu0 0.0
    %4514 = vmatprep.subr.mxu0 0.0
    %4515 = vmatpush1.msra.mxu0 0.0
    %4516 = vmatprep.subr.mxu0 0.0
    %4517 = vmatpush1.msra.mxu0 0.0
    %4518 = vmatprep.subr.mxu0 0.0
    %4519 = vmatpush1.msra.mxu0 0.0
    %4520 = vmatprep.subr.mxu0 0.0
    %4521 = vmatpush1.msra.mxu0 0.0
    %4522 = vmatprep.subr.mxu0 0.0
    %4523 = vmatpush1.msra.mxu0 0.0
    %4524 = vmatprep.subr.mxu0 0.0
    %4525 = vmatpush1.msra.mxu0 %v2203
    %4526 = vmatprep.subr.mxu0 0.0
    %4527 = vmatpush2.msra.mxu0 0.0
    %4528 = vmatprep.subr.mxu0 0.0
    %4529 = vmatpush2.msra.mxu0 0.0
    %4530 = vmatprep.subr.mxu0 0.0
    %4531 = vmatpush2.msra.mxu0 0.0
    %4532 = vmatprep.subr.mxu0 0.0
    %4533 = vmatpush2.msra.mxu0 0.0
    %4534 = vmatprep.subr.mxu0 0.0
    %4535 = vmatpush2.msra.mxu0 0.0
    %4536 = vmatprep.subr.mxu0 0.0
    %4537 = vmatpush2.msra.mxu0 0.0
    %4538 = vmatprep.subr.mxu0 0.0
    %4539 = vmatpush2.msra.mxu0 0.0
    %4540 = vmatprep.subr.mxu0 0.0
    %4541 = vmatpush2.msra.mxu0 0.0
    %4542 = vmatprep.subr.mxu0 0.0
    %4543 = vmatpush2.msra.mxu0 0.0
    %4544 = vmatprep.subr.mxu0 0.0
    %4545 = vmatpush2.msra.mxu0 0.0
    %4546 = vmatprep.subr.mxu0 0.0
    %4547 = vmatpush2.msra.mxu0 0.0
    %4548 = vmatprep.subr.mxu0 0.0
    %4549 = vmatpush2.msra.mxu0 0.0
    %4550 = vmatprep.subr.mxu0 0.0
    %4551 = vmatpush2.msra.mxu0 0.0
    %4552 = vmatprep.subr.mxu0 0.0
    %4553 = vmatpush2.msra.mxu0 0.0
    %4554 = vmatprep.subr.mxu0 0.0
    %4555 = vmatpush2.msra.mxu0 0.0
    %4556 = vmatprep.subr.mxu0 0.0
    %4557 = vmatpush2.msra.mxu0 0.0
    %4558 = vmatprep.mubr.f32.mxu0 0.0
    %4559 = vmatmul.mubr.f32.gmra.mxu0 %v4492
    %v4560 = vpop.f32.mrf.mxu0
    %v4561 = vadd.f32 0.0, %v4560
    %v4562 = vpop.f32.mrf.mxu0
    %4563 = vdwg.mxu0
    %v4565 = vsel %vm3438, %v3610, 0
    %4567 = vmatprep.subr.mxu0 0.0
    %4568 = vmatpush1.msra.mxu0 0.0
    %4569 = vmatprep.subr.mxu0 0.0
    %4570 = vmatpush1.msra.mxu0 0.0
    %4571 = vmatprep.subr.mxu0 0.0
    %4572 = vmatpush1.msra.mxu0 0.0
    %4573 = vmatprep.subr.mxu0 0.0
    %4574 = vmatpush1.msra.mxu0 0.0
    %4575 = vmatprep.subr.mxu0 0.0
    %4576 = vmatpush1.msra.mxu0 0.0
    %4577 = vmatprep.subr.mxu0 0.0
    %4578 = vmatpush1.msra.mxu0 0.0
    %4579 = vmatprep.subr.mxu0 0.0
    %4580 = vmatpush1.msra.mxu0 0.0
    %4581 = vmatprep.subr.mxu0 0.0
    %4582 = vmatpush1.msra.mxu0 0.0
    %4583 = vmatprep.subr.mxu0 0.0
    %4584 = vmatpush1.msra.mxu0 0.0
    %4585 = vmatprep.subr.mxu0 0.0
    %4586 = vmatpush1.msra.mxu0 0.0
    %4587 = vmatprep.subr.mxu0 0.0
    %4588 = vmatpush1.msra.mxu0 0.0
    %4589 = vmatprep.subr.mxu0 0.0
    %4590 = vmatpush1.msra.mxu0 0.0
    %4591 = vmatprep.subr.mxu0 0.0
    %4592 = vmatpush1.msra.mxu0 0.0
    %4593 = vmatprep.subr.mxu0 0.0
    %4594 = vmatpush1.msra.mxu0 0.0
    %4595 = vmatprep.subr.mxu0 0.0
    %4596 = vmatpush1.msra.mxu0 0.0
    %4597 = vmatprep.subr.mxu0 0.0
    %4598 = vmatpush1.msra.mxu0 %v2205
    %4599 = vmatprep.subr.mxu0 0.0
    %4600 = vmatpush2.msra.mxu0 0.0
    %4601 = vmatprep.subr.mxu0 0.0
    %4602 = vmatpush2.msra.mxu0 0.0
    %4603 = vmatprep.subr.mxu0 0.0
    %4604 = vmatpush2.msra.mxu0 0.0
    %4605 = vmatprep.subr.mxu0 0.0
    %4606 = vmatpush2.msra.mxu0 0.0
    %4607 = vmatprep.subr.mxu0 0.0
    %4608 = vmatpush2.msra.mxu0 0.0
    %4609 = vmatprep.subr.mxu0 0.0
    %4610 = vmatpush2.msra.mxu0 0.0
    %4611 = vmatprep.subr.mxu0 0.0
    %4612 = vmatpush2.msra.mxu0 0.0
    %4613 = vmatprep.subr.mxu0 0.0
    %4614 = vmatpush2.msra.mxu0 0.0
    %4615 = vmatprep.subr.mxu0 0.0
    %4616 = vmatpush2.msra.mxu0 0.0
    %4617 = vmatprep.subr.mxu0 0.0
    %4618 = vmatpush2.msra.mxu0 0.0
    %4619 = vmatprep.subr.mxu0 0.0
    %4620 = vmatpush2.msra.mxu0 0.0
    %4621 = vmatprep.subr.mxu0 0.0
    %4622 = vmatpush2.msra.mxu0 0.0
    %4623 = vmatprep.subr.mxu0 0.0
    %4624 = vmatpush2.msra.mxu0 0.0
    %4625 = vmatprep.subr.mxu0 0.0
    %4626 = vmatpush2.msra.mxu0 0.0
    %4627 = vmatprep.subr.mxu0 0.0
    %4628 = vmatpush2.msra.mxu0 0.0
    %4629 = vmatprep.subr.mxu0 0.0
    %4630 = vmatpush2.msra.mxu0 0.0
    %4631 = vmatprep.mubr.f32.mxu0 0.0
    %4632 = vmatmul.mubr.f32.gmra.mxu0 %v4565
    %v4633 = vpop.f32.mrf.mxu0
    %v4634 = vadd.f32 0.0, %v4633
    %v4635 = vpop.f32.mrf.mxu0
    %4636 = vdwg.mxu0
    %v4638 = vsel %vm3438, %v3612, 0
    %4640 = vmatprep.subr.mxu0 0.0
    %4641 = vmatpush1.msra.mxu0 0.0
    %4642 = vmatprep.subr.mxu0 0.0
    %4643 = vmatpush1.msra.mxu0 0.0
    %4644 = vmatprep.subr.mxu0 0.0
    %4645 = vmatpush1.msra.mxu0 0.0
    %4646 = vmatprep.subr.mxu0 0.0
    %4647 = vmatpush1.msra.mxu0 0.0
    %4648 = vmatprep.subr.mxu0 0.0
    %4649 = vmatpush1.msra.mxu0 0.0
    %4650 = vmatprep.subr.mxu0 0.0
    %4651 = vmatpush1.msra.mxu0 0.0
    %4652 = vmatprep.subr.mxu0 0.0
    %4653 = vmatpush1.msra.mxu0 0.0
    %4654 = vmatprep.subr.mxu0 0.0
    %4655 = vmatpush1.msra.mxu0 0.0
    %4656 = vmatprep.subr.mxu0 0.0
    %4657 = vmatpush1.msra.mxu0 0.0
    %4658 = vmatprep.subr.mxu0 0.0
    %4659 = vmatpush1.msra.mxu0 0.0
    %4660 = vmatprep.subr.mxu0 0.0
    %4661 = vmatpush1.msra.mxu0 0.0
    %4662 = vmatprep.subr.mxu0 0.0
    %4663 = vmatpush1.msra.mxu0 0.0
    %4664 = vmatprep.subr.mxu0 0.0
    %4665 = vmatpush1.msra.mxu0 0.0
    %4666 = vmatprep.subr.mxu0 0.0
    %4667 = vmatpush1.msra.mxu0 0.0
    %4668 = vmatprep.subr.mxu0 0.0
    %4669 = vmatpush1.msra.mxu0 0.0
    %4670 = vmatprep.subr.mxu0 0.0
    %4671 = vmatpush1.msra.mxu0 %v2209
    %4672 = vmatprep.subr.mxu0 0.0
    %4673 = vmatpush2.msra.mxu0 0.0
    %4674 = vmatprep.subr.mxu0 0.0
    %4675 = vmatpush2.msra.mxu0 0.0
    %4676 = vmatprep.subr.mxu0 0.0
    %4677 = vmatpush2.msra.mxu0 0.0
    %4678 = vmatprep.subr.mxu0 0.0
    %4679 = vmatpush2.msra.mxu0 0.0
    %4680 = vmatprep.subr.mxu0 0.0
    %4681 = vmatpush2.msra.mxu0 0.0
    %4682 = vmatprep.subr.mxu0 0.0
    %4683 = vmatpush2.msra.mxu0 0.0
    %4684 = vmatprep.subr.mxu0 0.0
    %4685 = vmatpush2.msra.mxu0 0.0
    %4686 = vmatprep.subr.mxu0 0.0
    %4687 = vmatpush2.msra.mxu0 0.0
    %4688 = vmatprep.subr.mxu0 0.0
    %4689 = vmatpush2.msra.mxu0 0.0
    %4690 = vmatprep.subr.mxu0 0.0
    %4691 = vmatpush2.msra.mxu0 0.0
    %4692 = vmatprep.subr.mxu0 0.0
    %4693 = vmatpush2.msra.mxu0 0.0
    %4694 = vmatprep.subr.mxu0 0.0
    %4695 = vmatpush2.msra.mxu0 0.0
    %4696 = vmatprep.subr.mxu0 0.0
    %4697 = vmatpush2.msra.mxu0 0.0
    %4698 = vmatprep.subr.mxu0 0.0
    %4699 = vmatpush2.msra.mxu0 0.0
    %4700 = vmatprep.subr.mxu0 0.0
    %4701 = vmatpush2.msra.mxu0 0.0
    %4702 = vmatprep.subr.mxu0 0.0
    %4703 = vmatpush2.msra.mxu0 0.0
    %4704 = vmatprep.mubr.f32.mxu0 0.0
    %4705 = vmatmul.mubr.f32.gmra.mxu0 %v4638
    %v4706 = vpop.f32.mrf.mxu0
    %v4707 = vadd.f32 0.0, %v4706
    %v4708 = vpop.f32.mrf.mxu0
    %4709 = vdwg.mxu0
    %v4711 = vsel %vm3438, %v3614, 0
    %4713 = vmatprep.subr.mxu0 0.0
    %4714 = vmatpush1.msra.mxu0 0.0
    %4715 = vmatprep.subr.mxu0 0.0
    %4716 = vmatpush1.msra.mxu0 0.0
    %4717 = vmatprep.subr.mxu0 0.0
    %4718 = vmatpush1.msra.mxu0 0.0
    %4719 = vmatprep.subr.mxu0 0.0
    %4720 = vmatpush1.msra.mxu0 0.0
    %4721 = vmatprep.subr.mxu0 0.0
    %4722 = vmatpush1.msra.mxu0 0.0
    %4723 = vmatprep.subr.mxu0 0.0
    %4724 = vmatpush1.msra.mxu0 0.0
    %4725 = vmatprep.subr.mxu0 0.0
    %4726 = vmatpush1.msra.mxu0 0.0
    %4727 = vmatprep.subr.mxu0 0.0
    %4728 = vmatpush1.msra.mxu0 0.0
    %4729 = vmatprep.subr.mxu0 0.0
    %4730 = vmatpush1.msra.mxu0 0.0
    %4731 = vmatprep.subr.mxu0 0.0
    %4732 = vmatpush1.msra.mxu0 0.0
    %4733 = vmatprep.subr.mxu0 0.0
    %4734 = vmatpush1.msra.mxu0 0.0
    %4735 = vmatprep.subr.mxu0 0.0
    %4736 = vmatpush1.msra.mxu0 0.0
    %4737 = vmatprep.subr.mxu0 0.0
    %4738 = vmatpush1.msra.mxu0 0.0
    %4739 = vmatprep.subr.mxu0 0.0
    %4740 = vmatpush1.msra.mxu0 0.0
    %4741 = vmatprep.subr.mxu0 0.0
    %4742 = vmatpush1.msra.mxu0 0.0
    %4743 = vmatprep.subr.mxu0 0.0
    %4744 = vmatpush1.msra.mxu0 %v2211
    %4745 = vmatprep.subr.mxu0 0.0
    %4746 = vmatpush2.msra.mxu0 0.0
    %4747 = vmatprep.subr.mxu0 0.0
    %4748 = vmatpush2.msra.mxu0 0.0
    %4749 = vmatprep.subr.mxu0 0.0
    %4750 = vmatpush2.msra.mxu0 0.0
    %4751 = vmatprep.subr.mxu0 0.0
    %4752 = vmatpush2.msra.mxu0 0.0
    %4753 = vmatprep.subr.mxu0 0.0
    %4754 = vmatpush2.msra.mxu0 0.0
    %4755 = vmatprep.subr.mxu0 0.0
    %4756 = vmatpush2.msra.mxu0 0.0
    %4757 = vmatprep.subr.mxu0 0.0
    %4758 = vmatpush2.msra.mxu0 0.0
    %4759 = vmatprep.subr.mxu0 0.0
    %4760 = vmatpush2.msra.mxu0 0.0
    %4761 = vmatprep.subr.mxu0 0.0
    %4762 = vmatpush2.msra.mxu0 0.0
    %4763 = vmatprep.subr.mxu0 0.0
    %4764 = vmatpush2.msra.mxu0 0.0
    %4765 = vmatprep.subr.mxu0 0.0
    %4766 = vmatpush2.msra.mxu0 0.0
    %4767 = vmatprep.subr.mxu0 0.0
    %4768 = vmatpush2.msra.mxu0 0.0
    %4769 = vmatprep.subr.mxu0 0.0
    %4770 = vmatpush2.msra.mxu0 0.0
    %4771 = vmatprep.subr.mxu0 0.0
    %4772 = vmatpush2.msra.mxu0 0.0
    %4773 = vmatprep.subr.mxu0 0.0
    %4774 = vmatpush2.msra.mxu0 0.0
    %4775 = vmatprep.subr.mxu0 0.0
    %4776 = vmatpush2.msra.mxu0 0.0
    %4777 = vmatprep.mubr.f32.mxu0 0.0
    %4778 = vmatmul.mubr.f32.gmra.mxu0 %v4711
    %v4779 = vpop.f32.mrf.mxu0
    %v4780 = vadd.f32 0.0, %v4779
    %v4781 = vpop.f32.mrf.mxu0
    %4782 = vdwg.mxu0
    %4785 = vrot.lane.b32.xlu0 %v3831, 48
    %v4786 = vpop.permute.xlu0 %4785
    %4787 = vrot.lane.b32.xlu0 %v3904, 48
    %v4788 = vpop.permute.xlu0 %4787
    %4793 = vrot.lane.b32.xlu0 %v3977, 96
    %v4794 = vpop.permute.xlu0 %4793
    %4795 = vrot.lane.b32.xlu0 %v4050, 96
    %v4796 = vpop.permute.xlu0 %4795
    %4801 = vrot.lane.b32.xlu0 %v4123, 16
    %v4802 = vpop.permute.xlu0 %4801
    %4803 = vrot.lane.b32.xlu0 %v4196, 16
    %v4804 = vpop.permute.xlu0 %4803
    %4809 = vrot.lane.b32.xlu0 %v4269, 64
    %v4810 = vpop.permute.xlu0 %4809
    %4811 = vrot.lane.b32.xlu0 %v4342, 64
    %v4812 = vpop.permute.xlu0 %4811
    %4817 = vrot.lane.b32.xlu0 %v4415, 112
    %v4818 = vpop.permute.xlu0 %4817
    %4819 = vrot.lane.b32.xlu0 %v4488, 112
    %v4820 = vpop.permute.xlu0 %4819
    %4825 = vrot.lane.b32.xlu0 %v4561, 32
    %v4826 = vpop.permute.xlu0 %4825
    %4827 = vrot.lane.b32.xlu0 %v4634, 32
    %v4828 = vpop.permute.xlu0 %4827
    %4833 = vrot.lane.b32.xlu0 %v4707, 80
    %v4834 = vpop.permute.xlu0 %4833
    %4835 = vrot.lane.b32.xlu0 %v4780, 80
    %v4836 = vpop.permute.xlu0 %4835
    %v4839 = vsel %vm2214, %v3685, %v4786
    %v4840 = vsel %vm2214, %v3758, %v4788
    %vm4841 = vcmask 785408
    %v4842 = vsel %vm4841, %v4839, %v4794
    %v4843 = vsel %vm4841, %v4840, %v4796
    %v4844 = vsel %vm2097, %v4794, %v4802
    %v4845 = vsel %vm2097, %v4796, %v4804
    %vm4846 = vcmask 523264
    %v4847 = vsel %vm4846, %v4844, %v4810
    %v4848 = vsel %vm4846, %v4845, %v4812
    %vm4849 = vcmask 916480
    %v4850 = vsel %vm4849, %v4847, %v4818
    %v4851 = vsel %vm4849, %v4848, %v4820
    %v4852 = vsel %vm2076, %v4818, %v4826
    %v4853 = vsel %vm2076, %v4820, %v4828
    %vm4854 = vcmask 654336
    %v4855 = vsel %vm4854, %v4852, %v4834
    %v4856 = vsel %vm4854, %v4853, %v4836
    %v4857 = vpack.c.bf16 %v4843, %v4842
    %v4858 = vpack.c.bf16 %v4851, %v4850
    %v4859 = vpack.c.bf16 %v4856, %v4855
    %v4860 = vld [vmem:[#allocation10] sm:$0xff]
    %v4861 = vld [vmem:[#allocation10 + $0x8] sm:$0xf]
    %v4862 = vld [vmem:[#allocation10 + $0xc] sm:$0xff]
    %v4863 = vld [vmem:[#allocation10 + $0x14] sm:$0xf]
    %v4864 = vld [vmem:[#allocation10 + $0x18] sm:$0xff]
    %v4865 = vld [vmem:[#allocation10 + $0x20] sm:$0xf]
    %v4866 = vld [vmem:[#allocation10 + $0x24] sm:$0xff]
    %v4867 = vld [vmem:[#allocation10 + $0x2c] sm:$0xf]
    %v4868 = vld [vmem:[#allocation10 + $0x30] sm:$0xff]
    %v4869 = vld [vmem:[#allocation10 + $0x38] sm:$0xf]
    %v4870 = vld [vmem:[#allocation10 + $0x3c] sm:$0xff]
    %v4871 = vld [vmem:[#allocation10 + $0x44] sm:$0xf]
    %v4872 = vld [vmem:[#allocation10 + $0x48] sm:$0xff]
    %v4873 = vld [vmem:[#allocation10 + $0x50] sm:$0xf]
    %v4874 = vld [vmem:[#allocation10 + $0x54] sm:$0xff]
    %v4875 = vld [vmem:[#allocation10 + $0x5c] sm:$0xf]
    %v4876 = vld [vmem:[#allocation10 + $0x60] sm:$0xff]
    %v4877 = vld [vmem:[#allocation10 + $0x68] sm:$0xf]
    %v4878 = vld [vmem:[#allocation10 + $0x6c] sm:$0xff]
    %v4879 = vld [vmem:[#allocation10 + $0x74] sm:$0xf]
    %v4880 = vld [vmem:[#allocation10 + $0x78] sm:$0xff]
    %v4881 = vld [vmem:[#allocation10 + $0x80] sm:$0xf]
    %v4882 = vld [vmem:[#allocation10 + $0x84] sm:$0xff]
    %v4883 = vld [vmem:[#allocation10 + $0x8c] sm:$0xf]
    %v4884 = vld [vmem:[#allocation10 + $0x90] sm:$0xff]
    %v4885 = vld [vmem:[#allocation10 + $0x98] sm:$0xf]
    %v4886 = vld [vmem:[#allocation10 + $0x9c] sm:$0xff]
    %v4887 = vld [vmem:[#allocation10 + $0xa4] sm:$0xf]
    %v4888 = vld [vmem:[#allocation10 + $0xa8] sm:$0xff]
    %v4889 = vld [vmem:[#allocation10 + $0xb0] sm:$0xf]
    %v4890 = vld [vmem:[#allocation10 + $0xb4] sm:$0xff]
    %v4891 = vld [vmem:[#allocation10 + $0xbc] sm:$0xf]
    %v4892 = vld [vmem:[#allocation10 + $0xc0] sm:$0xff]
    %v4893 = vld [vmem:[#allocation10 + $0xc8] sm:$0xf]
    %v4894 = vld [vmem:[#allocation10 + $0xcc] sm:$0xff]
    %v4895 = vld [vmem:[#allocation10 + $0xd4] sm:$0xf]
    %v4896 = vld [vmem:[#allocation10 + $0xd8] sm:$0xff]
    %v4897 = vld [vmem:[#allocation10 + $0xe0] sm:$0xf]
    %v4898 = vld [vmem:[#allocation10 + $0xe4] sm:$0xff]
    %v4899 = vld [vmem:[#allocation10 + $0xec] sm:$0xf]
    %v4900 = vld [vmem:[#allocation10 + $0xf0] sm:$0xff]
    %v4901 = vld [vmem:[#allocation10 + $0xf8] sm:$0xf]
    %v4902 = vld [vmem:[#allocation10 + $0xfc] sm:$0xff]
    %v4903 = vld [vmem:[#allocation10 + $0x104] sm:$0xf]
    %v4904 = vld [vmem:[#allocation10 + $0x108] sm:$0xff]
    %v4905 = vld [vmem:[#allocation10 + $0x110] sm:$0xf]
    %v4906 = vld [vmem:[#allocation10 + $0x114] sm:$0xff]
    %v4907 = vld [vmem:[#allocation10 + $0x11c] sm:$0xf]
    %v4908 = vld [vmem:[#allocation10 + $0x120] sm:$0xff]
    %v4909 = vld [vmem:[#allocation10 + $0x128] sm:$0xf]
    %v4910 = vld [vmem:[#allocation10 + $0x12c] sm:$0xff]
    %v4911 = vld [vmem:[#allocation10 + $0x134] sm:$0xf]
    %v4912 = vld [vmem:[#allocation10 + $0x138] sm:$0xff]
    %v4913 = vld [vmem:[#allocation10 + $0x140] sm:$0xf]
    %v4914 = vld [vmem:[#allocation10 + $0x144] sm:$0xff]
    %v4915 = vld [vmem:[#allocation10 + $0x14c] sm:$0xf]
    %v4916 = vld [vmem:[#allocation10 + $0x150] sm:$0xff]
    %v4917 = vld [vmem:[#allocation10 + $0x158] sm:$0xf]
    %v4918 = vld [vmem:[#allocation10 + $0x15c] sm:$0xff]
    %v4919 = vld [vmem:[#allocation10 + $0x164] sm:$0xf]
    %v4920 = vld [vmem:[#allocation10 + $0x168] sm:$0xff]
    %v4921 = vld [vmem:[#allocation10 + $0x170] sm:$0xf]
    %v4922 = vld [vmem:[#allocation10 + $0x174] sm:$0xff]
    %v4923 = vld [vmem:[#allocation10 + $0x17c] sm:$0xf]
    %v4924 = vld [vmem:[#allocation10 + $0x180] sm:$0xff]
    %v4925 = vld [vmem:[#allocation10 + $0x188] sm:$0xf]
    %v4926 = vld [vmem:[#allocation10 + $0x18c] sm:$0xff]
    %v4927 = vld [vmem:[#allocation10 + $0x194] sm:$0xf]
    %v4928 = vld [vmem:[#allocation10 + $0x198] sm:$0xff]
    %v4929 = vld [vmem:[#allocation10 + $0x1a0] sm:$0xf]
    %v4930 = vld [vmem:[#allocation10 + $0x1a4] sm:$0xff]
    %v4931 = vld [vmem:[#allocation10 + $0x1ac] sm:$0xf]
    %v4932 = vld [vmem:[#allocation10 + $0x1b0] sm:$0xff]
    %v4933 = vld [vmem:[#allocation10 + $0x1b8] sm:$0xf]
    %v4934 = vld [vmem:[#allocation10 + $0x1bc] sm:$0xff]
    %v4935 = vld [vmem:[#allocation10 + $0x1c4] sm:$0xf]
    %v4936 = vld [vmem:[#allocation10 + $0x1c8] sm:$0xff]
    %v4937 = vld [vmem:[#allocation10 + $0x1d0] sm:$0xf]
    %v4938 = vld [vmem:[#allocation10 + $0x1d4] sm:$0xff]
    %v4939 = vld [vmem:[#allocation10 + $0x1dc] sm:$0xf]
    %v4940 = vld [vmem:[#allocation10 + $0x1e0] sm:$0xff]
    %v4941 = vld [vmem:[#allocation10 + $0x1e8] sm:$0xf]
    %v4942 = vld [vmem:[#allocation10 + $0x1ec] sm:$0xff]
    %v4943 = vld [vmem:[#allocation10 + $0x1f4] sm:$0xf]
    %v4944 = vld [vmem:[#allocation10 + $0x1f8] sm:$0xff]
    %v4945 = vld [vmem:[#allocation10 + $0x200] sm:$0xf]
    %v4946 = vld [vmem:[#allocation10 + $0x204] sm:$0xff]
    %v4947 = vld [vmem:[#allocation10 + $0x20c] sm:$0xf]
    %v4948 = vld [vmem:[#allocation10 + $0x210] sm:$0xff]
    %v4949 = vld [vmem:[#allocation10 + $0x218] sm:$0xf]
    %v4950 = vld [vmem:[#allocation10 + $0x21c] sm:$0xff]
    %v4951 = vld [vmem:[#allocation10 + $0x224] sm:$0xf]
    %v4952 = vld [vmem:[#allocation10 + $0x228] sm:$0xff]
    %v4953 = vld [vmem:[#allocation10 + $0x230] sm:$0xf]
    %v4954 = vld [vmem:[#allocation10 + $0x234] sm:$0xff]
    %v4955 = vld [vmem:[#allocation10 + $0x23c] sm:$0xf]
    %v4956 = vld [vmem:[#allocation11] sm:$0x7]
    %v4958 = vlaneseq
    %v4959 = vshrl.u32 %v4958, 7
    %v4960 = vsub.s32 0, %v4959
    %v4961 = vrot.slane %v4956, %v4960
    %v4962 = vlaneseq
    %v4963 = vshrl.u32 %v4962, 7
    %v4964 = vsub.s32 1, %v4963
    %v4965 = vrot.slane %v4956, %v4964
    %v4966 = vlaneseq
    %v4967 = vshrl.u32 %v4966, 7
    %v4968 = vsub.s32 2, %v4967
    %v4969 = vrot.slane %v4956, %v4968
    %v5069 = vunpack.c.l.b16 %v4860
    %v5070 = vunpack.c.h.b16 %v4860
    %v5071 = vunpack.c.l.b16 %v4861
    %v5072 = vunpack.c.l.b16 %v4862
    %v5073 = vunpack.c.h.b16 %v4862
    %v5074 = vunpack.c.l.b16 %v4863
    %v5075 = vunpack.c.l.b16 %v4864
    %v5076 = vunpack.c.h.b16 %v4864
    %v5077 = vunpack.c.l.b16 %v4865
    %v5078 = vunpack.c.l.b16 %v4866
    %v5079 = vunpack.c.h.b16 %v4866
    %v5080 = vunpack.c.l.b16 %v4867
    %v5081 = vunpack.c.l.b16 %v4868
    %v5082 = vunpack.c.h.b16 %v4868
    %v5083 = vunpack.c.l.b16 %v4869
    %v5084 = vunpack.c.l.b16 %v4870
    %v5085 = vunpack.c.h.b16 %v4870
    %v5086 = vunpack.c.l.b16 %v4871
    %v5087 = vunpack.c.l.b16 %v4872
    %v5088 = vunpack.c.h.b16 %v4872
    %v5089 = vunpack.c.l.b16 %v4873
    %v5090 = vunpack.c.l.b16 %v4874
    %v5091 = vunpack.c.h.b16 %v4874
    %v5092 = vunpack.c.l.b16 %v4875
    %v5093 = vunpack.c.l.b16 %v4876
    %v5094 = vunpack.c.h.b16 %v4876
    %v5095 = vunpack.c.l.b16 %v4877
    %v5096 = vunpack.c.l.b16 %v4878
    %v5097 = vunpack.c.h.b16 %v4878
    %v5098 = vunpack.c.l.b16 %v4879
    %v5099 = vunpack.c.l.b16 %v4880
    %v5100 = vunpack.c.h.b16 %v4880
    %v5101 = vunpack.c.l.b16 %v4881
    %v5102 = vunpack.c.l.b16 %v4882
    %v5103 = vunpack.c.h.b16 %v4882
    %v5104 = vunpack.c.l.b16 %v4883
    %v5105 = vunpack.c.l.b16 %v4884
    %v5106 = vunpack.c.h.b16 %v4884
    %v5107 = vunpack.c.l.b16 %v4885
    %v5108 = vunpack.c.l.b16 %v4886
    %v5109 = vunpack.c.h.b16 %v4886
    %v5110 = vunpack.c.l.b16 %v4887
    %v5111 = vunpack.c.l.b16 %v4888
    %v5112 = vunpack.c.h.b16 %v4888
    %v5113 = vunpack.c.l.b16 %v4889
    %v5114 = vunpack.c.l.b16 %v4890
    %v5115 = vunpack.c.h.b16 %v4890
    %v5116 = vunpack.c.l.b16 %v4891
    %v5117 = vunpack.c.l.b16 %v4892
    %v5118 = vunpack.c.h.b16 %v4892
    %v5119 = vunpack.c.l.b16 %v4893
    %v5120 = vunpack.c.l.b16 %v4894
    %v5121 = vunpack.c.h.b16 %v4894
    %v5122 = vunpack.c.l.b16 %v4895
    %v5123 = vunpack.c.l.b16 %v4896
    %v5124 = vunpack.c.h.b16 %v4896
    %v5125 = vunpack.c.l.b16 %v4897
    %v5126 = vunpack.c.l.b16 %v4898
    %v5127 = vunpack.c.h.b16 %v4898
    %v5128 = vunpack.c.l.b16 %v4899
    %v5129 = vunpack.c.l.b16 %v4900
    %v5130 = vunpack.c.h.b16 %v4900
    %v5131 = vunpack.c.l.b16 %v4901
    %v5132 = vunpack.c.l.b16 %v4902
    %v5133 = vunpack.c.h.b16 %v4902
    %v5134 = vunpack.c.l.b16 %v4903
    %v5135 = vunpack.c.l.b16 %v4904
    %v5136 = vunpack.c.h.b16 %v4904
    %v5137 = vunpack.c.l.b16 %v4905
    %v5138 = vunpack.c.l.b16 %v4906
    %v5139 = vunpack.c.h.b16 %v4906
    %v5140 = vunpack.c.l.b16 %v4907
    %v5141 = vunpack.c.l.b16 %v4908
    %v5142 = vunpack.c.h.b16 %v4908
    %v5143 = vunpack.c.l.b16 %v4909
    %v5144 = vunpack.c.l.b16 %v4910
    %v5145 = vunpack.c.h.b16 %v4910
    %v5146 = vunpack.c.l.b16 %v4911
    %v5147 = vunpack.c.l.b16 %v4912
    %v5148 = vunpack.c.h.b16 %v4912
    %v5149 = vunpack.c.l.b16 %v4913
    %v5150 = vunpack.c.l.b16 %v4914
    %v5151 = vunpack.c.h.b16 %v4914
    %v5152 = vunpack.c.l.b16 %v4915
    %v5153 = vunpack.c.l.b16 %v4916
    %v5154 = vunpack.c.h.b16 %v4916
    %v5155 = vunpack.c.l.b16 %v4917
    %v5156 = vunpack.c.l.b16 %v4918
    %v5157 = vunpack.c.h.b16 %v4918
    %v5158 = vunpack.c.l.b16 %v4919
    %v5159 = vunpack.c.l.b16 %v4920
    %v5160 = vunpack.c.h.b16 %v4920
    %v5161 = vunpack.c.l.b16 %v4921
    %v5162 = vunpack.c.l.b16 %v4922
    %v5163 = vunpack.c.h.b16 %v4922
    %v5164 = vunpack.c.l.b16 %v4923
    %v5165 = vunpack.c.l.b16 %v4924
    %v5166 = vunpack.c.h.b16 %v4924
    %v5167 = vunpack.c.l.b16 %v4925
    %v5168 = vunpack.c.l.b16 %v4926
    %v5169 = vunpack.c.h.b16 %v4926
    %v5170 = vunpack.c.l.b16 %v4927
    %v5171 = vunpack.c.l.b16 %v4928
    %v5172 = vunpack.c.h.b16 %v4928
    %v5173 = vunpack.c.l.b16 %v4929
    %v5174 = vunpack.c.l.b16 %v4930
    %v5175 = vunpack.c.h.b16 %v4930
    %v5176 = vunpack.c.l.b16 %v4931
    %v5177 = vunpack.c.l.b16 %v4932
    %v5178 = vunpack.c.h.b16 %v4932
    %v5179 = vunpack.c.l.b16 %v4933
    %v5180 = vunpack.c.l.b16 %v4934
    %v5181 = vunpack.c.h.b16 %v4934
    %v5182 = vunpack.c.l.b16 %v4935
    %v5183 = vunpack.c.l.b16 %v4936
    %v5184 = vunpack.c.h.b16 %v4936
    %v5185 = vunpack.c.l.b16 %v4937
    %v5186 = vunpack.c.l.b16 %v4938
    %v5187 = vunpack.c.h.b16 %v4938
    %v5188 = vunpack.c.l.b16 %v4939
    %v5189 = vunpack.c.l.b16 %v4940
    %v5190 = vunpack.c.h.b16 %v4940
    %v5191 = vunpack.c.l.b16 %v4941
    %v5192 = vunpack.c.l.b16 %v4942
    %v5193 = vunpack.c.h.b16 %v4942
    %v5194 = vunpack.c.l.b16 %v4943
    %v5195 = vunpack.c.l.b16 %v4944
    %v5196 = vunpack.c.h.b16 %v4944
    %v5197 = vunpack.c.l.b16 %v4945
    %v5198 = vunpack.c.l.b16 %v4946
    %v5199 = vunpack.c.h.b16 %v4946
    %v5200 = vunpack.c.l.b16 %v4947
    %v5201 = vunpack.c.l.b16 %v4948
    %v5202 = vunpack.c.h.b16 %v4948
    %v5203 = vunpack.c.l.b16 %v4949
    %v5204 = vunpack.c.l.b16 %v4950
    %v5205 = vunpack.c.h.b16 %v4950
    %v5206 = vunpack.c.l.b16 %v4951
    %v5207 = vunpack.c.l.b16 %v4952
    %v5208 = vunpack.c.h.b16 %v4952
    %v5209 = vunpack.c.l.b16 %v4953
    %v5210 = vunpack.c.l.b16 %v4954
    %v5211 = vunpack.c.h.b16 %v4954
    %v5212 = vunpack.c.l.b16 %v4955
    %v5213 = vpack.c.b16 %v5072, %v5069
    %v5214 = vpack.c.b16 %v5073, %v5070
    %v5215 = vpack.c.b16 %v5074, %v5071
    %v5216 = vpack.c.b16 %v5078, %v5075
    %v5217 = vpack.c.b16 %v5079, %v5076
    %v5218 = vpack.c.b16 %v5080, %v5077
    %v5219 = vpack.c.b16 %v5084, %v5081
    %v5220 = vpack.c.b16 %v5085, %v5082
    %v5221 = vpack.c.b16 %v5086, %v5083
    %v5222 = vpack.c.b16 %v5090, %v5087
    %v5223 = vpack.c.b16 %v5091, %v5088
    %v5224 = vpack.c.b16 %v5092, %v5089
    %v5225 = vpack.c.b16 %v5096, %v5093
    %v5226 = vpack.c.b16 %v5097, %v5094
    %v5227 = vpack.c.b16 %v5098, %v5095
    %v5228 = vpack.c.b16 %v5102, %v5099
    %v5229 = vpack.c.b16 %v5103, %v5100
    %v5230 = vpack.c.b16 %v5104, %v5101
    %v5231 = vpack.c.b16 %v5108, %v5105
    %v5232 = vpack.c.b16 %v5109, %v5106
    %v5233 = vpack.c.b16 %v5110, %v5107
    %v5234 = vpack.c.b16 %v5114, %v5111
    %v5235 = vpack.c.b16 %v5115, %v5112
    %v5236 = vpack.c.b16 %v5116, %v5113
    %v5237 = vpack.c.b16 %v5120, %v5117
    %v5238 = vpack.c.b16 %v5121, %v5118
    %v5239 = vpack.c.b16 %v5122, %v5119
    %v5240 = vpack.c.b16 %v5126, %v5123
    %v5241 = vpack.c.b16 %v5127, %v5124
    %v5242 = vpack.c.b16 %v5128, %v5125
    %v5243 = vpack.c.b16 %v5132, %v5129
    %v5244 = vpack.c.b16 %v5133, %v5130
    %v5245 = vpack.c.b16 %v5134, %v5131
    %v5246 = vpack.c.b16 %v5138, %v5135
    %v5247 = vpack.c.b16 %v5139, %v5136
    %v5248 = vpack.c.b16 %v5140, %v5137
    %v5249 = vpack.c.b16 %v5144, %v5141
    %v5250 = vpack.c.b16 %v5145, %v5142
    %v5251 = vpack.c.b16 %v5146, %v5143
    %v5252 = vpack.c.b16 %v5150, %v5147
    %v5253 = vpack.c.b16 %v5151, %v5148
    %v5254 = vpack.c.b16 %v5152, %v5149
    %v5255 = vpack.c.b16 %v5156, %v5153
    %v5256 = vpack.c.b16 %v5157, %v5154
    %v5257 = vpack.c.b16 %v5158, %v5155
    %v5258 = vpack.c.b16 %v5162, %v5159
    %v5259 = vpack.c.b16 %v5163, %v5160
    %v5260 = vpack.c.b16 %v5164, %v5161
    %v5261 = vpack.c.b16 %v5168, %v5165
    %v5262 = vpack.c.b16 %v5169, %v5166
    %v5263 = vpack.c.b16 %v5170, %v5167
    %v5264 = vpack.c.b16 %v5174, %v5171
    %v5265 = vpack.c.b16 %v5175, %v5172
    %v5266 = vpack.c.b16 %v5176, %v5173
    %v5267 = vpack.c.b16 %v5180, %v5177
    %v5268 = vpack.c.b16 %v5181, %v5178
    %v5269 = vpack.c.b16 %v5182, %v5179
    %v5270 = vpack.c.b16 %v5186, %v5183
    %v5271 = vpack.c.b16 %v5187, %v5184
    %v5272 = vpack.c.b16 %v5188, %v5185
    %v5273 = vpack.c.b16 %v5192, %v5189
    %v5274 = vpack.c.b16 %v5193, %v5190
    %v5275 = vpack.c.b16 %v5194, %v5191
    %v5276 = vpack.c.b16 %v5198, %v5195
    %v5277 = vpack.c.b16 %v5199, %v5196
    %v5278 = vpack.c.b16 %v5200, %v5197
    %v5279 = vpack.c.b16 %v5204, %v5201
    %v5280 = vpack.c.b16 %v5205, %v5202
    %v5281 = vpack.c.b16 %v5206, %v5203
    %v5282 = vpack.c.b16 %v5210, %v5207
    %v5283 = vpack.c.b16 %v5211, %v5208
    %v5284 = vpack.c.b16 %v5212, %v5209
    %5357 = vmatprep.subr.bf16.mxu0 %v5235
    %5358 = vmatpush1.bf16.msra.mxu0 %v5234
    %5359 = vmatprep.subr.bf16.mxu0 %v5232
    %5360 = vmatpush1.bf16.msra.mxu0 %v5231
    %5361 = vmatprep.subr.bf16.mxu0 %v5229
    %5362 = vmatpush1.bf16.msra.mxu0 %v5228
    %5363 = vmatprep.subr.bf16.mxu0 %v5226
    %5364 = vmatpush1.bf16.msra.mxu0 %v5225
    %5365 = vmatprep.subr.bf16.mxu0 %v5223
    %5366 = vmatpush1.bf16.msra.mxu0 %v5222
    %5367 = vmatprep.subr.bf16.mxu0 %v5220
    %5368 = vmatpush1.bf16.msra.mxu0 %v5219
    %5369 = vmatprep.subr.bf16.mxu0 %v5217
    %5370 = vmatpush1.bf16.msra.mxu0 %v5216
    %5371 = vmatprep.subr.bf16.mxu0 %v5214
    %5372 = vmatpush1.bf16.msra.mxu0 %v5213
    %5373 = vmatprep.subr.bf16.mxu0 %v5259
    %5374 = vmatpush2.bf16.msra.mxu0 %v5258
    %5375 = vmatprep.subr.bf16.mxu0 %v5256
    %5376 = vmatpush2.bf16.msra.mxu0 %v5255
    %5377 = vmatprep.subr.bf16.mxu0 %v5253
    %5378 = vmatpush2.bf16.msra.mxu0 %v5252
    %5379 = vmatprep.subr.bf16.mxu0 %v5250
    %5380 = vmatpush2.bf16.msra.mxu0 %v5249
    %5381 = vmatprep.subr.bf16.mxu0 %v5247
    %5382 = vmatpush2.bf16.msra.mxu0 %v5246
    %5383 = vmatprep.subr.bf16.mxu0 %v5244
    %5384 = vmatpush2.bf16.msra.mxu0 %v5243
    %5385 = vmatprep.subr.bf16.mxu0 %v5241
    %5386 = vmatpush2.bf16.msra.mxu0 %v5240
    %5387 = vmatprep.subr.bf16.mxu0 %v5238
    %5388 = vmatpush2.bf16.msra.mxu0 %v5237
    %5389 = vmatprep.mubr.bf16.mxu0 %v4858
    %5390 = vmatmul.mubr.bf16.gmra.mxu0 %v4857
    %v5391 = vpop.f32.mrf.mxu0
    %v5392 = vadd.f32 %v4961, %v5391
    %v5393 = vpop.f32.mrf.mxu0
    %v5394 = vadd.f32 %v4965, %v5393
    %v5395 = vpop.f32.mrf.mxu0
    %v5396 = vadd.f32 %v4961, %v5395
    %v5397 = vpop.f32.mrf.mxu0
    %v5398 = vadd.f32 %v4965, %v5397
    %5399 = vdwg.mxu0
    %5400 = vmatprep.subr.bf16.mxu0 %v5283
    %5401 = vmatpush1.bf16.msra.mxu0 %v5282
    %5402 = vmatprep.subr.bf16.mxu0 %v5280
    %5403 = vmatpush1.bf16.msra.mxu0 %v5279
    %5404 = vmatprep.subr.bf16.mxu0 %v5277
    %5405 = vmatpush1.bf16.msra.mxu0 %v5276
    %5406 = vmatprep.subr.bf16.mxu0 %v5274
    %5407 = vmatpush1.bf16.msra.mxu0 %v5273
    %5408 = vmatprep.subr.bf16.mxu0 %v5271
    %5409 = vmatpush1.bf16.msra.mxu0 %v5270
    %5410 = vmatprep.subr.bf16.mxu0 %v5268
    %5411 = vmatpush1.bf16.msra.mxu0 %v5267
    %5412 = vmatprep.subr.bf16.mxu0 %v5265
    %5413 = vmatpush1.bf16.msra.mxu0 %v5264
    %5414 = vmatprep.subr.bf16.mxu0 %v5262
    %5415 = vmatpush1.bf16.msra.mxu0 %v5261
    %5416 = vmatprep.subr.bf16.mxu0 0
    %5417 = vmatpush2.bf16.msra.mxu0 0
    %5418 = vmatprep.subr.bf16.mxu0 0
    %5419 = vmatpush2.bf16.msra.mxu0 0
    %5420 = vmatprep.subr.bf16.mxu0 0
    %5421 = vmatpush2.bf16.msra.mxu0 0
    %5422 = vmatprep.subr.bf16.mxu0 0
    %5423 = vmatpush2.bf16.msra.mxu0 0
    %5424 = vmatprep.subr.bf16.mxu0 0
    %5425 = vmatpush2.bf16.msra.mxu0 0
    %5426 = vmatprep.subr.bf16.mxu0 0
    %5427 = vmatpush2.bf16.msra.mxu0 0
    %5428 = vmatprep.subr.bf16.mxu0 0
    %5429 = vmatpush2.bf16.msra.mxu0 0
    %5430 = vmatprep.subr.bf16.mxu0 0
    %5431 = vmatpush2.bf16.msra.mxu0 0
    %5432 = vmatprep.mubr.bf16.mxu0 0
    %5433 = vmatmul.mubr.bf16.gmra.mxu0 %v4859
    %v5434 = vpop.f32.mrf.mxu0
    %v5435 = vadd.f32 %v5392, %v5434
    %v5436 = vpop.f32.mrf.mxu0
    %v5437 = vadd.f32 %v5394, %v5436
    %v5438 = vpop.f32.mrf.mxu0
    %v5439 = vadd.f32 %v5396, %v5438
    %v5440 = vpop.f32.mrf.mxu0
    %v5441 = vadd.f32 %v5398, %v5440
    %5442 = vdwg.mxu0
    %5443 = vmatprep.subr.bf16.mxu0 0
    %5444 = vmatpush1.bf16.msra.mxu0 %v5236
    %5445 = vmatprep.subr.bf16.mxu0 0
    %5446 = vmatpush1.bf16.msra.mxu0 %v5233
    %5447 = vmatprep.subr.bf16.mxu0 0
    %5448 = vmatpush1.bf16.msra.mxu0 %v5230
    %5449 = vmatprep.subr.bf16.mxu0 0
    %5450 = vmatpush1.bf16.msra.mxu0 %v5227
    %5451 = vmatprep.subr.bf16.mxu0 0
    %5452 = vmatpush1.bf16.msra.mxu0 %v5224
    %5453 = vmatprep.subr.bf16.mxu0 0
    %5454 = vmatpush1.bf16.msra.mxu0 %v5221
    %5455 = vmatprep.subr.bf16.mxu0 0
    %5456 = vmatpush1.bf16.msra.mxu0 %v5218
    %5457 = vmatprep.subr.bf16.mxu0 0
    %5458 = vmatpush1.bf16.msra.mxu0 %v5215
    %5459 = vmatprep.subr.bf16.mxu0 0
    %5460 = vmatpush2.bf16.msra.mxu0 %v5260
    %5461 = vmatprep.subr.bf16.mxu0 0
    %5462 = vmatpush2.bf16.msra.mxu0 %v5257
    %5463 = vmatprep.subr.bf16.mxu0 0
    %5464 = vmatpush2.bf16.msra.mxu0 %v5254
    %5465 = vmatprep.subr.bf16.mxu0 0
    %5466 = vmatpush2.bf16.msra.mxu0 %v5251
    %5467 = vmatprep.subr.bf16.mxu0 0
    %5468 = vmatpush2.bf16.msra.mxu0 %v5248
    %5469 = vmatprep.subr.bf16.mxu0 0
    %5470 = vmatpush2.bf16.msra.mxu0 %v5245
    %5471 = vmatprep.subr.bf16.mxu0 0
    %5472 = vmatpush2.bf16.msra.mxu0 %v5242
    %5473 = vmatprep.subr.bf16.mxu0 0
    %5474 = vmatpush2.bf16.msra.mxu0 %v5239
    %5475 = vmatprep.mubr.bf16.mxu0 %v4858
    %5476 = vmatmul.mubr.bf16.gmra.mxu0 %v4857
    %v5477 = vpop.f32.mrf.mxu0
    %v5478 = vadd.f32 %v4969, %v5477
    %v5479 = vpop.f32.mrf.mxu0
    %v5480 = vpop.f32.mrf.mxu0
    %v5481 = vadd.f32 %v4969, %v5480
    %v5482 = vpop.f32.mrf.mxu0
    %5483 = vdwg.mxu0
    %5484 = vmatprep.subr.bf16.mxu0 0
    %5485 = vmatpush1.bf16.msra.mxu0 %v5284
    %5486 = vmatprep.subr.bf16.mxu0 0
    %5487 = vmatpush1.bf16.msra.mxu0 %v5281
    %5488 = vmatprep.subr.bf16.mxu0 0
    %5489 = vmatpush1.bf16.msra.mxu0 %v5278
    %5490 = vmatprep.subr.bf16.mxu0 0
    %5491 = vmatpush1.bf16.msra.mxu0 %v5275
    %5492 = vmatprep.subr.bf16.mxu0 0
    %5493 = vmatpush1.bf16.msra.mxu0 %v5272
    %5494 = vmatprep.subr.bf16.mxu0 0
    %5495 = vmatpush1.bf16.msra.mxu0 %v5269
    %5496 = vmatprep.subr.bf16.mxu0 0
    %5497 = vmatpush1.bf16.msra.mxu0 %v5266
    %5498 = vmatprep.subr.bf16.mxu0 0
    %5499 = vmatpush1.bf16.msra.mxu0 %v5263
    %5500 = vmatprep.subr.bf16.mxu0 0
    %5501 = vmatpush2.bf16.msra.mxu0 0
    %5502 = vmatprep.subr.bf16.mxu0 0
    %5503 = vmatpush2.bf16.msra.mxu0 0
    %5504 = vmatprep.subr.bf16.mxu0 0
    %5505 = vmatpush2.bf16.msra.mxu0 0
    %5506 = vmatprep.subr.bf16.mxu0 0
    %5507 = vmatpush2.bf16.msra.mxu0 0
    %5508 = vmatprep.subr.bf16.mxu0 0
    %5509 = vmatpush2.bf16.msra.mxu0 0
    %5510 = vmatprep.subr.bf16.mxu0 0
    %5511 = vmatpush2.bf16.msra.mxu0 0
    %5512 = vmatprep.subr.bf16.mxu0 0
    %5513 = vmatpush2.bf16.msra.mxu0 0
    %5514 = vmatprep.subr.bf16.mxu0 0
    %5515 = vmatpush2.bf16.msra.mxu0 0
    %5516 = vmatprep.mubr.bf16.mxu0 0
    %5517 = vmatmul.mubr.bf16.gmra.mxu0 %v4859
    %v5518 = vpop.f32.mrf.mxu0
    %v5519 = vadd.f32 %v5478, %v5518
    %v5520 = vpop.f32.mrf.mxu0
    %v5521 = vpop.f32.mrf.mxu0
    %v5522 = vadd.f32 %v5481, %v5521
    %v5523 = vpop.f32.mrf.mxu0
    %5524 = vdwg.mxu0
    %v5525 = vadd.f32 %v192, %v5435
    %v5526 = vadd.f32 %v193, %v5437
    %v5527 = vadd.f32 %v194, %v5519
    %v5528 = vadd.f32 %v195, %v5439
    %v5529 = vadd.f32 %v196, %v5441
    %v5530 = vadd.f32 %v197, %v5522
    %v5531 = vld [vmem:[#allocation13] sm:$0x7]
    %v5532 = vld [vmem:[#allocation14] sm:$0x7]
    %v5533 = vadd.f32 %v5525, %v5526
    %v5534 = vadd.f32 %v5533, %v5527
    %5535 = vadd.xlane.f32.xlu0 %v5534
    %v5536 = vpop.xlane.xlu0 %5535
    %v5537 = vadd.f32 %v5528, %v5529
    %v5538 = vadd.f32 %v5537, %v5530
    %5539 = vadd.xlane.f32.xlu0 %v5538
    %v5540 = vpop.xlane.xlu0 %5539
    %v5541 = vmul.f32 %v5536, %v208
    %v5542 = vmul.f32 %v5540, %v208
    %v5543 = vsub.f32 %v5525, %v5541
    %v5544 = vsub.f32 %v5526, %v5541
    %v5545 = vsub.f32 %v5527, %v5541
    %v5546 = vsub.f32 %v5528, %v5542
    %v5547 = vsub.f32 %v5529, %v5542
    %v5548 = vsub.f32 %v5530, %v5542
    %v5549 = vmul.f32 %v5543, %v5543
    %v5550 = vmul.f32 %v5544, %v5544
    %v5551 = vmul.f32 %v5545, %v5545
    %v5552 = vmul.f32 %v5546, %v5546
    %v5553 = vmul.f32 %v5547, %v5547
    %v5554 = vmul.f32 %v5548, %v5548
    %v5555 = vadd.f32 %v5549, %v5550
    %v5556 = vadd.f32 %v5555, %v5551
    %5557 = vadd.xlane.f32.xlu0 %v5556
    %v5558 = vpop.xlane.xlu0 %5557
    %v5559 = vadd.f32 %v5552, %v5553
    %v5560 = vadd.f32 %v5559, %v5554
    %5561 = vadd.xlane.f32.xlu0 %v5560
    %v5562 = vpop.xlane.xlu0 %5561
    %v5563 = vmul.f32 %v5558, %v208
    %v5564 = vmul.f32 %v5562, %v208
    %v5565 = vadd.f32 %v5563, 1e-05
    %v5566 = vadd.f32 %v5564, 1e-05
    %v5567 = vrsqrt.pop %v5565
    %v5568 = vrsqrt.pop %v5566
    %v5569 = vmul.f32 %v5543, %v5567
    %v5570 = vmul.f32 %v5544, %v5567
    %v5571 = vmul.f32 %v5545, %v5567
    %v5572 = vmul.f32 %v5546, %v5568
    %v5573 = vmul.f32 %v5547, %v5568
    %v5574 = vmul.f32 %v5548, %v5568
    %v5576 = vlaneseq
    %v5577 = vshrl.u32 %v5576, 7
    %v5578 = vsub.s32 0, %v5577
    %v5579 = vrot.slane %v5531, %v5578
    %v5580 = vlaneseq
    %v5581 = vshrl.u32 %v5580, 7
    %v5582 = vsub.s32 1, %v5581
    %v5583 = vrot.slane %v5531, %v5582
    %v5584 = vlaneseq
    %v5585 = vshrl.u32 %v5584, 7
    %v5586 = vsub.s32 2, %v5585
    %v5587 = vrot.slane %v5531, %v5586
    %v5591 = vmul.f32 %v5569, %v5579
    %v5592 = vmul.f32 %v5570, %v5583
    %v5593 = vmul.f32 %v5571, %v5587
    %v5594 = vmul.f32 %v5572, %v5579
    %v5595 = vmul.f32 %v5573, %v5583
    %v5596 = vmul.f32 %v5574, %v5587
    %v5598 = vlaneseq
    %v5599 = vshrl.u32 %v5598, 7
    %v5600 = vsub.s32 0, %v5599
    %v5601 = vrot.slane %v5532, %v5600
    %v5602 = vlaneseq
    %v5603 = vshrl.u32 %v5602, 7
    %v5604 = vsub.s32 1, %v5603
    %v5605 = vrot.slane %v5532, %v5604
    %v5606 = vlaneseq
    %v5607 = vshrl.u32 %v5606, 7
    %v5608 = vsub.s32 2, %v5607
    %v5609 = vrot.slane %v5532, %v5608
    %v5613 = vadd.f32 %v5591, %v5601
    %v5614 = vadd.f32 %v5592, %v5605
    %v5615 = vadd.f32 %v5593, %v5609
    %v5616 = vadd.f32 %v5594, %v5601
    %v5617 = vadd.f32 %v5595, %v5605
    %v5618 = vadd.f32 %v5596, %v5609
    %v5619 = vpack.c.bf16 %v5616, %v5613
    %v5620 = vpack.c.bf16 %v5617, %v5614
    %v5621 = vpack.c.bf16 %v5618, %v5615
    %v5622 = vld [vmem:[#allocation16] sm:$0xff]
    %v5623 = vld [vmem:[#allocation16 + $0x8] sm:$0xff]
    %v5624 = vld [vmem:[#allocation16 + $0x10] sm:$0xff]
    %v5625 = vld [vmem:[#allocation16 + $0x18] sm:$0xff]
    %v5626 = vld [vmem:[#allocation16 + $0x20] sm:$0xff]
    %v5627 = vld [vmem:[#allocation16 + $0x28] sm:$0xff]
    %v5628 = vld [vmem:[#allocation16 + $0x30] sm:$0xff]
    %v5629 = vld [vmem:[#allocation16 + $0x38] sm:$0xff]
    %v5630 = vld [vmem:[#allocation16 + $0x40] sm:$0xff]
    %v5631 = vld [vmem:[#allocation16 + $0x48] sm:$0xff]
    %v5632 = vld [vmem:[#allocation16 + $0x50] sm:$0xff]
    %v5633 = vld [vmem:[#allocation16 + $0x58] sm:$0xff]
    %v5634 = vld [vmem:[#allocation16 + $0x60] sm:$0xff]
    %v5635 = vld [vmem:[#allocation16 + $0x68] sm:$0xff]
    %v5636 = vld [vmem:[#allocation16 + $0x70] sm:$0xff]
    %v5637 = vld [vmem:[#allocation16 + $0x78] sm:$0xff]
    %v5638 = vld [vmem:[#allocation16 + $0x80] sm:$0xff]
    %v5639 = vld [vmem:[#allocation16 + $0x88] sm:$0xff]
    %v5640 = vld [vmem:[#allocation16 + $0x90] sm:$0xff]
    %v5641 = vld [vmem:[#allocation16 + $0x98] sm:$0xff]
    %v5642 = vld [vmem:[#allocation16 + $0xa0] sm:$0xff]
    %v5643 = vld [vmem:[#allocation16 + $0xa8] sm:$0xff]
    %v5644 = vld [vmem:[#allocation16 + $0xb0] sm:$0xff]
    %v5645 = vld [vmem:[#allocation16 + $0xb8] sm:$0xff]
    %v5646 = vld [vmem:[#allocation16 + $0xc0] sm:$0xff]
    %v5647 = vld [vmem:[#allocation16 + $0xc8] sm:$0xff]
    %v5648 = vld [vmem:[#allocation16 + $0xd0] sm:$0xff]
    %v5649 = vld [vmem:[#allocation16 + $0xd8] sm:$0xff]
    %v5650 = vld [vmem:[#allocation16 + $0xe0] sm:$0xff]
    %v5651 = vld [vmem:[#allocation16 + $0xe8] sm:$0xff]
    %v5652 = vld [vmem:[#allocation16 + $0xf0] sm:$0xff]
    %v5653 = vld [vmem:[#allocation16 + $0xf8] sm:$0xff]
    %v5654 = vld [vmem:[#allocation16 + $0x100] sm:$0xff]
    %v5655 = vld [vmem:[#allocation16 + $0x108] sm:$0xff]
    %v5656 = vld [vmem:[#allocation16 + $0x110] sm:$0xff]
    %v5657 = vld [vmem:[#allocation16 + $0x118] sm:$0xff]
    %v5658 = vld [vmem:[#allocation16 + $0x120] sm:$0xff]
    %v5659 = vld [vmem:[#allocation16 + $0x128] sm:$0xff]
    %v5660 = vld [vmem:[#allocation16 + $0x130] sm:$0xff]
    %v5661 = vld [vmem:[#allocation16 + $0x138] sm:$0xff]
    %v5662 = vld [vmem:[#allocation16 + $0x140] sm:$0xff]
    %v5663 = vld [vmem:[#allocation16 + $0x148] sm:$0xff]
    %v5664 = vld [vmem:[#allocation16 + $0x150] sm:$0xff]
    %v5665 = vld [vmem:[#allocation16 + $0x158] sm:$0xff]
    %v5666 = vld [vmem:[#allocation16 + $0x160] sm:$0xff]
    %v5667 = vld [vmem:[#allocation16 + $0x168] sm:$0xff]
    %v5668 = vld [vmem:[#allocation16 + $0x170] sm:$0xff]
    %v5669 = vld [vmem:[#allocation16 + $0x178] sm:$0xff]
    %v5670 = vld [vmem:[#allocation16 + $0x180] sm:$0xff]
    %v5671 = vld [vmem:[#allocation16 + $0x188] sm:$0xff]
    %v5672 = vld [vmem:[#allocation16 + $0x190] sm:$0xff]
    %v5673 = vld [vmem:[#allocation16 + $0x198] sm:$0xff]
    %v5674 = vld [vmem:[#allocation16 + $0x1a0] sm:$0xff]
    %v5675 = vld [vmem:[#allocation16 + $0x1a8] sm:$0xff]
    %v5676 = vld [vmem:[#allocation16 + $0x1b0] sm:$0xff]
    %v5677 = vld [vmem:[#allocation16 + $0x1b8] sm:$0xff]
    %v5678 = vld [vmem:[#allocation16 + $0x1c0] sm:$0xff]
    %v5679 = vld [vmem:[#allocation16 + $0x1c8] sm:$0xff]
    %v5680 = vld [vmem:[#allocation16 + $0x1d0] sm:$0xff]
    %v5681 = vld [vmem:[#allocation16 + $0x1d8] sm:$0xff]
    %v5682 = vld [vmem:[#allocation16 + $0x1e0] sm:$0xff]
    %v5683 = vld [vmem:[#allocation16 + $0x1e8] sm:$0xff]
    %v5684 = vld [vmem:[#allocation16 + $0x1f0] sm:$0xff]
    %v5685 = vld [vmem:[#allocation16 + $0x1f8] sm:$0xff]
    %v5686 = vld [vmem:[#allocation16 + $0x200] sm:$0xff]
    %v5687 = vld [vmem:[#allocation16 + $0x208] sm:$0xff]
    %v5688 = vld [vmem:[#allocation16 + $0x210] sm:$0xff]
    %v5689 = vld [vmem:[#allocation16 + $0x218] sm:$0xff]
    %v5690 = vld [vmem:[#allocation16 + $0x220] sm:$0xff]
    %v5691 = vld [vmem:[#allocation16 + $0x228] sm:$0xff]
    %v5692 = vld [vmem:[#allocation16 + $0x230] sm:$0xff]
    %v5693 = vld [vmem:[#allocation16 + $0x238] sm:$0xff]
    %v5694 = vld [vmem:[#allocation16 + $0x240] sm:$0xff]
    %v5695 = vld [vmem:[#allocation16 + $0x248] sm:$0xff]
    %v5696 = vld [vmem:[#allocation16 + $0x250] sm:$0xff]
    %v5697 = vld [vmem:[#allocation16 + $0x258] sm:$0xff]
    %v5698 = vld [vmem:[#allocation16 + $0x260] sm:$0xff]
    %v5699 = vld [vmem:[#allocation16 + $0x268] sm:$0xff]
    %v5700 = vld [vmem:[#allocation16 + $0x270] sm:$0xff]
    %v5701 = vld [vmem:[#allocation16 + $0x278] sm:$0xff]
    %v5702 = vld [vmem:[#allocation16 + $0x280] sm:$0xff]
    %v5703 = vld [vmem:[#allocation16 + $0x288] sm:$0xff]
    %v5704 = vld [vmem:[#allocation16 + $0x290] sm:$0xff]
    %v5705 = vld [vmem:[#allocation16 + $0x298] sm:$0xff]
    %v5706 = vld [vmem:[#allocation16 + $0x2a0] sm:$0xff]
    %v5707 = vld [vmem:[#allocation16 + $0x2a8] sm:$0xff]
    %v5708 = vld [vmem:[#allocation16 + $0x2b0] sm:$0xff]
    %v5709 = vld [vmem:[#allocation16 + $0x2b8] sm:$0xff]
    %v5710 = vld [vmem:[#allocation16 + $0x2c0] sm:$0xff]
    %v5711 = vld [vmem:[#allocation16 + $0x2c8] sm:$0xff]
    %v5712 = vld [vmem:[#allocation16 + $0x2d0] sm:$0xff]
    %v5713 = vld [vmem:[#allocation16 + $0x2d8] sm:$0xff]
    %v5714 = vld [vmem:[#allocation16 + $0x2e0] sm:$0xff]
    %v5715 = vld [vmem:[#allocation16 + $0x2e8] sm:$0xff]
    %v5716 = vld [vmem:[#allocation16 + $0x2f0] sm:$0xff]
    %v5717 = vld [vmem:[#allocation16 + $0x2f8] sm:$0xff]
    %v5718 = vld [vmem:[#allocation16 + $0x300] sm:$0xff]
    %v5719 = vld [vmem:[#allocation16 + $0x308] sm:$0xff]
    %v5720 = vld [vmem:[#allocation16 + $0x310] sm:$0xff]
    %v5721 = vld [vmem:[#allocation16 + $0x318] sm:$0xff]
    %v5722 = vld [vmem:[#allocation16 + $0x320] sm:$0xff]
    %v5723 = vld [vmem:[#allocation16 + $0x328] sm:$0xff]
    %v5724 = vld [vmem:[#allocation16 + $0x330] sm:$0xff]
    %v5725 = vld [vmem:[#allocation16 + $0x338] sm:$0xff]
    %v5726 = vld [vmem:[#allocation16 + $0x340] sm:$0xff]
    %v5727 = vld [vmem:[#allocation16 + $0x348] sm:$0xff]
    %v5728 = vld [vmem:[#allocation16 + $0x350] sm:$0xff]
    %v5729 = vld [vmem:[#allocation16 + $0x358] sm:$0xff]
    %v5730 = vld [vmem:[#allocation16 + $0x360] sm:$0xff]
    %v5731 = vld [vmem:[#allocation16 + $0x368] sm:$0xff]
    %v5732 = vld [vmem:[#allocation16 + $0x370] sm:$0xff]
    %v5733 = vld [vmem:[#allocation16 + $0x378] sm:$0xff]
    %v5734 = vld [vmem:[#allocation16 + $0x380] sm:$0xff]
    %v5735 = vld [vmem:[#allocation16 + $0x388] sm:$0xff]
    %v5736 = vld [vmem:[#allocation16 + $0x390] sm:$0xff]
    %v5737 = vld [vmem:[#allocation16 + $0x398] sm:$0xff]
    %v5738 = vld [vmem:[#allocation16 + $0x3a0] sm:$0xff]
    %v5739 = vld [vmem:[#allocation16 + $0x3a8] sm:$0xff]
    %v5740 = vld [vmem:[#allocation16 + $0x3b0] sm:$0xff]
    %v5741 = vld [vmem:[#allocation16 + $0x3b8] sm:$0xff]
    %v5742 = vld [vmem:[#allocation16 + $0x3c0] sm:$0xff]
    %v5743 = vld [vmem:[#allocation16 + $0x3c8] sm:$0xff]
    %v5744 = vld [vmem:[#allocation16 + $0x3d0] sm:$0xff]
    %v5745 = vld [vmem:[#allocation16 + $0x3d8] sm:$0xff]
    %v5746 = vld [vmem:[#allocation16 + $0x3e0] sm:$0xff]
    %v5747 = vld [vmem:[#allocation16 + $0x3e8] sm:$0xff]
    %v5748 = vld [vmem:[#allocation16 + $0x3f0] sm:$0xff]
    %v5749 = vld [vmem:[#allocation16 + $0x3f8] sm:$0xff]
    %v5750 = vld [vmem:[#allocation16 + $0x400] sm:$0xff]
    %v5751 = vld [vmem:[#allocation16 + $0x408] sm:$0xff]
    %v5752 = vld [vmem:[#allocation16 + $0x410] sm:$0xff]
    %v5753 = vld [vmem:[#allocation16 + $0x418] sm:$0xff]
    %v5754 = vld [vmem:[#allocation16 + $0x420] sm:$0xff]
    %v5755 = vld [vmem:[#allocation16 + $0x428] sm:$0xff]
    %v5756 = vld [vmem:[#allocation16 + $0x430] sm:$0xff]
    %v5757 = vld [vmem:[#allocation16 + $0x438] sm:$0xff]
    %v5758 = vld [vmem:[#allocation16 + $0x440] sm:$0xff]
    %v5759 = vld [vmem:[#allocation16 + $0x448] sm:$0xff]
    %v5760 = vld [vmem:[#allocation16 + $0x450] sm:$0xff]
    %v5761 = vld [vmem:[#allocation16 + $0x458] sm:$0xff]
    %v5762 = vld [vmem:[#allocation16 + $0x460] sm:$0xff]
    %v5763 = vld [vmem:[#allocation16 + $0x468] sm:$0xff]
    %v5764 = vld [vmem:[#allocation16 + $0x470] sm:$0xff]
    %v5765 = vld [vmem:[#allocation16 + $0x478] sm:$0xff]
    %v5766 = vld [vmem:[#allocation16 + $0x480] sm:$0xff]
    %v5767 = vld [vmem:[#allocation16 + $0x488] sm:$0xff]
    %v5768 = vld [vmem:[#allocation16 + $0x490] sm:$0xff]
    %v5769 = vld [vmem:[#allocation16 + $0x498] sm:$0xff]
    %v5770 = vld [vmem:[#allocation16 + $0x4a0] sm:$0xff]
    %v5771 = vld [vmem:[#allocation16 + $0x4a8] sm:$0xff]
    %v5772 = vld [vmem:[#allocation16 + $0x4b0] sm:$0xff]
    %v5773 = vld [vmem:[#allocation16 + $0x4b8] sm:$0xff]
    %v5774 = vld [vmem:[#allocation16 + $0x4c0] sm:$0xff]
    %v5775 = vld [vmem:[#allocation16 + $0x4c8] sm:$0xff]
    %v5776 = vld [vmem:[#allocation16 + $0x4d0] sm:$0xff]
    %v5777 = vld [vmem:[#allocation16 + $0x4d8] sm:$0xff]
    %v5778 = vld [vmem:[#allocation16 + $0x4e0] sm:$0xff]
    %v5779 = vld [vmem:[#allocation16 + $0x4e8] sm:$0xff]
    %v5780 = vld [vmem:[#allocation16 + $0x4f0] sm:$0xff]
    %v5781 = vld [vmem:[#allocation16 + $0x4f8] sm:$0xff]
    %v5782 = vld [vmem:[#allocation16 + $0x500] sm:$0xff]
    %v5783 = vld [vmem:[#allocation16 + $0x508] sm:$0xff]
    %v5784 = vld [vmem:[#allocation16 + $0x510] sm:$0xff]
    %v5785 = vld [vmem:[#allocation16 + $0x518] sm:$0xff]
    %v5786 = vld [vmem:[#allocation16 + $0x520] sm:$0xff]
    %v5787 = vld [vmem:[#allocation16 + $0x528] sm:$0xff]
    %v5788 = vld [vmem:[#allocation16 + $0x530] sm:$0xff]
    %v5789 = vld [vmem:[#allocation16 + $0x538] sm:$0xff]
    %v5790 = vld [vmem:[#allocation16 + $0x540] sm:$0xff]
    %v5791 = vld [vmem:[#allocation16 + $0x548] sm:$0xff]
    %v5792 = vld [vmem:[#allocation16 + $0x550] sm:$0xff]
    %v5793 = vld [vmem:[#allocation16 + $0x558] sm:$0xff]
    %v5794 = vld [vmem:[#allocation16 + $0x560] sm:$0xff]
    %v5795 = vld [vmem:[#allocation16 + $0x568] sm:$0xff]
    %v5796 = vld [vmem:[#allocation16 + $0x570] sm:$0xff]
    %v5797 = vld [vmem:[#allocation16 + $0x578] sm:$0xff]
    %v5798 = vld [vmem:[#allocation16 + $0x580] sm:$0xff]
    %v5799 = vld [vmem:[#allocation16 + $0x588] sm:$0xff]
    %v5800 = vld [vmem:[#allocation16 + $0x590] sm:$0xff]
    %v5801 = vld [vmem:[#allocation16 + $0x598] sm:$0xff]
    %v5802 = vld [vmem:[#allocation16 + $0x5a0] sm:$0xff]
    %v5803 = vld [vmem:[#allocation16 + $0x5a8] sm:$0xff]
    %v5804 = vld [vmem:[#allocation16 + $0x5b0] sm:$0xff]
    %v5805 = vld [vmem:[#allocation16 + $0x5b8] sm:$0xff]
    %v5806 = vld [vmem:[#allocation16 + $0x5c0] sm:$0xff]
    %v5807 = vld [vmem:[#allocation16 + $0x5c8] sm:$0xff]
    %v5808 = vld [vmem:[#allocation16 + $0x5d0] sm:$0xff]
    %v5809 = vld [vmem:[#allocation16 + $0x5d8] sm:$0xff]
    %v5810 = vld [vmem:[#allocation16 + $0x5e0] sm:$0xff]
    %v5811 = vld [vmem:[#allocation16 + $0x5e8] sm:$0xff]
    %v5812 = vld [vmem:[#allocation16 + $0x5f0] sm:$0xff]
    %v5813 = vld [vmem:[#allocation16 + $0x5f8] sm:$0xff]
    %v5814 = vld [vmem:[#allocation16 + $0x600] sm:$0xff]
    %v5815 = vld [vmem:[#allocation16 + $0x608] sm:$0xff]
    %v5816 = vld [vmem:[#allocation16 + $0x610] sm:$0xff]
    %v5817 = vld [vmem:[#allocation16 + $0x618] sm:$0xff]
    %v5818 = vld [vmem:[#allocation16 + $0x620] sm:$0xff]
    %v5819 = vld [vmem:[#allocation16 + $0x628] sm:$0xff]
    %v5820 = vld [vmem:[#allocation16 + $0x630] sm:$0xff]
    %v5821 = vld [vmem:[#allocation16 + $0x638] sm:$0xff]
    %v5822 = vld [vmem:[#allocation16 + $0x640] sm:$0xff]
    %v5823 = vld [vmem:[#allocation16 + $0x648] sm:$0xff]
    %v5824 = vld [vmem:[#allocation16 + $0x650] sm:$0xff]
    %v5825 = vld [vmem:[#allocation16 + $0x658] sm:$0xff]
    %v5826 = vld [vmem:[#allocation16 + $0x660] sm:$0xff]
    %v5827 = vld [vmem:[#allocation16 + $0x668] sm:$0xff]
    %v5828 = vld [vmem:[#allocation16 + $0x670] sm:$0xff]
    %v5829 = vld [vmem:[#allocation16 + $0x678] sm:$0xff]
    %v5830 = vld [vmem:[#allocation16 + $0x680] sm:$0xff]
    %v5831 = vld [vmem:[#allocation16 + $0x688] sm:$0xff]
    %v5832 = vld [vmem:[#allocation16 + $0x690] sm:$0xff]
    %v5833 = vld [vmem:[#allocation16 + $0x698] sm:$0xff]
    %v5834 = vld [vmem:[#allocation16 + $0x6a0] sm:$0xff]
    %v5835 = vld [vmem:[#allocation16 + $0x6a8] sm:$0xff]
    %v5836 = vld [vmem:[#allocation16 + $0x6b0] sm:$0xff]
    %v5837 = vld [vmem:[#allocation16 + $0x6b8] sm:$0xff]
    %v5838 = vld [vmem:[#allocation16 + $0x6c0] sm:$0xff]
    %v5839 = vld [vmem:[#allocation16 + $0x6c8] sm:$0xff]
    %v5840 = vld [vmem:[#allocation16 + $0x6d0] sm:$0xff]
    %v5841 = vld [vmem:[#allocation16 + $0x6d8] sm:$0xff]
    %v5842 = vld [vmem:[#allocation16 + $0x6e0] sm:$0xff]
    %v5843 = vld [vmem:[#allocation16 + $0x6e8] sm:$0xff]
    %v5844 = vld [vmem:[#allocation16 + $0x6f0] sm:$0xff]
    %v5845 = vld [vmem:[#allocation16 + $0x6f8] sm:$0xff]
    %v5846 = vld [vmem:[#allocation16 + $0x700] sm:$0xff]
    %v5847 = vld [vmem:[#allocation16 + $0x708] sm:$0xff]
    %v5848 = vld [vmem:[#allocation16 + $0x710] sm:$0xff]
    %v5849 = vld [vmem:[#allocation16 + $0x718] sm:$0xff]
    %v5850 = vld [vmem:[#allocation16 + $0x720] sm:$0xff]
    %v5851 = vld [vmem:[#allocation16 + $0x728] sm:$0xff]
    %v5852 = vld [vmem:[#allocation16 + $0x730] sm:$0xff]
    %v5853 = vld [vmem:[#allocation16 + $0x738] sm:$0xff]
    %v5854 = vld [vmem:[#allocation16 + $0x740] sm:$0xff]
    %v5855 = vld [vmem:[#allocation16 + $0x748] sm:$0xff]
    %v5856 = vld [vmem:[#allocation16 + $0x750] sm:$0xff]
    %v5857 = vld [vmem:[#allocation16 + $0x758] sm:$0xff]
    %v5858 = vld [vmem:[#allocation16 + $0x760] sm:$0xff]
    %v5859 = vld [vmem:[#allocation16 + $0x768] sm:$0xff]
    %v5860 = vld [vmem:[#allocation16 + $0x770] sm:$0xff]
    %v5861 = vld [vmem:[#allocation16 + $0x778] sm:$0xff]
    %v5862 = vld [vmem:[#allocation16 + $0x780] sm:$0xff]
    %v5863 = vld [vmem:[#allocation16 + $0x788] sm:$0xff]
    %v5864 = vld [vmem:[#allocation16 + $0x790] sm:$0xff]
    %v5865 = vld [vmem:[#allocation16 + $0x798] sm:$0xff]
    %v5866 = vld [vmem:[#allocation16 + $0x7a0] sm:$0xff]
    %v5867 = vld [vmem:[#allocation16 + $0x7a8] sm:$0xff]
    %v5868 = vld [vmem:[#allocation16 + $0x7b0] sm:$0xff]
    %v5869 = vld [vmem:[#allocation16 + $0x7b8] sm:$0xff]
    %v5870 = vld [vmem:[#allocation16 + $0x7c0] sm:$0xff]
    %v5871 = vld [vmem:[#allocation16 + $0x7c8] sm:$0xff]
    %v5872 = vld [vmem:[#allocation16 + $0x7d0] sm:$0xff]
    %v5873 = vld [vmem:[#allocation16 + $0x7d8] sm:$0xff]
    %v5874 = vld [vmem:[#allocation16 + $0x7e0] sm:$0xff]
    %v5875 = vld [vmem:[#allocation16 + $0x7e8] sm:$0xff]
    %v5876 = vld [vmem:[#allocation16 + $0x7f0] sm:$0xff]
    %v5877 = vld [vmem:[#allocation16 + $0x7f8] sm:$0xff]
    %v5878 = vld [vmem:[#allocation16 + $0x800] sm:$0xff]
    %v5879 = vld [vmem:[#allocation16 + $0x808] sm:$0xff]
    %v5880 = vld [vmem:[#allocation16 + $0x810] sm:$0xff]
    %v5881 = vld [vmem:[#allocation16 + $0x818] sm:$0xff]
    %v5882 = vld [vmem:[#allocation16 + $0x820] sm:$0xff]
    %v5883 = vld [vmem:[#allocation16 + $0x828] sm:$0xff]
    %v5884 = vld [vmem:[#allocation16 + $0x830] sm:$0xff]
    %v5885 = vld [vmem:[#allocation16 + $0x838] sm:$0xff]
    %v5886 = vld [vmem:[#allocation16 + $0x840] sm:$0xff]
    %v5887 = vld [vmem:[#allocation16 + $0x848] sm:$0xff]
    %v5888 = vld [vmem:[#allocation16 + $0x850] sm:$0xff]
    %v5889 = vld [vmem:[#allocation16 + $0x858] sm:$0xff]
    %v5890 = vld [vmem:[#allocation16 + $0x860] sm:$0xff]
    %v5891 = vld [vmem:[#allocation16 + $0x868] sm:$0xff]
    %v5892 = vld [vmem:[#allocation16 + $0x870] sm:$0xff]
    %v5893 = vld [vmem:[#allocation16 + $0x878] sm:$0xff]
    %v5894 = vld [vmem:[#allocation16 + $0x880] sm:$0xff]
    %v5895 = vld [vmem:[#allocation16 + $0x888] sm:$0xff]
    %v5896 = vld [vmem:[#allocation16 + $0x890] sm:$0xff]
    %v5897 = vld [vmem:[#allocation16 + $0x898] sm:$0xff]
    %v5898 = vld [vmem:[#allocation16 + $0x8a0] sm:$0xff]
    %v5899 = vld [vmem:[#allocation16 + $0x8a8] sm:$0xff]
    %v5900 = vld [vmem:[#allocation16 + $0x8b0] sm:$0xff]
    %v5901 = vld [vmem:[#allocation16 + $0x8b8] sm:$0xff]
    %v5902 = vld [vmem:[#allocation16 + $0x8c0] sm:$0xff]
    %v5903 = vld [vmem:[#allocation16 + $0x8c8] sm:$0xff]
    %v5904 = vld [vmem:[#allocation16 + $0x8d0] sm:$0xff]
    %v5905 = vld [vmem:[#allocation16 + $0x8d8] sm:$0xff]
    %v5906 = vld [vmem:[#allocation16 + $0x8e0] sm:$0xff]
    %v5907 = vld [vmem:[#allocation16 + $0x8e8] sm:$0xff]
    %v5908 = vld [vmem:[#allocation16 + $0x8f0] sm:$0xff]
    %v5909 = vld [vmem:[#allocation16 + $0x8f8] sm:$0xff]
    %v5910 = vld [vmem:[#allocation17] sm:$0xff]
    %v5911 = vld [vmem:[#allocation17 + $0x8] sm:$0xf]
    %v5914 = vlaneseq
    %v5915 = vshrl.u32 %v5914, 7
    %v5916 = vsub.s32 0, %v5915
    %v5917 = vrot.slane %v5910, %v5916
    %v5918 = vlaneseq
    %v5919 = vshrl.u32 %v5918, 7
    %v5920 = vsub.s32 1, %v5919
    %v5921 = vrot.slane %v5910, %v5920
    %v5922 = vlaneseq
    %v5923 = vshrl.u32 %v5922, 7
    %v5924 = vsub.s32 2, %v5923
    %v5925 = vrot.slane %v5910, %v5924
    %v5926 = vlaneseq
    %v5927 = vshrl.u32 %v5926, 7
    %v5928 = vsub.s32 3, %v5927
    %v5929 = vrot.slane %v5910, %v5928
    %v5930 = vlaneseq
    %v5931 = vshrl.u32 %v5930, 7
    %v5932 = vsub.s32 4, %v5931
    %v5933 = vrot.slane %v5910, %v5932
    %v5934 = vlaneseq
    %v5935 = vshrl.u32 %v5934, 7
    %v5936 = vsub.s32 5, %v5935
    %v5937 = vrot.slane %v5910, %v5936
    %v5938 = vlaneseq
    %v5939 = vshrl.u32 %v5938, 7
    %v5940 = vsub.s32 6, %v5939
    %v5941 = vrot.slane %v5910, %v5940
    %v5942 = vlaneseq
    %v5943 = vshrl.u32 %v5942, 7
    %v5944 = vsub.s32 7, %v5943
    %v5945 = vrot.slane %v5910, %v5944
    %v5946 = vlaneseq
    %v5947 = vshrl.u32 %v5946, 7
    %v5948 = vsub.s32 0, %v5947
    %v5949 = vrot.slane %v5911, %v5948
    %v5950 = vlaneseq
    %v5951 = vshrl.u32 %v5950, 7
    %v5952 = vsub.s32 1, %v5951
    %v5953 = vrot.slane %v5911, %v5952
    %v5954 = vlaneseq
    %v5955 = vshrl.u32 %v5954, 7
    %v5956 = vsub.s32 2, %v5955
    %v5957 = vrot.slane %v5911, %v5956
    %v5958 = vlaneseq
    %v5959 = vshrl.u32 %v5958, 7
    %v5960 = vsub.s32 3, %v5959
    %v5961 = vrot.slane %v5911, %v5960
    %v6262 = vunpack.c.l.b16 %v5622
    %v6263 = vunpack.c.h.b16 %v5622
    %v6264 = vunpack.c.l.b16 %v5623
    %v6265 = vunpack.c.h.b16 %v5623
    %v6266 = vunpack.c.l.b16 %v5624
    %v6267 = vunpack.c.h.b16 %v5624
    %v6268 = vunpack.c.l.b16 %v5625
    %v6269 = vunpack.c.h.b16 %v5625
    %v6270 = vunpack.c.l.b16 %v5626
    %v6271 = vunpack.c.h.b16 %v5626
    %v6272 = vunpack.c.l.b16 %v5627
    %v6273 = vunpack.c.h.b16 %v5627
    %v6274 = vunpack.c.l.b16 %v5628
    %v6275 = vunpack.c.h.b16 %v5628
    %v6276 = vunpack.c.l.b16 %v5629
    %v6277 = vunpack.c.h.b16 %v5629
    %v6278 = vunpack.c.l.b16 %v5630
    %v6279 = vunpack.c.h.b16 %v5630
    %v6280 = vunpack.c.l.b16 %v5631
    %v6281 = vunpack.c.h.b16 %v5631
    %v6282 = vunpack.c.l.b16 %v5632
    %v6283 = vunpack.c.h.b16 %v5632
    %v6284 = vunpack.c.l.b16 %v5633
    %v6285 = vunpack.c.h.b16 %v5633
    %v6286 = vunpack.c.l.b16 %v5634
    %v6287 = vunpack.c.h.b16 %v5634
    %v6288 = vunpack.c.l.b16 %v5635
    %v6289 = vunpack.c.h.b16 %v5635
    %v6290 = vunpack.c.l.b16 %v5636
    %v6291 = vunpack.c.h.b16 %v5636
    %v6292 = vunpack.c.l.b16 %v5637
    %v6293 = vunpack.c.h.b16 %v5637
    %v6294 = vunpack.c.l.b16 %v5638
    %v6295 = vunpack.c.h.b16 %v5638
    %v6296 = vunpack.c.l.b16 %v5639
    %v6297 = vunpack.c.h.b16 %v5639
    %v6298 = vunpack.c.l.b16 %v5640
    %v6299 = vunpack.c.h.b16 %v5640
    %v6300 = vunpack.c.l.b16 %v5641
    %v6301 = vunpack.c.h.b16 %v5641
    %v6302 = vunpack.c.l.b16 %v5642
    %v6303 = vunpack.c.h.b16 %v5642
    %v6304 = vunpack.c.l.b16 %v5643
    %v6305 = vunpack.c.h.b16 %v5643
    %v6306 = vunpack.c.l.b16 %v5644
    %v6307 = vunpack.c.h.b16 %v5644
    %v6308 = vunpack.c.l.b16 %v5645
    %v6309 = vunpack.c.h.b16 %v5645
    %v6310 = vunpack.c.l.b16 %v5646
    %v6311 = vunpack.c.h.b16 %v5646
    %v6312 = vunpack.c.l.b16 %v5647
    %v6313 = vunpack.c.h.b16 %v5647
    %v6314 = vunpack.c.l.b16 %v5648
    %v6315 = vunpack.c.h.b16 %v5648
    %v6316 = vunpack.c.l.b16 %v5649
    %v6317 = vunpack.c.h.b16 %v5649
    %v6318 = vunpack.c.l.b16 %v5650
    %v6319 = vunpack.c.h.b16 %v5650
    %v6320 = vunpack.c.l.b16 %v5651
    %v6321 = vunpack.c.h.b16 %v5651
    %v6322 = vunpack.c.l.b16 %v5652
    %v6323 = vunpack.c.h.b16 %v5652
    %v6324 = vunpack.c.l.b16 %v5653
    %v6325 = vunpack.c.h.b16 %v5653
    %v6326 = vunpack.c.l.b16 %v5654
    %v6327 = vunpack.c.h.b16 %v5654
    %v6328 = vunpack.c.l.b16 %v5655
    %v6329 = vunpack.c.h.b16 %v5655
    %v6330 = vunpack.c.l.b16 %v5656
    %v6331 = vunpack.c.h.b16 %v5656
    %v6332 = vunpack.c.l.b16 %v5657
    %v6333 = vunpack.c.h.b16 %v5657
    %v6334 = vunpack.c.l.b16 %v5658
    %v6335 = vunpack.c.h.b16 %v5658
    %v6336 = vunpack.c.l.b16 %v5659
    %v6337 = vunpack.c.h.b16 %v5659
    %v6338 = vunpack.c.l.b16 %v5660
    %v6339 = vunpack.c.h.b16 %v5660
    %v6340 = vunpack.c.l.b16 %v5661
    %v6341 = vunpack.c.h.b16 %v5661
    %v6342 = vunpack.c.l.b16 %v5662
    %v6343 = vunpack.c.h.b16 %v5662
    %v6344 = vunpack.c.l.b16 %v5663
    %v6345 = vunpack.c.h.b16 %v5663
    %v6346 = vunpack.c.l.b16 %v5664
    %v6347 = vunpack.c.h.b16 %v5664
    %v6348 = vunpack.c.l.b16 %v5665
    %v6349 = vunpack.c.h.b16 %v5665
    %v6350 = vunpack.c.l.b16 %v5666
    %v6351 = vunpack.c.h.b16 %v5666
    %v6352 = vunpack.c.l.b16 %v5667
    %v6353 = vunpack.c.h.b16 %v5667
    %v6354 = vunpack.c.l.b16 %v5668
    %v6355 = vunpack.c.h.b16 %v5668
    %v6356 = vunpack.c.l.b16 %v5669
    %v6357 = vunpack.c.h.b16 %v5669
    %v6358 = vunpack.c.l.b16 %v5670
    %v6359 = vunpack.c.h.b16 %v5670
    %v6360 = vunpack.c.l.b16 %v5671
    %v6361 = vunpack.c.h.b16 %v5671
    %v6362 = vunpack.c.l.b16 %v5672
    %v6363 = vunpack.c.h.b16 %v5672
    %v6364 = vunpack.c.l.b16 %v5673
    %v6365 = vunpack.c.h.b16 %v5673
    %v6366 = vunpack.c.l.b16 %v5674
    %v6367 = vunpack.c.h.b16 %v5674
    %v6368 = vunpack.c.l.b16 %v5675
    %v6369 = vunpack.c.h.b16 %v5675
    %v6370 = vunpack.c.l.b16 %v5676
    %v6371 = vunpack.c.h.b16 %v5676
    %v6372 = vunpack.c.l.b16 %v5677
    %v6373 = vunpack.c.h.b16 %v5677
    %v6374 = vunpack.c.l.b16 %v5678
    %v6375 = vunpack.c.h.b16 %v5678
    %v6376 = vunpack.c.l.b16 %v5679
    %v6377 = vunpack.c.h.b16 %v5679
    %v6378 = vunpack.c.l.b16 %v5680
    %v6379 = vunpack.c.h.b16 %v5680
    %v6380 = vunpack.c.l.b16 %v5681
    %v6381 = vunpack.c.h.b16 %v5681
    %v6382 = vunpack.c.l.b16 %v5682
    %v6383 = vunpack.c.h.b16 %v5682
    %v6384 = vunpack.c.l.b16 %v5683
    %v6385 = vunpack.c.h.b16 %v5683
    %v6386 = vunpack.c.l.b16 %v5684
    %v6387 = vunpack.c.h.b16 %v5684
    %v6388 = vunpack.c.l.b16 %v5685
    %v6389 = vunpack.c.h.b16 %v5685
    %v6390 = vunpack.c.l.b16 %v5686
    %v6391 = vunpack.c.h.b16 %v5686
    %v6392 = vunpack.c.l.b16 %v5687
    %v6393 = vunpack.c.h.b16 %v5687
    %v6394 = vunpack.c.l.b16 %v5688
    %v6395 = vunpack.c.h.b16 %v5688
    %v6396 = vunpack.c.l.b16 %v5689
    %v6397 = vunpack.c.h.b16 %v5689
    %v6398 = vunpack.c.l.b16 %v5690
    %v6399 = vunpack.c.h.b16 %v5690
    %v6400 = vunpack.c.l.b16 %v5691
    %v6401 = vunpack.c.h.b16 %v5691
    %v6402 = vunpack.c.l.b16 %v5692
    %v6403 = vunpack.c.h.b16 %v5692
    %v6404 = vunpack.c.l.b16 %v5693
    %v6405 = vunpack.c.h.b16 %v5693
    %v6406 = vunpack.c.l.b16 %v5694
    %v6407 = vunpack.c.h.b16 %v5694
    %v6408 = vunpack.c.l.b16 %v5695
    %v6409 = vunpack.c.h.b16 %v5695
    %v6410 = vunpack.c.l.b16 %v5696
    %v6411 = vunpack.c.h.b16 %v5696
    %v6412 = vunpack.c.l.b16 %v5697
    %v6413 = vunpack.c.h.b16 %v5697
    %v6414 = vunpack.c.l.b16 %v5698
    %v6415 = vunpack.c.h.b16 %v5698
    %v6416 = vunpack.c.l.b16 %v5699
    %v6417 = vunpack.c.h.b16 %v5699
    %v6418 = vunpack.c.l.b16 %v5700
    %v6419 = vunpack.c.h.b16 %v5700
    %v6420 = vunpack.c.l.b16 %v5701
    %v6421 = vunpack.c.h.b16 %v5701
    %v6422 = vunpack.c.l.b16 %v5702
    %v6423 = vunpack.c.h.b16 %v5702
    %v6424 = vunpack.c.l.b16 %v5703
    %v6425 = vunpack.c.h.b16 %v5703
    %v6426 = vunpack.c.l.b16 %v5704
    %v6427 = vunpack.c.h.b16 %v5704
    %v6428 = vunpack.c.l.b16 %v5705
    %v6429 = vunpack.c.h.b16 %v5705
    %v6430 = vunpack.c.l.b16 %v5706
    %v6431 = vunpack.c.h.b16 %v5706
    %v6432 = vunpack.c.l.b16 %v5707
    %v6433 = vunpack.c.h.b16 %v5707
    %v6434 = vunpack.c.l.b16 %v5708
    %v6435 = vunpack.c.h.b16 %v5708
    %v6436 = vunpack.c.l.b16 %v5709
    %v6437 = vunpack.c.h.b16 %v5709
    %v6438 = vunpack.c.l.b16 %v5710
    %v6439 = vunpack.c.h.b16 %v5710
    %v6440 = vunpack.c.l.b16 %v5711
    %v6441 = vunpack.c.h.b16 %v5711
    %v6442 = vunpack.c.l.b16 %v5712
    %v6443 = vunpack.c.h.b16 %v5712
    %v6444 = vunpack.c.l.b16 %v5713
    %v6445 = vunpack.c.h.b16 %v5713
    %v6446 = vunpack.c.l.b16 %v5714
    %v6447 = vunpack.c.h.b16 %v5714
    %v6448 = vunpack.c.l.b16 %v5715
    %v6449 = vunpack.c.h.b16 %v5715
    %v6450 = vunpack.c.l.b16 %v5716
    %v6451 = vunpack.c.h.b16 %v5716
    %v6452 = vunpack.c.l.b16 %v5717
    %v6453 = vunpack.c.h.b16 %v5717
    %v6454 = vunpack.c.l.b16 %v5718
    %v6455 = vunpack.c.h.b16 %v5718
    %v6456 = vunpack.c.l.b16 %v5719
    %v6457 = vunpack.c.h.b16 %v5719
    %v6458 = vunpack.c.l.b16 %v5720
    %v6459 = vunpack.c.h.b16 %v5720
    %v6460 = vunpack.c.l.b16 %v5721
    %v6461 = vunpack.c.h.b16 %v5721
    %v6462 = vunpack.c.l.b16 %v5722
    %v6463 = vunpack.c.h.b16 %v5722
    %v6464 = vunpack.c.l.b16 %v5723
    %v6465 = vunpack.c.h.b16 %v5723
    %v6466 = vunpack.c.l.b16 %v5724
    %v6467 = vunpack.c.h.b16 %v5724
    %v6468 = vunpack.c.l.b16 %v5725
    %v6469 = vunpack.c.h.b16 %v5725
    %v6470 = vunpack.c.l.b16 %v5726
    %v6471 = vunpack.c.h.b16 %v5726
    %v6472 = vunpack.c.l.b16 %v5727
    %v6473 = vunpack.c.h.b16 %v5727
    %v6474 = vunpack.c.l.b16 %v5728
    %v6475 = vunpack.c.h.b16 %v5728
    %v6476 = vunpack.c.l.b16 %v5729
    %v6477 = vunpack.c.h.b16 %v5729
    %v6478 = vunpack.c.l.b16 %v5730
    %v6479 = vunpack.c.h.b16 %v5730
    %v6480 = vunpack.c.l.b16 %v5731
    %v6481 = vunpack.c.h.b16 %v5731
    %v6482 = vunpack.c.l.b16 %v5732
    %v6483 = vunpack.c.h.b16 %v5732
    %v6484 = vunpack.c.l.b16 %v5733
    %v6485 = vunpack.c.h.b16 %v5733
    %v6486 = vunpack.c.l.b16 %v5734
    %v6487 = vunpack.c.h.b16 %v5734
    %v6488 = vunpack.c.l.b16 %v5735
    %v6489 = vunpack.c.h.b16 %v5735
    %v6490 = vunpack.c.l.b16 %v5736
    %v6491 = vunpack.c.h.b16 %v5736
    %v6492 = vunpack.c.l.b16 %v5737
    %v6493 = vunpack.c.h.b16 %v5737
    %v6494 = vunpack.c.l.b16 %v5738
    %v6495 = vunpack.c.h.b16 %v5738
    %v6496 = vunpack.c.l.b16 %v5739
    %v6497 = vunpack.c.h.b16 %v5739
    %v6498 = vunpack.c.l.b16 %v5740
    %v6499 = vunpack.c.h.b16 %v5740
    %v6500 = vunpack.c.l.b16 %v5741
    %v6501 = vunpack.c.h.b16 %v5741
    %v6502 = vunpack.c.l.b16 %v5742
    %v6503 = vunpack.c.h.b16 %v5742
    %v6504 = vunpack.c.l.b16 %v5743
    %v6505 = vunpack.c.h.b16 %v5743
    %v6506 = vunpack.c.l.b16 %v5744
    %v6507 = vunpack.c.h.b16 %v5744
    %v6508 = vunpack.c.l.b16 %v5745
    %v6509 = vunpack.c.h.b16 %v5745
    %v6510 = vunpack.c.l.b16 %v5746
    %v6511 = vunpack.c.h.b16 %v5746
    %v6512 = vunpack.c.l.b16 %v5747
    %v6513 = vunpack.c.h.b16 %v5747
    %v6514 = vunpack.c.l.b16 %v5748
    %v6515 = vunpack.c.h.b16 %v5748
    %v6516 = vunpack.c.l.b16 %v5749
    %v6517 = vunpack.c.h.b16 %v5749
    %v6518 = vunpack.c.l.b16 %v5750
    %v6519 = vunpack.c.h.b16 %v5750
    %v6520 = vunpack.c.l.b16 %v5751
    %v6521 = vunpack.c.h.b16 %v5751
    %v6522 = vunpack.c.l.b16 %v5752
    %v6523 = vunpack.c.h.b16 %v5752
    %v6524 = vunpack.c.l.b16 %v5753
    %v6525 = vunpack.c.h.b16 %v5753
    %v6526 = vunpack.c.l.b16 %v5754
    %v6527 = vunpack.c.h.b16 %v5754
    %v6528 = vunpack.c.l.b16 %v5755
    %v6529 = vunpack.c.h.b16 %v5755
    %v6530 = vunpack.c.l.b16 %v5756
    %v6531 = vunpack.c.h.b16 %v5756
    %v6532 = vunpack.c.l.b16 %v5757
    %v6533 = vunpack.c.h.b16 %v5757
    %v6534 = vunpack.c.l.b16 %v5758
    %v6535 = vunpack.c.h.b16 %v5758
    %v6536 = vunpack.c.l.b16 %v5759
    %v6537 = vunpack.c.h.b16 %v5759
    %v6538 = vunpack.c.l.b16 %v5760
    %v6539 = vunpack.c.h.b16 %v5760
    %v6540 = vunpack.c.l.b16 %v5761
    %v6541 = vunpack.c.h.b16 %v5761
    %v6542 = vunpack.c.l.b16 %v5762
    %v6543 = vunpack.c.h.b16 %v5762
    %v6544 = vunpack.c.l.b16 %v5763
    %v6545 = vunpack.c.h.b16 %v5763
    %v6546 = vunpack.c.l.b16 %v5764
    %v6547 = vunpack.c.h.b16 %v5764
    %v6548 = vunpack.c.l.b16 %v5765
    %v6549 = vunpack.c.h.b16 %v5765
    %v6550 = vunpack.c.l.b16 %v5766
    %v6551 = vunpack.c.h.b16 %v5766
    %v6552 = vunpack.c.l.b16 %v5767
    %v6553 = vunpack.c.h.b16 %v5767
    %v6554 = vunpack.c.l.b16 %v5768
    %v6555 = vunpack.c.h.b16 %v5768
    %v6556 = vunpack.c.l.b16 %v5769
    %v6557 = vunpack.c.h.b16 %v5769
    %v6558 = vunpack.c.l.b16 %v5770
    %v6559 = vunpack.c.h.b16 %v5770
    %v6560 = vunpack.c.l.b16 %v5771
    %v6561 = vunpack.c.h.b16 %v5771
    %v6562 = vunpack.c.l.b16 %v5772
    %v6563 = vunpack.c.h.b16 %v5772
    %v6564 = vunpack.c.l.b16 %v5773
    %v6565 = vunpack.c.h.b16 %v5773
    %v6566 = vunpack.c.l.b16 %v5774
    %v6567 = vunpack.c.h.b16 %v5774
    %v6568 = vunpack.c.l.b16 %v5775
    %v6569 = vunpack.c.h.b16 %v5775
    %v6570 = vunpack.c.l.b16 %v5776
    %v6571 = vunpack.c.h.b16 %v5776
    %v6572 = vunpack.c.l.b16 %v5777
    %v6573 = vunpack.c.h.b16 %v5777
    %v6574 = vunpack.c.l.b16 %v5778
    %v6575 = vunpack.c.h.b16 %v5778
    %v6576 = vunpack.c.l.b16 %v5779
    %v6577 = vunpack.c.h.b16 %v5779
    %v6578 = vunpack.c.l.b16 %v5780
    %v6579 = vunpack.c.h.b16 %v5780
    %v6580 = vunpack.c.l.b16 %v5781
    %v6581 = vunpack.c.h.b16 %v5781
    %v6582 = vunpack.c.l.b16 %v5782
    %v6583 = vunpack.c.h.b16 %v5782
    %v6584 = vunpack.c.l.b16 %v5783
    %v6585 = vunpack.c.h.b16 %v5783
    %v6586 = vunpack.c.l.b16 %v5784
    %v6587 = vunpack.c.h.b16 %v5784
    %v6588 = vunpack.c.l.b16 %v5785
    %v6589 = vunpack.c.h.b16 %v5785
    %v6590 = vunpack.c.l.b16 %v5786
    %v6591 = vunpack.c.h.b16 %v5786
    %v6592 = vunpack.c.l.b16 %v5787
    %v6593 = vunpack.c.h.b16 %v5787
    %v6594 = vunpack.c.l.b16 %v5788
    %v6595 = vunpack.c.h.b16 %v5788
    %v6596 = vunpack.c.l.b16 %v5789
    %v6597 = vunpack.c.h.b16 %v5789
    %v6598 = vunpack.c.l.b16 %v5790
    %v6599 = vunpack.c.h.b16 %v5790
    %v6600 = vunpack.c.l.b16 %v5791
    %v6601 = vunpack.c.h.b16 %v5791
    %v6602 = vunpack.c.l.b16 %v5792
    %v6603 = vunpack.c.h.b16 %v5792
    %v6604 = vunpack.c.l.b16 %v5793
    %v6605 = vunpack.c.h.b16 %v5793
    %v6606 = vunpack.c.l.b16 %v5794
    %v6607 = vunpack.c.h.b16 %v5794
    %v6608 = vunpack.c.l.b16 %v5795
    %v6609 = vunpack.c.h.b16 %v5795
    %v6610 = vunpack.c.l.b16 %v5796
    %v6611 = vunpack.c.h.b16 %v5796
    %v6612 = vunpack.c.l.b16 %v5797
    %v6613 = vunpack.c.h.b16 %v5797
    %v6614 = vunpack.c.l.b16 %v5798
    %v6615 = vunpack.c.h.b16 %v5798
    %v6616 = vunpack.c.l.b16 %v5799
    %v6617 = vunpack.c.h.b16 %v5799
    %v6618 = vunpack.c.l.b16 %v5800
    %v6619 = vunpack.c.h.b16 %v5800
    %v6620 = vunpack.c.l.b16 %v5801
    %v6621 = vunpack.c.h.b16 %v5801
    %v6622 = vunpack.c.l.b16 %v5802
    %v6623 = vunpack.c.h.b16 %v5802
    %v6624 = vunpack.c.l.b16 %v5803
    %v6625 = vunpack.c.h.b16 %v5803
    %v6626 = vunpack.c.l.b16 %v5804
    %v6627 = vunpack.c.h.b16 %v5804
    %v6628 = vunpack.c.l.b16 %v5805
    %v6629 = vunpack.c.h.b16 %v5805
    %v6630 = vunpack.c.l.b16 %v5806
    %v6631 = vunpack.c.h.b16 %v5806
    %v6632 = vunpack.c.l.b16 %v5807
    %v6633 = vunpack.c.h.b16 %v5807
    %v6634 = vunpack.c.l.b16 %v5808
    %v6635 = vunpack.c.h.b16 %v5808
    %v6636 = vunpack.c.l.b16 %v5809
    %v6637 = vunpack.c.h.b16 %v5809
    %v6638 = vunpack.c.l.b16 %v5810
    %v6639 = vunpack.c.h.b16 %v5810
    %v6640 = vunpack.c.l.b16 %v5811
    %v6641 = vunpack.c.h.b16 %v5811
    %v6642 = vunpack.c.l.b16 %v5812
    %v6643 = vunpack.c.h.b16 %v5812
    %v6644 = vunpack.c.l.b16 %v5813
    %v6645 = vunpack.c.h.b16 %v5813
    %v6646 = vunpack.c.l.b16 %v5814
    %v6647 = vunpack.c.h.b16 %v5814
    %v6648 = vunpack.c.l.b16 %v5815
    %v6649 = vunpack.c.h.b16 %v5815
    %v6650 = vunpack.c.l.b16 %v5816
    %v6651 = vunpack.c.h.b16 %v5816
    %v6652 = vunpack.c.l.b16 %v5817
    %v6653 = vunpack.c.h.b16 %v5817
    %v6654 = vunpack.c.l.b16 %v5818
    %v6655 = vunpack.c.h.b16 %v5818
    %v6656 = vunpack.c.l.b16 %v5819
    %v6657 = vunpack.c.h.b16 %v5819
    %v6658 = vunpack.c.l.b16 %v5820
    %v6659 = vunpack.c.h.b16 %v5820
    %v6660 = vunpack.c.l.b16 %v5821
    %v6661 = vunpack.c.h.b16 %v5821
    %v6662 = vunpack.c.l.b16 %v5822
    %v6663 = vunpack.c.h.b16 %v5822
    %v6664 = vunpack.c.l.b16 %v5823
    %v6665 = vunpack.c.h.b16 %v5823
    %v6666 = vunpack.c.l.b16 %v5824
    %v6667 = vunpack.c.h.b16 %v5824
    %v6668 = vunpack.c.l.b16 %v5825
    %v6669 = vunpack.c.h.b16 %v5825
    %v6670 = vunpack.c.l.b16 %v5826
    %v6671 = vunpack.c.h.b16 %v5826
    %v6672 = vunpack.c.l.b16 %v5827
    %v6673 = vunpack.c.h.b16 %v5827
    %v6674 = vunpack.c.l.b16 %v5828
    %v6675 = vunpack.c.h.b16 %v5828
    %v6676 = vunpack.c.l.b16 %v5829
    %v6677 = vunpack.c.h.b16 %v5829
    %v6678 = vunpack.c.l.b16 %v5830
    %v6679 = vunpack.c.h.b16 %v5830
    %v6680 = vunpack.c.l.b16 %v5831
    %v6681 = vunpack.c.h.b16 %v5831
    %v6682 = vunpack.c.l.b16 %v5832
    %v6683 = vunpack.c.h.b16 %v5832
    %v6684 = vunpack.c.l.b16 %v5833
    %v6685 = vunpack.c.h.b16 %v5833
    %v6686 = vunpack.c.l.b16 %v5834
    %v6687 = vunpack.c.h.b16 %v5834
    %v6688 = vunpack.c.l.b16 %v5835
    %v6689 = vunpack.c.h.b16 %v5835
    %v6690 = vunpack.c.l.b16 %v5836
    %v6691 = vunpack.c.h.b16 %v5836
    %v6692 = vunpack.c.l.b16 %v5837
    %v6693 = vunpack.c.h.b16 %v5837
    %v6694 = vunpack.c.l.b16 %v5838
    %v6695 = vunpack.c.h.b16 %v5838
    %v6696 = vunpack.c.l.b16 %v5839
    %v6697 = vunpack.c.h.b16 %v5839
    %v6698 = vunpack.c.l.b16 %v5840
    %v6699 = vunpack.c.h.b16 %v5840
    %v6700 = vunpack.c.l.b16 %v5841
    %v6701 = vunpack.c.h.b16 %v5841
    %v6702 = vunpack.c.l.b16 %v5842
    %v6703 = vunpack.c.h.b16 %v5842
    %v6704 = vunpack.c.l.b16 %v5843
    %v6705 = vunpack.c.h.b16 %v5843
    %v6706 = vunpack.c.l.b16 %v5844
    %v6707 = vunpack.c.h.b16 %v5844
    %v6708 = vunpack.c.l.b16 %v5845
    %v6709 = vunpack.c.h.b16 %v5845
    %v6710 = vunpack.c.l.b16 %v5846
    %v6711 = vunpack.c.h.b16 %v5846
    %v6712 = vunpack.c.l.b16 %v5847
    %v6713 = vunpack.c.h.b16 %v5847
    %v6714 = vunpack.c.l.b16 %v5848
    %v6715 = vunpack.c.h.b16 %v5848
    %v6716 = vunpack.c.l.b16 %v5849
    %v6717 = vunpack.c.h.b16 %v5849
    %v6718 = vunpack.c.l.b16 %v5850
    %v6719 = vunpack.c.h.b16 %v5850
    %v6720 = vunpack.c.l.b16 %v5851
    %v6721 = vunpack.c.h.b16 %v5851
    %v6722 = vunpack.c.l.b16 %v5852
    %v6723 = vunpack.c.h.b16 %v5852
    %v6724 = vunpack.c.l.b16 %v5853
    %v6725 = vunpack.c.h.b16 %v5853
    %v6726 = vunpack.c.l.b16 %v5854
    %v6727 = vunpack.c.h.b16 %v5854
    %v6728 = vunpack.c.l.b16 %v5855
    %v6729 = vunpack.c.h.b16 %v5855
    %v6730 = vunpack.c.l.b16 %v5856
    %v6731 = vunpack.c.h.b16 %v5856
    %v6732 = vunpack.c.l.b16 %v5857
    %v6733 = vunpack.c.h.b16 %v5857
    %v6734 = vunpack.c.l.b16 %v5858
    %v6735 = vunpack.c.h.b16 %v5858
    %v6736 = vunpack.c.l.b16 %v5859
    %v6737 = vunpack.c.h.b16 %v5859
    %v6738 = vunpack.c.l.b16 %v5860
    %v6739 = vunpack.c.h.b16 %v5860
    %v6740 = vunpack.c.l.b16 %v5861
    %v6741 = vunpack.c.h.b16 %v5861
    %v6742 = vunpack.c.l.b16 %v5862
    %v6743 = vunpack.c.h.b16 %v5862
    %v6744 = vunpack.c.l.b16 %v5863
    %v6745 = vunpack.c.h.b16 %v5863
    %v6746 = vunpack.c.l.b16 %v5864
    %v6747 = vunpack.c.h.b16 %v5864
    %v6748 = vunpack.c.l.b16 %v5865
    %v6749 = vunpack.c.h.b16 %v5865
    %v6750 = vunpack.c.l.b16 %v5866
    %v6751 = vunpack.c.h.b16 %v5866
    %v6752 = vunpack.c.l.b16 %v5867
    %v6753 = vunpack.c.h.b16 %v5867
    %v6754 = vunpack.c.l.b16 %v5868
    %v6755 = vunpack.c.h.b16 %v5868
    %v6756 = vunpack.c.l.b16 %v5869
    %v6757 = vunpack.c.h.b16 %v5869
    %v6758 = vunpack.c.l.b16 %v5870
    %v6759 = vunpack.c.h.b16 %v5870
    %v6760 = vunpack.c.l.b16 %v5871
    %v6761 = vunpack.c.h.b16 %v5871
    %v6762 = vunpack.c.l.b16 %v5872
    %v6763 = vunpack.c.h.b16 %v5872
    %v6764 = vunpack.c.l.b16 %v5873
    %v6765 = vunpack.c.h.b16 %v5873
    %v6766 = vunpack.c.l.b16 %v5874
    %v6767 = vunpack.c.h.b16 %v5874
    %v6768 = vunpack.c.l.b16 %v5875
    %v6769 = vunpack.c.h.b16 %v5875
    %v6770 = vunpack.c.l.b16 %v5876
    %v6771 = vunpack.c.h.b16 %v5876
    %v6772 = vunpack.c.l.b16 %v5877
    %v6773 = vunpack.c.h.b16 %v5877
    %v6774 = vunpack.c.l.b16 %v5878
    %v6775 = vunpack.c.h.b16 %v5878
    %v6776 = vunpack.c.l.b16 %v5879
    %v6777 = vunpack.c.h.b16 %v5879
    %v6778 = vunpack.c.l.b16 %v5880
    %v6779 = vunpack.c.h.b16 %v5880
    %v6780 = vunpack.c.l.b16 %v5881
    %v6781 = vunpack.c.h.b16 %v5881
    %v6782 = vunpack.c.l.b16 %v5882
    %v6783 = vunpack.c.h.b16 %v5882
    %v6784 = vunpack.c.l.b16 %v5883
    %v6785 = vunpack.c.h.b16 %v5883
    %v6786 = vunpack.c.l.b16 %v5884
    %v6787 = vunpack.c.h.b16 %v5884
    %v6788 = vunpack.c.l.b16 %v5885
    %v6789 = vunpack.c.h.b16 %v5885
    %v6790 = vunpack.c.l.b16 %v5886
    %v6791 = vunpack.c.h.b16 %v5886
    %v6792 = vunpack.c.l.b16 %v5887
    %v6793 = vunpack.c.h.b16 %v5887
    %v6794 = vunpack.c.l.b16 %v5888
    %v6795 = vunpack.c.h.b16 %v5888
    %v6796 = vunpack.c.l.b16 %v5889
    %v6797 = vunpack.c.h.b16 %v5889
    %v6798 = vunpack.c.l.b16 %v5890
    %v6799 = vunpack.c.h.b16 %v5890
    %v6800 = vunpack.c.l.b16 %v5891
    %v6801 = vunpack.c.h.b16 %v5891
    %v6802 = vunpack.c.l.b16 %v5892
    %v6803 = vunpack.c.h.b16 %v5892
    %v6804 = vunpack.c.l.b16 %v5893
    %v6805 = vunpack.c.h.b16 %v5893
    %v6806 = vunpack.c.l.b16 %v5894
    %v6807 = vunpack.c.h.b16 %v5894
    %v6808 = vunpack.c.l.b16 %v5895
    %v6809 = vunpack.c.h.b16 %v5895
    %v6810 = vunpack.c.l.b16 %v5896
    %v6811 = vunpack.c.h.b16 %v5896
    %v6812 = vunpack.c.l.b16 %v5897
    %v6813 = vunpack.c.h.b16 %v5897
    %v6814 = vunpack.c.l.b16 %v5898
    %v6815 = vunpack.c.h.b16 %v5898
    %v6816 = vunpack.c.l.b16 %v5899
    %v6817 = vunpack.c.h.b16 %v5899
    %v6818 = vunpack.c.l.b16 %v5900
    %v6819 = vunpack.c.h.b16 %v5900
    %v6820 = vunpack.c.l.b16 %v5901
    %v6821 = vunpack.c.h.b16 %v5901
    %v6822 = vunpack.c.l.b16 %v5902
    %v6823 = vunpack.c.h.b16 %v5902
    %v6824 = vunpack.c.l.b16 %v5903
    %v6825 = vunpack.c.h.b16 %v5903
    %v6826 = vunpack.c.l.b16 %v5904
    %v6827 = vunpack.c.h.b16 %v5904
    %v6828 = vunpack.c.l.b16 %v5905
    %v6829 = vunpack.c.h.b16 %v5905
    %v6830 = vunpack.c.l.b16 %v5906
    %v6831 = vunpack.c.h.b16 %v5906
    %v6832 = vunpack.c.l.b16 %v5907
    %v6833 = vunpack.c.h.b16 %v5907
    %v6834 = vunpack.c.l.b16 %v5908
    %v6835 = vunpack.c.h.b16 %v5908
    %v6836 = vunpack.c.l.b16 %v5909
    %v6837 = vunpack.c.h.b16 %v5909
    %v6838 = vpack.c.b16 %v6274, %v6262
    %v6839 = vpack.c.b16 %v6275, %v6263
    %v6840 = vpack.c.b16 %v6276, %v6264
    %v6841 = vpack.c.b16 %v6277, %v6265
    %v6842 = vpack.c.b16 %v6278, %v6266
    %v6843 = vpack.c.b16 %v6279, %v6267
    %v6844 = vpack.c.b16 %v6280, %v6268
    %v6845 = vpack.c.b16 %v6281, %v6269
    %v6846 = vpack.c.b16 %v6282, %v6270
    %v6847 = vpack.c.b16 %v6283, %v6271
    %v6848 = vpack.c.b16 %v6284, %v6272
    %v6849 = vpack.c.b16 %v6285, %v6273
    %v6850 = vpack.c.b16 %v6298, %v6286
    %v6851 = vpack.c.b16 %v6299, %v6287
    %v6852 = vpack.c.b16 %v6300, %v6288
    %v6853 = vpack.c.b16 %v6301, %v6289
    %v6854 = vpack.c.b16 %v6302, %v6290
    %v6855 = vpack.c.b16 %v6303, %v6291
    %v6856 = vpack.c.b16 %v6304, %v6292
    %v6857 = vpack.c.b16 %v6305, %v6293
    %v6858 = vpack.c.b16 %v6306, %v6294
    %v6859 = vpack.c.b16 %v6307, %v6295
    %v6860 = vpack.c.b16 %v6308, %v6296
    %v6861 = vpack.c.b16 %v6309, %v6297
    %v6862 = vpack.c.b16 %v6322, %v6310
    %v6863 = vpack.c.b16 %v6323, %v6311
    %v6864 = vpack.c.b16 %v6324, %v6312
    %v6865 = vpack.c.b16 %v6325, %v6313
    %v6866 = vpack.c.b16 %v6326, %v6314
    %v6867 = vpack.c.b16 %v6327, %v6315
    %v6868 = vpack.c.b16 %v6328, %v6316
    %v6869 = vpack.c.b16 %v6329, %v6317
    %v6870 = vpack.c.b16 %v6330, %v6318
    %v6871 = vpack.c.b16 %v6331, %v6319
    %v6872 = vpack.c.b16 %v6332, %v6320
    %v6873 = vpack.c.b16 %v6333, %v6321
    %v6874 = vpack.c.b16 %v6346, %v6334
    %v6875 = vpack.c.b16 %v6347, %v6335
    %v6876 = vpack.c.b16 %v6348, %v6336
    %v6877 = vpack.c.b16 %v6349, %v6337
    %v6878 = vpack.c.b16 %v6350, %v6338
    %v6879 = vpack.c.b16 %v6351, %v6339
    %v6880 = vpack.c.b16 %v6352, %v6340
    %v6881 = vpack.c.b16 %v6353, %v6341
    %v6882 = vpack.c.b16 %v6354, %v6342
    %v6883 = vpack.c.b16 %v6355, %v6343
    %v6884 = vpack.c.b16 %v6356, %v6344
    %v6885 = vpack.c.b16 %v6357, %v6345
    %v6886 = vpack.c.b16 %v6370, %v6358
    %v6887 = vpack.c.b16 %v6371, %v6359
    %v6888 = vpack.c.b16 %v6372, %v6360
    %v6889 = vpack.c.b16 %v6373, %v6361
    %v6890 = vpack.c.b16 %v6374, %v6362
    %v6891 = vpack.c.b16 %v6375, %v6363
    %v6892 = vpack.c.b16 %v6376, %v6364
    %v6893 = vpack.c.b16 %v6377, %v6365
    %v6894 = vpack.c.b16 %v6378, %v6366
    %v6895 = vpack.c.b16 %v6379, %v6367
    %v6896 = vpack.c.b16 %v6380, %v6368
    %v6897 = vpack.c.b16 %v6381, %v6369
    %v6898 = vpack.c.b16 %v6394, %v6382
    %v6899 = vpack.c.b16 %v6395, %v6383
    %v6900 = vpack.c.b16 %v6396, %v6384
    %v6901 = vpack.c.b16 %v6397, %v6385
    %v6902 = vpack.c.b16 %v6398, %v6386
    %v6903 = vpack.c.b16 %v6399, %v6387
    %v6904 = vpack.c.b16 %v6400, %v6388
    %v6905 = vpack.c.b16 %v6401, %v6389
    %v6906 = vpack.c.b16 %v6402, %v6390
    %v6907 = vpack.c.b16 %v6403, %v6391
    %v6908 = vpack.c.b16 %v6404, %v6392
    %v6909 = vpack.c.b16 %v6405, %v6393
    %v6910 = vpack.c.b16 %v6418, %v6406
    %v6911 = vpack.c.b16 %v6419, %v6407
    %v6912 = vpack.c.b16 %v6420, %v6408
    %v6913 = vpack.c.b16 %v6421, %v6409
    %v6914 = vpack.c.b16 %v6422, %v6410
    %v6915 = vpack.c.b16 %v6423, %v6411
    %v6916 = vpack.c.b16 %v6424, %v6412
    %v6917 = vpack.c.b16 %v6425, %v6413
    %v6918 = vpack.c.b16 %v6426, %v6414
    %v6919 = vpack.c.b16 %v6427, %v6415
    %v6920 = vpack.c.b16 %v6428, %v6416
    %v6921 = vpack.c.b16 %v6429, %v6417
    %v6922 = vpack.c.b16 %v6442, %v6430
    %v6923 = vpack.c.b16 %v6443, %v6431
    %v6924 = vpack.c.b16 %v6444, %v6432
    %v6925 = vpack.c.b16 %v6445, %v6433
    %v6926 = vpack.c.b16 %v6446, %v6434
    %v6927 = vpack.c.b16 %v6447, %v6435
    %v6928 = vpack.c.b16 %v6448, %v6436
    %v6929 = vpack.c.b16 %v6449, %v6437
    %v6930 = vpack.c.b16 %v6450, %v6438
    %v6931 = vpack.c.b16 %v6451, %v6439
    %v6932 = vpack.c.b16 %v6452, %v6440
    %v6933 = vpack.c.b16 %v6453, %v6441
    %v6934 = vpack.c.b16 %v6466, %v6454
    %v6935 = vpack.c.b16 %v6467, %v6455
    %v6936 = vpack.c.b16 %v6468, %v6456
    %v6937 = vpack.c.b16 %v6469, %v6457
    %v6938 = vpack.c.b16 %v6470, %v6458
    %v6939 = vpack.c.b16 %v6471, %v6459
    %v6940 = vpack.c.b16 %v6472, %v6460
    %v6941 = vpack.c.b16 %v6473, %v6461
    %v6942 = vpack.c.b16 %v6474, %v6462
    %v6943 = vpack.c.b16 %v6475, %v6463
    %v6944 = vpack.c.b16 %v6476, %v6464
    %v6945 = vpack.c.b16 %v6477, %v6465
    %v6946 = vpack.c.b16 %v6490, %v6478
    %v6947 = vpack.c.b16 %v6491, %v6479
    %v6948 = vpack.c.b16 %v6492, %v6480
    %v6949 = vpack.c.b16 %v6493, %v6481
    %v6950 = vpack.c.b16 %v6494, %v6482
    %v6951 = vpack.c.b16 %v6495, %v6483
    %v6952 = vpack.c.b16 %v6496, %v6484
    %v6953 = vpack.c.b16 %v6497, %v6485
    %v6954 = vpack.c.b16 %v6498, %v6486
    %v6955 = vpack.c.b16 %v6499, %v6487
    %v6956 = vpack.c.b16 %v6500, %v6488
    %v6957 = vpack.c.b16 %v6501, %v6489
    %v6958 = vpack.c.b16 %v6514, %v6502
    %v6959 = vpack.c.b16 %v6515, %v6503
    %v6960 = vpack.c.b16 %v6516, %v6504
    %v6961 = vpack.c.b16 %v6517, %v6505
    %v6962 = vpack.c.b16 %v6518, %v6506
    %v6963 = vpack.c.b16 %v6519, %v6507
    %v6964 = vpack.c.b16 %v6520, %v6508
    %v6965 = vpack.c.b16 %v6521, %v6509
    %v6966 = vpack.c.b16 %v6522, %v6510
    %v6967 = vpack.c.b16 %v6523, %v6511
    %v6968 = vpack.c.b16 %v6524, %v6512
    %v6969 = vpack.c.b16 %v6525, %v6513
    %v6970 = vpack.c.b16 %v6538, %v6526
    %v6971 = vpack.c.b16 %v6539, %v6527
    %v6972 = vpack.c.b16 %v6540, %v6528
    %v6973 = vpack.c.b16 %v6541, %v6529
    %v6974 = vpack.c.b16 %v6542, %v6530
    %v6975 = vpack.c.b16 %v6543, %v6531
    %v6976 = vpack.c.b16 %v6544, %v6532
    %v6977 = vpack.c.b16 %v6545, %v6533
    %v6978 = vpack.c.b16 %v6546, %v6534
    %v6979 = vpack.c.b16 %v6547, %v6535
    %v6980 = vpack.c.b16 %v6548, %v6536
    %v6981 = vpack.c.b16 %v6549, %v6537
    %v6982 = vpack.c.b16 %v6562, %v6550
    %v6983 = vpack.c.b16 %v6563, %v6551
    %v6984 = vpack.c.b16 %v6564, %v6552
    %v6985 = vpack.c.b16 %v6565, %v6553
    %v6986 = vpack.c.b16 %v6566, %v6554
    %v6987 = vpack.c.b16 %v6567, %v6555
    %v6988 = vpack.c.b16 %v6568, %v6556
    %v6989 = vpack.c.b16 %v6569, %v6557
    %v6990 = vpack.c.b16 %v6570, %v6558
    %v6991 = vpack.c.b16 %v6571, %v6559
    %v6992 = vpack.c.b16 %v6572, %v6560
    %v6993 = vpack.c.b16 %v6573, %v6561
    %v6994 = vpack.c.b16 %v6586, %v6574
    %v6995 = vpack.c.b16 %v6587, %v6575
    %v6996 = vpack.c.b16 %v6588, %v6576
    %v6997 = vpack.c.b16 %v6589, %v6577
    %v6998 = vpack.c.b16 %v6590, %v6578
    %v6999 = vpack.c.b16 %v6591, %v6579
    %v7000 = vpack.c.b16 %v6592, %v6580
    %v7001 = vpack.c.b16 %v6593, %v6581
    %v7002 = vpack.c.b16 %v6594, %v6582
    %v7003 = vpack.c.b16 %v6595, %v6583
    %v7004 = vpack.c.b16 %v6596, %v6584
    %v7005 = vpack.c.b16 %v6597, %v6585
    %v7006 = vpack.c.b16 %v6610, %v6598
    %v7007 = vpack.c.b16 %v6611, %v6599
    %v7008 = vpack.c.b16 %v6612, %v6600
    %v7009 = vpack.c.b16 %v6613, %v6601
    %v7010 = vpack.c.b16 %v6614, %v6602
    %v7011 = vpack.c.b16 %v6615, %v6603
    %v7012 = vpack.c.b16 %v6616, %v6604
    %v7013 = vpack.c.b16 %v6617, %v6605
    %v7014 = vpack.c.b16 %v6618, %v6606
    %v7015 = vpack.c.b16 %v6619, %v6607
    %v7016 = vpack.c.b16 %v6620, %v6608
    %v7017 = vpack.c.b16 %v6621, %v6609
    %v7018 = vpack.c.b16 %v6634, %v6622
    %v7019 = vpack.c.b16 %v6635, %v6623
    %v7020 = vpack.c.b16 %v6636, %v6624
    %v7021 = vpack.c.b16 %v6637, %v6625
    %v7022 = vpack.c.b16 %v6638, %v6626
    %v7023 = vpack.c.b16 %v6639, %v6627
    %v7024 = vpack.c.b16 %v6640, %v6628
    %v7025 = vpack.c.b16 %v6641, %v6629
    %v7026 = vpack.c.b16 %v6642, %v6630
    %v7027 = vpack.c.b16 %v6643, %v6631
    %v7028 = vpack.c.b16 %v6644, %v6632
    %v7029 = vpack.c.b16 %v6645, %v6633
    %v7030 = vpack.c.b16 %v6658, %v6646
    %v7031 = vpack.c.b16 %v6659, %v6647
    %v7032 = vpack.c.b16 %v6660, %v6648
    %v7033 = vpack.c.b16 %v6661, %v6649
    %v7034 = vpack.c.b16 %v6662, %v6650
    %v7035 = vpack.c.b16 %v6663, %v6651
    %v7036 = vpack.c.b16 %v6664, %v6652
    %v7037 = vpack.c.b16 %v6665, %v6653
    %v7038 = vpack.c.b16 %v6666, %v6654
    %v7039 = vpack.c.b16 %v6667, %v6655
    %v7040 = vpack.c.b16 %v6668, %v6656
    %v7041 = vpack.c.b16 %v6669, %v6657
    %v7042 = vpack.c.b16 %v6682, %v6670
    %v7043 = vpack.c.b16 %v6683, %v6671
    %v7044 = vpack.c.b16 %v6684, %v6672
    %v7045 = vpack.c.b16 %v6685, %v6673
    %v7046 = vpack.c.b16 %v6686, %v6674
    %v7047 = vpack.c.b16 %v6687, %v6675
    %v7048 = vpack.c.b16 %v6688, %v6676
    %v7049 = vpack.c.b16 %v6689, %v6677
    %v7050 = vpack.c.b16 %v6690, %v6678
    %v7051 = vpack.c.b16 %v6691, %v6679
    %v7052 = vpack.c.b16 %v6692, %v6680
    %v7053 = vpack.c.b16 %v6693, %v6681
    %v7054 = vpack.c.b16 %v6706, %v6694
    %v7055 = vpack.c.b16 %v6707, %v6695
    %v7056 = vpack.c.b16 %v6708, %v6696
    %v7057 = vpack.c.b16 %v6709, %v6697
    %v7058 = vpack.c.b16 %v6710, %v6698
    %v7059 = vpack.c.b16 %v6711, %v6699
    %v7060 = vpack.c.b16 %v6712, %v6700
    %v7061 = vpack.c.b16 %v6713, %v6701
    %v7062 = vpack.c.b16 %v6714, %v6702
    %v7063 = vpack.c.b16 %v6715, %v6703
    %v7064 = vpack.c.b16 %v6716, %v6704
    %v7065 = vpack.c.b16 %v6717, %v6705
    %v7066 = vpack.c.b16 %v6730, %v6718
    %v7067 = vpack.c.b16 %v6731, %v6719
    %v7068 = vpack.c.b16 %v6732, %v6720
    %v7069 = vpack.c.b16 %v6733, %v6721
    %v7070 = vpack.c.b16 %v6734, %v6722
    %v7071 = vpack.c.b16 %v6735, %v6723
    %v7072 = vpack.c.b16 %v6736, %v6724
    %v7073 = vpack.c.b16 %v6737, %v6725
    %v7074 = vpack.c.b16 %v6738, %v6726
    %v7075 = vpack.c.b16 %v6739, %v6727
    %v7076 = vpack.c.b16 %v6740, %v6728
    %v7077 = vpack.c.b16 %v6741, %v6729
    %v7078 = vpack.c.b16 %v6754, %v6742
    %v7079 = vpack.c.b16 %v6755, %v6743
    %v7080 = vpack.c.b16 %v6756, %v6744
    %v7081 = vpack.c.b16 %v6757, %v6745
    %v7082 = vpack.c.b16 %v6758, %v6746
    %v7083 = vpack.c.b16 %v6759, %v6747
    %v7084 = vpack.c.b16 %v6760, %v6748
    %v7085 = vpack.c.b16 %v6761, %v6749
    %v7086 = vpack.c.b16 %v6762, %v6750
    %v7087 = vpack.c.b16 %v6763, %v6751
    %v7088 = vpack.c.b16 %v6764, %v6752
    %v7089 = vpack.c.b16 %v6765, %v6753
    %v7090 = vpack.c.b16 %v6778, %v6766
    %v7091 = vpack.c.b16 %v6779, %v6767
    %v7092 = vpack.c.b16 %v6780, %v6768
    %v7093 = vpack.c.b16 %v6781, %v6769
    %v7094 = vpack.c.b16 %v6782, %v6770
    %v7095 = vpack.c.b16 %v6783, %v6771
    %v7096 = vpack.c.b16 %v6784, %v6772
    %v7097 = vpack.c.b16 %v6785, %v6773
    %v7098 = vpack.c.b16 %v6786, %v6774
    %v7099 = vpack.c.b16 %v6787, %v6775
    %v7100 = vpack.c.b16 %v6788, %v6776
    %v7101 = vpack.c.b16 %v6789, %v6777
    %v7102 = vpack.c.b16 %v6802, %v6790
    %v7103 = vpack.c.b16 %v6803, %v6791
    %v7104 = vpack.c.b16 %v6804, %v6792
    %v7105 = vpack.c.b16 %v6805, %v6793
    %v7106 = vpack.c.b16 %v6806, %v6794
    %v7107 = vpack.c.b16 %v6807, %v6795
    %v7108 = vpack.c.b16 %v6808, %v6796
    %v7109 = vpack.c.b16 %v6809, %v6797
    %v7110 = vpack.c.b16 %v6810, %v6798
    %v7111 = vpack.c.b16 %v6811, %v6799
    %v7112 = vpack.c.b16 %v6812, %v6800
    %v7113 = vpack.c.b16 %v6813, %v6801
    %v7114 = vpack.c.b16 %v6826, %v6814
    %v7115 = vpack.c.b16 %v6827, %v6815
    %v7116 = vpack.c.b16 %v6828, %v6816
    %v7117 = vpack.c.b16 %v6829, %v6817
    %v7118 = vpack.c.b16 %v6830, %v6818
    %v7119 = vpack.c.b16 %v6831, %v6819
    %v7120 = vpack.c.b16 %v6832, %v6820
    %v7121 = vpack.c.b16 %v6833, %v6821
    %v7122 = vpack.c.b16 %v6834, %v6822
    %v7123 = vpack.c.b16 %v6835, %v6823
    %v7124 = vpack.c.b16 %v6836, %v6824
    %v7125 = vpack.c.b16 %v6837, %v6825
    %7414 = vmatprep.subr.bf16.mxu0 %v6923
    %7415 = vmatpush1.bf16.msra.mxu0 %v6922
    %7416 = vmatprep.subr.bf16.mxu0 %v6911
    %7417 = vmatpush1.bf16.msra.mxu0 %v6910
    %7418 = vmatprep.subr.bf16.mxu0 %v6899
    %7419 = vmatpush1.bf16.msra.mxu0 %v6898
    %7420 = vmatprep.subr.bf16.mxu0 %v6887
    %7421 = vmatpush1.bf16.msra.mxu0 %v6886
    %7422 = vmatprep.subr.bf16.mxu0 %v6875
    %7423 = vmatpush1.bf16.msra.mxu0 %v6874
    %7424 = vmatprep.subr.bf16.mxu0 %v6863
    %7425 = vmatpush1.bf16.msra.mxu0 %v6862
    %7426 = vmatprep.subr.bf16.mxu0 %v6851
    %7427 = vmatpush1.bf16.msra.mxu0 %v6850
    %7428 = vmatprep.subr.bf16.mxu0 %v6839
    %7429 = vmatpush1.bf16.msra.mxu0 %v6838
    %7430 = vmatprep.subr.bf16.mxu0 %v7019
    %7431 = vmatpush2.bf16.msra.mxu0 %v7018
    %7432 = vmatprep.subr.bf16.mxu0 %v7007
    %7433 = vmatpush2.bf16.msra.mxu0 %v7006
    %7434 = vmatprep.subr.bf16.mxu0 %v6995
    %7435 = vmatpush2.bf16.msra.mxu0 %v6994
    %7436 = vmatprep.subr.bf16.mxu0 %v6983
    %7437 = vmatpush2.bf16.msra.mxu0 %v6982
    %7438 = vmatprep.subr.bf16.mxu0 %v6971
    %7439 = vmatpush2.bf16.msra.mxu0 %v6970
    %7440 = vmatprep.subr.bf16.mxu0 %v6959
    %7441 = vmatpush2.bf16.msra.mxu0 %v6958
    %7442 = vmatprep.subr.bf16.mxu0 %v6947
    %7443 = vmatpush2.bf16.msra.mxu0 %v6946
    %7444 = vmatprep.subr.bf16.mxu0 %v6935
    %7445 = vmatpush2.bf16.msra.mxu0 %v6934
    %7446 = vmatprep.mubr.bf16.mxu0 %v5620
    %7447 = vmatmul.mubr.bf16.gmra.mxu0 %v5619
    %v7448 = vpop.f32.mrf.mxu0
    %v7449 = vadd.f32 %v5917, %v7448
    %v7450 = vpop.f32.mrf.mxu0
    %v7451 = vadd.f32 %v5921, %v7450
    %v7452 = vpop.f32.mrf.mxu0
    %v7453 = vadd.f32 %v5917, %v7452
    %v7454 = vpop.f32.mrf.mxu0
    %v7455 = vadd.f32 %v5921, %v7454
    %7456 = vdwg.mxu0
    %7457 = vmatprep.subr.bf16.mxu0 %v7115
    %7458 = vmatpush1.bf16.msra.mxu0 %v7114
    %7459 = vmatprep.subr.bf16.mxu0 %v7103
    %7460 = vmatpush1.bf16.msra.mxu0 %v7102
    %7461 = vmatprep.subr.bf16.mxu0 %v7091
    %7462 = vmatpush1.bf16.msra.mxu0 %v7090
    %7463 = vmatprep.subr.bf16.mxu0 %v7079
    %7464 = vmatpush1.bf16.msra.mxu0 %v7078
    %7465 = vmatprep.subr.bf16.mxu0 %v7067
    %7466 = vmatpush1.bf16.msra.mxu0 %v7066
    %7467 = vmatprep.subr.bf16.mxu0 %v7055
    %7468 = vmatpush1.bf16.msra.mxu0 %v7054
    %7469 = vmatprep.subr.bf16.mxu0 %v7043
    %7470 = vmatpush1.bf16.msra.mxu0 %v7042
    %7471 = vmatprep.subr.bf16.mxu0 %v7031
    %7472 = vmatpush1.bf16.msra.mxu0 %v7030
    %7473 = vmatprep.subr.bf16.mxu0 0
    %7474 = vmatpush2.bf16.msra.mxu0 0
    %7475 = vmatprep.subr.bf16.mxu0 0
    %7476 = vmatpush2.bf16.msra.mxu0 0
    %7477 = vmatprep.subr.bf16.mxu0 0
    %7478 = vmatpush2.bf16.msra.mxu0 0
    %7479 = vmatprep.subr.bf16.mxu0 0
    %7480 = vmatpush2.bf16.msra.mxu0 0
    %7481 = vmatprep.subr.bf16.mxu0 0
    %7482 = vmatpush2.bf16.msra.mxu0 0
    %7483 = vmatprep.subr.bf16.mxu0 0
    %7484 = vmatpush2.bf16.msra.mxu0 0
    %7485 = vmatprep.subr.bf16.mxu0 0
    %7486 = vmatpush2.bf16.msra.mxu0 0
    %7487 = vmatprep.subr.bf16.mxu0 0
    %7488 = vmatpush2.bf16.msra.mxu0 0
    %7489 = vmatprep.mubr.bf16.mxu0 0
    %7490 = vmatmul.mubr.bf16.gmra.mxu0 %v5621
    %v7491 = vpop.f32.mrf.mxu0
    %v7492 = vadd.f32 %v7449, %v7491
    %v7493 = vpop.f32.mrf.mxu0
    %v7494 = vadd.f32 %v7451, %v7493
    %v7495 = vpop.f32.mrf.mxu0
    %v7496 = vadd.f32 %v7453, %v7495
    %v7497 = vpop.f32.mrf.mxu0
    %v7498 = vadd.f32 %v7455, %v7497
    %7499 = vdwg.mxu0
    %7500 = vmatprep.subr.bf16.mxu0 %v6925
    %7501 = vmatpush1.bf16.msra.mxu0 %v6924
    %7502 = vmatprep.subr.bf16.mxu0 %v6913
    %7503 = vmatpush1.bf16.msra.mxu0 %v6912
    %7504 = vmatprep.subr.bf16.mxu0 %v6901
    %7505 = vmatpush1.bf16.msra.mxu0 %v6900
    %7506 = vmatprep.subr.bf16.mxu0 %v6889
    %7507 = vmatpush1.bf16.msra.mxu0 %v6888
    %7508 = vmatprep.subr.bf16.mxu0 %v6877
    %7509 = vmatpush1.bf16.msra.mxu0 %v6876
    %7510 = vmatprep.subr.bf16.mxu0 %v6865
    %7511 = vmatpush1.bf16.msra.mxu0 %v6864
    %7512 = vmatprep.subr.bf16.mxu0 %v6853
    %7513 = vmatpush1.bf16.msra.mxu0 %v6852
    %7514 = vmatprep.subr.bf16.mxu0 %v6841
    %7515 = vmatpush1.bf16.msra.mxu0 %v6840
    %7516 = vmatprep.subr.bf16.mxu0 %v7021
    %7517 = vmatpush2.bf16.msra.mxu0 %v7020
    %7518 = vmatprep.subr.bf16.mxu0 %v7009
    %7519 = vmatpush2.bf16.msra.mxu0 %v7008
    %7520 = vmatprep.subr.bf16.mxu0 %v6997
    %7521 = vmatpush2.bf16.msra.mxu0 %v6996
    %7522 = vmatprep.subr.bf16.mxu0 %v6985
    %7523 = vmatpush2.bf16.msra.mxu0 %v6984
    %7524 = vmatprep.subr.bf16.mxu0 %v6973
    %7525 = vmatpush2.bf16.msra.mxu0 %v6972
    %7526 = vmatprep.subr.bf16.mxu0 %v6961
    %7527 = vmatpush2.bf16.msra.mxu0 %v6960
    %7528 = vmatprep.subr.bf16.mxu0 %v6949
    %7529 = vmatpush2.bf16.msra.mxu0 %v6948
    %7530 = vmatprep.subr.bf16.mxu0 %v6937
    %7531 = vmatpush2.bf16.msra.mxu0 %v6936
    %7532 = vmatprep.mubr.bf16.mxu0 %v5620
    %7533 = vmatmul.mubr.bf16.gmra.mxu0 %v5619
    %v7534 = vpop.f32.mrf.mxu0
    %v7535 = vadd.f32 %v5925, %v7534
    %v7536 = vpop.f32.mrf.mxu0
    %v7537 = vadd.f32 %v5929, %v7536
    %v7538 = vpop.f32.mrf.mxu0
    %v7539 = vadd.f32 %v5925, %v7538
    %v7540 = vpop.f32.mrf.mxu0
    %v7541 = vadd.f32 %v5929, %v7540
    %7542 = vdwg.mxu0
    %7543 = vmatprep.subr.bf16.mxu0 %v7117
    %7544 = vmatpush1.bf16.msra.mxu0 %v7116
    %7545 = vmatprep.subr.bf16.mxu0 %v7105
    %7546 = vmatpush1.bf16.msra.mxu0 %v7104
    %7547 = vmatprep.subr.bf16.mxu0 %v7093
    %7548 = vmatpush1.bf16.msra.mxu0 %v7092
    %7549 = vmatprep.subr.bf16.mxu0 %v7081
    %7550 = vmatpush1.bf16.msra.mxu0 %v7080
    %7551 = vmatprep.subr.bf16.mxu0 %v7069
    %7552 = vmatpush1.bf16.msra.mxu0 %v7068
    %7553 = vmatprep.subr.bf16.mxu0 %v7057
    %7554 = vmatpush1.bf16.msra.mxu0 %v7056
    %7555 = vmatprep.subr.bf16.mxu0 %v7045
    %7556 = vmatpush1.bf16.msra.mxu0 %v7044
    %7557 = vmatprep.subr.bf16.mxu0 %v7033
    %7558 = vmatpush1.bf16.msra.mxu0 %v7032
    %7559 = vmatprep.subr.bf16.mxu0 0
    %7560 = vmatpush2.bf16.msra.mxu0 0
    %7561 = vmatprep.subr.bf16.mxu0 0
    %7562 = vmatpush2.bf16.msra.mxu0 0
    %7563 = vmatprep.subr.bf16.mxu0 0
    %7564 = vmatpush2.bf16.msra.mxu0 0
    %7565 = vmatprep.subr.bf16.mxu0 0
    %7566 = vmatpush2.bf16.msra.mxu0 0
    %7567 = vmatprep.subr.bf16.mxu0 0
    %7568 = vmatpush2.bf16.msra.mxu0 0
    %7569 = vmatprep.subr.bf16.mxu0 0
    %7570 = vmatpush2.bf16.msra.mxu0 0
    %7571 = vmatprep.subr.bf16.mxu0 0
    %7572 = vmatpush2.bf16.msra.mxu0 0
    %7573 = vmatprep.subr.bf16.mxu0 0
    %7574 = vmatpush2.bf16.msra.mxu0 0
    %7575 = vmatprep.mubr.bf16.mxu0 0
    %7576 = vmatmul.mubr.bf16.gmra.mxu0 %v5621
    %v7577 = vpop.f32.mrf.mxu0
    %v7578 = vadd.f32 %v7535, %v7577
    %v7579 = vpop.f32.mrf.mxu0
    %v7580 = vadd.f32 %v7537, %v7579
    %v7581 = vpop.f32.mrf.mxu0
    %v7582 = vadd.f32 %v7539, %v7581
    %v7583 = vpop.f32.mrf.mxu0
    %v7584 = vadd.f32 %v7541, %v7583
    %7585 = vdwg.mxu0
    %7586 = vmatprep.subr.bf16.mxu0 %v6927
    %7587 = vmatpush1.bf16.msra.mxu0 %v6926
    %7588 = vmatprep.subr.bf16.mxu0 %v6915
    %7589 = vmatpush1.bf16.msra.mxu0 %v6914
    %7590 = vmatprep.subr.bf16.mxu0 %v6903
    %7591 = vmatpush1.bf16.msra.mxu0 %v6902
    %7592 = vmatprep.subr.bf16.mxu0 %v6891
    %7593 = vmatpush1.bf16.msra.mxu0 %v6890
    %7594 = vmatprep.subr.bf16.mxu0 %v6879
    %7595 = vmatpush1.bf16.msra.mxu0 %v6878
    %7596 = vmatprep.subr.bf16.mxu0 %v6867
    %7597 = vmatpush1.bf16.msra.mxu0 %v6866
    %7598 = vmatprep.subr.bf16.mxu0 %v6855
    %7599 = vmatpush1.bf16.msra.mxu0 %v6854
    %7600 = vmatprep.subr.bf16.mxu0 %v6843
    %7601 = vmatpush1.bf16.msra.mxu0 %v6842
    %7602 = vmatprep.subr.bf16.mxu0 %v7023
    %7603 = vmatpush2.bf16.msra.mxu0 %v7022
    %7604 = vmatprep.subr.bf16.mxu0 %v7011
    %7605 = vmatpush2.bf16.msra.mxu0 %v7010
    %7606 = vmatprep.subr.bf16.mxu0 %v6999
    %7607 = vmatpush2.bf16.msra.mxu0 %v6998
    %7608 = vmatprep.subr.bf16.mxu0 %v6987
    %7609 = vmatpush2.bf16.msra.mxu0 %v6986
    %7610 = vmatprep.subr.bf16.mxu0 %v6975
    %7611 = vmatpush2.bf16.msra.mxu0 %v6974
    %7612 = vmatprep.subr.bf16.mxu0 %v6963
    %7613 = vmatpush2.bf16.msra.mxu0 %v6962
    %7614 = vmatprep.subr.bf16.mxu0 %v6951
    %7615 = vmatpush2.bf16.msra.mxu0 %v6950
    %7616 = vmatprep.subr.bf16.mxu0 %v6939
    %7617 = vmatpush2.bf16.msra.mxu0 %v6938
    %7618 = vmatprep.mubr.bf16.mxu0 %v5620
    %7619 = vmatmul.mubr.bf16.gmra.mxu0 %v5619
    %v7620 = vpop.f32.mrf.mxu0
    %v7621 = vadd.f32 %v5933, %v7620
    %v7622 = vpop.f32.mrf.mxu0
    %v7623 = vadd.f32 %v5937, %v7622
    %v7624 = vpop.f32.mrf.mxu0
    %v7625 = vadd.f32 %v5933, %v7624
    %v7626 = vpop.f32.mrf.mxu0
    %v7627 = vadd.f32 %v5937, %v7626
    %7628 = vdwg.mxu0
    %7629 = vmatprep.subr.bf16.mxu0 %v7119
    %7630 = vmatpush1.bf16.msra.mxu0 %v7118
    %7631 = vmatprep.subr.bf16.mxu0 %v7107
    %7632 = vmatpush1.bf16.msra.mxu0 %v7106
    %7633 = vmatprep.subr.bf16.mxu0 %v7095
    %7634 = vmatpush1.bf16.msra.mxu0 %v7094
    %7635 = vmatprep.subr.bf16.mxu0 %v7083
    %7636 = vmatpush1.bf16.msra.mxu0 %v7082
    %7637 = vmatprep.subr.bf16.mxu0 %v7071
    %7638 = vmatpush1.bf16.msra.mxu0 %v7070
    %7639 = vmatprep.subr.bf16.mxu0 %v7059
    %7640 = vmatpush1.bf16.msra.mxu0 %v7058
    %7641 = vmatprep.subr.bf16.mxu0 %v7047
    %7642 = vmatpush1.bf16.msra.mxu0 %v7046
    %7643 = vmatprep.subr.bf16.mxu0 %v7035
    %7644 = vmatpush1.bf16.msra.mxu0 %v7034
    %7645 = vmatprep.subr.bf16.mxu0 0
    %7646 = vmatpush2.bf16.msra.mxu0 0
    %7647 = vmatprep.subr.bf16.mxu0 0
    %7648 = vmatpush2.bf16.msra.mxu0 0
    %7649 = vmatprep.subr.bf16.mxu0 0
    %7650 = vmatpush2.bf16.msra.mxu0 0
    %7651 = vmatprep.subr.bf16.mxu0 0
    %7652 = vmatpush2.bf16.msra.mxu0 0
    %7653 = vmatprep.subr.bf16.mxu0 0
    %7654 = vmatpush2.bf16.msra.mxu0 0
    %7655 = vmatprep.subr.bf16.mxu0 0
    %7656 = vmatpush2.bf16.msra.mxu0 0
    %7657 = vmatprep.subr.bf16.mxu0 0
    %7658 = vmatpush2.bf16.msra.mxu0 0
    %7659 = vmatprep.subr.bf16.mxu0 0
    %7660 = vmatpush2.bf16.msra.mxu0 0
    %7661 = vmatprep.mubr.bf16.mxu0 0
    %7662 = vmatmul.mubr.bf16.gmra.mxu0 %v5621
    %v7663 = vpop.f32.mrf.mxu0
    %v7664 = vadd.f32 %v7621, %v7663
    %v7665 = vpop.f32.mrf.mxu0
    %v7666 = vadd.f32 %v7623, %v7665
    %v7667 = vpop.f32.mrf.mxu0
    %v7668 = vadd.f32 %v7625, %v7667
    %v7669 = vpop.f32.mrf.mxu0
    %v7670 = vadd.f32 %v7627, %v7669
    %7671 = vdwg.mxu0
    %7672 = vmatprep.subr.bf16.mxu0 %v6929
    %7673 = vmatpush1.bf16.msra.mxu0 %v6928
    %7674 = vmatprep.subr.bf16.mxu0 %v6917
    %7675 = vmatpush1.bf16.msra.mxu0 %v6916
    %7676 = vmatprep.subr.bf16.mxu0 %v6905
    %7677 = vmatpush1.bf16.msra.mxu0 %v6904
    %7678 = vmatprep.subr.bf16.mxu0 %v6893
    %7679 = vmatpush1.bf16.msra.mxu0 %v6892
    %7680 = vmatprep.subr.bf16.mxu0 %v6881
    %7681 = vmatpush1.bf16.msra.mxu0 %v6880
    %7682 = vmatprep.subr.bf16.mxu0 %v6869
    %7683 = vmatpush1.bf16.msra.mxu0 %v6868
    %7684 = vmatprep.subr.bf16.mxu0 %v6857
    %7685 = vmatpush1.bf16.msra.mxu0 %v6856
    %7686 = vmatprep.subr.bf16.mxu0 %v6845
    %7687 = vmatpush1.bf16.msra.mxu0 %v6844
    %7688 = vmatprep.subr.bf16.mxu0 %v7025
    %7689 = vmatpush2.bf16.msra.mxu0 %v7024
    %7690 = vmatprep.subr.bf16.mxu0 %v7013
    %7691 = vmatpush2.bf16.msra.mxu0 %v7012
    %7692 = vmatprep.subr.bf16.mxu0 %v7001
    %7693 = vmatpush2.bf16.msra.mxu0 %v7000
    %7694 = vmatprep.subr.bf16.mxu0 %v6989
    %7695 = vmatpush2.bf16.msra.mxu0 %v6988
    %7696 = vmatprep.subr.bf16.mxu0 %v6977
    %7697 = vmatpush2.bf16.msra.mxu0 %v6976
    %7698 = vmatprep.subr.bf16.mxu0 %v6965
    %7699 = vmatpush2.bf16.msra.mxu0 %v6964
    %7700 = vmatprep.subr.bf16.mxu0 %v6953
    %7701 = vmatpush2.bf16.msra.mxu0 %v6952
    %7702 = vmatprep.subr.bf16.mxu0 %v6941
    %7703 = vmatpush2.bf16.msra.mxu0 %v6940
    %7704 = vmatprep.mubr.bf16.mxu0 %v5620
    %7705 = vmatmul.mubr.bf16.gmra.mxu0 %v5619
    %v7706 = vpop.f32.mrf.mxu0
    %v7707 = vadd.f32 %v5941, %v7706
    %v7708 = vpop.f32.mrf.mxu0
    %v7709 = vadd.f32 %v5945, %v7708
    %v7710 = vpop.f32.mrf.mxu0
    %v7711 = vadd.f32 %v5941, %v7710
    %v7712 = vpop.f32.mrf.mxu0
    %v7713 = vadd.f32 %v5945, %v7712
    %7714 = vdwg.mxu0
    %7715 = vmatprep.subr.bf16.mxu0 %v7121
    %7716 = vmatpush1.bf16.msra.mxu0 %v7120
    %7717 = vmatprep.subr.bf16.mxu0 %v7109
    %7718 = vmatpush1.bf16.msra.mxu0 %v7108
    %7719 = vmatprep.subr.bf16.mxu0 %v7097
    %7720 = vmatpush1.bf16.msra.mxu0 %v7096
    %7721 = vmatprep.subr.bf16.mxu0 %v7085
    %7722 = vmatpush1.bf16.msra.mxu0 %v7084
    %7723 = vmatprep.subr.bf16.mxu0 %v7073
    %7724 = vmatpush1.bf16.msra.mxu0 %v7072
    %7725 = vmatprep.subr.bf16.mxu0 %v7061
    %7726 = vmatpush1.bf16.msra.mxu0 %v7060
    %7727 = vmatprep.subr.bf16.mxu0 %v7049
    %7728 = vmatpush1.bf16.msra.mxu0 %v7048
    %7729 = vmatprep.subr.bf16.mxu0 %v7037
    %7730 = vmatpush1.bf16.msra.mxu0 %v7036
    %7731 = vmatprep.subr.bf16.mxu0 0
    %7732 = vmatpush2.bf16.msra.mxu0 0
    %7733 = vmatprep.subr.bf16.mxu0 0
    %7734 = vmatpush2.bf16.msra.mxu0 0
    %7735 = vmatprep.subr.bf16.mxu0 0
    %7736 = vmatpush2.bf16.msra.mxu0 0
    %7737 = vmatprep.subr.bf16.mxu0 0
    %7738 = vmatpush2.bf16.msra.mxu0 0
    %7739 = vmatprep.subr.bf16.mxu0 0
    %7740 = vmatpush2.bf16.msra.mxu0 0
    %7741 = vmatprep.subr.bf16.mxu0 0
    %7742 = vmatpush2.bf16.msra.mxu0 0
    %7743 = vmatprep.subr.bf16.mxu0 0
    %7744 = vmatpush2.bf16.msra.mxu0 0
    %7745 = vmatprep.subr.bf16.mxu0 0
    %7746 = vmatpush2.bf16.msra.mxu0 0
    %7747 = vmatprep.mubr.bf16.mxu0 0
    %7748 = vmatmul.mubr.bf16.gmra.mxu0 %v5621
    %v7749 = vpop.f32.mrf.mxu0
    %v7750 = vadd.f32 %v7707, %v7749
    %v7751 = vpop.f32.mrf.mxu0
    %v7752 = vadd.f32 %v7709, %v7751
    %v7753 = vpop.f32.mrf.mxu0
    %v7754 = vadd.f32 %v7711, %v7753
    %v7755 = vpop.f32.mrf.mxu0
    %v7756 = vadd.f32 %v7713, %v7755
    %7757 = vdwg.mxu0
    %7758 = vmatprep.subr.bf16.mxu0 %v6931
    %7759 = vmatpush1.bf16.msra.mxu0 %v6930
    %7760 = vmatprep.subr.bf16.mxu0 %v6919
    %7761 = vmatpush1.bf16.msra.mxu0 %v6918
    %7762 = vmatprep.subr.bf16.mxu0 %v6907
    %7763 = vmatpush1.bf16.msra.mxu0 %v6906
    %7764 = vmatprep.subr.bf16.mxu0 %v6895
    %7765 = vmatpush1.bf16.msra.mxu0 %v6894
    %7766 = vmatprep.subr.bf16.mxu0 %v6883
    %7767 = vmatpush1.bf16.msra.mxu0 %v6882
    %7768 = vmatprep.subr.bf16.mxu0 %v6871
    %7769 = vmatpush1.bf16.msra.mxu0 %v6870
    %7770 = vmatprep.subr.bf16.mxu0 %v6859
    %7771 = vmatpush1.bf16.msra.mxu0 %v6858
    %7772 = vmatprep.subr.bf16.mxu0 %v6847
    %7773 = vmatpush1.bf16.msra.mxu0 %v6846
    %7774 = vmatprep.subr.bf16.mxu0 %v7027
    %7775 = vmatpush2.bf16.msra.mxu0 %v7026
    %7776 = vmatprep.subr.bf16.mxu0 %v7015
    %7777 = vmatpush2.bf16.msra.mxu0 %v7014
    %7778 = vmatprep.subr.bf16.mxu0 %v7003
    %7779 = vmatpush2.bf16.msra.mxu0 %v7002
    %7780 = vmatprep.subr.bf16.mxu0 %v6991
    %7781 = vmatpush2.bf16.msra.mxu0 %v6990
    %7782 = vmatprep.subr.bf16.mxu0 %v6979
    %7783 = vmatpush2.bf16.msra.mxu0 %v6978
    %7784 = vmatprep.subr.bf16.mxu0 %v6967
    %7785 = vmatpush2.bf16.msra.mxu0 %v6966
    %7786 = vmatprep.subr.bf16.mxu0 %v6955
    %7787 = vmatpush2.bf16.msra.mxu0 %v6954
    %7788 = vmatprep.subr.bf16.mxu0 %v6943
    %7789 = vmatpush2.bf16.msra.mxu0 %v6942
    %7790 = vmatprep.mubr.bf16.mxu0 %v5620
    %7791 = vmatmul.mubr.bf16.gmra.mxu0 %v5619
    %v7792 = vpop.f32.mrf.mxu0
    %v7793 = vadd.f32 %v5949, %v7792
    %v7794 = vpop.f32.mrf.mxu0
    %v7795 = vadd.f32 %v5953, %v7794
    %v7796 = vpop.f32.mrf.mxu0
    %v7797 = vadd.f32 %v5949, %v7796
    %v7798 = vpop.f32.mrf.mxu0
    %v7799 = vadd.f32 %v5953, %v7798
    %7800 = vdwg.mxu0
    %7801 = vmatprep.subr.bf16.mxu0 %v7123
    %7802 = vmatpush1.bf16.msra.mxu0 %v7122
    %7803 = vmatprep.subr.bf16.mxu0 %v7111
    %7804 = vmatpush1.bf16.msra.mxu0 %v7110
    %7805 = vmatprep.subr.bf16.mxu0 %v7099
    %7806 = vmatpush1.bf16.msra.mxu0 %v7098
    %7807 = vmatprep.subr.bf16.mxu0 %v7087
    %7808 = vmatpush1.bf16.msra.mxu0 %v7086
    %7809 = vmatprep.subr.bf16.mxu0 %v7075
    %7810 = vmatpush1.bf16.msra.mxu0 %v7074
    %7811 = vmatprep.subr.bf16.mxu0 %v7063
    %7812 = vmatpush1.bf16.msra.mxu0 %v7062
    %7813 = vmatprep.subr.bf16.mxu0 %v7051
    %7814 = vmatpush1.bf16.msra.mxu0 %v7050
    %7815 = vmatprep.subr.bf16.mxu0 %v7039
    %7816 = vmatpush1.bf16.msra.mxu0 %v7038
    %7817 = vmatprep.subr.bf16.mxu0 0
    %7818 = vmatpush2.bf16.msra.mxu0 0
    %7819 = vmatprep.subr.bf16.mxu0 0
    %7820 = vmatpush2.bf16.msra.mxu0 0
    %7821 = vmatprep.subr.bf16.mxu0 0
    %7822 = vmatpush2.bf16.msra.mxu0 0
    %7823 = vmatprep.subr.bf16.mxu0 0
    %7824 = vmatpush2.bf16.msra.mxu0 0
    %7825 = vmatprep.subr.bf16.mxu0 0
    %7826 = vmatpush2.bf16.msra.mxu0 0
    %7827 = vmatprep.subr.bf16.mxu0 0
    %7828 = vmatpush2.bf16.msra.mxu0 0
    %7829 = vmatprep.subr.bf16.mxu0 0
    %7830 = vmatpush2.bf16.msra.mxu0 0
    %7831 = vmatprep.subr.bf16.mxu0 0
    %7832 = vmatpush2.bf16.msra.mxu0 0
    %7833 = vmatprep.mubr.bf16.mxu0 0
    %7834 = vmatmul.mubr.bf16.gmra.mxu0 %v5621
    %v7835 = vpop.f32.mrf.mxu0
    %v7836 = vadd.f32 %v7793, %v7835
    %v7837 = vpop.f32.mrf.mxu0
    %v7838 = vadd.f32 %v7795, %v7837
    %v7839 = vpop.f32.mrf.mxu0
    %v7840 = vadd.f32 %v7797, %v7839
    %v7841 = vpop.f32.mrf.mxu0
    %v7842 = vadd.f32 %v7799, %v7841
    %7843 = vdwg.mxu0
    %7844 = vmatprep.subr.bf16.mxu0 %v6933
    %7845 = vmatpush1.bf16.msra.mxu0 %v6932
    %7846 = vmatprep.subr.bf16.mxu0 %v6921
    %7847 = vmatpush1.bf16.msra.mxu0 %v6920
    %7848 = vmatprep.subr.bf16.mxu0 %v6909
    %7849 = vmatpush1.bf16.msra.mxu0 %v6908
    %7850 = vmatprep.subr.bf16.mxu0 %v6897
    %7851 = vmatpush1.bf16.msra.mxu0 %v6896
    %7852 = vmatprep.subr.bf16.mxu0 %v6885
    %7853 = vmatpush1.bf16.msra.mxu0 %v6884
    %7854 = vmatprep.subr.bf16.mxu0 %v6873
    %7855 = vmatpush1.bf16.msra.mxu0 %v6872
    %7856 = vmatprep.subr.bf16.mxu0 %v6861
    %7857 = vmatpush1.bf16.msra.mxu0 %v6860
    %7858 = vmatprep.subr.bf16.mxu0 %v6849
    %7859 = vmatpush1.bf16.msra.mxu0 %v6848
    %7860 = vmatprep.subr.bf16.mxu0 %v7029
    %7861 = vmatpush2.bf16.msra.mxu0 %v7028
    %7862 = vmatprep.subr.bf16.mxu0 %v7017
    %7863 = vmatpush2.bf16.msra.mxu0 %v7016
    %7864 = vmatprep.subr.bf16.mxu0 %v7005
    %7865 = vmatpush2.bf16.msra.mxu0 %v7004
    %7866 = vmatprep.subr.bf16.mxu0 %v6993
    %7867 = vmatpush2.bf16.msra.mxu0 %v6992
    %7868 = vmatprep.subr.bf16.mxu0 %v6981
    %7869 = vmatpush2.bf16.msra.mxu0 %v6980
    %7870 = vmatprep.subr.bf16.mxu0 %v6969
    %7871 = vmatpush2.bf16.msra.mxu0 %v6968
    %7872 = vmatprep.subr.bf16.mxu0 %v6957
    %7873 = vmatpush2.bf16.msra.mxu0 %v6956
    %7874 = vmatprep.subr.bf16.mxu0 %v6945
    %7875 = vmatpush2.bf16.msra.mxu0 %v6944
    %7876 = vmatprep.mubr.bf16.mxu0 %v5620
    %7877 = vmatmul.mubr.bf16.gmra.mxu0 %v5619
    %v7878 = vpop.f32.mrf.mxu0
    %v7879 = vadd.f32 %v5957, %v7878
    %v7880 = vpop.f32.mrf.mxu0
    %v7881 = vadd.f32 %v5961, %v7880
    %v7882 = vpop.f32.mrf.mxu0
    %v7883 = vadd.f32 %v5957, %v7882
    %v7884 = vpop.f32.mrf.mxu0
    %v7885 = vadd.f32 %v5961, %v7884
    %7886 = vdwg.mxu0
    %7887 = vmatprep.subr.bf16.mxu0 %v7125
    %7888 = vmatpush1.bf16.msra.mxu0 %v7124
    %7889 = vmatprep.subr.bf16.mxu0 %v7113
    %7890 = vmatpush1.bf16.msra.mxu0 %v7112
    %7891 = vmatprep.subr.bf16.mxu0 %v7101
    %7892 = vmatpush1.bf16.msra.mxu0 %v7100
    %7893 = vmatprep.subr.bf16.mxu0 %v7089
    %7894 = vmatpush1.bf16.msra.mxu0 %v7088
    %7895 = vmatprep.subr.bf16.mxu0 %v7077
    %7896 = vmatpush1.bf16.msra.mxu0 %v7076
    %7897 = vmatprep.subr.bf16.mxu0 %v7065
    %7898 = vmatpush1.bf16.msra.mxu0 %v7064
    %7899 = vmatprep.subr.bf16.mxu0 %v7053
    %7900 = vmatpush1.bf16.msra.mxu0 %v7052
    %7901 = vmatprep.subr.bf16.mxu0 %v7041
    %7902 = vmatpush1.bf16.msra.mxu0 %v7040
    %7903 = vmatprep.subr.bf16.mxu0 0
    %7904 = vmatpush2.bf16.msra.mxu0 0
    %7905 = vmatprep.subr.bf16.mxu0 0
    %7906 = vmatpush2.bf16.msra.mxu0 0
    %7907 = vmatprep.subr.bf16.mxu0 0
    %7908 = vmatpush2.bf16.msra.mxu0 0
    %7909 = vmatprep.subr.bf16.mxu0 0
    %7910 = vmatpush2.bf16.msra.mxu0 0
    %7911 = vmatprep.subr.bf16.mxu0 0
    %7912 = vmatpush2.bf16.msra.mxu0 0
    %7913 = vmatprep.subr.bf16.mxu0 0
    %7914 = vmatpush2.bf16.msra.mxu0 0
    %7915 = vmatprep.subr.bf16.mxu0 0
    %7916 = vmatpush2.bf16.msra.mxu0 0
    %7917 = vmatprep.subr.bf16.mxu0 0
    %7918 = vmatpush2.bf16.msra.mxu0 0
    %7919 = vmatprep.mubr.bf16.mxu0 0
    %7920 = vmatmul.mubr.bf16.gmra.mxu0 %v5621
    %v7921 = vpop.f32.mrf.mxu0
    %v7922 = vadd.f32 %v7879, %v7921
    %v7923 = vpop.f32.mrf.mxu0
    %v7924 = vadd.f32 %v7881, %v7923
    %v7925 = vpop.f32.mrf.mxu0
    %v7926 = vadd.f32 %v7883, %v7925
    %v7927 = vpop.f32.mrf.mxu0
    %v7928 = vadd.f32 %v7885, %v7927
    %7929 = vdwg.mxu0
    %v7930 = vmax.f32 %v7492, 0.0
    %v7931 = vmax.f32 %v7494, 0.0
    %v7932 = vmax.f32 %v7578, 0.0
    %v7933 = vmax.f32 %v7580, 0.0
    %v7934 = vmax.f32 %v7664, 0.0
    %v7935 = vmax.f32 %v7666, 0.0
    %v7936 = vmax.f32 %v7750, 0.0
    %v7937 = vmax.f32 %v7752, 0.0
    %v7938 = vmax.f32 %v7836, 0.0
    %v7939 = vmax.f32 %v7838, 0.0
    %v7940 = vmax.f32 %v7922, 0.0
    %v7941 = vmax.f32 %v7924, 0.0
    %v7942 = vmax.f32 %v7496, 0.0
    %v7943 = vmax.f32 %v7498, 0.0
    %v7944 = vmax.f32 %v7582, 0.0
    %v7945 = vmax.f32 %v7584, 0.0
    %v7946 = vmax.f32 %v7668, 0.0
    %v7947 = vmax.f32 %v7670, 0.0
    %v7948 = vmax.f32 %v7754, 0.0
    %v7949 = vmax.f32 %v7756, 0.0
    %v7950 = vmax.f32 %v7840, 0.0
    %v7951 = vmax.f32 %v7842, 0.0
    %v7952 = vmax.f32 %v7926, 0.0
    %v7953 = vmax.f32 %v7928, 0.0
    %v7954 = vpack.c.bf16 %v7942, %v7930
    %v7955 = vpack.c.bf16 %v7943, %v7931
    %v7956 = vpack.c.bf16 %v7944, %v7932
    %v7957 = vpack.c.bf16 %v7945, %v7933
    %v7958 = vpack.c.bf16 %v7946, %v7934
    %v7959 = vpack.c.bf16 %v7947, %v7935
    %v7960 = vpack.c.bf16 %v7948, %v7936
    %v7961 = vpack.c.bf16 %v7949, %v7937
    %v7962 = vpack.c.bf16 %v7950, %v7938
    %v7963 = vpack.c.bf16 %v7951, %v7939
    %v7964 = vpack.c.bf16 %v7952, %v7940
    %v7965 = vpack.c.bf16 %v7953, %v7941
    %v7966 = vld [vmem:[#allocation19] sm:$0xff]
    %v7967 = vld [vmem:[#allocation19 + $0x8] sm:$0xf]
    %v7968 = vld [vmem:[#allocation19 + $0xc] sm:$0xff]
    %v7969 = vld [vmem:[#allocation19 + $0x14] sm:$0xf]
    %v7970 = vld [vmem:[#allocation19 + $0x18] sm:$0xff]
    %v7971 = vld [vmem:[#allocation19 + $0x20] sm:$0xf]
    %v7972 = vld [vmem:[#allocation19 + $0x24] sm:$0xff]
    %v7973 = vld [vmem:[#allocation19 + $0x2c] sm:$0xf]
    %v7974 = vld [vmem:[#allocation19 + $0x30] sm:$0xff]
    %v7975 = vld [vmem:[#allocation19 + $0x38] sm:$0xf]
    %v7976 = vld [vmem:[#allocation19 + $0x3c] sm:$0xff]
    %v7977 = vld [vmem:[#allocation19 + $0x44] sm:$0xf]
    %v7978 = vld [vmem:[#allocation19 + $0x48] sm:$0xff]
    %v7979 = vld [vmem:[#allocation19 + $0x50] sm:$0xf]
    %v7980 = vld [vmem:[#allocation19 + $0x54] sm:$0xff]
    %v7981 = vld [vmem:[#allocation19 + $0x5c] sm:$0xf]
    %v7982 = vld [vmem:[#allocation19 + $0x60] sm:$0xff]
    %v7983 = vld [vmem:[#allocation19 + $0x68] sm:$0xf]
    %v7984 = vld [vmem:[#allocation19 + $0x6c] sm:$0xff]
    %v7985 = vld [vmem:[#allocation19 + $0x74] sm:$0xf]
    %v7986 = vld [vmem:[#allocation19 + $0x78] sm:$0xff]
    %v7987 = vld [vmem:[#allocation19 + $0x80] sm:$0xf]
    %v7988 = vld [vmem:[#allocation19 + $0x84] sm:$0xff]
    %v7989 = vld [vmem:[#allocation19 + $0x8c] sm:$0xf]
    %v7990 = vld [vmem:[#allocation19 + $0x90] sm:$0xff]
    %v7991 = vld [vmem:[#allocation19 + $0x98] sm:$0xf]
    %v7992 = vld [vmem:[#allocation19 + $0x9c] sm:$0xff]
    %v7993 = vld [vmem:[#allocation19 + $0xa4] sm:$0xf]
    %v7994 = vld [vmem:[#allocation19 + $0xa8] sm:$0xff]
    %v7995 = vld [vmem:[#allocation19 + $0xb0] sm:$0xf]
    %v7996 = vld [vmem:[#allocation19 + $0xb4] sm:$0xff]
    %v7997 = vld [vmem:[#allocation19 + $0xbc] sm:$0xf]
    %v7998 = vld [vmem:[#allocation19 + $0xc0] sm:$0xff]
    %v7999 = vld [vmem:[#allocation19 + $0xc8] sm:$0xf]
    %v8000 = vld [vmem:[#allocation19 + $0xcc] sm:$0xff]
    %v8001 = vld [vmem:[#allocation19 + $0xd4] sm:$0xf]
    %v8002 = vld [vmem:[#allocation19 + $0xd8] sm:$0xff]
    %v8003 = vld [vmem:[#allocation19 + $0xe0] sm:$0xf]
    %v8004 = vld [vmem:[#allocation19 + $0xe4] sm:$0xff]
    %v8005 = vld [vmem:[#allocation19 + $0xec] sm:$0xf]
    %v8006 = vld [vmem:[#allocation19 + $0xf0] sm:$0xff]
    %v8007 = vld [vmem:[#allocation19 + $0xf8] sm:$0xf]
    %v8008 = vld [vmem:[#allocation19 + $0xfc] sm:$0xff]
    %v8009 = vld [vmem:[#allocation19 + $0x104] sm:$0xf]
    %v8010 = vld [vmem:[#allocation19 + $0x108] sm:$0xff]
    %v8011 = vld [vmem:[#allocation19 + $0x110] sm:$0xf]
    %v8012 = vld [vmem:[#allocation19 + $0x114] sm:$0xff]
    %v8013 = vld [vmem:[#allocation19 + $0x11c] sm:$0xf]
    %v8014 = vld [vmem:[#allocation19 + $0x120] sm:$0xff]
    %v8015 = vld [vmem:[#allocation19 + $0x128] sm:$0xf]
    %v8016 = vld [vmem:[#allocation19 + $0x12c] sm:$0xff]
    %v8017 = vld [vmem:[#allocation19 + $0x134] sm:$0xf]
    %v8018 = vld [vmem:[#allocation19 + $0x138] sm:$0xff]
    %v8019 = vld [vmem:[#allocation19 + $0x140] sm:$0xf]
    %v8020 = vld [vmem:[#allocation19 + $0x144] sm:$0xff]
    %v8021 = vld [vmem:[#allocation19 + $0x14c] sm:$0xf]
    %v8022 = vld [vmem:[#allocation19 + $0x150] sm:$0xff]
    %v8023 = vld [vmem:[#allocation19 + $0x158] sm:$0xf]
    %v8024 = vld [vmem:[#allocation19 + $0x15c] sm:$0xff]
    %v8025 = vld [vmem:[#allocation19 + $0x164] sm:$0xf]
    %v8026 = vld [vmem:[#allocation19 + $0x168] sm:$0xff]
    %v8027 = vld [vmem:[#allocation19 + $0x170] sm:$0xf]
    %v8028 = vld [vmem:[#allocation19 + $0x174] sm:$0xff]
    %v8029 = vld [vmem:[#allocation19 + $0x17c] sm:$0xf]
    %v8030 = vld [vmem:[#allocation19 + $0x180] sm:$0xff]
    %v8031 = vld [vmem:[#allocation19 + $0x188] sm:$0xf]
    %v8032 = vld [vmem:[#allocation19 + $0x18c] sm:$0xff]
    %v8033 = vld [vmem:[#allocation19 + $0x194] sm:$0xf]
    %v8034 = vld [vmem:[#allocation19 + $0x198] sm:$0xff]
    %v8035 = vld [vmem:[#allocation19 + $0x1a0] sm:$0xf]
    %v8036 = vld [vmem:[#allocation19 + $0x1a4] sm:$0xff]
    %v8037 = vld [vmem:[#allocation19 + $0x1ac] sm:$0xf]
    %v8038 = vld [vmem:[#allocation19 + $0x1b0] sm:$0xff]
    %v8039 = vld [vmem:[#allocation19 + $0x1b8] sm:$0xf]
    %v8040 = vld [vmem:[#allocation19 + $0x1bc] sm:$0xff]
    %v8041 = vld [vmem:[#allocation19 + $0x1c4] sm:$0xf]
    %v8042 = vld [vmem:[#allocation19 + $0x1c8] sm:$0xff]
    %v8043 = vld [vmem:[#allocation19 + $0x1d0] sm:$0xf]
    %v8044 = vld [vmem:[#allocation19 + $0x1d4] sm:$0xff]
    %v8045 = vld [vmem:[#allocation19 + $0x1dc] sm:$0xf]
    %v8046 = vld [vmem:[#allocation19 + $0x1e0] sm:$0xff]
    %v8047 = vld [vmem:[#allocation19 + $0x1e8] sm:$0xf]
    %v8048 = vld [vmem:[#allocation19 + $0x1ec] sm:$0xff]
    %v8049 = vld [vmem:[#allocation19 + $0x1f4] sm:$0xf]
    %v8050 = vld [vmem:[#allocation19 + $0x1f8] sm:$0xff]
    %v8051 = vld [vmem:[#allocation19 + $0x200] sm:$0xf]
    %v8052 = vld [vmem:[#allocation19 + $0x204] sm:$0xff]
    %v8053 = vld [vmem:[#allocation19 + $0x20c] sm:$0xf]
    %v8054 = vld [vmem:[#allocation19 + $0x210] sm:$0xff]
    %v8055 = vld [vmem:[#allocation19 + $0x218] sm:$0xf]
    %v8056 = vld [vmem:[#allocation19 + $0x21c] sm:$0xff]
    %v8057 = vld [vmem:[#allocation19 + $0x224] sm:$0xf]
    %v8058 = vld [vmem:[#allocation19 + $0x228] sm:$0xff]
    %v8059 = vld [vmem:[#allocation19 + $0x230] sm:$0xf]
    %v8060 = vld [vmem:[#allocation19 + $0x234] sm:$0xff]
    %v8061 = vld [vmem:[#allocation19 + $0x23c] sm:$0xf]
    %v8062 = vld [vmem:[#allocation19 + $0x240] sm:$0xff]
    %v8063 = vld [vmem:[#allocation19 + $0x248] sm:$0xf]
    %v8064 = vld [vmem:[#allocation19 + $0x24c] sm:$0xff]
    %v8065 = vld [vmem:[#allocation19 + $0x254] sm:$0xf]
    %v8066 = vld [vmem:[#allocation19 + $0x258] sm:$0xff]
    %v8067 = vld [vmem:[#allocation19 + $0x260] sm:$0xf]
    %v8068 = vld [vmem:[#allocation19 + $0x264] sm:$0xff]
    %v8069 = vld [vmem:[#allocation19 + $0x26c] sm:$0xf]
    %v8070 = vld [vmem:[#allocation19 + $0x270] sm:$0xff]
    %v8071 = vld [vmem:[#allocation19 + $0x278] sm:$0xf]
    %v8072 = vld [vmem:[#allocation19 + $0x27c] sm:$0xff]
    %v8073 = vld [vmem:[#allocation19 + $0x284] sm:$0xf]
    %v8074 = vld [vmem:[#allocation19 + $0x288] sm:$0xff]
    %v8075 = vld [vmem:[#allocation19 + $0x290] sm:$0xf]
    %v8076 = vld [vmem:[#allocation19 + $0x294] sm:$0xff]
    %v8077 = vld [vmem:[#allocation19 + $0x29c] sm:$0xf]
    %v8078 = vld [vmem:[#allocation19 + $0x2a0] sm:$0xff]
    %v8079 = vld [vmem:[#allocation19 + $0x2a8] sm:$0xf]
    %v8080 = vld [vmem:[#allocation19 + $0x2ac] sm:$0xff]
    %v8081 = vld [vmem:[#allocation19 + $0x2b4] sm:$0xf]
    %v8082 = vld [vmem:[#allocation19 + $0x2b8] sm:$0xff]
    %v8083 = vld [vmem:[#allocation19 + $0x2c0] sm:$0xf]
    %v8084 = vld [vmem:[#allocation19 + $0x2c4] sm:$0xff]
    %v8085 = vld [vmem:[#allocation19 + $0x2cc] sm:$0xf]
    %v8086 = vld [vmem:[#allocation19 + $0x2d0] sm:$0xff]
    %v8087 = vld [vmem:[#allocation19 + $0x2d8] sm:$0xf]
    %v8088 = vld [vmem:[#allocation19 + $0x2dc] sm:$0xff]
    %v8089 = vld [vmem:[#allocation19 + $0x2e4] sm:$0xf]
    %v8090 = vld [vmem:[#allocation19 + $0x2e8] sm:$0xff]
    %v8091 = vld [vmem:[#allocation19 + $0x2f0] sm:$0xf]
    %v8092 = vld [vmem:[#allocation19 + $0x2f4] sm:$0xff]
    %v8093 = vld [vmem:[#allocation19 + $0x2fc] sm:$0xf]
    %v8094 = vld [vmem:[#allocation19 + $0x300] sm:$0xff]
    %v8095 = vld [vmem:[#allocation19 + $0x308] sm:$0xf]
    %v8096 = vld [vmem:[#allocation19 + $0x30c] sm:$0xff]
    %v8097 = vld [vmem:[#allocation19 + $0x314] sm:$0xf]
    %v8098 = vld [vmem:[#allocation19 + $0x318] sm:$0xff]
    %v8099 = vld [vmem:[#allocation19 + $0x320] sm:$0xf]
    %v8100 = vld [vmem:[#allocation19 + $0x324] sm:$0xff]
    %v8101 = vld [vmem:[#allocation19 + $0x32c] sm:$0xf]
    %v8102 = vld [vmem:[#allocation19 + $0x330] sm:$0xff]
    %v8103 = vld [vmem:[#allocation19 + $0x338] sm:$0xf]
    %v8104 = vld [vmem:[#allocation19 + $0x33c] sm:$0xff]
    %v8105 = vld [vmem:[#allocation19 + $0x344] sm:$0xf]
    %v8106 = vld [vmem:[#allocation19 + $0x348] sm:$0xff]
    %v8107 = vld [vmem:[#allocation19 + $0x350] sm:$0xf]
    %v8108 = vld [vmem:[#allocation19 + $0x354] sm:$0xff]
    %v8109 = vld [vmem:[#allocation19 + $0x35c] sm:$0xf]
    %v8110 = vld [vmem:[#allocation19 + $0x360] sm:$0xff]
    %v8111 = vld [vmem:[#allocation19 + $0x368] sm:$0xf]
    %v8112 = vld [vmem:[#allocation19 + $0x36c] sm:$0xff]
    %v8113 = vld [vmem:[#allocation19 + $0x374] sm:$0xf]
    %v8114 = vld [vmem:[#allocation19 + $0x378] sm:$0xff]
    %v8115 = vld [vmem:[#allocation19 + $0x380] sm:$0xf]
    %v8116 = vld [vmem:[#allocation19 + $0x384] sm:$0xff]
    %v8117 = vld [vmem:[#allocation19 + $0x38c] sm:$0xf]
    %v8118 = vld [vmem:[#allocation19 + $0x390] sm:$0xff]
    %v8119 = vld [vmem:[#allocation19 + $0x398] sm:$0xf]
    %v8120 = vld [vmem:[#allocation19 + $0x39c] sm:$0xff]
    %v8121 = vld [vmem:[#allocation19 + $0x3a4] sm:$0xf]
    %v8122 = vld [vmem:[#allocation19 + $0x3a8] sm:$0xff]
    %v8123 = vld [vmem:[#allocation19 + $0x3b0] sm:$0xf]
    %v8124 = vld [vmem:[#allocation19 + $0x3b4] sm:$0xff]
    %v8125 = vld [vmem:[#allocation19 + $0x3bc] sm:$0xf]
    %v8126 = vld [vmem:[#allocation19 + $0x3c0] sm:$0xff]
    %v8127 = vld [vmem:[#allocation19 + $0x3c8] sm:$0xf]
    %v8128 = vld [vmem:[#allocation19 + $0x3cc] sm:$0xff]
    %v8129 = vld [vmem:[#allocation19 + $0x3d4] sm:$0xf]
    %v8130 = vld [vmem:[#allocation19 + $0x3d8] sm:$0xff]
    %v8131 = vld [vmem:[#allocation19 + $0x3e0] sm:$0xf]
    %v8132 = vld [vmem:[#allocation19 + $0x3e4] sm:$0xff]
    %v8133 = vld [vmem:[#allocation19 + $0x3ec] sm:$0xf]
    %v8134 = vld [vmem:[#allocation19 + $0x3f0] sm:$0xff]
    %v8135 = vld [vmem:[#allocation19 + $0x3f8] sm:$0xf]
    %v8136 = vld [vmem:[#allocation19 + $0x3fc] sm:$0xff]
    %v8137 = vld [vmem:[#allocation19 + $0x404] sm:$0xf]
    %v8138 = vld [vmem:[#allocation19 + $0x408] sm:$0xff]
    %v8139 = vld [vmem:[#allocation19 + $0x410] sm:$0xf]
    %v8140 = vld [vmem:[#allocation19 + $0x414] sm:$0xff]
    %v8141 = vld [vmem:[#allocation19 + $0x41c] sm:$0xf]
    %v8142 = vld [vmem:[#allocation19 + $0x420] sm:$0xff]
    %v8143 = vld [vmem:[#allocation19 + $0x428] sm:$0xf]
    %v8144 = vld [vmem:[#allocation19 + $0x42c] sm:$0xff]
    %v8145 = vld [vmem:[#allocation19 + $0x434] sm:$0xf]
    %v8146 = vld [vmem:[#allocation19 + $0x438] sm:$0xff]
    %v8147 = vld [vmem:[#allocation19 + $0x440] sm:$0xf]
    %v8148 = vld [vmem:[#allocation19 + $0x444] sm:$0xff]
    %v8149 = vld [vmem:[#allocation19 + $0x44c] sm:$0xf]
    %v8150 = vld [vmem:[#allocation19 + $0x450] sm:$0xff]
    %v8151 = vld [vmem:[#allocation19 + $0x458] sm:$0xf]
    %v8152 = vld [vmem:[#allocation19 + $0x45c] sm:$0xff]
    %v8153 = vld [vmem:[#allocation19 + $0x464] sm:$0xf]
    %v8154 = vld [vmem:[#allocation19 + $0x468] sm:$0xff]
    %v8155 = vld [vmem:[#allocation19 + $0x470] sm:$0xf]
    %v8156 = vld [vmem:[#allocation19 + $0x474] sm:$0xff]
    %v8157 = vld [vmem:[#allocation19 + $0x47c] sm:$0xf]
    %v8158 = vld [vmem:[#allocation19 + $0x480] sm:$0xff]
    %v8159 = vld [vmem:[#allocation19 + $0x488] sm:$0xf]
    %v8160 = vld [vmem:[#allocation19 + $0x48c] sm:$0xff]
    %v8161 = vld [vmem:[#allocation19 + $0x494] sm:$0xf]
    %v8162 = vld [vmem:[#allocation19 + $0x498] sm:$0xff]
    %v8163 = vld [vmem:[#allocation19 + $0x4a0] sm:$0xf]
    %v8164 = vld [vmem:[#allocation19 + $0x4a4] sm:$0xff]
    %v8165 = vld [vmem:[#allocation19 + $0x4ac] sm:$0xf]
    %v8166 = vld [vmem:[#allocation19 + $0x4b0] sm:$0xff]
    %v8167 = vld [vmem:[#allocation19 + $0x4b8] sm:$0xf]
    %v8168 = vld [vmem:[#allocation19 + $0x4bc] sm:$0xff]
    %v8169 = vld [vmem:[#allocation19 + $0x4c4] sm:$0xf]
    %v8170 = vld [vmem:[#allocation19 + $0x4c8] sm:$0xff]
    %v8171 = vld [vmem:[#allocation19 + $0x4d0] sm:$0xf]
    %v8172 = vld [vmem:[#allocation19 + $0x4d4] sm:$0xff]
    %v8173 = vld [vmem:[#allocation19 + $0x4dc] sm:$0xf]
    %v8174 = vld [vmem:[#allocation19 + $0x4e0] sm:$0xff]
    %v8175 = vld [vmem:[#allocation19 + $0x4e8] sm:$0xf]
    %v8176 = vld [vmem:[#allocation19 + $0x4ec] sm:$0xff]
    %v8177 = vld [vmem:[#allocation19 + $0x4f4] sm:$0xf]
    %v8178 = vld [vmem:[#allocation19 + $0x4f8] sm:$0xff]
    %v8179 = vld [vmem:[#allocation19 + $0x500] sm:$0xf]
    %v8180 = vld [vmem:[#allocation19 + $0x504] sm:$0xff]
    %v8181 = vld [vmem:[#allocation19 + $0x50c] sm:$0xf]
    %v8182 = vld [vmem:[#allocation19 + $0x510] sm:$0xff]
    %v8183 = vld [vmem:[#allocation19 + $0x518] sm:$0xf]
    %v8184 = vld [vmem:[#allocation19 + $0x51c] sm:$0xff]
    %v8185 = vld [vmem:[#allocation19 + $0x524] sm:$0xf]
    %v8186 = vld [vmem:[#allocation19 + $0x528] sm:$0xff]
    %v8187 = vld [vmem:[#allocation19 + $0x530] sm:$0xf]
    %v8188 = vld [vmem:[#allocation19 + $0x534] sm:$0xff]
    %v8189 = vld [vmem:[#allocation19 + $0x53c] sm:$0xf]
    %v8190 = vld [vmem:[#allocation19 + $0x540] sm:$0xff]
    %v8191 = vld [vmem:[#allocation19 + $0x548] sm:$0xf]
    %v8192 = vld [vmem:[#allocation19 + $0x54c] sm:$0xff]
    %v8193 = vld [vmem:[#allocation19 + $0x554] sm:$0xf]
    %v8194 = vld [vmem:[#allocation19 + $0x558] sm:$0xff]
    %v8195 = vld [vmem:[#allocation19 + $0x560] sm:$0xf]
    %v8196 = vld [vmem:[#allocation19 + $0x564] sm:$0xff]
    %v8197 = vld [vmem:[#allocation19 + $0x56c] sm:$0xf]
    %v8198 = vld [vmem:[#allocation19 + $0x570] sm:$0xff]
    %v8199 = vld [vmem:[#allocation19 + $0x578] sm:$0xf]
    %v8200 = vld [vmem:[#allocation19 + $0x57c] sm:$0xff]
    %v8201 = vld [vmem:[#allocation19 + $0x584] sm:$0xf]
    %v8202 = vld [vmem:[#allocation19 + $0x588] sm:$0xff]
    %v8203 = vld [vmem:[#allocation19 + $0x590] sm:$0xf]
    %v8204 = vld [vmem:[#allocation19 + $0x594] sm:$0xff]
    %v8205 = vld [vmem:[#allocation19 + $0x59c] sm:$0xf]
    %v8206 = vld [vmem:[#allocation19 + $0x5a0] sm:$0xff]
    %v8207 = vld [vmem:[#allocation19 + $0x5a8] sm:$0xf]
    %v8208 = vld [vmem:[#allocation19 + $0x5ac] sm:$0xff]
    %v8209 = vld [vmem:[#allocation19 + $0x5b4] sm:$0xf]
    %v8210 = vld [vmem:[#allocation19 + $0x5b8] sm:$0xff]
    %v8211 = vld [vmem:[#allocation19 + $0x5c0] sm:$0xf]
    %v8212 = vld [vmem:[#allocation19 + $0x5c4] sm:$0xff]
    %v8213 = vld [vmem:[#allocation19 + $0x5cc] sm:$0xf]
    %v8214 = vld [vmem:[#allocation19 + $0x5d0] sm:$0xff]
    %v8215 = vld [vmem:[#allocation19 + $0x5d8] sm:$0xf]
    %v8216 = vld [vmem:[#allocation19 + $0x5dc] sm:$0xff]
    %v8217 = vld [vmem:[#allocation19 + $0x5e4] sm:$0xf]
    %v8218 = vld [vmem:[#allocation19 + $0x5e8] sm:$0xff]
    %v8219 = vld [vmem:[#allocation19 + $0x5f0] sm:$0xf]
    %v8220 = vld [vmem:[#allocation19 + $0x5f4] sm:$0xff]
    %v8221 = vld [vmem:[#allocation19 + $0x5fc] sm:$0xf]
    %v8222 = vld [vmem:[#allocation19 + $0x600] sm:$0xff]
    %v8223 = vld [vmem:[#allocation19 + $0x608] sm:$0xf]
    %v8224 = vld [vmem:[#allocation19 + $0x60c] sm:$0xff]
    %v8225 = vld [vmem:[#allocation19 + $0x614] sm:$0xf]
    %v8226 = vld [vmem:[#allocation19 + $0x618] sm:$0xff]
    %v8227 = vld [vmem:[#allocation19 + $0x620] sm:$0xf]
    %v8228 = vld [vmem:[#allocation19 + $0x624] sm:$0xff]
    %v8229 = vld [vmem:[#allocation19 + $0x62c] sm:$0xf]
    %v8230 = vld [vmem:[#allocation19 + $0x630] sm:$0xff]
    %v8231 = vld [vmem:[#allocation19 + $0x638] sm:$0xf]
    %v8232 = vld [vmem:[#allocation19 + $0x63c] sm:$0xff]
    %v8233 = vld [vmem:[#allocation19 + $0x644] sm:$0xf]
    %v8234 = vld [vmem:[#allocation19 + $0x648] sm:$0xff]
    %v8235 = vld [vmem:[#allocation19 + $0x650] sm:$0xf]
    %v8236 = vld [vmem:[#allocation19 + $0x654] sm:$0xff]
    %v8237 = vld [vmem:[#allocation19 + $0x65c] sm:$0xf]
    %v8238 = vld [vmem:[#allocation19 + $0x660] sm:$0xff]
    %v8239 = vld [vmem:[#allocation19 + $0x668] sm:$0xf]
    %v8240 = vld [vmem:[#allocation19 + $0x66c] sm:$0xff]
    %v8241 = vld [vmem:[#allocation19 + $0x674] sm:$0xf]
    %v8242 = vld [vmem:[#allocation19 + $0x678] sm:$0xff]
    %v8243 = vld [vmem:[#allocation19 + $0x680] sm:$0xf]
    %v8244 = vld [vmem:[#allocation19 + $0x684] sm:$0xff]
    %v8245 = vld [vmem:[#allocation19 + $0x68c] sm:$0xf]
    %v8246 = vld [vmem:[#allocation19 + $0x690] sm:$0xff]
    %v8247 = vld [vmem:[#allocation19 + $0x698] sm:$0xf]
    %v8248 = vld [vmem:[#allocation19 + $0x69c] sm:$0xff]
    %v8249 = vld [vmem:[#allocation19 + $0x6a4] sm:$0xf]
    %v8250 = vld [vmem:[#allocation19 + $0x6a8] sm:$0xff]
    %v8251 = vld [vmem:[#allocation19 + $0x6b0] sm:$0xf]
    %v8252 = vld [vmem:[#allocation19 + $0x6b4] sm:$0xff]
    %v8253 = vld [vmem:[#allocation19 + $0x6bc] sm:$0xf]
    %v8254 = vld [vmem:[#allocation19 + $0x6c0] sm:$0xff]
    %v8255 = vld [vmem:[#allocation19 + $0x6c8] sm:$0xf]
    %v8256 = vld [vmem:[#allocation19 + $0x6cc] sm:$0xff]
    %v8257 = vld [vmem:[#allocation19 + $0x6d4] sm:$0xf]
    %v8258 = vld [vmem:[#allocation19 + $0x6d8] sm:$0xff]
    %v8259 = vld [vmem:[#allocation19 + $0x6e0] sm:$0xf]
    %v8260 = vld [vmem:[#allocation19 + $0x6e4] sm:$0xff]
    %v8261 = vld [vmem:[#allocation19 + $0x6ec] sm:$0xf]
    %v8262 = vld [vmem:[#allocation19 + $0x6f0] sm:$0xff]
    %v8263 = vld [vmem:[#allocation19 + $0x6f8] sm:$0xf]
    %v8264 = vld [vmem:[#allocation19 + $0x6fc] sm:$0xff]
    %v8265 = vld [vmem:[#allocation19 + $0x704] sm:$0xf]
    %v8266 = vld [vmem:[#allocation19 + $0x708] sm:$0xff]
    %v8267 = vld [vmem:[#allocation19 + $0x710] sm:$0xf]
    %v8268 = vld [vmem:[#allocation19 + $0x714] sm:$0xff]
    %v8269 = vld [vmem:[#allocation19 + $0x71c] sm:$0xf]
    %v8270 = vld [vmem:[#allocation19 + $0x720] sm:$0xff]
    %v8271 = vld [vmem:[#allocation19 + $0x728] sm:$0xf]
    %v8272 = vld [vmem:[#allocation19 + $0x72c] sm:$0xff]
    %v8273 = vld [vmem:[#allocation19 + $0x734] sm:$0xf]
    %v8274 = vld [vmem:[#allocation19 + $0x738] sm:$0xff]
    %v8275 = vld [vmem:[#allocation19 + $0x740] sm:$0xf]
    %v8276 = vld [vmem:[#allocation19 + $0x744] sm:$0xff]
    %v8277 = vld [vmem:[#allocation19 + $0x74c] sm:$0xf]
    %v8278 = vld [vmem:[#allocation19 + $0x750] sm:$0xff]
    %v8279 = vld [vmem:[#allocation19 + $0x758] sm:$0xf]
    %v8280 = vld [vmem:[#allocation19 + $0x75c] sm:$0xff]
    %v8281 = vld [vmem:[#allocation19 + $0x764] sm:$0xf]
    %v8282 = vld [vmem:[#allocation19 + $0x768] sm:$0xff]
    %v8283 = vld [vmem:[#allocation19 + $0x770] sm:$0xf]
    %v8284 = vld [vmem:[#allocation19 + $0x774] sm:$0xff]
    %v8285 = vld [vmem:[#allocation19 + $0x77c] sm:$0xf]
    %v8286 = vld [vmem:[#allocation19 + $0x780] sm:$0xff]
    %v8287 = vld [vmem:[#allocation19 + $0x788] sm:$0xf]
    %v8288 = vld [vmem:[#allocation19 + $0x78c] sm:$0xff]
    %v8289 = vld [vmem:[#allocation19 + $0x794] sm:$0xf]
    %v8290 = vld [vmem:[#allocation19 + $0x798] sm:$0xff]
    %v8291 = vld [vmem:[#allocation19 + $0x7a0] sm:$0xf]
    %v8292 = vld [vmem:[#allocation19 + $0x7a4] sm:$0xff]
    %v8293 = vld [vmem:[#allocation19 + $0x7ac] sm:$0xf]
    %v8294 = vld [vmem:[#allocation19 + $0x7b0] sm:$0xff]
    %v8295 = vld [vmem:[#allocation19 + $0x7b8] sm:$0xf]
    %v8296 = vld [vmem:[#allocation19 + $0x7bc] sm:$0xff]
    %v8297 = vld [vmem:[#allocation19 + $0x7c4] sm:$0xf]
    %v8298 = vld [vmem:[#allocation19 + $0x7c8] sm:$0xff]
    %v8299 = vld [vmem:[#allocation19 + $0x7d0] sm:$0xf]
    %v8300 = vld [vmem:[#allocation19 + $0x7d4] sm:$0xff]
    %v8301 = vld [vmem:[#allocation19 + $0x7dc] sm:$0xf]
    %v8302 = vld [vmem:[#allocation19 + $0x7e0] sm:$0xff]
    %v8303 = vld [vmem:[#allocation19 + $0x7e8] sm:$0xf]
    %v8304 = vld [vmem:[#allocation19 + $0x7ec] sm:$0xff]
    %v8305 = vld [vmem:[#allocation19 + $0x7f4] sm:$0xf]
    %v8306 = vld [vmem:[#allocation19 + $0x7f8] sm:$0xff]
    %v8307 = vld [vmem:[#allocation19 + $0x800] sm:$0xf]
    %v8308 = vld [vmem:[#allocation19 + $0x804] sm:$0xff]
    %v8309 = vld [vmem:[#allocation19 + $0x80c] sm:$0xf]
    %v8310 = vld [vmem:[#allocation19 + $0x810] sm:$0xff]
    %v8311 = vld [vmem:[#allocation19 + $0x818] sm:$0xf]
    %v8312 = vld [vmem:[#allocation19 + $0x81c] sm:$0xff]
    %v8313 = vld [vmem:[#allocation19 + $0x824] sm:$0xf]
    %v8314 = vld [vmem:[#allocation19 + $0x828] sm:$0xff]
    %v8315 = vld [vmem:[#allocation19 + $0x830] sm:$0xf]
    %v8316 = vld [vmem:[#allocation19 + $0x834] sm:$0xff]
    %v8317 = vld [vmem:[#allocation19 + $0x83c] sm:$0xf]
    %v8318 = vld [vmem:[#allocation19 + $0x840] sm:$0xff]
    %v8319 = vld [vmem:[#allocation19 + $0x848] sm:$0xf]
    %v8320 = vld [vmem:[#allocation19 + $0x84c] sm:$0xff]
    %v8321 = vld [vmem:[#allocation19 + $0x854] sm:$0xf]
    %v8322 = vld [vmem:[#allocation19 + $0x858] sm:$0xff]
    %v8323 = vld [vmem:[#allocation19 + $0x860] sm:$0xf]
    %v8324 = vld [vmem:[#allocation19 + $0x864] sm:$0xff]
    %v8325 = vld [vmem:[#allocation19 + $0x86c] sm:$0xf]
    %v8326 = vld [vmem:[#allocation19 + $0x870] sm:$0xff]
    %v8327 = vld [vmem:[#allocation19 + $0x878] sm:$0xf]
    %v8328 = vld [vmem:[#allocation19 + $0x87c] sm:$0xff]
    %v8329 = vld [vmem:[#allocation19 + $0x884] sm:$0xf]
    %v8330 = vld [vmem:[#allocation19 + $0x888] sm:$0xff]
    %v8331 = vld [vmem:[#allocation19 + $0x890] sm:$0xf]
    %v8332 = vld [vmem:[#allocation19 + $0x894] sm:$0xff]
    %v8333 = vld [vmem:[#allocation19 + $0x89c] sm:$0xf]
    %v8334 = vld [vmem:[#allocation19 + $0x8a0] sm:$0xff]
    %v8335 = vld [vmem:[#allocation19 + $0x8a8] sm:$0xf]
    %v8336 = vld [vmem:[#allocation19 + $0x8ac] sm:$0xff]
    %v8337 = vld [vmem:[#allocation19 + $0x8b4] sm:$0xf]
    %v8338 = vld [vmem:[#allocation19 + $0x8b8] sm:$0xff]
    %v8339 = vld [vmem:[#allocation19 + $0x8c0] sm:$0xf]
    %v8340 = vld [vmem:[#allocation19 + $0x8c4] sm:$0xff]
    %v8341 = vld [vmem:[#allocation19 + $0x8cc] sm:$0xf]
    %v8342 = vld [vmem:[#allocation19 + $0x8d0] sm:$0xff]
    %v8343 = vld [vmem:[#allocation19 + $0x8d8] sm:$0xf]
    %v8344 = vld [vmem:[#allocation19 + $0x8dc] sm:$0xff]
    %v8345 = vld [vmem:[#allocation19 + $0x8e4] sm:$0xf]
    %v8346 = vld [vmem:[#allocation19 + $0x8e8] sm:$0xff]
    %v8347 = vld [vmem:[#allocation19 + $0x8f0] sm:$0xf]
    %v8348 = vld [vmem:[#allocation19 + $0x8f4] sm:$0xff]
    %v8349 = vld [vmem:[#allocation19 + $0x8fc] sm:$0xf]
    %v8350 = vld [vmem:[#allocation20] sm:$0x7]
    %v8352 = vlaneseq
    %v8353 = vshrl.u32 %v8352, 7
    %v8354 = vsub.s32 0, %v8353
    %v8355 = vrot.slane %v8350, %v8354
    %v8356 = vlaneseq
    %v8357 = vshrl.u32 %v8356, 7
    %v8358 = vsub.s32 1, %v8357
    %v8359 = vrot.slane %v8350, %v8358
    %v8360 = vlaneseq
    %v8361 = vshrl.u32 %v8360, 7
    %v8362 = vsub.s32 2, %v8361
    %v8363 = vrot.slane %v8350, %v8362
    %v8751 = vunpack.c.l.b16 %v7966
    %v8752 = vunpack.c.h.b16 %v7966
    %v8753 = vunpack.c.l.b16 %v7967
    %v8754 = vunpack.c.l.b16 %v7968
    %v8755 = vunpack.c.h.b16 %v7968
    %v8756 = vunpack.c.l.b16 %v7969
    %v8757 = vunpack.c.l.b16 %v7970
    %v8758 = vunpack.c.h.b16 %v7970
    %v8759 = vunpack.c.l.b16 %v7971
    %v8760 = vunpack.c.l.b16 %v7972
    %v8761 = vunpack.c.h.b16 %v7972
    %v8762 = vunpack.c.l.b16 %v7973
    %v8763 = vunpack.c.l.b16 %v7974
    %v8764 = vunpack.c.h.b16 %v7974
    %v8765 = vunpack.c.l.b16 %v7975
    %v8766 = vunpack.c.l.b16 %v7976
    %v8767 = vunpack.c.h.b16 %v7976
    %v8768 = vunpack.c.l.b16 %v7977
    %v8769 = vunpack.c.l.b16 %v7978
    %v8770 = vunpack.c.h.b16 %v7978
    %v8771 = vunpack.c.l.b16 %v7979
    %v8772 = vunpack.c.l.b16 %v7980
    %v8773 = vunpack.c.h.b16 %v7980
    %v8774 = vunpack.c.l.b16 %v7981
    %v8775 = vunpack.c.l.b16 %v7982
    %v8776 = vunpack.c.h.b16 %v7982
    %v8777 = vunpack.c.l.b16 %v7983
    %v8778 = vunpack.c.l.b16 %v7984
    %v8779 = vunpack.c.h.b16 %v7984
    %v8780 = vunpack.c.l.b16 %v7985
    %v8781 = vunpack.c.l.b16 %v7986
    %v8782 = vunpack.c.h.b16 %v7986
    %v8783 = vunpack.c.l.b16 %v7987
    %v8784 = vunpack.c.l.b16 %v7988
    %v8785 = vunpack.c.h.b16 %v7988
    %v8786 = vunpack.c.l.b16 %v7989
    %v8787 = vunpack.c.l.b16 %v7990
    %v8788 = vunpack.c.h.b16 %v7990
    %v8789 = vunpack.c.l.b16 %v7991
    %v8790 = vunpack.c.l.b16 %v7992
    %v8791 = vunpack.c.h.b16 %v7992
    %v8792 = vunpack.c.l.b16 %v7993
    %v8793 = vunpack.c.l.b16 %v7994
    %v8794 = vunpack.c.h.b16 %v7994
    %v8795 = vunpack.c.l.b16 %v7995
    %v8796 = vunpack.c.l.b16 %v7996
    %v8797 = vunpack.c.h.b16 %v7996
    %v8798 = vunpack.c.l.b16 %v7997
    %v8799 = vunpack.c.l.b16 %v7998
    %v8800 = vunpack.c.h.b16 %v7998
    %v8801 = vunpack.c.l.b16 %v7999
    %v8802 = vunpack.c.l.b16 %v8000
    %v8803 = vunpack.c.h.b16 %v8000
    %v8804 = vunpack.c.l.b16 %v8001
    %v8805 = vunpack.c.l.b16 %v8002
    %v8806 = vunpack.c.h.b16 %v8002
    %v8807 = vunpack.c.l.b16 %v8003
    %v8808 = vunpack.c.l.b16 %v8004
    %v8809 = vunpack.c.h.b16 %v8004
    %v8810 = vunpack.c.l.b16 %v8005
    %v8811 = vunpack.c.l.b16 %v8006
    %v8812 = vunpack.c.h.b16 %v8006
    %v8813 = vunpack.c.l.b16 %v8007
    %v8814 = vunpack.c.l.b16 %v8008
    %v8815 = vunpack.c.h.b16 %v8008
    %v8816 = vunpack.c.l.b16 %v8009
    %v8817 = vunpack.c.l.b16 %v8010
    %v8818 = vunpack.c.h.b16 %v8010
    %v8819 = vunpack.c.l.b16 %v8011
    %v8820 = vunpack.c.l.b16 %v8012
    %v8821 = vunpack.c.h.b16 %v8012
    %v8822 = vunpack.c.l.b16 %v8013
    %v8823 = vunpack.c.l.b16 %v8014
    %v8824 = vunpack.c.h.b16 %v8014
    %v8825 = vunpack.c.l.b16 %v8015
    %v8826 = vunpack.c.l.b16 %v8016
    %v8827 = vunpack.c.h.b16 %v8016
    %v8828 = vunpack.c.l.b16 %v8017
    %v8829 = vunpack.c.l.b16 %v8018
    %v8830 = vunpack.c.h.b16 %v8018
    %v8831 = vunpack.c.l.b16 %v8019
    %v8832 = vunpack.c.l.b16 %v8020
    %v8833 = vunpack.c.h.b16 %v8020
    %v8834 = vunpack.c.l.b16 %v8021
    %v8835 = vunpack.c.l.b16 %v8022
    %v8836 = vunpack.c.h.b16 %v8022
    %v8837 = vunpack.c.l.b16 %v8023
    %v8838 = vunpack.c.l.b16 %v8024
    %v8839 = vunpack.c.h.b16 %v8024
    %v8840 = vunpack.c.l.b16 %v8025
    %v8841 = vunpack.c.l.b16 %v8026
    %v8842 = vunpack.c.h.b16 %v8026
    %v8843 = vunpack.c.l.b16 %v8027
    %v8844 = vunpack.c.l.b16 %v8028
    %v8845 = vunpack.c.h.b16 %v8028
    %v8846 = vunpack.c.l.b16 %v8029
    %v8847 = vunpack.c.l.b16 %v8030
    %v8848 = vunpack.c.h.b16 %v8030
    %v8849 = vunpack.c.l.b16 %v8031
    %v8850 = vunpack.c.l.b16 %v8032
    %v8851 = vunpack.c.h.b16 %v8032
    %v8852 = vunpack.c.l.b16 %v8033
    %v8853 = vunpack.c.l.b16 %v8034
    %v8854 = vunpack.c.h.b16 %v8034
    %v8855 = vunpack.c.l.b16 %v8035
    %v8856 = vunpack.c.l.b16 %v8036
    %v8857 = vunpack.c.h.b16 %v8036
    %v8858 = vunpack.c.l.b16 %v8037
    %v8859 = vunpack.c.l.b16 %v8038
    %v8860 = vunpack.c.h.b16 %v8038
    %v8861 = vunpack.c.l.b16 %v8039
    %v8862 = vunpack.c.l.b16 %v8040
    %v8863 = vunpack.c.h.b16 %v8040
    %v8864 = vunpack.c.l.b16 %v8041
    %v8865 = vunpack.c.l.b16 %v8042
    %v8866 = vunpack.c.h.b16 %v8042
    %v8867 = vunpack.c.l.b16 %v8043
    %v8868 = vunpack.c.l.b16 %v8044
    %v8869 = vunpack.c.h.b16 %v8044
    %v8870 = vunpack.c.l.b16 %v8045
    %v8871 = vunpack.c.l.b16 %v8046
    %v8872 = vunpack.c.h.b16 %v8046
    %v8873 = vunpack.c.l.b16 %v8047
    %v8874 = vunpack.c.l.b16 %v8048
    %v8875 = vunpack.c.h.b16 %v8048
    %v8876 = vunpack.c.l.b16 %v8049
    %v8877 = vunpack.c.l.b16 %v8050
    %v8878 = vunpack.c.h.b16 %v8050
    %v8879 = vunpack.c.l.b16 %v8051
    %v8880 = vunpack.c.l.b16 %v8052
    %v8881 = vunpack.c.h.b16 %v8052
    %v8882 = vunpack.c.l.b16 %v8053
    %v8883 = vunpack.c.l.b16 %v8054
    %v8884 = vunpack.c.h.b16 %v8054
    %v8885 = vunpack.c.l.b16 %v8055
    %v8886 = vunpack.c.l.b16 %v8056
    %v8887 = vunpack.c.h.b16 %v8056
    %v8888 = vunpack.c.l.b16 %v8057
    %v8889 = vunpack.c.l.b16 %v8058
    %v8890 = vunpack.c.h.b16 %v8058
    %v8891 = vunpack.c.l.b16 %v8059
    %v8892 = vunpack.c.l.b16 %v8060
    %v8893 = vunpack.c.h.b16 %v8060
    %v8894 = vunpack.c.l.b16 %v8061
    %v8895 = vunpack.c.l.b16 %v8062
    %v8896 = vunpack.c.h.b16 %v8062
    %v8897 = vunpack.c.l.b16 %v8063
    %v8898 = vunpack.c.l.b16 %v8064
    %v8899 = vunpack.c.h.b16 %v8064
    %v8900 = vunpack.c.l.b16 %v8065
    %v8901 = vunpack.c.l.b16 %v8066
    %v8902 = vunpack.c.h.b16 %v8066
    %v8903 = vunpack.c.l.b16 %v8067
    %v8904 = vunpack.c.l.b16 %v8068
    %v8905 = vunpack.c.h.b16 %v8068
    %v8906 = vunpack.c.l.b16 %v8069
    %v8907 = vunpack.c.l.b16 %v8070
    %v8908 = vunpack.c.h.b16 %v8070
    %v8909 = vunpack.c.l.b16 %v8071
    %v8910 = vunpack.c.l.b16 %v8072
    %v8911 = vunpack.c.h.b16 %v8072
    %v8912 = vunpack.c.l.b16 %v8073
    %v8913 = vunpack.c.l.b16 %v8074
    %v8914 = vunpack.c.h.b16 %v8074
    %v8915 = vunpack.c.l.b16 %v8075
    %v8916 = vunpack.c.l.b16 %v8076
    %v8917 = vunpack.c.h.b16 %v8076
    %v8918 = vunpack.c.l.b16 %v8077
    %v8919 = vunpack.c.l.b16 %v8078
    %v8920 = vunpack.c.h.b16 %v8078
    %v8921 = vunpack.c.l.b16 %v8079
    %v8922 = vunpack.c.l.b16 %v8080
    %v8923 = vunpack.c.h.b16 %v8080
    %v8924 = vunpack.c.l.b16 %v8081
    %v8925 = vunpack.c.l.b16 %v8082
    %v8926 = vunpack.c.h.b16 %v8082
    %v8927 = vunpack.c.l.b16 %v8083
    %v8928 = vunpack.c.l.b16 %v8084
    %v8929 = vunpack.c.h.b16 %v8084
    %v8930 = vunpack.c.l.b16 %v8085
    %v8931 = vunpack.c.l.b16 %v8086
    %v8932 = vunpack.c.h.b16 %v8086
    %v8933 = vunpack.c.l.b16 %v8087
    %v8934 = vunpack.c.l.b16 %v8088
    %v8935 = vunpack.c.h.b16 %v8088
    %v8936 = vunpack.c.l.b16 %v8089
    %v8937 = vunpack.c.l.b16 %v8090
    %v8938 = vunpack.c.h.b16 %v8090
    %v8939 = vunpack.c.l.b16 %v8091
    %v8940 = vunpack.c.l.b16 %v8092
    %v8941 = vunpack.c.h.b16 %v8092
    %v8942 = vunpack.c.l.b16 %v8093
    %v8943 = vunpack.c.l.b16 %v8094
    %v8944 = vunpack.c.h.b16 %v8094
    %v8945 = vunpack.c.l.b16 %v8095
    %v8946 = vunpack.c.l.b16 %v8096
    %v8947 = vunpack.c.h.b16 %v8096
    %v8948 = vunpack.c.l.b16 %v8097
    %v8949 = vunpack.c.l.b16 %v8098
    %v8950 = vunpack.c.h.b16 %v8098
    %v8951 = vunpack.c.l.b16 %v8099
    %v8952 = vunpack.c.l.b16 %v8100
    %v8953 = vunpack.c.h.b16 %v8100
    %v8954 = vunpack.c.l.b16 %v8101
    %v8955 = vunpack.c.l.b16 %v8102
    %v8956 = vunpack.c.h.b16 %v8102
    %v8957 = vunpack.c.l.b16 %v8103
    %v8958 = vunpack.c.l.b16 %v8104
    %v8959 = vunpack.c.h.b16 %v8104
    %v8960 = vunpack.c.l.b16 %v8105
    %v8961 = vunpack.c.l.b16 %v8106
    %v8962 = vunpack.c.h.b16 %v8106
    %v8963 = vunpack.c.l.b16 %v8107
    %v8964 = vunpack.c.l.b16 %v8108
    %v8965 = vunpack.c.h.b16 %v8108
    %v8966 = vunpack.c.l.b16 %v8109
    %v8967 = vunpack.c.l.b16 %v8110
    %v8968 = vunpack.c.h.b16 %v8110
    %v8969 = vunpack.c.l.b16 %v8111
    %v8970 = vunpack.c.l.b16 %v8112
    %v8971 = vunpack.c.h.b16 %v8112
    %v8972 = vunpack.c.l.b16 %v8113
    %v8973 = vunpack.c.l.b16 %v8114
    %v8974 = vunpack.c.h.b16 %v8114
    %v8975 = vunpack.c.l.b16 %v8115
    %v8976 = vunpack.c.l.b16 %v8116
    %v8977 = vunpack.c.h.b16 %v8116
    %v8978 = vunpack.c.l.b16 %v8117
    %v8979 = vunpack.c.l.b16 %v8118
    %v8980 = vunpack.c.h.b16 %v8118
    %v8981 = vunpack.c.l.b16 %v8119
    %v8982 = vunpack.c.l.b16 %v8120
    %v8983 = vunpack.c.h.b16 %v8120
    %v8984 = vunpack.c.l.b16 %v8121
    %v8985 = vunpack.c.l.b16 %v8122
    %v8986 = vunpack.c.h.b16 %v8122
    %v8987 = vunpack.c.l.b16 %v8123
    %v8988 = vunpack.c.l.b16 %v8124
    %v8989 = vunpack.c.h.b16 %v8124
    %v8990 = vunpack.c.l.b16 %v8125
    %v8991 = vunpack.c.l.b16 %v8126
    %v8992 = vunpack.c.h.b16 %v8126
    %v8993 = vunpack.c.l.b16 %v8127
    %v8994 = vunpack.c.l.b16 %v8128
    %v8995 = vunpack.c.h.b16 %v8128
    %v8996 = vunpack.c.l.b16 %v8129
    %v8997 = vunpack.c.l.b16 %v8130
    %v8998 = vunpack.c.h.b16 %v8130
    %v8999 = vunpack.c.l.b16 %v8131
    %v9000 = vunpack.c.l.b16 %v8132
    %v9001 = vunpack.c.h.b16 %v8132
    %v9002 = vunpack.c.l.b16 %v8133
    %v9003 = vunpack.c.l.b16 %v8134
    %v9004 = vunpack.c.h.b16 %v8134
    %v9005 = vunpack.c.l.b16 %v8135
    %v9006 = vunpack.c.l.b16 %v8136
    %v9007 = vunpack.c.h.b16 %v8136
    %v9008 = vunpack.c.l.b16 %v8137
    %v9009 = vunpack.c.l.b16 %v8138
    %v9010 = vunpack.c.h.b16 %v8138
    %v9011 = vunpack.c.l.b16 %v8139
    %v9012 = vunpack.c.l.b16 %v8140
    %v9013 = vunpack.c.h.b16 %v8140
    %v9014 = vunpack.c.l.b16 %v8141
    %v9015 = vunpack.c.l.b16 %v8142
    %v9016 = vunpack.c.h.b16 %v8142
    %v9017 = vunpack.c.l.b16 %v8143
    %v9018 = vunpack.c.l.b16 %v8144
    %v9019 = vunpack.c.h.b16 %v8144
    %v9020 = vunpack.c.l.b16 %v8145
    %v9021 = vunpack.c.l.b16 %v8146
    %v9022 = vunpack.c.h.b16 %v8146
    %v9023 = vunpack.c.l.b16 %v8147
    %v9024 = vunpack.c.l.b16 %v8148
    %v9025 = vunpack.c.h.b16 %v8148
    %v9026 = vunpack.c.l.b16 %v8149
    %v9027 = vunpack.c.l.b16 %v8150
    %v9028 = vunpack.c.h.b16 %v8150
    %v9029 = vunpack.c.l.b16 %v8151
    %v9030 = vunpack.c.l.b16 %v8152
    %v9031 = vunpack.c.h.b16 %v8152
    %v9032 = vunpack.c.l.b16 %v8153
    %v9033 = vunpack.c.l.b16 %v8154
    %v9034 = vunpack.c.h.b16 %v8154
    %v9035 = vunpack.c.l.b16 %v8155
    %v9036 = vunpack.c.l.b16 %v8156
    %v9037 = vunpack.c.h.b16 %v8156
    %v9038 = vunpack.c.l.b16 %v8157
    %v9039 = vunpack.c.l.b16 %v8158
    %v9040 = vunpack.c.h.b16 %v8158
    %v9041 = vunpack.c.l.b16 %v8159
    %v9042 = vunpack.c.l.b16 %v8160
    %v9043 = vunpack.c.h.b16 %v8160
    %v9044 = vunpack.c.l.b16 %v8161
    %v9045 = vunpack.c.l.b16 %v8162
    %v9046 = vunpack.c.h.b16 %v8162
    %v9047 = vunpack.c.l.b16 %v8163
    %v9048 = vunpack.c.l.b16 %v8164
    %v9049 = vunpack.c.h.b16 %v8164
    %v9050 = vunpack.c.l.b16 %v8165
    %v9051 = vunpack.c.l.b16 %v8166
    %v9052 = vunpack.c.h.b16 %v8166
    %v9053 = vunpack.c.l.b16 %v8167
    %v9054 = vunpack.c.l.b16 %v8168
    %v9055 = vunpack.c.h.b16 %v8168
    %v9056 = vunpack.c.l.b16 %v8169
    %v9057 = vunpack.c.l.b16 %v8170
    %v9058 = vunpack.c.h.b16 %v8170
    %v9059 = vunpack.c.l.b16 %v8171
    %v9060 = vunpack.c.l.b16 %v8172
    %v9061 = vunpack.c.h.b16 %v8172
    %v9062 = vunpack.c.l.b16 %v8173
    %v9063 = vunpack.c.l.b16 %v8174
    %v9064 = vunpack.c.h.b16 %v8174
    %v9065 = vunpack.c.l.b16 %v8175
    %v9066 = vunpack.c.l.b16 %v8176
    %v9067 = vunpack.c.h.b16 %v8176
    %v9068 = vunpack.c.l.b16 %v8177
    %v9069 = vunpack.c.l.b16 %v8178
    %v9070 = vunpack.c.h.b16 %v8178
    %v9071 = vunpack.c.l.b16 %v8179
    %v9072 = vunpack.c.l.b16 %v8180
    %v9073 = vunpack.c.h.b16 %v8180
    %v9074 = vunpack.c.l.b16 %v8181
    %v9075 = vunpack.c.l.b16 %v8182
    %v9076 = vunpack.c.h.b16 %v8182
    %v9077 = vunpack.c.l.b16 %v8183
    %v9078 = vunpack.c.l.b16 %v8184
    %v9079 = vunpack.c.h.b16 %v8184
    %v9080 = vunpack.c.l.b16 %v8185
    %v9081 = vunpack.c.l.b16 %v8186
    %v9082 = vunpack.c.h.b16 %v8186
    %v9083 = vunpack.c.l.b16 %v8187
    %v9084 = vunpack.c.l.b16 %v8188
    %v9085 = vunpack.c.h.b16 %v8188
    %v9086 = vunpack.c.l.b16 %v8189
    %v9087 = vunpack.c.l.b16 %v8190
    %v9088 = vunpack.c.h.b16 %v8190
    %v9089 = vunpack.c.l.b16 %v8191
    %v9090 = vunpack.c.l.b16 %v8192
    %v9091 = vunpack.c.h.b16 %v8192
    %v9092 = vunpack.c.l.b16 %v8193
    %v9093 = vunpack.c.l.b16 %v8194
    %v9094 = vunpack.c.h.b16 %v8194
    %v9095 = vunpack.c.l.b16 %v8195
    %v9096 = vunpack.c.l.b16 %v8196
    %v9097 = vunpack.c.h.b16 %v8196
    %v9098 = vunpack.c.l.b16 %v8197
    %v9099 = vunpack.c.l.b16 %v8198
    %v9100 = vunpack.c.h.b16 %v8198
    %v9101 = vunpack.c.l.b16 %v8199
    %v9102 = vunpack.c.l.b16 %v8200
    %v9103 = vunpack.c.h.b16 %v8200
    %v9104 = vunpack.c.l.b16 %v8201
    %v9105 = vunpack.c.l.b16 %v8202
    %v9106 = vunpack.c.h.b16 %v8202
    %v9107 = vunpack.c.l.b16 %v8203
    %v9108 = vunpack.c.l.b16 %v8204
    %v9109 = vunpack.c.h.b16 %v8204
    %v9110 = vunpack.c.l.b16 %v8205
    %v9111 = vunpack.c.l.b16 %v8206
    %v9112 = vunpack.c.h.b16 %v8206
    %v9113 = vunpack.c.l.b16 %v8207
    %v9114 = vunpack.c.l.b16 %v8208
    %v9115 = vunpack.c.h.b16 %v8208
    %v9116 = vunpack.c.l.b16 %v8209
    %v9117 = vunpack.c.l.b16 %v8210
    %v9118 = vunpack.c.h.b16 %v8210
    %v9119 = vunpack.c.l.b16 %v8211
    %v9120 = vunpack.c.l.b16 %v8212
    %v9121 = vunpack.c.h.b16 %v8212
    %v9122 = vunpack.c.l.b16 %v8213
    %v9123 = vunpack.c.l.b16 %v8214
    %v9124 = vunpack.c.h.b16 %v8214
    %v9125 = vunpack.c.l.b16 %v8215
    %v9126 = vunpack.c.l.b16 %v8216
    %v9127 = vunpack.c.h.b16 %v8216
    %v9128 = vunpack.c.l.b16 %v8217
    %v9129 = vunpack.c.l.b16 %v8218
    %v9130 = vunpack.c.h.b16 %v8218
    %v9131 = vunpack.c.l.b16 %v8219
    %v9132 = vunpack.c.l.b16 %v8220
    %v9133 = vunpack.c.h.b16 %v8220
    %v9134 = vunpack.c.l.b16 %v8221
    %v9135 = vunpack.c.l.b16 %v8222
    %v9136 = vunpack.c.h.b16 %v8222
    %v9137 = vunpack.c.l.b16 %v8223
    %v9138 = vunpack.c.l.b16 %v8224
    %v9139 = vunpack.c.h.b16 %v8224
    %v9140 = vunpack.c.l.b16 %v8225
    %v9141 = vunpack.c.l.b16 %v8226
    %v9142 = vunpack.c.h.b16 %v8226
    %v9143 = vunpack.c.l.b16 %v8227
    %v9144 = vunpack.c.l.b16 %v8228
    %v9145 = vunpack.c.h.b16 %v8228
    %v9146 = vunpack.c.l.b16 %v8229
    %v9147 = vunpack.c.l.b16 %v8230
    %v9148 = vunpack.c.h.b16 %v8230
    %v9149 = vunpack.c.l.b16 %v8231
    %v9150 = vunpack.c.l.b16 %v8232
    %v9151 = vunpack.c.h.b16 %v8232
    %v9152 = vunpack.c.l.b16 %v8233
    %v9153 = vunpack.c.l.b16 %v8234
    %v9154 = vunpack.c.h.b16 %v8234
    %v9155 = vunpack.c.l.b16 %v8235
    %v9156 = vunpack.c.l.b16 %v8236
    %v9157 = vunpack.c.h.b16 %v8236
    %v9158 = vunpack.c.l.b16 %v8237
    %v9159 = vunpack.c.l.b16 %v8238
    %v9160 = vunpack.c.h.b16 %v8238
    %v9161 = vunpack.c.l.b16 %v8239
    %v9162 = vunpack.c.l.b16 %v8240
    %v9163 = vunpack.c.h.b16 %v8240
    %v9164 = vunpack.c.l.b16 %v8241
    %v9165 = vunpack.c.l.b16 %v8242
    %v9166 = vunpack.c.h.b16 %v8242
    %v9167 = vunpack.c.l.b16 %v8243
    %v9168 = vunpack.c.l.b16 %v8244
    %v9169 = vunpack.c.h.b16 %v8244
    %v9170 = vunpack.c.l.b16 %v8245
    %v9171 = vunpack.c.l.b16 %v8246
    %v9172 = vunpack.c.h.b16 %v8246
    %v9173 = vunpack.c.l.b16 %v8247
    %v9174 = vunpack.c.l.b16 %v8248
    %v9175 = vunpack.c.h.b16 %v8248
    %v9176 = vunpack.c.l.b16 %v8249
    %v9177 = vunpack.c.l.b16 %v8250
    %v9178 = vunpack.c.h.b16 %v8250
    %v9179 = vunpack.c.l.b16 %v8251
    %v9180 = vunpack.c.l.b16 %v8252
    %v9181 = vunpack.c.h.b16 %v8252
    %v9182 = vunpack.c.l.b16 %v8253
    %v9183 = vunpack.c.l.b16 %v8254
    %v9184 = vunpack.c.h.b16 %v8254
    %v9185 = vunpack.c.l.b16 %v8255
    %v9186 = vunpack.c.l.b16 %v8256
    %v9187 = vunpack.c.h.b16 %v8256
    %v9188 = vunpack.c.l.b16 %v8257
    %v9189 = vunpack.c.l.b16 %v8258
    %v9190 = vunpack.c.h.b16 %v8258
    %v9191 = vunpack.c.l.b16 %v8259
    %v9192 = vunpack.c.l.b16 %v8260
    %v9193 = vunpack.c.h.b16 %v8260
    %v9194 = vunpack.c.l.b16 %v8261
    %v9195 = vunpack.c.l.b16 %v8262
    %v9196 = vunpack.c.h.b16 %v8262
    %v9197 = vunpack.c.l.b16 %v8263
    %v9198 = vunpack.c.l.b16 %v8264
    %v9199 = vunpack.c.h.b16 %v8264
    %v9200 = vunpack.c.l.b16 %v8265
    %v9201 = vunpack.c.l.b16 %v8266
    %v9202 = vunpack.c.h.b16 %v8266
    %v9203 = vunpack.c.l.b16 %v8267
    %v9204 = vunpack.c.l.b16 %v8268
    %v9205 = vunpack.c.h.b16 %v8268
    %v9206 = vunpack.c.l.b16 %v8269
    %v9207 = vunpack.c.l.b16 %v8270
    %v9208 = vunpack.c.h.b16 %v8270
    %v9209 = vunpack.c.l.b16 %v8271
    %v9210 = vunpack.c.l.b16 %v8272
    %v9211 = vunpack.c.h.b16 %v8272
    %v9212 = vunpack.c.l.b16 %v8273
    %v9213 = vunpack.c.l.b16 %v8274
    %v9214 = vunpack.c.h.b16 %v8274
    %v9215 = vunpack.c.l.b16 %v8275
    %v9216 = vunpack.c.l.b16 %v8276
    %v9217 = vunpack.c.h.b16 %v8276
    %v9218 = vunpack.c.l.b16 %v8277
    %v9219 = vunpack.c.l.b16 %v8278
    %v9220 = vunpack.c.h.b16 %v8278
    %v9221 = vunpack.c.l.b16 %v8279
    %v9222 = vunpack.c.l.b16 %v8280
    %v9223 = vunpack.c.h.b16 %v8280
    %v9224 = vunpack.c.l.b16 %v8281
    %v9225 = vunpack.c.l.b16 %v8282
    %v9226 = vunpack.c.h.b16 %v8282
    %v9227 = vunpack.c.l.b16 %v8283
    %v9228 = vunpack.c.l.b16 %v8284
    %v9229 = vunpack.c.h.b16 %v8284
    %v9230 = vunpack.c.l.b16 %v8285
    %v9231 = vunpack.c.l.b16 %v8286
    %v9232 = vunpack.c.h.b16 %v8286
    %v9233 = vunpack.c.l.b16 %v8287
    %v9234 = vunpack.c.l.b16 %v8288
    %v9235 = vunpack.c.h.b16 %v8288
    %v9236 = vunpack.c.l.b16 %v8289
    %v9237 = vunpack.c.l.b16 %v8290
    %v9238 = vunpack.c.h.b16 %v8290
    %v9239 = vunpack.c.l.b16 %v8291
    %v9240 = vunpack.c.l.b16 %v8292
    %v9241 = vunpack.c.h.b16 %v8292
    %v9242 = vunpack.c.l.b16 %v8293
    %v9243 = vunpack.c.l.b16 %v8294
    %v9244 = vunpack.c.h.b16 %v8294
    %v9245 = vunpack.c.l.b16 %v8295
    %v9246 = vunpack.c.l.b16 %v8296
    %v9247 = vunpack.c.h.b16 %v8296
    %v9248 = vunpack.c.l.b16 %v8297
    %v9249 = vunpack.c.l.b16 %v8298
    %v9250 = vunpack.c.h.b16 %v8298
    %v9251 = vunpack.c.l.b16 %v8299
    %v9252 = vunpack.c.l.b16 %v8300
    %v9253 = vunpack.c.h.b16 %v8300
    %v9254 = vunpack.c.l.b16 %v8301
    %v9255 = vunpack.c.l.b16 %v8302
    %v9256 = vunpack.c.h.b16 %v8302
    %v9257 = vunpack.c.l.b16 %v8303
    %v9258 = vunpack.c.l.b16 %v8304
    %v9259 = vunpack.c.h.b16 %v8304
    %v9260 = vunpack.c.l.b16 %v8305
    %v9261 = vunpack.c.l.b16 %v8306
    %v9262 = vunpack.c.h.b16 %v8306
    %v9263 = vunpack.c.l.b16 %v8307
    %v9264 = vunpack.c.l.b16 %v8308
    %v9265 = vunpack.c.h.b16 %v8308
    %v9266 = vunpack.c.l.b16 %v8309
    %v9267 = vunpack.c.l.b16 %v8310
    %v9268 = vunpack.c.h.b16 %v8310
    %v9269 = vunpack.c.l.b16 %v8311
    %v9270 = vunpack.c.l.b16 %v8312
    %v9271 = vunpack.c.h.b16 %v8312
    %v9272 = vunpack.c.l.b16 %v8313
    %v9273 = vunpack.c.l.b16 %v8314
    %v9274 = vunpack.c.h.b16 %v8314
    %v9275 = vunpack.c.l.b16 %v8315
    %v9276 = vunpack.c.l.b16 %v8316
    %v9277 = vunpack.c.h.b16 %v8316
    %v9278 = vunpack.c.l.b16 %v8317
    %v9279 = vunpack.c.l.b16 %v8318
    %v9280 = vunpack.c.h.b16 %v8318
    %v9281 = vunpack.c.l.b16 %v8319
    %v9282 = vunpack.c.l.b16 %v8320
    %v9283 = vunpack.c.h.b16 %v8320
    %v9284 = vunpack.c.l.b16 %v8321
    %v9285 = vunpack.c.l.b16 %v8322
    %v9286 = vunpack.c.h.b16 %v8322
    %v9287 = vunpack.c.l.b16 %v8323
    %v9288 = vunpack.c.l.b16 %v8324
    %v9289 = vunpack.c.h.b16 %v8324
    %v9290 = vunpack.c.l.b16 %v8325
    %v9291 = vunpack.c.l.b16 %v8326
    %v9292 = vunpack.c.h.b16 %v8326
    %v9293 = vunpack.c.l.b16 %v8327
    %v9294 = vunpack.c.l.b16 %v8328
    %v9295 = vunpack.c.h.b16 %v8328
    %v9296 = vunpack.c.l.b16 %v8329
    %v9297 = vunpack.c.l.b16 %v8330
    %v9298 = vunpack.c.h.b16 %v8330
    %v9299 = vunpack.c.l.b16 %v8331
    %v9300 = vunpack.c.l.b16 %v8332
    %v9301 = vunpack.c.h.b16 %v8332
    %v9302 = vunpack.c.l.b16 %v8333
    %v9303 = vunpack.c.l.b16 %v8334
    %v9304 = vunpack.c.h.b16 %v8334
    %v9305 = vunpack.c.l.b16 %v8335
    %v9306 = vunpack.c.l.b16 %v8336
    %v9307 = vunpack.c.h.b16 %v8336
    %v9308 = vunpack.c.l.b16 %v8337
    %v9309 = vunpack.c.l.b16 %v8338
    %v9310 = vunpack.c.h.b16 %v8338
    %v9311 = vunpack.c.l.b16 %v8339
    %v9312 = vunpack.c.l.b16 %v8340
    %v9313 = vunpack.c.h.b16 %v8340
    %v9314 = vunpack.c.l.b16 %v8341
    %v9315 = vunpack.c.l.b16 %v8342
    %v9316 = vunpack.c.h.b16 %v8342
    %v9317 = vunpack.c.l.b16 %v8343
    %v9318 = vunpack.c.l.b16 %v8344
    %v9319 = vunpack.c.h.b16 %v8344
    %v9320 = vunpack.c.l.b16 %v8345
    %v9321 = vunpack.c.l.b16 %v8346
    %v9322 = vunpack.c.h.b16 %v8346
    %v9323 = vunpack.c.l.b16 %v8347
    %v9324 = vunpack.c.l.b16 %v8348
    %v9325 = vunpack.c.h.b16 %v8348
    %v9326 = vunpack.c.l.b16 %v8349
    %v9327 = vpack.c.b16 %v8754, %v8751
    %v9328 = vpack.c.b16 %v8755, %v8752
    %v9329 = vpack.c.b16 %v8756, %v8753
    %v9330 = vpack.c.b16 %v8760, %v8757
    %v9331 = vpack.c.b16 %v8761, %v8758
    %v9332 = vpack.c.b16 %v8762, %v8759
    %v9333 = vpack.c.b16 %v8766, %v8763
    %v9334 = vpack.c.b16 %v8767, %v8764
    %v9335 = vpack.c.b16 %v8768, %v8765
    %v9336 = vpack.c.b16 %v8772, %v8769
    %v9337 = vpack.c.b16 %v8773, %v8770
    %v9338 = vpack.c.b16 %v8774, %v8771
    %v9339 = vpack.c.b16 %v8778, %v8775
    %v9340 = vpack.c.b16 %v8779, %v8776
    %v9341 = vpack.c.b16 %v8780, %v8777
    %v9342 = vpack.c.b16 %v8784, %v8781
    %v9343 = vpack.c.b16 %v8785, %v8782
    %v9344 = vpack.c.b16 %v8786, %v8783
    %v9345 = vpack.c.b16 %v8790, %v8787
    %v9346 = vpack.c.b16 %v8791, %v8788
    %v9347 = vpack.c.b16 %v8792, %v8789
    %v9348 = vpack.c.b16 %v8796, %v8793
    %v9349 = vpack.c.b16 %v8797, %v8794
    %v9350 = vpack.c.b16 %v8798, %v8795
    %v9351 = vpack.c.b16 %v8802, %v8799
    %v9352 = vpack.c.b16 %v8803, %v8800
    %v9353 = vpack.c.b16 %v8804, %v8801
    %v9354 = vpack.c.b16 %v8808, %v8805
    %v9355 = vpack.c.b16 %v8809, %v8806
    %v9356 = vpack.c.b16 %v8810, %v8807
    %v9357 = vpack.c.b16 %v8814, %v8811
    %v9358 = vpack.c.b16 %v8815, %v8812
    %v9359 = vpack.c.b16 %v8816, %v8813
    %v9360 = vpack.c.b16 %v8820, %v8817
    %v9361 = vpack.c.b16 %v8821, %v8818
    %v9362 = vpack.c.b16 %v8822, %v8819
    %v9363 = vpack.c.b16 %v8826, %v8823
    %v9364 = vpack.c.b16 %v8827, %v8824
    %v9365 = vpack.c.b16 %v8828, %v8825
    %v9366 = vpack.c.b16 %v8832, %v8829
    %v9367 = vpack.c.b16 %v8833, %v8830
    %v9368 = vpack.c.b16 %v8834, %v8831
    %v9369 = vpack.c.b16 %v8838, %v8835
    %v9370 = vpack.c.b16 %v8839, %v8836
    %v9371 = vpack.c.b16 %v8840, %v8837
    %v9372 = vpack.c.b16 %v8844, %v8841
    %v9373 = vpack.c.b16 %v8845, %v8842
    %v9374 = vpack.c.b16 %v8846, %v8843
    %v9375 = vpack.c.b16 %v8850, %v8847
    %v9376 = vpack.c.b16 %v8851, %v8848
    %v9377 = vpack.c.b16 %v8852, %v8849
    %v9378 = vpack.c.b16 %v8856, %v8853
    %v9379 = vpack.c.b16 %v8857, %v8854
    %v9380 = vpack.c.b16 %v8858, %v8855
    %v9381 = vpack.c.b16 %v8862, %v8859
    %v9382 = vpack.c.b16 %v8863, %v8860
    %v9383 = vpack.c.b16 %v8864, %v8861
    %v9384 = vpack.c.b16 %v8868, %v8865
    %v9385 = vpack.c.b16 %v8869, %v8866
    %v9386 = vpack.c.b16 %v8870, %v8867
    %v9387 = vpack.c.b16 %v8874, %v8871
    %v9388 = vpack.c.b16 %v8875, %v8872
    %v9389 = vpack.c.b16 %v8876, %v8873
    %v9390 = vpack.c.b16 %v8880, %v8877
    %v9391 = vpack.c.b16 %v8881, %v8878
    %v9392 = vpack.c.b16 %v8882, %v8879
    %v9393 = vpack.c.b16 %v8886, %v8883
    %v9394 = vpack.c.b16 %v8887, %v8884
    %v9395 = vpack.c.b16 %v8888, %v8885
    %v9396 = vpack.c.b16 %v8892, %v8889
    %v9397 = vpack.c.b16 %v8893, %v8890
    %v9398 = vpack.c.b16 %v8894, %v8891
    %v9399 = vpack.c.b16 %v8898, %v8895
    %v9400 = vpack.c.b16 %v8899, %v8896
    %v9401 = vpack.c.b16 %v8900, %v8897
    %v9402 = vpack.c.b16 %v8904, %v8901
    %v9403 = vpack.c.b16 %v8905, %v8902
    %v9404 = vpack.c.b16 %v8906, %v8903
    %v9405 = vpack.c.b16 %v8910, %v8907
    %v9406 = vpack.c.b16 %v8911, %v8908
    %v9407 = vpack.c.b16 %v8912, %v8909
    %v9408 = vpack.c.b16 %v8916, %v8913
    %v9409 = vpack.c.b16 %v8917, %v8914
    %v9410 = vpack.c.b16 %v8918, %v8915
    %v9411 = vpack.c.b16 %v8922, %v8919
    %v9412 = vpack.c.b16 %v8923, %v8920
    %v9413 = vpack.c.b16 %v8924, %v8921
    %v9414 = vpack.c.b16 %v8928, %v8925
    %v9415 = vpack.c.b16 %v8929, %v8926
    %v9416 = vpack.c.b16 %v8930, %v8927
    %v9417 = vpack.c.b16 %v8934, %v8931
    %v9418 = vpack.c.b16 %v8935, %v8932
    %v9419 = vpack.c.b16 %v8936, %v8933
    %v9420 = vpack.c.b16 %v8940, %v8937
    %v9421 = vpack.c.b16 %v8941, %v8938
    %v9422 = vpack.c.b16 %v8942, %v8939
    %v9423 = vpack.c.b16 %v8946, %v8943
    %v9424 = vpack.c.b16 %v8947, %v8944
    %v9425 = vpack.c.b16 %v8948, %v8945
    %v9426 = vpack.c.b16 %v8952, %v8949
    %v9427 = vpack.c.b16 %v8953, %v8950
    %v9428 = vpack.c.b16 %v8954, %v8951
    %v9429 = vpack.c.b16 %v8958, %v8955
    %v9430 = vpack.c.b16 %v8959, %v8956
    %v9431 = vpack.c.b16 %v8960, %v8957
    %v9432 = vpack.c.b16 %v8964, %v8961
    %v9433 = vpack.c.b16 %v8965, %v8962
    %v9434 = vpack.c.b16 %v8966, %v8963
    %v9435 = vpack.c.b16 %v8970, %v8967
    %v9436 = vpack.c.b16 %v8971, %v8968
    %v9437 = vpack.c.b16 %v8972, %v8969
    %v9438 = vpack.c.b16 %v8976, %v8973
    %v9439 = vpack.c.b16 %v8977, %v8974
    %v9440 = vpack.c.b16 %v8978, %v8975
    %v9441 = vpack.c.b16 %v8982, %v8979
    %v9442 = vpack.c.b16 %v8983, %v8980
    %v9443 = vpack.c.b16 %v8984, %v8981
    %v9444 = vpack.c.b16 %v8988, %v8985
    %v9445 = vpack.c.b16 %v8989, %v8986
    %v9446 = vpack.c.b16 %v8990, %v8987
    %v9447 = vpack.c.b16 %v8994, %v8991
    %v9448 = vpack.c.b16 %v8995, %v8992
    %v9449 = vpack.c.b16 %v8996, %v8993
    %v9450 = vpack.c.b16 %v9000, %v8997
    %v9451 = vpack.c.b16 %v9001, %v8998
    %v9452 = vpack.c.b16 %v9002, %v8999
    %v9453 = vpack.c.b16 %v9006, %v9003
    %v9454 = vpack.c.b16 %v9007, %v9004
    %v9455 = vpack.c.b16 %v9008, %v9005
    %v9456 = vpack.c.b16 %v9012, %v9009
    %v9457 = vpack.c.b16 %v9013, %v9010
    %v9458 = vpack.c.b16 %v9014, %v9011
    %v9459 = vpack.c.b16 %v9018, %v9015
    %v9460 = vpack.c.b16 %v9019, %v9016
    %v9461 = vpack.c.b16 %v9020, %v9017
    %v9462 = vpack.c.b16 %v9024, %v9021
    %v9463 = vpack.c.b16 %v9025, %v9022
    %v9464 = vpack.c.b16 %v9026, %v9023
    %v9465 = vpack.c.b16 %v9030, %v9027
    %v9466 = vpack.c.b16 %v9031, %v9028
    %v9467 = vpack.c.b16 %v9032, %v9029
    %v9468 = vpack.c.b16 %v9036, %v9033
    %v9469 = vpack.c.b16 %v9037, %v9034
    %v9470 = vpack.c.b16 %v9038, %v9035
    %v9471 = vpack.c.b16 %v9042, %v9039
    %v9472 = vpack.c.b16 %v9043, %v9040
    %v9473 = vpack.c.b16 %v9044, %v9041
    %v9474 = vpack.c.b16 %v9048, %v9045
    %v9475 = vpack.c.b16 %v9049, %v9046
    %v9476 = vpack.c.b16 %v9050, %v9047
    %v9477 = vpack.c.b16 %v9054, %v9051
    %v9478 = vpack.c.b16 %v9055, %v9052
    %v9479 = vpack.c.b16 %v9056, %v9053
    %v9480 = vpack.c.b16 %v9060, %v9057
    %v9481 = vpack.c.b16 %v9061, %v9058
    %v9482 = vpack.c.b16 %v9062, %v9059
    %v9483 = vpack.c.b16 %v9066, %v9063
    %v9484 = vpack.c.b16 %v9067, %v9064
    %v9485 = vpack.c.b16 %v9068, %v9065
    %v9486 = vpack.c.b16 %v9072, %v9069
    %v9487 = vpack.c.b16 %v9073, %v9070
    %v9488 = vpack.c.b16 %v9074, %v9071
    %v9489 = vpack.c.b16 %v9078, %v9075
    %v9490 = vpack.c.b16 %v9079, %v9076
    %v9491 = vpack.c.b16 %v9080, %v9077
    %v9492 = vpack.c.b16 %v9084, %v9081
    %v9493 = vpack.c.b16 %v9085, %v9082
    %v9494 = vpack.c.b16 %v9086, %v9083
    %v9495 = vpack.c.b16 %v9090, %v9087
    %v9496 = vpack.c.b16 %v9091, %v9088
    %v9497 = vpack.c.b16 %v9092, %v9089
    %v9498 = vpack.c.b16 %v9096, %v9093
    %v9499 = vpack.c.b16 %v9097, %v9094
    %v9500 = vpack.c.b16 %v9098, %v9095
    %v9501 = vpack.c.b16 %v9102, %v9099
    %v9502 = vpack.c.b16 %v9103, %v9100
    %v9503 = vpack.c.b16 %v9104, %v9101
    %v9504 = vpack.c.b16 %v9108, %v9105
    %v9505 = vpack.c.b16 %v9109, %v9106
    %v9506 = vpack.c.b16 %v9110, %v9107
    %v9507 = vpack.c.b16 %v9114, %v9111
    %v9508 = vpack.c.b16 %v9115, %v9112
    %v9509 = vpack.c.b16 %v9116, %v9113
    %v9510 = vpack.c.b16 %v9120, %v9117
    %v9511 = vpack.c.b16 %v9121, %v9118
    %v9512 = vpack.c.b16 %v9122, %v9119
    %v9513 = vpack.c.b16 %v9126, %v9123
    %v9514 = vpack.c.b16 %v9127, %v9124
    %v9515 = vpack.c.b16 %v9128, %v9125
    %v9516 = vpack.c.b16 %v9132, %v9129
    %v9517 = vpack.c.b16 %v9133, %v9130
    %v9518 = vpack.c.b16 %v9134, %v9131
    %v9519 = vpack.c.b16 %v9138, %v9135
    %v9520 = vpack.c.b16 %v9139, %v9136
    %v9521 = vpack.c.b16 %v9140, %v9137
    %v9522 = vpack.c.b16 %v9144, %v9141
    %v9523 = vpack.c.b16 %v9145, %v9142
    %v9524 = vpack.c.b16 %v9146, %v9143
    %v9525 = vpack.c.b16 %v9150, %v9147
    %v9526 = vpack.c.b16 %v9151, %v9148
    %v9527 = vpack.c.b16 %v9152, %v9149
    %v9528 = vpack.c.b16 %v9156, %v9153
    %v9529 = vpack.c.b16 %v9157, %v9154
    %v9530 = vpack.c.b16 %v9158, %v9155
    %v9531 = vpack.c.b16 %v9162, %v9159
    %v9532 = vpack.c.b16 %v9163, %v9160
    %v9533 = vpack.c.b16 %v9164, %v9161
    %v9534 = vpack.c.b16 %v9168, %v9165
    %v9535 = vpack.c.b16 %v9169, %v9166
    %v9536 = vpack.c.b16 %v9170, %v9167
    %v9537 = vpack.c.b16 %v9174, %v9171
    %v9538 = vpack.c.b16 %v9175, %v9172
    %v9539 = vpack.c.b16 %v9176, %v9173
    %v9540 = vpack.c.b16 %v9180, %v9177
    %v9541 = vpack.c.b16 %v9181, %v9178
    %v9542 = vpack.c.b16 %v9182, %v9179
    %v9543 = vpack.c.b16 %v9186, %v9183
    %v9544 = vpack.c.b16 %v9187, %v9184
    %v9545 = vpack.c.b16 %v9188, %v9185
    %v9546 = vpack.c.b16 %v9192, %v9189
    %v9547 = vpack.c.b16 %v9193, %v9190
    %v9548 = vpack.c.b16 %v9194, %v9191
    %v9549 = vpack.c.b16 %v9198, %v9195
    %v9550 = vpack.c.b16 %v9199, %v9196
    %v9551 = vpack.c.b16 %v9200, %v9197
    %v9552 = vpack.c.b16 %v9204, %v9201
    %v9553 = vpack.c.b16 %v9205, %v9202
    %v9554 = vpack.c.b16 %v9206, %v9203
    %v9555 = vpack.c.b16 %v9210, %v9207
    %v9556 = vpack.c.b16 %v9211, %v9208
    %v9557 = vpack.c.b16 %v9212, %v9209
    %v9558 = vpack.c.b16 %v9216, %v9213
    %v9559 = vpack.c.b16 %v9217, %v9214
    %v9560 = vpack.c.b16 %v9218, %v9215
    %v9561 = vpack.c.b16 %v9222, %v9219
    %v9562 = vpack.c.b16 %v9223, %v9220
    %v9563 = vpack.c.b16 %v9224, %v9221
    %v9564 = vpack.c.b16 %v9228, %v9225
    %v9565 = vpack.c.b16 %v9229, %v9226
    %v9566 = vpack.c.b16 %v9230, %v9227
    %v9567 = vpack.c.b16 %v9234, %v9231
    %v9568 = vpack.c.b16 %v9235, %v9232
    %v9569 = vpack.c.b16 %v9236, %v9233
    %v9570 = vpack.c.b16 %v9240, %v9237
    %v9571 = vpack.c.b16 %v9241, %v9238
    %v9572 = vpack.c.b16 %v9242, %v9239
    %v9573 = vpack.c.b16 %v9246, %v9243
    %v9574 = vpack.c.b16 %v9247, %v9244
    %v9575 = vpack.c.b16 %v9248, %v9245
    %v9576 = vpack.c.b16 %v9252, %v9249
    %v9577 = vpack.c.b16 %v9253, %v9250
    %v9578 = vpack.c.b16 %v9254, %v9251
    %v9579 = vpack.c.b16 %v9258, %v9255
    %v9580 = vpack.c.b16 %v9259, %v9256
    %v9581 = vpack.c.b16 %v9260, %v9257
    %v9582 = vpack.c.b16 %v9264, %v9261
    %v9583 = vpack.c.b16 %v9265, %v9262
    %v9584 = vpack.c.b16 %v9266, %v9263
    %v9585 = vpack.c.b16 %v9270, %v9267
    %v9586 = vpack.c.b16 %v9271, %v9268
    %v9587 = vpack.c.b16 %v9272, %v9269
    %v9588 = vpack.c.b16 %v9276, %v9273
    %v9589 = vpack.c.b16 %v9277, %v9274
    %v9590 = vpack.c.b16 %v9278, %v9275
    %v9591 = vpack.c.b16 %v9282, %v9279
    %v9592 = vpack.c.b16 %v9283, %v9280
    %v9593 = vpack.c.b16 %v9284, %v9281
    %v9594 = vpack.c.b16 %v9288, %v9285
    %v9595 = vpack.c.b16 %v9289, %v9286
    %v9596 = vpack.c.b16 %v9290, %v9287
    %v9597 = vpack.c.b16 %v9294, %v9291
    %v9598 = vpack.c.b16 %v9295, %v9292
    %v9599 = vpack.c.b16 %v9296, %v9293
    %v9600 = vpack.c.b16 %v9300, %v9297
    %v9601 = vpack.c.b16 %v9301, %v9298
    %v9602 = vpack.c.b16 %v9302, %v9299
    %v9603 = vpack.c.b16 %v9306, %v9303
    %v9604 = vpack.c.b16 %v9307, %v9304
    %v9605 = vpack.c.b16 %v9308, %v9305
    %v9606 = vpack.c.b16 %v9312, %v9309
    %v9607 = vpack.c.b16 %v9313, %v9310
    %v9608 = vpack.c.b16 %v9314, %v9311
    %v9609 = vpack.c.b16 %v9318, %v9315
    %v9610 = vpack.c.b16 %v9319, %v9316
    %v9611 = vpack.c.b16 %v9320, %v9317
    %v9612 = vpack.c.b16 %v9324, %v9321
    %v9613 = vpack.c.b16 %v9325, %v9322
    %v9614 = vpack.c.b16 %v9326, %v9323
    %9903 = vmatprep.subr.bf16.mxu0 %v9349
    %9904 = vmatpush1.bf16.msra.mxu0 %v9348
    %9905 = vmatprep.subr.bf16.mxu0 %v9346
    %9906 = vmatpush1.bf16.msra.mxu0 %v9345
    %9907 = vmatprep.subr.bf16.mxu0 %v9343
    %9908 = vmatpush1.bf16.msra.mxu0 %v9342
    %9909 = vmatprep.subr.bf16.mxu0 %v9340
    %9910 = vmatpush1.bf16.msra.mxu0 %v9339
    %9911 = vmatprep.subr.bf16.mxu0 %v9337
    %9912 = vmatpush1.bf16.msra.mxu0 %v9336
    %9913 = vmatprep.subr.bf16.mxu0 %v9334
    %9914 = vmatpush1.bf16.msra.mxu0 %v9333
    %9915 = vmatprep.subr.bf16.mxu0 %v9331
    %9916 = vmatpush1.bf16.msra.mxu0 %v9330
    %9917 = vmatprep.subr.bf16.mxu0 %v9328
    %9918 = vmatpush1.bf16.msra.mxu0 %v9327
    %9919 = vmatprep.subr.bf16.mxu0 %v9373
    %9920 = vmatpush2.bf16.msra.mxu0 %v9372
    %9921 = vmatprep.subr.bf16.mxu0 %v9370
    %9922 = vmatpush2.bf16.msra.mxu0 %v9369
    %9923 = vmatprep.subr.bf16.mxu0 %v9367
    %9924 = vmatpush2.bf16.msra.mxu0 %v9366
    %9925 = vmatprep.subr.bf16.mxu0 %v9364
    %9926 = vmatpush2.bf16.msra.mxu0 %v9363
    %9927 = vmatprep.subr.bf16.mxu0 %v9361
    %9928 = vmatpush2.bf16.msra.mxu0 %v9360
    %9929 = vmatprep.subr.bf16.mxu0 %v9358
    %9930 = vmatpush2.bf16.msra.mxu0 %v9357
    %9931 = vmatprep.subr.bf16.mxu0 %v9355
    %9932 = vmatpush2.bf16.msra.mxu0 %v9354
    %9933 = vmatprep.subr.bf16.mxu0 %v9352
    %9934 = vmatpush2.bf16.msra.mxu0 %v9351
    %9935 = vmatprep.mubr.bf16.mxu0 %v7955
    %9936 = vmatmul.mubr.bf16.gmra.mxu0 %v7954
    %v9937 = vpop.f32.mrf.mxu0
    %v9938 = vadd.f32 %v8355, %v9937
    %v9939 = vpop.f32.mrf.mxu0
    %v9940 = vadd.f32 %v8359, %v9939
    %v9941 = vpop.f32.mrf.mxu0
    %v9942 = vadd.f32 %v8355, %v9941
    %v9943 = vpop.f32.mrf.mxu0
    %v9944 = vadd.f32 %v8359, %v9943
    %9945 = vdwg.mxu0
    %9946 = vmatprep.subr.bf16.mxu0 %v9397
    %9947 = vmatpush1.bf16.msra.mxu0 %v9396
    %9948 = vmatprep.subr.bf16.mxu0 %v9394
    %9949 = vmatpush1.bf16.msra.mxu0 %v9393
    %9950 = vmatprep.subr.bf16.mxu0 %v9391
    %9951 = vmatpush1.bf16.msra.mxu0 %v9390
    %9952 = vmatprep.subr.bf16.mxu0 %v9388
    %9953 = vmatpush1.bf16.msra.mxu0 %v9387
    %9954 = vmatprep.subr.bf16.mxu0 %v9385
    %9955 = vmatpush1.bf16.msra.mxu0 %v9384
    %9956 = vmatprep.subr.bf16.mxu0 %v9382
    %9957 = vmatpush1.bf16.msra.mxu0 %v9381
    %9958 = vmatprep.subr.bf16.mxu0 %v9379
    %9959 = vmatpush1.bf16.msra.mxu0 %v9378
    %9960 = vmatprep.subr.bf16.mxu0 %v9376
    %9961 = vmatpush1.bf16.msra.mxu0 %v9375
    %9962 = vmatprep.subr.bf16.mxu0 %v9421
    %9963 = vmatpush2.bf16.msra.mxu0 %v9420
    %9964 = vmatprep.subr.bf16.mxu0 %v9418
    %9965 = vmatpush2.bf16.msra.mxu0 %v9417
    %9966 = vmatprep.subr.bf16.mxu0 %v9415
    %9967 = vmatpush2.bf16.msra.mxu0 %v9414
    %9968 = vmatprep.subr.bf16.mxu0 %v9412
    %9969 = vmatpush2.bf16.msra.mxu0 %v9411
    %9970 = vmatprep.subr.bf16.mxu0 %v9409
    %9971 = vmatpush2.bf16.msra.mxu0 %v9408
    %9972 = vmatprep.subr.bf16.mxu0 %v9406
    %9973 = vmatpush2.bf16.msra.mxu0 %v9405
    %9974 = vmatprep.subr.bf16.mxu0 %v9403
    %9975 = vmatpush2.bf16.msra.mxu0 %v9402
    %9976 = vmatprep.subr.bf16.mxu0 %v9400
    %9977 = vmatpush2.bf16.msra.mxu0 %v9399
    %9978 = vmatprep.mubr.bf16.mxu0 %v7957
    %9979 = vmatmul.mubr.bf16.gmra.mxu0 %v7956
    %v9980 = vpop.f32.mrf.mxu0
    %v9981 = vadd.f32 %v9938, %v9980
    %v9982 = vpop.f32.mrf.mxu0
    %v9983 = vadd.f32 %v9940, %v9982
    %v9984 = vpop.f32.mrf.mxu0
    %v9985 = vadd.f32 %v9942, %v9984
    %v9986 = vpop.f32.mrf.mxu0
    %v9987 = vadd.f32 %v9944, %v9986
    %9988 = vdwg.mxu0
    %9989 = vmatprep.subr.bf16.mxu0 %v9445
    %9990 = vmatpush1.bf16.msra.mxu0 %v9444
    %9991 = vmatprep.subr.bf16.mxu0 %v9442
    %9992 = vmatpush1.bf16.msra.mxu0 %v9441
    %9993 = vmatprep.subr.bf16.mxu0 %v9439
    %9994 = vmatpush1.bf16.msra.mxu0 %v9438
    %9995 = vmatprep.subr.bf16.mxu0 %v9436
    %9996 = vmatpush1.bf16.msra.mxu0 %v9435
    %9997 = vmatprep.subr.bf16.mxu0 %v9433
    %9998 = vmatpush1.bf16.msra.mxu0 %v9432
    %9999 = vmatprep.subr.bf16.mxu0 %v9430
    %10000 = vmatpush1.bf16.msra.mxu0 %v9429
    %10001 = vmatprep.subr.bf16.mxu0 %v9427
    %10002 = vmatpush1.bf16.msra.mxu0 %v9426
    %10003 = vmatprep.subr.bf16.mxu0 %v9424
    %10004 = vmatpush1.bf16.msra.mxu0 %v9423
    %10005 = vmatprep.subr.bf16.mxu0 %v9469
    %10006 = vmatpush2.bf16.msra.mxu0 %v9468
    %10007 = vmatprep.subr.bf16.mxu0 %v9466
    %10008 = vmatpush2.bf16.msra.mxu0 %v9465
    %10009 = vmatprep.subr.bf16.mxu0 %v9463
    %10010 = vmatpush2.bf16.msra.mxu0 %v9462
    %10011 = vmatprep.subr.bf16.mxu0 %v9460
    %10012 = vmatpush2.bf16.msra.mxu0 %v9459
    %10013 = vmatprep.subr.bf16.mxu0 %v9457
    %10014 = vmatpush2.bf16.msra.mxu0 %v9456
    %10015 = vmatprep.subr.bf16.mxu0 %v9454
    %10016 = vmatpush2.bf16.msra.mxu0 %v9453
    %10017 = vmatprep.subr.bf16.mxu0 %v9451
    %10018 = vmatpush2.bf16.msra.mxu0 %v9450
    %10019 = vmatprep.subr.bf16.mxu0 %v9448
    %10020 = vmatpush2.bf16.msra.mxu0 %v9447
    %10021 = vmatprep.mubr.bf16.mxu0 %v7959
    %10022 = vmatmul.mubr.bf16.gmra.mxu0 %v7958
    %v10023 = vpop.f32.mrf.mxu0
    %v10024 = vadd.f32 %v9981, %v10023
    %v10025 = vpop.f32.mrf.mxu0
    %v10026 = vadd.f32 %v9983, %v10025
    %v10027 = vpop.f32.mrf.mxu0
    %v10028 = vadd.f32 %v9985, %v10027
    %v10029 = vpop.f32.mrf.mxu0
    %v10030 = vadd.f32 %v9987, %v10029
    %10031 = vdwg.mxu0
    %10032 = vmatprep.subr.bf16.mxu0 %v9493
    %10033 = vmatpush1.bf16.msra.mxu0 %v9492
    %10034 = vmatprep.subr.bf16.mxu0 %v9490
    %10035 = vmatpush1.bf16.msra.mxu0 %v9489
    %10036 = vmatprep.subr.bf16.mxu0 %v9487
    %10037 = vmatpush1.bf16.msra.mxu0 %v9486
    %10038 = vmatprep.subr.bf16.mxu0 %v9484
    %10039 = vmatpush1.bf16.msra.mxu0 %v9483
    %10040 = vmatprep.subr.bf16.mxu0 %v9481
    %10041 = vmatpush1.bf16.msra.mxu0 %v9480
    %10042 = vmatprep.subr.bf16.mxu0 %v9478
    %10043 = vmatpush1.bf16.msra.mxu0 %v9477
    %10044 = vmatprep.subr.bf16.mxu0 %v9475
    %10045 = vmatpush1.bf16.msra.mxu0 %v9474
    %10046 = vmatprep.subr.bf16.mxu0 %v9472
    %10047 = vmatpush1.bf16.msra.mxu0 %v9471
    %10048 = vmatprep.subr.bf16.mxu0 %v9517
    %10049 = vmatpush2.bf16.msra.mxu0 %v9516
    %10050 = vmatprep.subr.bf16.mxu0 %v9514
    %10051 = vmatpush2.bf16.msra.mxu0 %v9513
    %10052 = vmatprep.subr.bf16.mxu0 %v9511
    %10053 = vmatpush2.bf16.msra.mxu0 %v9510
    %10054 = vmatprep.subr.bf16.mxu0 %v9508
    %10055 = vmatpush2.bf16.msra.mxu0 %v9507
    %10056 = vmatprep.subr.bf16.mxu0 %v9505
    %10057 = vmatpush2.bf16.msra.mxu0 %v9504
    %10058 = vmatprep.subr.bf16.mxu0 %v9502
    %10059 = vmatpush2.bf16.msra.mxu0 %v9501
    %10060 = vmatprep.subr.bf16.mxu0 %v9499
    %10061 = vmatpush2.bf16.msra.mxu0 %v9498
    %10062 = vmatprep.subr.bf16.mxu0 %v9496
    %10063 = vmatpush2.bf16.msra.mxu0 %v9495
    %10064 = vmatprep.mubr.bf16.mxu0 %v7961
    %10065 = vmatmul.mubr.bf16.gmra.mxu0 %v7960
    %v10066 = vpop.f32.mrf.mxu0
    %v10067 = vadd.f32 %v10024, %v10066
    %v10068 = vpop.f32.mrf.mxu0
    %v10069 = vadd.f32 %v10026, %v10068
    %v10070 = vpop.f32.mrf.mxu0
    %v10071 = vadd.f32 %v10028, %v10070
    %v10072 = vpop.f32.mrf.mxu0
    %v10073 = vadd.f32 %v10030, %v10072
    %10074 = vdwg.mxu0
    %10075 = vmatprep.subr.bf16.mxu0 %v9541
    %10076 = vmatpush1.bf16.msra.mxu0 %v9540
    %10077 = vmatprep.subr.bf16.mxu0 %v9538
    %10078 = vmatpush1.bf16.msra.mxu0 %v9537
    %10079 = vmatprep.subr.bf16.mxu0 %v9535
    %10080 = vmatpush1.bf16.msra.mxu0 %v9534
    %10081 = vmatprep.subr.bf16.mxu0 %v9532
    %10082 = vmatpush1.bf16.msra.mxu0 %v9531
    %10083 = vmatprep.subr.bf16.mxu0 %v9529
    %10084 = vmatpush1.bf16.msra.mxu0 %v9528
    %10085 = vmatprep.subr.bf16.mxu0 %v9526
    %10086 = vmatpush1.bf16.msra.mxu0 %v9525
    %10087 = vmatprep.subr.bf16.mxu0 %v9523
    %10088 = vmatpush1.bf16.msra.mxu0 %v9522
    %10089 = vmatprep.subr.bf16.mxu0 %v9520
    %10090 = vmatpush1.bf16.msra.mxu0 %v9519
    %10091 = vmatprep.subr.bf16.mxu0 %v9565
    %10092 = vmatpush2.bf16.msra.mxu0 %v9564
    %10093 = vmatprep.subr.bf16.mxu0 %v9562
    %10094 = vmatpush2.bf16.msra.mxu0 %v9561
    %10095 = vmatprep.subr.bf16.mxu0 %v9559
    %10096 = vmatpush2.bf16.msra.mxu0 %v9558
    %10097 = vmatprep.subr.bf16.mxu0 %v9556
    %10098 = vmatpush2.bf16.msra.mxu0 %v9555
    %10099 = vmatprep.subr.bf16.mxu0 %v9553
    %10100 = vmatpush2.bf16.msra.mxu0 %v9552
    %10101 = vmatprep.subr.bf16.mxu0 %v9550
    %10102 = vmatpush2.bf16.msra.mxu0 %v9549
    %10103 = vmatprep.subr.bf16.mxu0 %v9547
    %10104 = vmatpush2.bf16.msra.mxu0 %v9546
    %10105 = vmatprep.subr.bf16.mxu0 %v9544
    %10106 = vmatpush2.bf16.msra.mxu0 %v9543
    %10107 = vmatprep.mubr.bf16.mxu0 %v7963
    %10108 = vmatmul.mubr.bf16.gmra.mxu0 %v7962
    %v10109 = vpop.f32.mrf.mxu0
    %v10110 = vadd.f32 %v10067, %v10109
    %v10111 = vpop.f32.mrf.mxu0
    %v10112 = vadd.f32 %v10069, %v10111
    %v10113 = vpop.f32.mrf.mxu0
    %v10114 = vadd.f32 %v10071, %v10113
    %v10115 = vpop.f32.mrf.mxu0
    %v10116 = vadd.f32 %v10073, %v10115
    %10117 = vdwg.mxu0
    %10118 = vmatprep.subr.bf16.mxu0 %v9589
    %10119 = vmatpush1.bf16.msra.mxu0 %v9588
    %10120 = vmatprep.subr.bf16.mxu0 %v9586
    %10121 = vmatpush1.bf16.msra.mxu0 %v9585
    %10122 = vmatprep.subr.bf16.mxu0 %v9583
    %10123 = vmatpush1.bf16.msra.mxu0 %v9582
    %10124 = vmatprep.subr.bf16.mxu0 %v9580
    %10125 = vmatpush1.bf16.msra.mxu0 %v9579
    %10126 = vmatprep.subr.bf16.mxu0 %v9577
    %10127 = vmatpush1.bf16.msra.mxu0 %v9576
    %10128 = vmatprep.subr.bf16.mxu0 %v9574
    %10129 = vmatpush1.bf16.msra.mxu0 %v9573
    %10130 = vmatprep.subr.bf16.mxu0 %v9571
    %10131 = vmatpush1.bf16.msra.mxu0 %v9570
    %10132 = vmatprep.subr.bf16.mxu0 %v9568
    %10133 = vmatpush1.bf16.msra.mxu0 %v9567
    %10134 = vmatprep.subr.bf16.mxu0 %v9613
    %10135 = vmatpush2.bf16.msra.mxu0 %v9612
    %10136 = vmatprep.subr.bf16.mxu0 %v9610
    %10137 = vmatpush2.bf16.msra.mxu0 %v9609
    %10138 = vmatprep.subr.bf16.mxu0 %v9607
    %10139 = vmatpush2.bf16.msra.mxu0 %v9606
    %10140 = vmatprep.subr.bf16.mxu0 %v9604
    %10141 = vmatpush2.bf16.msra.mxu0 %v9603
    %10142 = vmatprep.subr.bf16.mxu0 %v9601
    %10143 = vmatpush2.bf16.msra.mxu0 %v9600
    %10144 = vmatprep.subr.bf16.mxu0 %v9598
    %10145 = vmatpush2.bf16.msra.mxu0 %v9597
    %10146 = vmatprep.subr.bf16.mxu0 %v9595
    %10147 = vmatpush2.bf16.msra.mxu0 %v9594
    %10148 = vmatprep.subr.bf16.mxu0 %v9592
    %10149 = vmatpush2.bf16.msra.mxu0 %v9591
    %10150 = vmatprep.mubr.bf16.mxu0 %v7965
    %10151 = vmatmul.mubr.bf16.gmra.mxu0 %v7964
    %v10152 = vpop.f32.mrf.mxu0
    %v10153 = vadd.f32 %v10110, %v10152
    %v10154 = vpop.f32.mrf.mxu0
    %v10155 = vadd.f32 %v10112, %v10154
    %v10156 = vpop.f32.mrf.mxu0
    %v10157 = vadd.f32 %v10114, %v10156
    %v10158 = vpop.f32.mrf.mxu0
    %v10159 = vadd.f32 %v10116, %v10158
    %10160 = vdwg.mxu0
    %10161 = vmatprep.subr.bf16.mxu0 0
    %10162 = vmatpush1.bf16.msra.mxu0 %v9350
    %10163 = vmatprep.subr.bf16.mxu0 0
    %10164 = vmatpush1.bf16.msra.mxu0 %v9347
    %10165 = vmatprep.subr.bf16.mxu0 0
    %10166 = vmatpush1.bf16.msra.mxu0 %v9344
    %10167 = vmatprep.subr.bf16.mxu0 0
    %10168 = vmatpush1.bf16.msra.mxu0 %v9341
    %10169 = vmatprep.subr.bf16.mxu0 0
    %10170 = vmatpush1.bf16.msra.mxu0 %v9338
    %10171 = vmatprep.subr.bf16.mxu0 0
    %10172 = vmatpush1.bf16.msra.mxu0 %v9335
    %10173 = vmatprep.subr.bf16.mxu0 0
    %10174 = vmatpush1.bf16.msra.mxu0 %v9332
    %10175 = vmatprep.subr.bf16.mxu0 0
    %10176 = vmatpush1.bf16.msra.mxu0 %v9329
    %10177 = vmatprep.subr.bf16.mxu0 0
    %10178 = vmatpush2.bf16.msra.mxu0 %v9374
    %10179 = vmatprep.subr.bf16.mxu0 0
    %10180 = vmatpush2.bf16.msra.mxu0 %v9371
    %10181 = vmatprep.subr.bf16.mxu0 0
    %10182 = vmatpush2.bf16.msra.mxu0 %v9368
    %10183 = vmatprep.subr.bf16.mxu0 0
    %10184 = vmatpush2.bf16.msra.mxu0 %v9365
    %10185 = vmatprep.subr.bf16.mxu0 0
    %10186 = vmatpush2.bf16.msra.mxu0 %v9362
    %10187 = vmatprep.subr.bf16.mxu0 0
    %10188 = vmatpush2.bf16.msra.mxu0 %v9359
    %10189 = vmatprep.subr.bf16.mxu0 0
    %10190 = vmatpush2.bf16.msra.mxu0 %v9356
    %10191 = vmatprep.subr.bf16.mxu0 0
    %10192 = vmatpush2.bf16.msra.mxu0 %v9353
    %10193 = vmatprep.mubr.bf16.mxu0 %v7955
    %10194 = vmatmul.mubr.bf16.gmra.mxu0 %v7954
    %v10195 = vpop.f32.mrf.mxu0
    %v10196 = vadd.f32 %v8363, %v10195
    %v10197 = vpop.f32.mrf.mxu0
    %v10198 = vpop.f32.mrf.mxu0
    %v10199 = vadd.f32 %v8363, %v10198
    %v10200 = vpop.f32.mrf.mxu0
    %10201 = vdwg.mxu0
    %10202 = vmatprep.subr.bf16.mxu0 0
    %10203 = vmatpush1.bf16.msra.mxu0 %v9398
    %10204 = vmatprep.subr.bf16.mxu0 0
    %10205 = vmatpush1.bf16.msra.mxu0 %v9395
    %10206 = vmatprep.subr.bf16.mxu0 0
    %10207 = vmatpush1.bf16.msra.mxu0 %v9392
    %10208 = vmatprep.subr.bf16.mxu0 0
    %10209 = vmatpush1.bf16.msra.mxu0 %v9389
    %10210 = vmatprep.subr.bf16.mxu0 0
    %10211 = vmatpush1.bf16.msra.mxu0 %v9386
    %10212 = vmatprep.subr.bf16.mxu0 0
    %10213 = vmatpush1.bf16.msra.mxu0 %v9383
    %10214 = vmatprep.subr.bf16.mxu0 0
    %10215 = vmatpush1.bf16.msra.mxu0 %v9380
    %10216 = vmatprep.subr.bf16.mxu0 0
    %10217 = vmatpush1.bf16.msra.mxu0 %v9377
    %10218 = vmatprep.subr.bf16.mxu0 0
    %10219 = vmatpush2.bf16.msra.mxu0 %v9422
    %10220 = vmatprep.subr.bf16.mxu0 0
    %10221 = vmatpush2.bf16.msra.mxu0 %v9419
    %10222 = vmatprep.subr.bf16.mxu0 0
    %10223 = vmatpush2.bf16.msra.mxu0 %v9416
    %10224 = vmatprep.subr.bf16.mxu0 0
    %10225 = vmatpush2.bf16.msra.mxu0 %v9413
    %10226 = vmatprep.subr.bf16.mxu0 0
    %10227 = vmatpush2.bf16.msra.mxu0 %v9410
    %10228 = vmatprep.subr.bf16.mxu0 0
    %10229 = vmatpush2.bf16.msra.mxu0 %v9407
    %10230 = vmatprep.subr.bf16.mxu0 0
    %10231 = vmatpush2.bf16.msra.mxu0 %v9404
    %10232 = vmatprep.subr.bf16.mxu0 0
    %10233 = vmatpush2.bf16.msra.mxu0 %v9401
    %10234 = vmatprep.mubr.bf16.mxu0 %v7957
    %10235 = vmatmul.mubr.bf16.gmra.mxu0 %v7956
    %v10236 = vpop.f32.mrf.mxu0
    %v10237 = vadd.f32 %v10196, %v10236
    %v10238 = vpop.f32.mrf.mxu0
    %v10239 = vpop.f32.mrf.mxu0
    %v10240 = vadd.f32 %v10199, %v10239
    %v10241 = vpop.f32.mrf.mxu0
    %10242 = vdwg.mxu0
    %10243 = vmatprep.subr.bf16.mxu0 0
    %10244 = vmatpush1.bf16.msra.mxu0 %v9446
    %10245 = vmatprep.subr.bf16.mxu0 0
    %10246 = vmatpush1.bf16.msra.mxu0 %v9443
    %10247 = vmatprep.subr.bf16.mxu0 0
    %10248 = vmatpush1.bf16.msra.mxu0 %v9440
    %10249 = vmatprep.subr.bf16.mxu0 0
    %10250 = vmatpush1.bf16.msra.mxu0 %v9437
    %10251 = vmatprep.subr.bf16.mxu0 0
    %10252 = vmatpush1.bf16.msra.mxu0 %v9434
    %10253 = vmatprep.subr.bf16.mxu0 0
    %10254 = vmatpush1.bf16.msra.mxu0 %v9431
    %10255 = vmatprep.subr.bf16.mxu0 0
    %10256 = vmatpush1.bf16.msra.mxu0 %v9428
    %10257 = vmatprep.subr.bf16.mxu0 0
    %10258 = vmatpush1.bf16.msra.mxu0 %v9425
    %10259 = vmatprep.subr.bf16.mxu0 0
    %10260 = vmatpush2.bf16.msra.mxu0 %v9470
    %10261 = vmatprep.subr.bf16.mxu0 0
    %10262 = vmatpush2.bf16.msra.mxu0 %v9467
    %10263 = vmatprep.subr.bf16.mxu0 0
    %10264 = vmatpush2.bf16.msra.mxu0 %v9464
    %10265 = vmatprep.subr.bf16.mxu0 0
    %10266 = vmatpush2.bf16.msra.mxu0 %v9461
    %10267 = vmatprep.subr.bf16.mxu0 0
    %10268 = vmatpush2.bf16.msra.mxu0 %v9458
    %10269 = vmatprep.subr.bf16.mxu0 0
    %10270 = vmatpush2.bf16.msra.mxu0 %v9455
    %10271 = vmatprep.subr.bf16.mxu0 0
    %10272 = vmatpush2.bf16.msra.mxu0 %v9452
    %10273 = vmatprep.subr.bf16.mxu0 0
    %10274 = vmatpush2.bf16.msra.mxu0 %v9449
    %10275 = vmatprep.mubr.bf16.mxu0 %v7959
    %10276 = vmatmul.mubr.bf16.gmra.mxu0 %v7958
    %v10277 = vpop.f32.mrf.mxu0
    %v10278 = vadd.f32 %v10237, %v10277
    %v10279 = vpop.f32.mrf.mxu0
    %v10280 = vpop.f32.mrf.mxu0
    %v10281 = vadd.f32 %v10240, %v10280
    %v10282 = vpop.f32.mrf.mxu0
    %10283 = vdwg.mxu0
    %10284 = vmatprep.subr.bf16.mxu0 0
    %10285 = vmatpush1.bf16.msra.mxu0 %v9494
    %10286 = vmatprep.subr.bf16.mxu0 0
    %10287 = vmatpush1.bf16.msra.mxu0 %v9491
    %10288 = vmatprep.subr.bf16.mxu0 0
    %10289 = vmatpush1.bf16.msra.mxu0 %v9488
    %10290 = vmatprep.subr.bf16.mxu0 0
    %10291 = vmatpush1.bf16.msra.mxu0 %v9485
    %10292 = vmatprep.subr.bf16.mxu0 0
    %10293 = vmatpush1.bf16.msra.mxu0 %v9482
    %10294 = vmatprep.subr.bf16.mxu0 0
    %10295 = vmatpush1.bf16.msra.mxu0 %v9479
    %10296 = vmatprep.subr.bf16.mxu0 0
    %10297 = vmatpush1.bf16.msra.mxu0 %v9476
    %10298 = vmatprep.subr.bf16.mxu0 0
    %10299 = vmatpush1.bf16.msra.mxu0 %v9473
    %10300 = vmatprep.subr.bf16.mxu0 0
    %10301 = vmatpush2.bf16.msra.mxu0 %v9518
    %10302 = vmatprep.subr.bf16.mxu0 0
    %10303 = vmatpush2.bf16.msra.mxu0 %v9515
    %10304 = vmatprep.subr.bf16.mxu0 0
    %10305 = vmatpush2.bf16.msra.mxu0 %v9512
    %10306 = vmatprep.subr.bf16.mxu0 0
    %10307 = vmatpush2.bf16.msra.mxu0 %v9509
    %10308 = vmatprep.subr.bf16.mxu0 0
    %10309 = vmatpush2.bf16.msra.mxu0 %v9506
    %10310 = vmatprep.subr.bf16.mxu0 0
    %10311 = vmatpush2.bf16.msra.mxu0 %v9503
    %10312 = vmatprep.subr.bf16.mxu0 0
    %10313 = vmatpush2.bf16.msra.mxu0 %v9500
    %10314 = vmatprep.subr.bf16.mxu0 0
    %10315 = vmatpush2.bf16.msra.mxu0 %v9497
    %10316 = vmatprep.mubr.bf16.mxu0 %v7961
    %10317 = vmatmul.mubr.bf16.gmra.mxu0 %v7960
    %v10318 = vpop.f32.mrf.mxu0
    %v10319 = vadd.f32 %v10278, %v10318
    %v10320 = vpop.f32.mrf.mxu0
    %v10321 = vpop.f32.mrf.mxu0
    %v10322 = vadd.f32 %v10281, %v10321
    %v10323 = vpop.f32.mrf.mxu0
    %10324 = vdwg.mxu0
    %10325 = vmatprep.subr.bf16.mxu0 0
    %10326 = vmatpush1.bf16.msra.mxu0 %v9542
    %10327 = vmatprep.subr.bf16.mxu0 0
    %10328 = vmatpush1.bf16.msra.mxu0 %v9539
    %10329 = vmatprep.subr.bf16.mxu0 0
    %10330 = vmatpush1.bf16.msra.mxu0 %v9536
    %10331 = vmatprep.subr.bf16.mxu0 0
    %10332 = vmatpush1.bf16.msra.mxu0 %v9533
    %10333 = vmatprep.subr.bf16.mxu0 0
    %10334 = vmatpush1.bf16.msra.mxu0 %v9530
    %10335 = vmatprep.subr.bf16.mxu0 0
    %10336 = vmatpush1.bf16.msra.mxu0 %v9527
    %10337 = vmatprep.subr.bf16.mxu0 0
    %10338 = vmatpush1.bf16.msra.mxu0 %v9524
    %10339 = vmatprep.subr.bf16.mxu0 0
    %10340 = vmatpush1.bf16.msra.mxu0 %v9521
    %10341 = vmatprep.subr.bf16.mxu0 0
    %10342 = vmatpush2.bf16.msra.mxu0 %v9566
    %10343 = vmatprep.subr.bf16.mxu0 0
    %10344 = vmatpush2.bf16.msra.mxu0 %v9563
    %10345 = vmatprep.subr.bf16.mxu0 0
    %10346 = vmatpush2.bf16.msra.mxu0 %v9560
    %10347 = vmatprep.subr.bf16.mxu0 0
    %10348 = vmatpush2.bf16.msra.mxu0 %v9557
    %10349 = vmatprep.subr.bf16.mxu0 0
    %10350 = vmatpush2.bf16.msra.mxu0 %v9554
    %10351 = vmatprep.subr.bf16.mxu0 0
    %10352 = vmatpush2.bf16.msra.mxu0 %v9551
    %10353 = vmatprep.subr.bf16.mxu0 0
    %10354 = vmatpush2.bf16.msra.mxu0 %v9548
    %10355 = vmatprep.subr.bf16.mxu0 0
    %10356 = vmatpush2.bf16.msra.mxu0 %v9545
    %10357 = vmatprep.mubr.bf16.mxu0 %v7963
    %10358 = vmatmul.mubr.bf16.gmra.mxu0 %v7962
    %v10359 = vpop.f32.mrf.mxu0
    %v10360 = vadd.f32 %v10319, %v10359
    %v10361 = vpop.f32.mrf.mxu0
    %v10362 = vpop.f32.mrf.mxu0
    %v10363 = vadd.f32 %v10322, %v10362
    %v10364 = vpop.f32.mrf.mxu0
    %10365 = vdwg.mxu0
    %10366 = vmatprep.subr.bf16.mxu0 0
    %10367 = vmatpush1.bf16.msra.mxu0 %v9590
    %10368 = vmatprep.subr.bf16.mxu0 0
    %10369 = vmatpush1.bf16.msra.mxu0 %v9587
    %10370 = vmatprep.subr.bf16.mxu0 0
    %10371 = vmatpush1.bf16.msra.mxu0 %v9584
    %10372 = vmatprep.subr.bf16.mxu0 0
    %10373 = vmatpush1.bf16.msra.mxu0 %v9581
    %10374 = vmatprep.subr.bf16.mxu0 0
    %10375 = vmatpush1.bf16.msra.mxu0 %v9578
    %10376 = vmatprep.subr.bf16.mxu0 0
    %10377 = vmatpush1.bf16.msra.mxu0 %v9575
    %10378 = vmatprep.subr.bf16.mxu0 0
    %10379 = vmatpush1.bf16.msra.mxu0 %v9572
    %10380 = vmatprep.subr.bf16.mxu0 0
    %10381 = vmatpush1.bf16.msra.mxu0 %v9569
    %10382 = vmatprep.subr.bf16.mxu0 0
    %10383 = vmatpush2.bf16.msra.mxu0 %v9614
    %10384 = vmatprep.subr.bf16.mxu0 0
    %10385 = vmatpush2.bf16.msra.mxu0 %v9611
    %10386 = vmatprep.subr.bf16.mxu0 0
    %10387 = vmatpush2.bf16.msra.mxu0 %v9608
    %10388 = vmatprep.subr.bf16.mxu0 0
    %10389 = vmatpush2.bf16.msra.mxu0 %v9605
    %10390 = vmatprep.subr.bf16.mxu0 0
    %10391 = vmatpush2.bf16.msra.mxu0 %v9602
    %10392 = vmatprep.subr.bf16.mxu0 0
    %10393 = vmatpush2.bf16.msra.mxu0 %v9599
    %10394 = vmatprep.subr.bf16.mxu0 0
    %10395 = vmatpush2.bf16.msra.mxu0 %v9596
    %10396 = vmatprep.subr.bf16.mxu0 0
    %10397 = vmatpush2.bf16.msra.mxu0 %v9593
    %10398 = vmatprep.mubr.bf16.mxu0 %v7965
    %10399 = vmatmul.mubr.bf16.gmra.mxu0 %v7964
    %v10400 = vpop.f32.mrf.mxu0
    %v10401 = vadd.f32 %v10360, %v10400
    %v10402 = vpop.f32.mrf.mxu0
    %v10403 = vpop.f32.mrf.mxu0
    %v10404 = vadd.f32 %v10363, %v10403
    %v10405 = vpop.f32.mrf.mxu0
    %10406 = vdwg.mxu0
    %v10407 = vadd.f32 %v5525, %v10153
    %v10408 = vadd.f32 %v5526, %v10155
    %v10409 = vadd.f32 %v5527, %v10401
    %v10410 = vadd.f32 %v5528, %v10157
    %v10411 = vadd.f32 %v5529, %v10159
    %v10412 = vadd.f32 %v5530, %v10404
    %10413 = vst [vmem:[#allocation22] sm:$0xff] %v10407
    %10414 = vst [vmem:[#allocation22 + $0x8] sm:$0xff] %v10408
    %10415 = vst [vmem:[#allocation22 + $0x10] sm:$0xff] %v10409
    %10416 = vst [vmem:[#allocation22 + $0x18] sm:$0xff] %v10410
    %10417 = vst [vmem:[#allocation22 + $0x20] sm:$0xff] %v10411
    %10418 = vst [vmem:[#allocation22 + $0x28] sm:$0xff] %v10412
    // Predicated region
    $region98: #{tpu_custom_call.1} parent=1 // pred_check
      _
    $region99: #{tpu_custom_call.1} parent=1 // pred_check_branch
      %10420 = sbr.rel (0) target = $region101
    $region100: #{tpu_custom_call.1} parent=1 // pred_region
      %s10422 = ssub.s32 768, 768
      %10423 = vsyncadd [#allocation4], %s10422
      %s10424 = sshll.u32 [#allocation22], 4
      %s10425 = int_to_ptr.vmem [resolvable:$true] %s10424
      %10430 = dma.vmem_to_hbm [thread:$0]  %s10425, 768, %s12, [#allocation4], 384, 384, 24
    $region101: #{tpu_custom_call.1} parent=1 // pred_fallthru
      _
    // Predicated region
    $region102: #{tpu_custom_call.1} parent=1 // pred_check
      _
    $region103: #{tpu_custom_call.1} parent=1 // pred_check_branch
      %10432 = sbr.rel (0) target = $region105
    $region104: #{tpu_custom_call.1} parent=1 // pred_region
      %10433 = dma.done [#allocation4], 768
    $region105: #{tpu_custom_call.1} parent=1 // pred_fallthru
      _
    %10434 = vsyncpa [#allocation3], 1
    %10435 = vsyncpa [#allocation6], 1
    %10436 = vsyncpa [#allocation9], 1
    %10437 = vsyncpa [#allocation12], 1
    %10438 = vsyncpa [#allocation15], 1
    %10439 = vsyncpa [#allocation18], 1
    %10440 = vsyncpa [#allocation21], 1
    %10441 = vsyncpa [#allocation4], 1

</llo_original>
